<compile_context>
chip_gen: v7x
topology: tpu7x:2x2x1
jax: 0.10.0
libtpu: 0.0.40
codegen_flags: <defaults>
</compile_context>

<pallas_src>
import jax
import jax.numpy as jnp
import numpy as np
from jax.experimental import pallas as pl
from jax.experimental.pallas import tpu as pltpu


def _resblock_kernel(xm_ref, xa_ref, xb_ref, w_ref, b_ref, o_ref, xt_ref):
    """One spatial tile of one batch element of a ResBlock.

    y = relu( conv3x3(x) + proj1x1(x) + bias ),  proj folded into center tap.

    xm_ref: (1, TILE_H, W, Cin) f32   main rows of the (unpadded) input tile
    xa_ref: (1, 1, W, Cin)      f32   input row just above the tile (clamped)
    xb_ref: (1, 1, W, Cin)      f32   input row just below the tile (clamped)
    w_ref:  (9, Cin, Cout)      bf16  3x3 taps, 1x1 proj folded into tap 4
    b_ref:  (1, Cout)           f32   conv bias
    o_ref:  (1, TILE_H, W, Cout) f32
    xt_ref: (TILE_H+2, W+2, Cin) f32  VMEM scratch: zero-padded halo'd tile
    """
    tile_h = xm_ref.shape[1]
    w_out = xm_ref.shape[2]
    cin = xm_ref.shape[3]
    cout = o_ref.shape[3]
    hw = tile_h * w_out

    j = pl.program_id(1)
    n_hb = pl.num_programs(1)

    # Zero-fill the halo'd scratch (the zero borders ARE the conv's SAME
    # padding), then write the tile interior and the existing 1-row halos.
    xt_ref[...] = jnp.zeros_like(xt_ref)
    xt_ref[1:tile_h + 1, 1:w_out + 1, :] = xm_ref[0]

    @pl.when(j > 0)
    def _():  # row above the tile exists -> copy it; else it stays zero.
        xt_ref[0:1, 1:w_out + 1, :] = xa_ref[0]

    @pl.when(j < n_hb - 1)
    def _():  # row below the tile exists -> copy it; else it stays zero.
        xt_ref[tile_h + 1:tile_h + 2, 1:w_out + 1, :] = xb_ref[0]

    # Accumulator starts at the bias (saves one full-tile VPU add).
    acc = jnp.broadcast_to(b_ref[...], (hw, cout)).astype(jnp.float32)

    # 3x3 conv: 9 shifted views of the halo'd tile -> 9 MXU matmuls, f32 acc.
    # (Residual path is already folded into tap 4's weights.)
    for t in range(9):
        ky, kx = divmod(t, 3)
        tap = xt_ref[ky:ky + tile_h, kx:kx + w_out, :]        # (TILE_H, W, Cin)
        tap2d = tap.reshape(hw, cin).astype(jnp.bfloat16)     # layout-preserving
        acc = acc + jnp.dot(tap2d, w_ref[t],
                            preferred_element_type=jnp.float32)

    y = jnp.maximum(acc, 0.0).reshape(tile_h, w_out, cout)    # fused ReLU
    o_ref[0] = y.astype(o_ref.dtype)


def _pick_tile_h(h, cap=32):
    """Largest divisor of H not exceeding `cap`.

    For real UNet sizes `cap` should be derived from the per-generation VMEM
    budget (v7x has half the VMEM of v5e/v6e); trivial at demo shapes.
    """
    for t in range(min(h, cap), 0, -1):
        if h % t == 0:
            return t
    return 1


def resblock_pallas(x_nhwc, w9, b):
    """One ResBlock.

    x_nhwc: (N, H, W, Cin) f32
    w9:     (9, Cin, Cout) bf16  -- 3x3 weights with the 1x1 proj folded in
    b:      (Cout,) f32
    """
    n, h, wdt, cin = x_nhwc.shape
    cout = w9.shape[-1]

    tile_h = _pick_tile_h(h)
    n_hb = h // tile_h

    x = x_nhwc.astype(jnp.float32)
    b2 = b.reshape(1, cout).astype(jnp.float32)

    flops = 2 * n * h * wdt * 9 * cin * cout
    bytes_accessed = (x.size * 4 + n * h * wdt * cout * 4
                      + w9.size * 2 + b2.size * 4)

    out = pl.pallas_call(
        _resblock_kernel,
        out_shape=jax.ShapeDtypeStruct((n, h, wdt, cout), jnp.float32),
        grid=(n, n_hb),
        in_specs=[
            # main rows of the current spatial tile
            pl.BlockSpec((1, tile_h, wdt, cin), lambda i, j: (i, j, 0, 0)),
            # 1-row halo above (block size 1 along H -> element-row index),
            # clamped at the top boundary; the kernel ignores it when j == 0.
            pl.BlockSpec((1, 1, wdt, cin),
                         lambda i, j: (i, jnp.maximum(j * tile_h - 1, 0), 0, 0)),
            # 1-row halo below, clamped at the bottom boundary.
            pl.BlockSpec((1, 1, wdt, cin),
                         lambda i, j: (i, jnp.minimum((j + 1) * tile_h, h - 1),
                                       0, 0)),
            # weights / bias stay resident across the grid
            pl.BlockSpec((9, cin, cout), lambda i, j: (0, 0, 0)),
            pl.BlockSpec((1, cout), lambda i, j: (0, 0)),
        ],
        out_specs=pl.BlockSpec((1, tile_h, wdt, cout),
                               lambda i, j: (i, j, 0, 0)),
        scratch_shapes=[pltpu.VMEM((tile_h + 2, wdt + 2, cin), jnp.float32)],
        compiler_params=pltpu.CompilerParams(
            dimension_semantics=("parallel", "parallel")),
        cost_estimate=pl.CostEstimate(flops=flops, transcendentals=0,
                                      bytes_accessed=bytes_accessed),
    )(x, x, x, w9, b2)
    return out


def init_conv_block_params(key, in_channels, out_channels, num_layers):
    """Deterministic synthetic parameters for the ResBlock stack (`conv1`)."""
    params = []
    cin = in_channels
    for _ in range(num_layers):
        key, kw, kb, kp = jax.random.split(key, 4)
        fan_in = 9 * cin
        w = jax.random.uniform(kw, (3, 3, cin, out_channels), jnp.float32,
                               -1.0, 1.0) / np.sqrt(fan_in)
        b = jax.random.uniform(kb, (out_channels,), jnp.float32,
                               -1.0, 1.0) / np.sqrt(fan_in)
        if cin != out_channels:
            p = jax.random.uniform(kp, (cin, out_channels), jnp.float32,
                                   -1.0, 1.0) / np.sqrt(cin)
        else:
            p = jnp.eye(out_channels, dtype=jnp.float32)  # identity skip
        params.append((w, b, p))
        cin = out_channels
    return params


def conv_block_forward(x_nchw, params):
    """ConvBlock.forward.  Input/output are PyTorch-style NCHW."""
    x = jnp.transpose(x_nchw, (0, 2, 3, 1)).astype(jnp.float32)  # NCHW -> NHWC
    for (w, b, p) in params:          # self.conv1: stack of ResBlocks
        cin, cout = w.shape[2], w.shape[3]
        # Fold the 1x1 residual projection into the center (unshifted) tap.
        w9 = w.reshape(9, cin, cout).at[4].add(p).astype(jnp.bfloat16)
        x = resblock_pallas(x, w9, b.astype(jnp.float32))
    # TODO(synk): reference forward also calls `self.conv2(x)`, which is never
    # defined in __init__ (would raise AttributeError in PyTorch) — omitted.
    return jnp.transpose(x, (0, 3, 1, 2))                        # NHWC -> NCHW


# ---------------- pure-JAX reference for correctness check ----------------
def _resblock_ref(x_nhwc, w, b, p):
    y = jax.lax.conv_general_dilated(
        x_nhwc, w, window_strides=(1, 1), padding="SAME",
        dimension_numbers=("NHWC", "HWIO", "NHWC"))
    y = y + b + jnp.einsum("nhwc,co->nhwo", x_nhwc, p)
    return jnp.maximum(y, 0.0)


def conv_block_ref(x_nchw, params):
    x = jnp.transpose(x_nchw, (0, 2, 3, 1)).astype(jnp.float32)
    for (w, b, p) in params:
        x = _resblock_ref(x, w, b, p)
    return jnp.transpose(x, (0, 3, 1, 2))


if __name__ == "__main__":
    key = jax.random.PRNGKey(0)
    kx, kp = jax.random.split(key)

    in_channels, out_channels, num_layers = 4, 8, 2
    x = jax.random.normal(kx, (2, in_channels, 16, 16), jnp.float32)  # NCHW
    params = init_conv_block_params(kp, in_channels, out_channels, num_layers)

    fwd = jax.jit(conv_block_forward)
    out = jax.block_until_ready(fwd(x, params))
    assert out.shape == (2, out_channels, 16, 16), out.shape

    ref = jax.block_until_ready(conv_block_ref(x, params))
    np.testing.assert_allclose(np.asarray(out), np.asarray(ref),
                               rtol=2e-2, atol=2e-2)
    print("KERNEL_OK")
</pallas_src>

<mosaic_0001>
module attributes {stable_mosaic.version = 11 : i64} {
  func.func @_resblock_kernel(%arg0: i32, %arg1: i32, %arg2: memref<1x16x16x4xf32, #tpu.memory_space<vmem>>, %arg3: memref<1x1x16x4xf32, #tpu.memory_space<vmem>>, %arg4: memref<1x1x16x4xf32, #tpu.memory_space<vmem>>, %arg5: memref<9x4x8xbf16, #tpu.memory_space<vmem>>, %arg6: memref<1x8xf32, #tpu.memory_space<vmem>>, %arg7: memref<1x16x16x8xf32, #tpu.memory_space<vmem>>, %arg8: memref<18x18x4xf32, #tpu.memory_space<vmem>>) attributes {dimension_semantics = [#tpu.dimension_semantics<parallel>, #tpu.dimension_semantics<parallel>], iteration_bounds = array<i64: 2, 1>, scalar_prefetch = 0 : i64, scratch_operands = 1 : i64, tpu.core_type = #tpu.core_type<tc>, window_params = [{transform_indices = @transform_0, window_bounds = array<i64: 1, 16, 16, 4>}, {transform_indices = @transform_1, window_bounds = array<i64: 1, 1, 16, 4>}, {transform_indices = @transform_2, window_bounds = array<i64: 1, 1, 16, 4>}, {pipeline_mode = #tpu.pipeline_mode<synchronous>, transform_indices = @transform_3, window_bounds = array<i64: 9, 4, 8>}, {pipeline_mode = #tpu.pipeline_mode<synchronous>, transform_indices = @transform_4, window_bounds = array<i64: 1, 8>}, {transform_indices = @transform_5, window_bounds = array<i64: 1, 16, 16, 8>}]} {
    %cst = arith.constant 0.000000e+00 : f32
    %0 = vector.broadcast %cst : f32 to vector<18x18x4xf32>
    %c0 = arith.constant 0 : index
    %c0_0 = arith.constant 0 : index
    %c0_1 = arith.constant 0 : index
    %1 = vector.load %arg8[%c0, %c0_0, %c0_1] : memref<18x18x4xf32, #tpu.memory_space<vmem>>, vector<18x18x4xf32>
    tpu.vector_store %arg8[%c0, %c0_0, %c0_1], %0 {strides = array<i32>} : memref<18x18x4xf32, #tpu.memory_space<vmem>>, vector<18x18x4xf32>,
    %c0_2 = arith.constant 0 : index
    %c0_3 = arith.constant 0 : index
    %c0_4 = arith.constant 0 : index
    %c0_5 = arith.constant 0 : index
    %2 = vector.load %arg2[%c0_2, %c0_3, %c0_4, %c0_5] : memref<1x16x16x4xf32, #tpu.memory_space<vmem>>, vector<1x16x16x4xf32>
    %3 = vector.shape_cast %2 : vector<1x16x16x4xf32> to vector<16x16x4xf32>
    %c1 = arith.constant 1 : index
    %c1_6 = arith.constant 1 : index
    %c0_7 = arith.constant 0 : index
    %4 = vector.load %arg8[%c1, %c1_6, %c0_7] : memref<18x18x4xf32, #tpu.memory_space<vmem>>, vector<16x16x4xf32>
    tpu.vector_store %arg8[%c1, %c1_6, %c0_7], %3 {strides = array<i32>} : memref<18x18x4xf32, #tpu.memory_space<vmem>>, vector<16x16x4xf32>,
    %c0_i32 = arith.constant 0 : i32
    %5 = arith.cmpi sgt, %arg1, %c0_i32 : i32
    %6 = arith.extui %5 : i1 to i32
    %c0_i32_8 = arith.constant 0 : i32
    %7 = arith.cmpi ne, %6, %c0_i32_8 : i32
    scf.if %7 {
      %c0_74 = arith.constant 0 : index
      %c0_75 = arith.constant 0 : index
      %c0_76 = arith.constant 0 : index
      %c0_77 = arith.constant 0 : index
      %83 = vector.load %arg3[%c0_74, %c0_75, %c0_76, %c0_77] : memref<1x1x16x4xf32, #tpu.memory_space<vmem>>, vector<1x1x16x4xf32>
      %84 = vector.shape_cast %83 : vector<1x1x16x4xf32> to vector<1x16x4xf32>
      %c0_78 = arith.constant 0 : index
      %c1_79 = arith.constant 1 : index
      %c0_80 = arith.constant 0 : index
      %85 = vector.load %arg8[%c0_78, %c1_79, %c0_80] : memref<18x18x4xf32, #tpu.memory_space<vmem>>, vector<1x16x4xf32>
      tpu.vector_store %arg8[%c0_78, %c1_79, %c0_80], %84 {strides = array<i32>} : memref<18x18x4xf32, #tpu.memory_space<vmem>>, vector<1x16x4xf32>,
    } else {
    }
    %c0_i32_9 = arith.constant 0 : i32
    %8 = arith.cmpi slt, %arg1, %c0_i32_9 : i32
    %9 = arith.extui %8 : i1 to i32
    %c0_i32_10 = arith.constant 0 : i32
    %10 = arith.cmpi ne, %9, %c0_i32_10 : i32
    scf.if %10 {
      %c0_74 = arith.constant 0 : index
      %c0_75 = arith.constant 0 : index
      %c0_76 = arith.constant 0 : index
      %c0_77 = arith.constant 0 : index
      %83 = vector.load %arg4[%c0_74, %c0_75, %c0_76, %c0_77] : memref<1x1x16x4xf32, #tpu.memory_space<vmem>>, vector<1x1x16x4xf32>
      %84 = vector.shape_cast %83 : vector<1x1x16x4xf32> to vector<1x16x4xf32>
      %c17 = arith.constant 17 : index
      %c1_78 = arith.constant 1 : index
      %c0_79 = arith.constant 0 : index
      %85 = vector.load %arg8[%c17, %c1_78, %c0_79] : memref<18x18x4xf32, #tpu.memory_space<vmem>>, vector<1x16x4xf32>
      tpu.vector_store %arg8[%c17, %c1_78, %c0_79], %84 {strides = array<i32>} : memref<18x18x4xf32, #tpu.memory_space<vmem>>, vector<1x16x4xf32>,
    } else {
    }
    %c0_11 = arith.constant 0 : index
    %c0_12 = arith.constant 0 : index
    %11 = vector.load %arg6[%c0_11, %c0_12] : memref<1x8xf32, #tpu.memory_space<vmem>>, vector<1x8xf32>
    %12 = vector.shape_cast %11 : vector<1x8xf32> to vector<1x8xf32>
    %13 = vector.broadcast %12 : vector<1x8xf32> to vector<256x8xf32>
    %c0_13 = arith.constant 0 : index
    %c0_14 = arith.constant 0 : index
    %c0_15 = arith.constant 0 : index
    %14 = vector.load %arg8[%c0_13, %c0_14, %c0_15] : memref<18x18x4xf32, #tpu.memory_space<vmem>>, vector<16x16x4xf32>
    %15 = vector.shape_cast %14 : vector<16x16x4xf32> to vector<256x4xf32>
    %16 = arith.truncf %15 : vector<256x4xf32> to vector<256x4xbf16>
    %c0_16 = arith.constant 0 : index
    %c0_17 = arith.constant 0 : index
    %c0_18 = arith.constant 0 : index
    %17 = vector.load %arg5[%c0_16, %c0_17, %c0_18] : memref<9x4x8xbf16, #tpu.memory_space<vmem>>, vector<1x4x8xbf16>
    %18 = vector.shape_cast %17 : vector<1x4x8xbf16> to vector<4x8xbf16>
    %cst_19 = arith.constant dense<0.000000e+00> : vector<256x8xf32>
    %19 = tpu.matmul %16, %18, %cst_19 {dimension_numbers = #tpu.dot_dimension_numbers<[1], [0], [0], [1], [0, 0, 1, 1], [], []>} : vector<256x4xbf16>, vector<4x8xbf16>, vector<256x8xf32> -> vector<256x8xf32>
    %20 = arith.addf %13, %19 : vector<256x8xf32>
    %c0_20 = arith.constant 0 : index
    %c1_21 = arith.constant 1 : index
    %c0_22 = arith.constant 0 : index
    %21 = vector.load %arg8[%c0_20, %c1_21, %c0_22] : memref<18x18x4xf32, #tpu.memory_space<vmem>>, vector<16x16x4xf32>
    %22 = vector.shape_cast %21 : vector<16x16x4xf32> to vector<256x4xf32>
    %23 = arith.truncf %22 : vector<256x4xf32> to vector<256x4xbf16>
    %c1_23 = arith.constant 1 : index
    %c0_24 = arith.constant 0 : index
    %c0_25 = arith.constant 0 : index
    %24 = vector.load %arg5[%c1_23, %c0_24, %c0_25] : memref<9x4x8xbf16, #tpu.memory_space<vmem>>, vector<1x4x8xbf16>
    %25 = vector.shape_cast %24 : vector<1x4x8xbf16> to vector<4x8xbf16>
    %cst_26 = arith.constant dense<0.000000e+00> : vector<256x8xf32>
    %26 = tpu.matmul %23, %25, %cst_26 {dimension_numbers = #tpu.dot_dimension_numbers<[1], [0], [0], [1], [0, 0, 1, 1], [], []>} : vector<256x4xbf16>, vector<4x8xbf16>, vector<256x8xf32> -> vector<256x8xf32>
    %27 = arith.addf %20, %26 : vector<256x8xf32>
    %c0_27 = arith.constant 0 : index
    %c2 = arith.constant 2 : index
    %c0_28 = arith.constant 0 : index
    %28 = vector.load %arg8[%c0_27, %c2, %c0_28] : memref<18x18x4xf32, #tpu.memory_space<vmem>>, vector<16x16x4xf32>
    %29 = vector.shape_cast %28 : vector<16x16x4xf32> to vector<256x4xf32>
    %30 = arith.truncf %29 : vector<256x4xf32> to vector<256x4xbf16>
    %c2_29 = arith.constant 2 : index
    %c0_30 = arith.constant 0 : index
    %c0_31 = arith.constant 0 : index
    %31 = vector.load %arg5[%c2_29, %c0_30, %c0_31] : memref<9x4x8xbf16, #tpu.memory_space<vmem>>, vector<1x4x8xbf16>
    %32 = vector.shape_cast %31 : vector<1x4x8xbf16> to vector<4x8xbf16>
    %cst_32 = arith.constant dense<0.000000e+00> : vector<256x8xf32>
    %33 = tpu.matmul %30, %32, %cst_32 {dimension_numbers = #tpu.dot_dimension_numbers<[1], [0], [0], [1], [0, 0, 1, 1], [], []>} : vector<256x4xbf16>, vector<4x8xbf16>, vector<256x8xf32> -> vector<256x8xf32>
    %34 = arith.addf %27, %33 : vector<256x8xf32>
    %c1_33 = arith.constant 1 : index
    %c0_34 = arith.constant 0 : index
    %c0_35 = arith.constant 0 : index
    %35 = vector.load %arg8[%c1_33, %c0_34, %c0_35] : memref<18x18x4xf32, #tpu.memory_space<vmem>>, vector<16x16x4xf32>
    %36 = vector.shape_cast %35 : vector<16x16x4xf32> to vector<256x4xf32>
    %37 = arith.truncf %36 : vector<256x4xf32> to vector<256x4xbf16>
    %c3 = arith.constant 3 : index
    %c0_36 = arith.constant 0 : index
    %c0_37 = arith.constant 0 : index
    %38 = vector.load %arg5[%c3, %c0_36, %c0_37] : memref<9x4x8xbf16, #tpu.memory_space<vmem>>, vector<1x4x8xbf16>
    %39 = vector.shape_cast %38 : vector<1x4x8xbf16> to vector<4x8xbf16>
    %cst_38 = arith.constant dense<0.000000e+00> : vector<256x8xf32>
    %40 = tpu.matmul %37, %39, %cst_38 {dimension_numbers = #tpu.dot_dimension_numbers<[1], [0], [0], [1], [0, 0, 1, 1], [], []>} : vector<256x4xbf16>, vector<4x8xbf16>, vector<256x8xf32> -> vector<256x8xf32>
    %41 = arith.addf %34, %40 : vector<256x8xf32>
    %c1_39 = arith.constant 1 : index
    %c1_40 = arith.constant 1 : index
    %c0_41 = arith.constant 0 : index
    %42 = vector.load %arg8[%c1_39, %c1_40, %c0_41] : memref<18x18x4xf32, #tpu.memory_space<vmem>>, vector<16x16x4xf32>
    %43 = vector.shape_cast %42 : vector<16x16x4xf32> to vector<256x4xf32>
    %44 = arith.truncf %43 : vector<256x4xf32> to vector<256x4xbf16>
    %c4 = arith.constant 4 : index
    %c0_42 = arith.constant 0 : index
    %c0_43 = arith.constant 0 : index
    %45 = vector.load %arg5[%c4, %c0_42, %c0_43] : memref<9x4x8xbf16, #tpu.memory_space<vmem>>, vector<1x4x8xbf16>
    %46 = vector.shape_cast %45 : vector<1x4x8xbf16> to vector<4x8xbf16>
    %cst_44 = arith.constant dense<0.000000e+00> : vector<256x8xf32>
    %47 = tpu.matmul %44, %46, %cst_44 {dimension_numbers = #tpu.dot_dimension_numbers<[1], [0], [0], [1], [0, 0, 1, 1], [], []>} : vector<256x4xbf16>, vector<4x8xbf16>, vector<256x8xf32> -> vector<256x8xf32>
    %48 = arith.addf %41, %47 : vector<256x8xf32>
    %c1_45 = arith.constant 1 : index
    %c2_46 = arith.constant 2 : index
    %c0_47 = arith.constant 0 : index
    %49 = vector.load %arg8[%c1_45, %c2_46, %c0_47] : memref<18x18x4xf32, #tpu.memory_space<vmem>>, vector<16x16x4xf32>
    %50 = vector.shape_cast %49 : vector<16x16x4xf32> to vector<256x4xf32>
    %51 = arith.truncf %50 : vector<256x4xf32> to vector<256x4xbf16>
    %c5 = arith.constant 5 : index
    %c0_48 = arith.constant 0 : index
    %c0_49 = arith.constant 0 : index
    %52 = vector.load %arg5[%c5, %c0_48, %c0_49] : memref<9x4x8xbf16, #tpu.memory_space<vmem>>, vector<1x4x8xbf16>
    %53 = vector.shape_cast %52 : vector<1x4x8xbf16> to vector<4x8xbf16>
    %cst_50 = arith.constant dense<0.000000e+00> : vector<256x8xf32>
    %54 = tpu.matmul %51, %53, %cst_50 {dimension_numbers = #tpu.dot_dimension_numbers<[1], [0], [0], [1], [0, 0, 1, 1], [], []>} : vector<256x4xbf16>, vector<4x8xbf16>, vector<256x8xf32> -> vector<256x8xf32>
    %55 = arith.addf %48, %54 : vector<256x8xf32>
    %c2_51 = arith.constant 2 : index
    %c0_52 = arith.constant 0 : index
    %c0_53 = arith.constant 0 : index
    %56 = vector.load %arg8[%c2_51, %c0_52, %c0_53] : memref<18x18x4xf32, #tpu.memory_space<vmem>>, vector<16x16x4xf32>
    %57 = vector.shape_cast %56 : vector<16x16x4xf32> to vector<256x4xf32>
    %58 = arith.truncf %57 : vector<256x4xf32> to vector<256x4xbf16>
    %c6 = arith.constant 6 : index
    %c0_54 = arith.constant 0 : index
    %c0_55 = arith.constant 0 : index
    %59 = vector.load %arg5[%c6, %c0_54, %c0_55] : memref<9x4x8xbf16, #tpu.memory_space<vmem>>, vector<1x4x8xbf16>
    %60 = vector.shape_cast %59 : vector<1x4x8xbf16> to vector<4x8xbf16>
    %cst_56 = arith.constant dense<0.000000e+00> : vector<256x8xf32>
    %61 = tpu.matmul %58, %60, %cst_56 {dimension_numbers = #tpu.dot_dimension_numbers<[1], [0], [0], [1], [0, 0, 1, 1], [], []>} : vector<256x4xbf16>, vector<4x8xbf16>, vector<256x8xf32> -> vector<256x8xf32>
    %62 = arith.addf %55, %61 : vector<256x8xf32>
    %c2_57 = arith.constant 2 : index
    %c1_58 = arith.constant 1 : index
    %c0_59 = arith.constant 0 : index
    %63 = vector.load %arg8[%c2_57, %c1_58, %c0_59] : memref<18x18x4xf32, #tpu.memory_space<vmem>>, vector<16x16x4xf32>
    %64 = vector.shape_cast %63 : vector<16x16x4xf32> to vector<256x4xf32>
    %65 = arith.truncf %64 : vector<256x4xf32> to vector<256x4xbf16>
    %c7 = arith.constant 7 : index
    %c0_60 = arith.constant 0 : index
    %c0_61 = arith.constant 0 : index
    %66 = vector.load %arg5[%c7, %c0_60, %c0_61] : memref<9x4x8xbf16, #tpu.memory_space<vmem>>, vector<1x4x8xbf16>
    %67 = vector.shape_cast %66 : vector<1x4x8xbf16> to vector<4x8xbf16>
    %cst_62 = arith.constant dense<0.000000e+00> : vector<256x8xf32>
    %68 = tpu.matmul %65, %67, %cst_62 {dimension_numbers = #tpu.dot_dimension_numbers<[1], [0], [0], [1], [0, 0, 1, 1], [], []>} : vector<256x4xbf16>, vector<4x8xbf16>, vector<256x8xf32> -> vector<256x8xf32>
    %69 = arith.addf %62, %68 : vector<256x8xf32>
    %c2_63 = arith.constant 2 : index
    %c2_64 = arith.constant 2 : index
    %c0_65 = arith.constant 0 : index
    %70 = vector.load %arg8[%c2_63, %c2_64, %c0_65] : memref<18x18x4xf32, #tpu.memory_space<vmem>>, vector<16x16x4xf32>
    %71 = vector.shape_cast %70 : vector<16x16x4xf32> to vector<256x4xf32>
    %72 = arith.truncf %71 : vector<256x4xf32> to vector<256x4xbf16>
    %c8 = arith.constant 8 : index
    %c0_66 = arith.constant 0 : index
    %c0_67 = arith.constant 0 : index
    %73 = vector.load %arg5[%c8, %c0_66, %c0_67] : memref<9x4x8xbf16, #tpu.memory_space<vmem>>, vector<1x4x8xbf16>
    %74 = vector.shape_cast %73 : vector<1x4x8xbf16> to vector<4x8xbf16>
    %cst_68 = arith.constant dense<0.000000e+00> : vector<256x8xf32>
    %75 = tpu.matmul %72, %74, %cst_68 {dimension_numbers = #tpu.dot_dimension_numbers<[1], [0], [0], [1], [0, 0, 1, 1], [], []>} : vector<256x4xbf16>, vector<4x8xbf16>, vector<256x8xf32> -> vector<256x8xf32>
    %76 = arith.addf %69, %75 : vector<256x8xf32>
    %cst_69 = arith.constant 0.000000e+00 : f32
    %77 = vector.broadcast %cst_69 : f32 to vector<256x8xf32>
    %78 = arith.maximumf %76, %77 : vector<256x8xf32>
    %79 = vector.shape_cast %78 : vector<256x8xf32> to vector<16x16x8xf32>
    %c0_70 = arith.constant 0 : index
    %c0_71 = arith.constant 0 : index
    %c0_72 = arith.constant 0 : index
    %c0_73 = arith.constant 0 : index
    %80 = vector.load %arg7[%c0_70, %c0_71, %c0_72, %c0_73] : memref<1x16x16x8xf32, #tpu.memory_space<vmem>>, vector<1x16x16x8xf32>
    %81 = vector.shape_cast %80 : vector<1x16x16x8xf32> to vector<16x16x8xf32>
    %82 = vector.shape_cast %79 : vector<16x16x8xf32> to vector<1x16x16x8xf32>
    tpu.vector_store %arg7[%c0_70, %c0_71, %c0_72, %c0_73], %82 {strides = array<i32>} : memref<1x16x16x8xf32, #tpu.memory_space<vmem>>, vector<1x16x16x8xf32>,
    return
  }
  func.func @transform_0(%arg0: i32, %arg1: i32) -> (i32, i32, i32, i32) {
    %c0_i32 = arith.constant 0 : i32
    %c0_i32_0 = arith.constant 0 : i32
    %c0_i32_1 = arith.constant 0 : i32
    return %arg0, %arg1, %c0_i32, %c0_i32_0 : i32, i32, i32, i32
  }
  func.func @transform_1(%arg0: i32, %arg1: i32) -> (i32, i32, i32, i32) {
    %c16_i32 = arith.constant 16 : i32
    %0 = arith.muli %arg1, %c16_i32 : i32
    %c1_i32 = arith.constant 1 : i32
    %1 = arith.subi %0, %c1_i32 : i32
    %c0_i32 = arith.constant 0 : i32
    %2 = arith.maxsi %1, %c0_i32 : i32
    %c0_i32_0 = arith.constant 0 : i32
    %c0_i32_1 = arith.constant 0 : i32
    %c0_i32_2 = arith.constant 0 : i32
    return %arg0, %2, %c0_i32_0, %c0_i32_1 : i32, i32, i32, i32
  }
  func.func @transform_2(%arg0: i32, %arg1: i32) -> (i32, i32, i32, i32) {
    %c1_i32 = arith.constant 1 : i32
    %0 = arith.addi %arg1, %c1_i32 : i32
    %c16_i32 = arith.constant 16 : i32
    %1 = arith.muli %0, %c16_i32 : i32
    %c15_i32 = arith.constant 15 : i32
    %2 = arith.minsi %1, %c15_i32 : i32
    %c0_i32 = arith.constant 0 : i32
    %c0_i32_0 = arith.constant 0 : i32
    %c0_i32_1 = arith.constant 0 : i32
    return %arg0, %2, %c0_i32, %c0_i32_0 : i32, i32, i32, i32
  }
  func.func @transform_3(%arg0: i32, %arg1: i32) -> (i32, i32, i32) {
    %c0_i32 = arith.constant 0 : i32
    %c0_i32_0 = arith.constant 0 : i32
    %c0_i32_1 = arith.constant 0 : i32
    %c0_i32_2 = arith.constant 0 : i32
    return %c0_i32, %c0_i32_0, %c0_i32_1 : i32, i32, i32
  }
  func.func @transform_4(%arg0: i32, %arg1: i32) -> (i32, i32) {
    %c0_i32 = arith.constant 0 : i32
    %c0_i32_0 = arith.constant 0 : i32
    %c0_i32_1 = arith.constant 0 : i32
    return %c0_i32, %c0_i32_0 : i32, i32
  }
  func.func @transform_5(%arg0: i32, %arg1: i32) -> (i32, i32, i32, i32) {
    %c0_i32 = arith.constant 0 : i32
    %c0_i32_0 = arith.constant 0 : i32
    %c0_i32_1 = arith.constant 0 : i32
    return %arg0, %arg1, %c0_i32, %c0_i32_0 : i32, i32, i32, i32
  }
}

module attributes {stable_mosaic.version = 11 : i64} {
  func.func @_resblock_kernel(%arg0: i32, %arg1: i32, %arg2: memref<1x16x16x8xf32, #tpu.memory_space<vmem>>, %arg3: memref<1x1x16x8xf32, #tpu.memory_space<vmem>>, %arg4: memref<1x1x16x8xf32, #tpu.memory_space<vmem>>, %arg5: memref<9x8x8xbf16, #tpu.memory_space<vmem>>, %arg6: memref<1x8xf32, #tpu.memory_space<vmem>>, %arg7: memref<1x16x16x8xf32, #tpu.memory_space<vmem>>, %arg8: memref<18x18x8xf32, #tpu.memory_space<vmem>>) attributes {dimension_semantics = [#tpu.dimension_semantics<parallel>, #tpu.dimension_semantics<parallel>], iteration_bounds = array<i64: 2, 1>, scalar_prefetch = 0 : i64, scratch_operands = 1 : i64, tpu.core_type = #tpu.core_type<tc>, window_params = [{transform_indices = @transform_0, window_bounds = array<i64: 1, 16, 16, 8>}, {transform_indices = @transform_1, window_bounds = array<i64: 1, 1, 16, 8>}, {transform_indices = @transform_2, window_bounds = array<i64: 1, 1, 16, 8>}, {pipeline_mode = #tpu.pipeline_mode<synchronous>, transform_indices = @transform_3, window_bounds = array<i64: 9, 8, 8>}, {pipeline_mode = #tpu.pipeline_mode<synchronous>, transform_indices = @transform_4, window_bounds = array<i64: 1, 8>}, {transform_indices = @transform_5, window_bounds = array<i64: 1, 16, 16, 8>}]} {
    %cst = arith.constant 0.000000e+00 : f32
    %0 = vector.broadcast %cst : f32 to vector<18x18x8xf32>
    %c0 = arith.constant 0 : index
    %c0_0 = arith.constant 0 : index
    %c0_1 = arith.constant 0 : index
    %1 = vector.load %arg8[%c0, %c0_0, %c0_1] : memref<18x18x8xf32, #tpu.memory_space<vmem>>, vector<18x18x8xf32>
    tpu.vector_store %arg8[%c0, %c0_0, %c0_1], %0 {strides = array<i32>} : memref<18x18x8xf32, #tpu.memory_space<vmem>>, vector<18x18x8xf32>,
    %c0_2 = arith.constant 0 : index
    %c0_3 = arith.constant 0 : index
    %c0_4 = arith.constant 0 : index
    %c0_5 = arith.constant 0 : index
    %2 = vector.load %arg2[%c0_2, %c0_3, %c0_4, %c0_5] : memref<1x16x16x8xf32, #tpu.memory_space<vmem>>, vector<1x16x16x8xf32>
    %3 = vector.shape_cast %2 : vector<1x16x16x8xf32> to vector<16x16x8xf32>
    %c1 = arith.constant 1 : index
    %c1_6 = arith.constant 1 : index
    %c0_7 = arith.constant 0 : index
    %4 = vector.load %arg8[%c1, %c1_6, %c0_7] : memref<18x18x8xf32, #tpu.memory_space<vmem>>, vector<16x16x8xf32>
    tpu.vector_store %arg8[%c1, %c1_6, %c0_7], %3 {strides = array<i32>} : memref<18x18x8xf32, #tpu.memory_space<vmem>>, vector<16x16x8xf32>,
    %c0_i32 = arith.constant 0 : i32
    %5 = arith.cmpi sgt, %arg1, %c0_i32 : i32
    %6 = arith.extui %5 : i1 to i32
    %c0_i32_8 = arith.constant 0 : i32
    %7 = arith.cmpi ne, %6, %c0_i32_8 : i32
    scf.if %7 {
      %c0_74 = arith.constant 0 : index
      %c0_75 = arith.constant 0 : index
      %c0_76 = arith.constant 0 : index
      %c0_77 = arith.constant 0 : index
      %83 = vector.load %arg3[%c0_74, %c0_75, %c0_76, %c0_77] : memref<1x1x16x8xf32, #tpu.memory_space<vmem>>, vector<1x1x16x8xf32>
      %84 = vector.shape_cast %83 : vector<1x1x16x8xf32> to vector<1x16x8xf32>
      %c0_78 = arith.constant 0 : index
      %c1_79 = arith.constant 1 : index
      %c0_80 = arith.constant 0 : index
      %85 = vector.load %arg8[%c0_78, %c1_79, %c0_80] : memref<18x18x8xf32, #tpu.memory_space<vmem>>, vector<1x16x8xf32>
      tpu.vector_store %arg8[%c0_78, %c1_79, %c0_80], %84 {strides = array<i32>} : memref<18x18x8xf32, #tpu.memory_space<vmem>>, vector<1x16x8xf32>,
    } else {
    }
    %c0_i32_9 = arith.constant 0 : i32
    %8 = arith.cmpi slt, %arg1, %c0_i32_9 : i32
    %9 = arith.extui %8 : i1 to i32
    %c0_i32_10 = arith.constant 0 : i32
    %10 = arith.cmpi ne, %9, %c0_i32_10 : i32
    scf.if %10 {
      %c0_74 = arith.constant 0 : index
      %c0_75 = arith.constant 0 : index
      %c0_76 = arith.constant 0 : index
      %c0_77 = arith.constant 0 : index
      %83 = vector.load %arg4[%c0_74, %c0_75, %c0_76, %c0_77] : memref<1x1x16x8xf32, #tpu.memory_space<vmem>>, vector<1x1x16x8xf32>
      %84 = vector.shape_cast %83 : vector<1x1x16x8xf32> to vector<1x16x8xf32>
      %c17 = arith.constant 17 : index
      %c1_78 = arith.constant 1 : index
      %c0_79 = arith.constant 0 : index
      %85 = vector.load %arg8[%c17, %c1_78, %c0_79] : memref<18x18x8xf32, #tpu.memory_space<vmem>>, vector<1x16x8xf32>
      tpu.vector_store %arg8[%c17, %c1_78, %c0_79], %84 {strides = array<i32>} : memref<18x18x8xf32, #tpu.memory_space<vmem>>, vector<1x16x8xf32>,
    } else {
    }
    %c0_11 = arith.constant 0 : index
    %c0_12 = arith.constant 0 : index
    %11 = vector.load %arg6[%c0_11, %c0_12] : memref<1x8xf32, #tpu.memory_space<vmem>>, vector<1x8xf32>
    %12 = vector.shape_cast %11 : vector<1x8xf32> to vector<1x8xf32>
    %13 = vector.broadcast %12 : vector<1x8xf32> to vector<256x8xf32>
    %c0_13 = arith.constant 0 : index
    %c0_14 = arith.constant 0 : index
    %c0_15 = arith.constant 0 : index
    %14 = vector.load %arg8[%c0_13, %c0_14, %c0_15] : memref<18x18x8xf32, #tpu.memory_space<vmem>>, vector<16x16x8xf32>
    %15 = vector.shape_cast %14 : vector<16x16x8xf32> to vector<256x8xf32>
    %16 = arith.truncf %15 : vector<256x8xf32> to vector<256x8xbf16>
    %c0_16 = arith.constant 0 : index
    %c0_17 = arith.constant 0 : index
    %c0_18 = arith.constant 0 : index
    %17 = vector.load %arg5[%c0_16, %c0_17, %c0_18] : memref<9x8x8xbf16, #tpu.memory_space<vmem>>, vector<1x8x8xbf16>
    %18 = vector.shape_cast %17 : vector<1x8x8xbf16> to vector<8x8xbf16>
    %cst_19 = arith.constant dense<0.000000e+00> : vector<256x8xf32>
    %19 = tpu.matmul %16, %18, %cst_19 {dimension_numbers = #tpu.dot_dimension_numbers<[1], [0], [0], [1], [0, 0, 1, 1], [], []>} : vector<256x8xbf16>, vector<8x8xbf16>, vector<256x8xf32> -> vector<256x8xf32>
    %20 = arith.addf %13, %19 : vector<256x8xf32>
    %c0_20 = arith.constant 0 : index
    %c1_21 = arith.constant 1 : index
    %c0_22 = arith.constant 0 : index
    %21 = vector.load %arg8[%c0_20, %c1_21, %c0_22] : memref<18x18x8xf32, #tpu.memory_space<vmem>>, vector<16x16x8xf32>
    %22 = vector.shape_cast %21 : vector<16x16x8xf32> to vector<256x8xf32>
    %23 = arith.truncf %22 : vector<256x8xf32> to vector<256x8xbf16>
    %c1_23 = arith.constant 1 : index
    %c0_24 = arith.constant 0 : index
    %c0_25 = arith.constant 0 : index
    %24 = vector.load %arg5[%c1_23, %c0_24, %c0_25] : memref<9x8x8xbf16, #tpu.memory_space<vmem>>, vector<1x8x8xbf16>
    %25 = vector.shape_cast %24 : vector<1x8x8xbf16> to vector<8x8xbf16>
    %cst_26 = arith.constant dense<0.000000e+00> : vector<256x8xf32>
    %26 = tpu.matmul %23, %25, %cst_26 {dimension_numbers = #tpu.dot_dimension_numbers<[1], [0], [0], [1], [0, 0, 1, 1], [], []>} : vector<256x8xbf16>, vector<8x8xbf16>, vector<256x8xf32> -> vector<256x8xf32>
    %27 = arith.addf %20, %26 : vector<256x8xf32>
    %c0_27 = arith.constant 0 : index
    %c2 = arith.constant 2 : index
    %c0_28 = arith.constant 0 : index
    %28 = vector.load %arg8[%c0_27, %c2, %c0_28] : memref<18x18x8xf32, #tpu.memory_space<vmem>>, vector<16x16x8xf32>
    %29 = vector.shape_cast %28 : vector<16x16x8xf32> to vector<256x8xf32>
    %30 = arith.truncf %29 : vector<256x8xf32> to vector<256x8xbf16>
    %c2_29 = arith.constant 2 : index
    %c0_30 = arith.constant 0 : index
    %c0_31 = arith.constant 0 : index
    %31 = vector.load %arg5[%c2_29, %c0_30, %c0_31] : memref<9x8x8xbf16, #tpu.memory_space<vmem>>, vector<1x8x8xbf16>
    %32 = vector.shape_cast %31 : vector<1x8x8xbf16> to vector<8x8xbf16>
    %cst_32 = arith.constant dense<0.000000e+00> : vector<256x8xf32>
    %33 = tpu.matmul %30, %32, %cst_32 {dimension_numbers = #tpu.dot_dimension_numbers<[1], [0], [0], [1], [0, 0, 1, 1], [], []>} : vector<256x8xbf16>, vector<8x8xbf16>, vector<256x8xf32> -> vector<256x8xf32>
    %34 = arith.addf %27, %33 : vector<256x8xf32>
    %c1_33 = arith.constant 1 : index
    %c0_34 = arith.constant 0 : index
    %c0_35 = arith.constant 0 : index
    %35 = vector.load %arg8[%c1_33, %c0_34, %c0_35] : memref<18x18x8xf32, #tpu.memory_space<vmem>>, vector<16x16x8xf32>
    %36 = vector.shape_cast %35 : vector<16x16x8xf32> to vector<256x8xf32>
    %37 = arith.truncf %36 : vector<256x8xf32> to vector<256x8xbf16>
    %c3 = arith.constant 3 : index
    %c0_36 = arith.constant 0 : index
    %c0_37 = arith.constant 0 : index
    %38 = vector.load %arg5[%c3, %c0_36, %c0_37] : memref<9x8x8xbf16, #tpu.memory_space<vmem>>, vector<1x8x8xbf16>
    %39 = vector.shape_cast %38 : vector<1x8x8xbf16> to vector<8x8xbf16>
    %cst_38 = arith.constant dense<0.000000e+00> : vector<256x8xf32>
    %40 = tpu.matmul %37, %39, %cst_38 {dimension_numbers = #tpu.dot_dimension_numbers<[1], [0], [0], [1], [0, 0, 1, 1], [], []>} : vector<256x8xbf16>, vector<8x8xbf16>, vector<256x8xf32> -> vector<256x8xf32>
    %41 = arith.addf %34, %40 : vector<256x8xf32>
    %c1_39 = arith.constant 1 : index
    %c1_40 = arith.constant 1 : index
    %c0_41 = arith.constant 0 : index
    %42 = vector.load %arg8[%c1_39, %c1_40, %c0_41] : memref<18x18x8xf32, #tpu.memory_space<vmem>>, vector<16x16x8xf32>
    %43 = vector.shape_cast %42 : vector<16x16x8xf32> to vector<256x8xf32>
    %44 = arith.truncf %43 : vector<256x8xf32> to vector<256x8xbf16>
    %c4 = arith.constant 4 : index
    %c0_42 = arith.constant 0 : index
    %c0_43 = arith.constant 0 : index
    %45 = vector.load %arg5[%c4, %c0_42, %c0_43] : memref<9x8x8xbf16, #tpu.memory_space<vmem>>, vector<1x8x8xbf16>
    %46 = vector.shape_cast %45 : vector<1x8x8xbf16> to vector<8x8xbf16>
    %cst_44 = arith.constant dense<0.000000e+00> : vector<256x8xf32>
    %47 = tpu.matmul %44, %46, %cst_44 {dimension_numbers = #tpu.dot_dimension_numbers<[1], [0], [0], [1], [0, 0, 1, 1], [], []>} : vector<256x8xbf16>, vector<8x8xbf16>, vector<256x8xf32> -> vector<256x8xf32>
    %48 = arith.addf %41, %47 : vector<256x8xf32>
    %c1_45 = arith.constant 1 : index
    %c2_46 = arith.constant 2 : index
    %c0_47 = arith.constant 0 : index
    %49 = vector.load %arg8[%c1_45, %c2_46, %c0_47] : memref<18x18x8xf32, #tpu.memory_space<vmem>>, vector<16x16x8xf32>
    %50 = vector.shape_cast %49 : vector<16x16x8xf32> to vector<256x8xf32>
    %51 = arith.truncf %50 : vector<256x8xf32> to vector<256x8xbf16>
    %c5 = arith.constant 5 : index
    %c0_48 = arith.constant 0 : index
    %c0_49 = arith.constant 0 : index
    %52 = vector.load %arg5[%c5, %c0_48, %c0_49] : memref<9x8x8xbf16, #tpu.memory_space<vmem>>, vector<1x8x8xbf16>
    %53 = vector.shape_cast %52 : vector<1x8x8xbf16> to vector<8x8xbf16>
    %cst_50 = arith.constant dense<0.000000e+00> : vector<256x8xf32>
    %54 = tpu.matmul %51, %53, %cst_50 {dimension_numbers = #tpu.dot_dimension_numbers<[1], [0], [0], [1], [0, 0, 1, 1], [], []>} : vector<256x8xbf16>, vector<8x8xbf16>, vector<256x8xf32> -> vector<256x8xf32>
    %55 = arith.addf %48, %54 : vector<256x8xf32>
    %c2_51 = arith.constant 2 : index
    %c0_52 = arith.constant 0 : index
    %c0_53 = arith.constant 0 : index
    %56 = vector.load %arg8[%c2_51, %c0_52, %c0_53] : memref<18x18x8xf32, #tpu.memory_space<vmem>>, vector<16x16x8xf32>
    %57 = vector.shape_cast %56 : vector<16x16x8xf32> to vector<256x8xf32>
    %58 = arith.truncf %57 : vector<256x8xf32> to vector<256x8xbf16>
    %c6 = arith.constant 6 : index
    %c0_54 = arith.constant 0 : index
    %c0_55 = arith.constant 0 : index
    %59 = vector.load %arg5[%c6, %c0_54, %c0_55] : memref<9x8x8xbf16, #tpu.memory_space<vmem>>, vector<1x8x8xbf16>
    %60 = vector.shape_cast %59 : vector<1x8x8xbf16> to vector<8x8xbf16>
    %cst_56 = arith.constant dense<0.000000e+00> : vector<256x8xf32>
    %61 = tpu.matmul %58, %60, %cst_56 {dimension_numbers = #tpu.dot_dimension_numbers<[1], [0], [0], [1], [0, 0, 1, 1], [], []>} : vector<256x8xbf16>, vector<8x8xbf16>, vector<256x8xf32> -> vector<256x8xf32>
    %62 = arith.addf %55, %61 : vector<256x8xf32>
    %c2_57 = arith.constant 2 : index
    %c1_58 = arith.constant 1 : index
    %c0_59 = arith.constant 0 : index
    %63 = vector.load %arg8[%c2_57, %c1_58, %c0_59] : memref<18x18x8xf32, #tpu.memory_space<vmem>>, vector<16x16x8xf32>
    %64 = vector.shape_cast %63 : vector<16x16x8xf32> to vector<256x8xf32>
    %65 = arith.truncf %64 : vector<256x8xf32> to vector<256x8xbf16>
    %c7 = arith.constant 7 : index
    %c0_60 = arith.constant 0 : index
    %c0_61 = arith.constant 0 : index
    %66 = vector.load %arg5[%c7, %c0_60, %c0_61] : memref<9x8x8xbf16, #tpu.memory_space<vmem>>, vector<1x8x8xbf16>
    %67 = vector.shape_cast %66 : vector<1x8x8xbf16> to vector<8x8xbf16>
    %cst_62 = arith.constant dense<0.000000e+00> : vector<256x8xf32>
    %68 = tpu.matmul %65, %67, %cst_62 {dimension_numbers = #tpu.dot_dimension_numbers<[1], [0], [0], [1], [0, 0, 1, 1], [], []>} : vector<256x8xbf16>, vector<8x8xbf16>, vector<256x8xf32> -> vector<256x8xf32>
    %69 = arith.addf %62, %68 : vector<256x8xf32>
    %c2_63 = arith.constant 2 : index
    %c2_64 = arith.constant 2 : index
    %c0_65 = arith.constant 0 : index
    %70 = vector.load %arg8[%c2_63, %c2_64, %c0_65] : memref<18x18x8xf32, #tpu.memory_space<vmem>>, vector<16x16x8xf32>
    %71 = vector.shape_cast %70 : vector<16x16x8xf32> to vector<256x8xf32>
    %72 = arith.truncf %71 : vector<256x8xf32> to vector<256x8xbf16>
    %c8 = arith.constant 8 : index
    %c0_66 = arith.constant 0 : index
    %c0_67 = arith.constant 0 : index
    %73 = vector.load %arg5[%c8, %c0_66, %c0_67] : memref<9x8x8xbf16, #tpu.memory_space<vmem>>, vector<1x8x8xbf16>
    %74 = vector.shape_cast %73 : vector<1x8x8xbf16> to vector<8x8xbf16>
    %cst_68 = arith.constant dense<0.000000e+00> : vector<256x8xf32>
    %75 = tpu.matmul %72, %74, %cst_68 {dimension_numbers = #tpu.dot_dimension_numbers<[1], [0], [0], [1], [0, 0, 1, 1], [], []>} : vector<256x8xbf16>, vector<8x8xbf16>, vector<256x8xf32> -> vector<256x8xf32>
    %76 = arith.addf %69, %75 : vector<256x8xf32>
    %cst_69 = arith.constant 0.000000e+00 : f32
    %77 = vector.broadcast %cst_69 : f32 to vector<256x8xf32>
    %78 = arith.maximumf %76, %77 : vector<256x8xf32>
    %79 = vector.shape_cast %78 : vector<256x8xf32> to vector<16x16x8xf32>
    %c0_70 = arith.constant 0 : index
    %c0_71 = arith.constant 0 : index
    %c0_72 = arith.constant 0 : index
    %c0_73 = arith.constant 0 : index
    %80 = vector.load %arg7[%c0_70, %c0_71, %c0_72, %c0_73] : memref<1x16x16x8xf32, #tpu.memory_space<vmem>>, vector<1x16x16x8xf32>
    %81 = vector.shape_cast %80 : vector<1x16x16x8xf32> to vector<16x16x8xf32>
    %82 = vector.shape_cast %79 : vector<16x16x8xf32> to vector<1x16x16x8xf32>
    tpu.vector_store %arg7[%c0_70, %c0_71, %c0_72, %c0_73], %82 {strides = array<i32>} : memref<1x16x16x8xf32, #tpu.memory_space<vmem>>, vector<1x16x16x8xf32>,
    return
  }
  func.func @transform_0(%arg0: i32, %arg1: i32) -> (i32, i32, i32, i32) {
    %c0_i32 = arith.constant 0 : i32
    %c0_i32_0 = arith.constant 0 : i32
    %c0_i32_1 = arith.constant 0 : i32
    return %arg0, %arg1, %c0_i32, %c0_i32_0 : i32, i32, i32, i32
  }
  func.func @transform_1(%arg0: i32, %arg1: i32) -> (i32, i32, i32, i32) {
    %c16_i32 = arith.constant 16 : i32
    %0 = arith.muli %arg1, %c16_i32 : i32
    %c1_i32 = arith.constant 1 : i32
    %1 = arith.subi %0, %c1_i32 : i32
    %c0_i32 = arith.constant 0 : i32
    %2 = arith.maxsi %1, %c0_i32 : i32
    %c0_i32_0 = arith.constant 0 : i32
    %c0_i32_1 = arith.constant 0 : i32
    %c0_i32_2 = arith.constant 0 : i32
    return %arg0, %2, %c0_i32_0, %c0_i32_1 : i32, i32, i32, i32
  }
  func.func @transform_2(%arg0: i32, %arg1: i32) -> (i32, i32, i32, i32) {
    %c1_i32 = arith.constant 1 : i32
    %0 = arith.addi %arg1, %c1_i32 : i32
    %c16_i32 = arith.constant 16 : i32
    %1 = arith.muli %0, %c16_i32 : i32
    %c15_i32 = arith.constant 15 : i32
    %2 = arith.minsi %1, %c15_i32 : i32
    %c0_i32 = arith.constant 0 : i32
    %c0_i32_0 = arith.constant 0 : i32
    %c0_i32_1 = arith.constant 0 : i32
    return %arg0, %2, %c0_i32, %c0_i32_0 : i32, i32, i32, i32
  }
  func.func @transform_3(%arg0: i32, %arg1: i32) -> (i32, i32, i32) {
    %c0_i32 = arith.constant 0 : i32
    %c0_i32_0 = arith.constant 0 : i32
    %c0_i32_1 = arith.constant 0 : i32
    %c0_i32_2 = arith.constant 0 : i32
    return %c0_i32, %c0_i32_0, %c0_i32_1 : i32, i32, i32
  }
  func.func @transform_4(%arg0: i32, %arg1: i32) -> (i32, i32) {
    %c0_i32 = arith.constant 0 : i32
    %c0_i32_0 = arith.constant 0 : i32
    %c0_i32_1 = arith.constant 0 : i32
    return %c0_i32, %c0_i32_0 : i32, i32
  }
  func.func @transform_5(%arg0: i32, %arg1: i32) -> (i32, i32, i32, i32) {
    %c0_i32 = arith.constant 0 : i32
    %c0_i32_0 = arith.constant 0 : i32
    %c0_i32_1 = arith.constant 0 : i32
    return %arg0, %arg1, %c0_i32, %c0_i32_0 : i32, i32, i32, i32
  }
}

</mosaic_0001>

<llo_original>
// kernel: conv_block_forward.3
$region0: #{conv_block_forward.3}
  #allocation0 [shape = 'u32[]', space=smem, size = 0x4, offset = 0x4, fixed_abs, tag = 'smem constant byte address 0x4 - core index']
  #allocation1 [shape = 'u32[144,128]{1,0:T(1,128)}', space=vmem, size = 0x12000, scoped, tag = 'internal scratch']
  #allocation2 [shape = 'f32[18,18,8]{2,1,0:T(8,128)}', space=vmem, size = 0x36000, scoped, tag = 'scratch operand']
  %s0 = inlined_call_operand.vmem [shape: f32[2,16,16,8], index: 0, kind: input, shape index: {}, may-alias: {0,1,2}]
  %s1 = inlined_call_operand.vmem [shape: f32[2,16,16,8], index: 1, kind: input, shape index: {}, may-alias: {0,1,2}]
  %s2 = inlined_call_operand.vmem [shape: f32[2,16,16,8], index: 2, kind: input, shape index: {}, may-alias: {0,1,2}]
  %s3 = inlined_call_operand.vmem [shape: bf16[9,8,8], index: 3, kind: input, shape index: {}]
  %s4 = inlined_call_operand.vmem [shape: f32[1,8], index: 4, kind: input, shape index: {}]
  %s5 = inlined_call_operand.vmem [shape: f32[2,16,16,8], index: 5, kind: output, shape index: {}]
  %s6 = sld [smem:[#allocation0]]
  $region61: #{conv_block_forward.3} parent=0
    _
  %s8 = ssub.s32 1, %s6
  %s9 = scalar_select 0, %s8, %s6
  loop: start=0, step=1, limit=4
  $region2: #{conv_block_forward.3} parent=0 // loop_pre_header
    _
  $region3: #{conv_block_forward.3} parent=0 // loop_header
    %s11 = sphi 0, %s15
    %p12 = scmp.ge.s32.totalorder %s11, 4
    %s18 = sphi 0, %s30
    %s19 = sphi 0, %s26
    %s20 = sphi 0, %s18
    %s21 = sphi 0, %s19
    %s22 = sphi 0, %s20
    %s23 = sphi 0, %s21
    %s35 = sphi 0, %s37
    %s38 = sphi 0, %s35
    %s39 = sphi 0, %s38
    %s55 = sphi 0, %s39
    %s71 = sphi 0, %s73
    %s74 = sphi 0, %s71
    %s75 = sphi 0, %s74
    %s91 = sphi 0, %s75
    %s107 = sphi 0, %s109
    %s110 = sphi 0, %s107
    %s111 = sphi 0, %s110
    %s127 = sphi 0, %s111
    %s131 = sphi 0, %s131
    %s133 = sphi 0, %s131
    %s134 = sphi 0, %s133
    %s148 = sphi 0, %s134
    %s152 = sphi 0, %s152
    %s154 = sphi 0, %s152
    %s155 = sphi 0, %s154
    %s169 = sphi 0, %s155
    %s177 = sphi 0, %s179
    %s180 = sphi 0, %s177
    %s181 = sphi 0, %s180
    %s197 = sphi 0, %s181
  $region4: #{conv_block_forward.3} parent=0 // loop_header_branch
    %14 = sbr.rel (%p12) target = $region8
  $region5: #{conv_block_forward.3} parent=0 // loop_body
    %s16 = ssub.s32 %s11, 1
    %s17 = ssub.s32 %s11, 2
    %s24 = sadd.s32 1, %s19
    %p25 = scmp.ge.s32.totalorder %s24, 1
    %s26 = scalar_select %p25, 0, %s24
    %s27 = sadd.s32 1, %s18
    %s28 = scalar_select %p25, %s27, %s18
    %p29 = scmp.ge.s32.totalorder %s28, 2
    %s30 = scalar_select %p29, 0, %s28
    %s31 = ssub.s32 %s18, %s30
    %s32 = ssub.s32 %s19, %s26
    %s33 = sor.u32 %s31, %s32
    %p34 = scmp.eq.s32.totalorder %s33, 0
    %s36 = sadd.s32 %s35, 1
    %s37 = scalar_select %p34, %s35, %s36
    %p40 = pneg %p34
    %p41 = scmp.eq.s32.totalorder %s11, 1
    %p42 = por %p40, %p41
    %p43 = scmp.ne.s32.totalorder %s35, %s38
    %p44 = scmp.eq.s32.totalorder %s11, 0
    %p45 = por %p43, %p44
    %p46 = scmp.ne.s32.totalorder %s35, %s38
    %p47 = scmp.eq.s32.totalorder %s16, 1
    %p48 = por %p46, %p47
    %p49 = scmp.ne.s32.totalorder %s38, %s39
    %p50 = scmp.eq.s32.totalorder %s16, 0
    %p51 = por %p49, %p50
    %p52 = scmp.ne.s32.totalorder %s38, %s39
    %p53 = scmp.eq.s32.totalorder %s17, 1
    %p54 = por %p52, %p53
    %p56 = scmp.ne.s32.totalorder %s39, %s55
    %p57 = scmp.eq.s32.totalorder %s17, 0
    %p58 = por %p56, %p57
    %s59 = smul.u32 %s19, 16
    %s60 = ssub.s32 %s59, 1
    %p61 = scmp.gt.s32.totalorder %s60, 0
    %s62 = scalar_select %p61, %s60, 0
    %s63 = smul.u32 %s26, 16
    %s64 = ssub.s32 %s63, 1
    %p65 = scmp.gt.s32.totalorder %s64, 0
    %s66 = scalar_select %p65, %s64, 0
    %s67 = ssub.s32 %s18, %s30
    %s68 = ssub.s32 %s62, %s66
    %s69 = sor.u32 %s67, %s68
    %p70 = scmp.eq.s32.totalorder %s69, 0
    %s72 = sadd.s32 %s71, 1
    %s73 = scalar_select %p70, %s71, %s72
    %p76 = pneg %p70
    %p77 = scmp.eq.s32.totalorder %s11, 1
    %p78 = por %p76, %p77
    %p79 = scmp.ne.s32.totalorder %s71, %s74
    %p80 = scmp.eq.s32.totalorder %s11, 0
    %p81 = por %p79, %p80
    %p82 = scmp.ne.s32.totalorder %s71, %s74
    %p83 = scmp.eq.s32.totalorder %s16, 1
    %p84 = por %p82, %p83
    %p85 = scmp.ne.s32.totalorder %s74, %s75
    %p86 = scmp.eq.s32.totalorder %s16, 0
    %p87 = por %p85, %p86
    %p88 = scmp.ne.s32.totalorder %s74, %s75
    %p89 = scmp.eq.s32.totalorder %s17, 1
    %p90 = por %p88, %p89
    %p92 = scmp.ne.s32.totalorder %s75, %s91
    %p93 = scmp.eq.s32.totalorder %s17, 0
    %p94 = por %p92, %p93
    %s95 = sadd.s32 %s19, 1
    %s96 = smul.u32 %s95, 16
    %p97 = scmp.lt.s32.totalorder %s96, 15
    %s98 = scalar_select %p97, %s96, 15
    %s99 = sadd.s32 %s26, 1
    %s100 = smul.u32 %s99, 16
    %p101 = scmp.lt.s32.totalorder %s100, 15
    %s102 = scalar_select %p101, %s100, 15
    %s103 = ssub.s32 %s18, %s30
    %s104 = ssub.s32 %s98, %s102
    %s105 = sor.u32 %s103, %s104
    %p106 = scmp.eq.s32.totalorder %s105, 0
    %s108 = sadd.s32 %s107, 1
    %s109 = scalar_select %p106, %s107, %s108
    %p112 = pneg %p106
    %p113 = scmp.eq.s32.totalorder %s11, 1
    %p114 = por %p112, %p113
    %p115 = scmp.ne.s32.totalorder %s107, %s110
    %p116 = scmp.eq.s32.totalorder %s11, 0
    %p117 = por %p115, %p116
    %p118 = scmp.ne.s32.totalorder %s107, %s110
    %p119 = scmp.eq.s32.totalorder %s16, 1
    %p120 = por %p118, %p119
    %p121 = scmp.ne.s32.totalorder %s110, %s111
    %p122 = scmp.eq.s32.totalorder %s16, 0
    %p123 = por %p121, %p122
    %p124 = scmp.ne.s32.totalorder %s110, %s111
    %p125 = scmp.eq.s32.totalorder %s17, 1
    %p126 = por %p124, %p125
    %p128 = scmp.ne.s32.totalorder %s111, %s127
    %p129 = scmp.eq.s32.totalorder %s17, 0
    %p130 = por %p128, %p129
    %s132 = sadd.s32 %s131, 1
    %p135 = scmp.eq.s32.totalorder %s11, 1
    %p136 = scmp.ne.s32.totalorder %s131, %s133
    %p137 = scmp.eq.s32.totalorder %s11, 0
    %p138 = por %p136, %p137
    %p139 = scmp.ne.s32.totalorder %s131, %s133
    %p140 = scmp.eq.s32.totalorder %s16, 1
    %p141 = por %p139, %p140
    %p142 = scmp.ne.s32.totalorder %s133, %s134
    %p143 = scmp.eq.s32.totalorder %s16, 0
    %p144 = por %p142, %p143
    %p145 = scmp.ne.s32.totalorder %s133, %s134
    %p146 = scmp.eq.s32.totalorder %s17, 1
    %p147 = por %p145, %p146
    %p149 = scmp.ne.s32.totalorder %s134, %s148
    %p150 = scmp.eq.s32.totalorder %s17, 0
    %p151 = por %p149, %p150
    %s153 = sadd.s32 %s152, 1
    %p156 = scmp.eq.s32.totalorder %s11, 1
    %p157 = scmp.ne.s32.totalorder %s152, %s154
    %p158 = scmp.eq.s32.totalorder %s11, 0
    %p159 = por %p157, %p158
    %p160 = scmp.ne.s32.totalorder %s152, %s154
    %p161 = scmp.eq.s32.totalorder %s16, 1
    %p162 = por %p160, %p161
    %p163 = scmp.ne.s32.totalorder %s154, %s155
    %p164 = scmp.eq.s32.totalorder %s16, 0
    %p165 = por %p163, %p164
    %p166 = scmp.ne.s32.totalorder %s154, %s155
    %p167 = scmp.eq.s32.totalorder %s17, 1
    %p168 = por %p166, %p167
    %p170 = scmp.ne.s32.totalorder %s155, %s169
    %p171 = scmp.eq.s32.totalorder %s17, 0
    %p172 = por %p170, %p171
    %s173 = ssub.s32 %s18, %s30
    %s174 = ssub.s32 %s19, %s26
    %s175 = sor.u32 %s173, %s174
    %p176 = scmp.eq.s32.totalorder %s175, 0
    %s178 = sadd.s32 %s177, 1
    %s179 = scalar_select %p176, %s177, %s178
    %p182 = pneg %p176
    %p183 = scmp.eq.s32.totalorder %s11, 1
    %p184 = por %p182, %p183
    %p185 = scmp.ne.s32.totalorder %s177, %s180
    %p186 = scmp.eq.s32.totalorder %s11, 0
    %p187 = por %p185, %p186
    %p188 = scmp.ne.s32.totalorder %s177, %s180
    %p189 = scmp.eq.s32.totalorder %s16, 1
    %p190 = por %p188, %p189
    %p191 = scmp.ne.s32.totalorder %s180, %s181
    %p192 = scmp.eq.s32.totalorder %s16, 0
    %p193 = por %p191, %p192
    %p194 = scmp.ne.s32.totalorder %s180, %s181
    %p195 = scmp.eq.s32.totalorder %s17, 1
    %p196 = por %p194, %p195
    %p198 = scmp.ne.s32.totalorder %s181, %s197
    %p199 = scmp.eq.s32.totalorder %s17, 0
    %p200 = por %p198, %p199
    %p201 = scmp.le.s32.totalorder 1, %s11
    %p202 = scmp.lt.s32.totalorder %s11, 3
    %p203 = pnand %p201, %p202
    %p204 = pneg %p203
    // Predicated region
    $region9: #{conv_block_forward.3} parent=5 // pred_check
      _
    $region10: #{conv_block_forward.3} parent=5 // pred_check_branch
      %206 = sbr.rel (%p203) target = $region12
    $region11: #{conv_block_forward.3} parent=5 // pred_region
      %s207 = ssub.s32 %s11, 1
      // Predicated region
      $region13: #{conv_block_forward.3} parent=11 // pred_check
        %p208 = pneg %p144
      $region14: #{conv_block_forward.3} parent=11 // pred_check_branch
        %210 = sbr.rel (%p208) target = $region16
      $region15: #{conv_block_forward.3} parent=11 // pred_region
        _
      $region16: #{conv_block_forward.3} parent=11 // pred_fallthru
        _
      // Predicated region
      $region17: #{conv_block_forward.3} parent=11 // pred_check
        %p211 = pneg %p165
      $region18: #{conv_block_forward.3} parent=11 // pred_check_branch
        %213 = sbr.rel (%p211) target = $region20
      $region19: #{conv_block_forward.3} parent=11 // pred_region
        _
      $region20: #{conv_block_forward.3} parent=11 // pred_fallthru
        _
    $region12: #{conv_block_forward.3} parent=5 // pred_fallthru
      _
    %p214 = scmp.lt.s32.totalorder %s11, 2
    // Predicated region
    $region21: #{conv_block_forward.3} parent=5 // pred_check
      %p215 = pneg %p214
    $region22: #{conv_block_forward.3} parent=5 // pred_check_branch
      %217 = sbr.rel (%p215) target = $region24
    $region23: #{conv_block_forward.3} parent=5 // pred_region
      // Predicated region
      $region25: #{conv_block_forward.3} parent=23 // pred_check
        %p218 = pneg %p45
      $region26: #{conv_block_forward.3} parent=23 // pred_check_branch
        %220 = sbr.rel (%p218) target = $region28
      $region27: #{conv_block_forward.3} parent=23 // pred_region
        %s221 = smul.u32 16, %s19
        %p222 = scmp.lt.s32.totalorder %s18, 1
        %s223 = scalar_select %p222, %s18, 1
        %p224 = scmp.lt.s32.totalorder %s221, 15
        %s225 = scalar_select %p224, %s221, 15
        %s226 = smul.addr %s225, 2
        %s227 = smul.addr %s223, 32
        %s228 = sadd.s32 %s226, %s227
        %s229 = smul.addr %s228, 8
        %s230 = scalar_lea.vmem %s0, %s229
        %s231 = smul.u32 16, %s19
      $region28: #{conv_block_forward.3} parent=23 // pred_fallthru
        _
      // Predicated region
      $region29: #{conv_block_forward.3} parent=23 // pred_check
        %p232 = pneg %p81
      $region30: #{conv_block_forward.3} parent=23 // pred_check_branch
        %234 = sbr.rel (%p232) target = $region32
      $region31: #{conv_block_forward.3} parent=23 // pred_region
        %s235 = smul.u32 %s19, 16
        %s236 = ssub.s32 %s235, 1
        %p237 = scmp.gt.s32.totalorder %s236, 0
        %s238 = scalar_select %p237, %s236, 0
        %p239 = scmp.lt.s32.totalorder %s18, 1
        %s240 = scalar_select %p239, %s18, 1
        %p241 = scmp.lt.s32.totalorder %s238, 15
        %s242 = scalar_select %p241, %s238, 15
        %s243 = smul.addr %s242, 2
        %s244 = smul.addr %s240, 32
        %s245 = sadd.s32 %s243, %s244
        %s246 = smul.addr %s245, 8
        %s247 = scalar_lea.vmem %s1, %s246
        %s248 = smul.u32 %s19, 16
        %s249 = ssub.s32 %s248, 1
        %p250 = scmp.gt.s32.totalorder %s249, 0
        %s251 = scalar_select %p250, %s249, 0
      $region32: #{conv_block_forward.3} parent=23 // pred_fallthru
        _
      // Predicated region
      $region33: #{conv_block_forward.3} parent=23 // pred_check
        %p252 = pneg %p117
      $region34: #{conv_block_forward.3} parent=23 // pred_check_branch
        %254 = sbr.rel (%p252) target = $region36
      $region35: #{conv_block_forward.3} parent=23 // pred_region
        %s255 = sadd.s32 %s19, 1
        %s256 = smul.u32 %s255, 16
        %p257 = scmp.lt.s32.totalorder %s256, 15
        %s258 = scalar_select %p257, %s256, 15
        %p259 = scmp.lt.s32.totalorder %s18, 1
        %s260 = scalar_select %p259, %s18, 1
        %p261 = scmp.lt.s32.totalorder %s258, 15
        %s262 = scalar_select %p261, %s258, 15
        %s263 = smul.addr %s262, 2
        %s264 = smul.addr %s260, 32
        %s265 = sadd.s32 %s263, %s264
        %s266 = smul.addr %s265, 8
        %s267 = scalar_lea.vmem %s2, %s266
        %s268 = sadd.s32 %s19, 1
        %s269 = smul.u32 %s268, 16
        %p270 = scmp.lt.s32.totalorder %s269, 15
        %s271 = scalar_select %p270, %s269, 15
      $region36: #{conv_block_forward.3} parent=23 // pred_fallthru
        _
    $region24: #{conv_block_forward.3} parent=5 // pred_fallthru
      _
    %p272 = scmp.le.s32.totalorder 1, %s11
    %p273 = scmp.lt.s32.totalorder %s11, 3
    %p274 = pnand %p272, %p273
    %p275 = pneg %p274
    // Predicated region
    $region37: #{conv_block_forward.3} parent=5 // pred_check
      _
    $region38: #{conv_block_forward.3} parent=5 // pred_check_branch
      %277 = sbr.rel (%p274) target = $region40
    $region39: #{conv_block_forward.3} parent=5 // pred_region
      %s278 = ssub.s32 %s11, 1
      %s279 = smul.u32 16, %s21
      %p280 = scmp.lt.s32.totalorder %s20, 1
      %s281 = scalar_select %p280, %s20, 1
      %p282 = scmp.lt.s32.totalorder %s279, 15
      %s283 = scalar_select %p282, %s279, 15
      %s284 = smul.addr %s283, 2
      %s285 = smul.addr %s281, 32
      %s286 = sadd.s32 %s284, %s285
      %s287 = smul.addr %s286, 8
      %s288 = scalar_lea.vmem %s0, %s287
      %p289 = pneg %p51
      %p290 = pneg %p48
      %s291 = smul.u32 %s21, 16
      %s292 = ssub.s32 %s291, 1
      %p293 = scmp.gt.s32.totalorder %s292, 0
      %s294 = scalar_select %p293, %s292, 0
      %p295 = scmp.lt.s32.totalorder %s20, 1
      %s296 = scalar_select %p295, %s20, 1
      %p297 = scmp.lt.s32.totalorder %s294, 15
      %s298 = scalar_select %p297, %s294, 15
      %s299 = smul.addr %s298, 2
      %s300 = smul.addr %s296, 32
      %s301 = sadd.s32 %s299, %s300
      %s302 = smul.addr %s301, 8
      %s303 = scalar_lea.vmem %s1, %s302
      %p304 = pneg %p87
      %p305 = pneg %p84
      %s306 = sadd.s32 %s21, 1
      %s307 = smul.u32 %s306, 16
      %p308 = scmp.lt.s32.totalorder %s307, 15
      %s309 = scalar_select %p308, %s307, 15
      %p310 = scmp.lt.s32.totalorder %s20, 1
      %s311 = scalar_select %p310, %s20, 1
      %p312 = scmp.lt.s32.totalorder %s309, 15
      %s313 = scalar_select %p312, %s309, 15
      %s314 = smul.addr %s313, 2
      %s315 = smul.addr %s311, 32
      %s316 = sadd.s32 %s314, %s315
      %s317 = smul.addr %s316, 8
      %s318 = scalar_lea.vmem %s2, %s317
      %p319 = pneg %p123
      %p320 = pneg %p120
      %p321 = pneg %p144
      %p322 = pneg %p141
      %p323 = pneg %p165
      %p324 = pneg %p162
      %p325 = pneg %p193
      %p326 = pneg %p190
      %s327 = smul.u32 16, %s21
      %p328 = scmp.lt.s32.totalorder %s20, 1
      %s329 = scalar_select %p328, %s20, 1
      %p330 = scmp.lt.s32.totalorder %s327, 15
      %s331 = scalar_select %p330, %s327, 15
      %s332 = smul.addr %s331, 2
      %s333 = smul.addr %s329, 32
      %s334 = sadd.s32 %s332, %s333
      %s335 = smul.addr %s334, 8
      %s336 = scalar_lea.vmem %s5, %s335
      %s337 = smul.u32 16, %s21
      %p338 = scmp.lt.s32.totalorder %s20, 1
      %s339 = scalar_select %p338, %s20, 1
      %p340 = scmp.lt.s32.totalorder %s337, 15
      %s341 = scalar_select %p340, %s337, 15
      %s342 = smul.addr %s341, 2
      %s343 = smul.addr %s339, 32
      %s344 = sadd.s32 %s342, %s343
      %s345 = smul.addr %s344, 8
      %s346 = scalar_lea.vmem %s0, %s345
      %s347 = smul.u32 16, %s21
      %s348 = smul.u32 %s21, 16
      %s349 = ssub.s32 %s348, 1
      %p350 = scmp.gt.s32.totalorder %s349, 0
      %s351 = scalar_select %p350, %s349, 0
      %p352 = scmp.lt.s32.totalorder %s20, 1
      %s353 = scalar_select %p352, %s20, 1
      %p354 = scmp.lt.s32.totalorder %s351, 15
      %s355 = scalar_select %p354, %s351, 15
      %s356 = smul.addr %s355, 2
      %s357 = smul.addr %s353, 32
      %s358 = sadd.s32 %s356, %s357
      %s359 = smul.addr %s358, 8
      %s360 = scalar_lea.vmem %s1, %s359
      %s361 = smul.u32 %s21, 16
      %s362 = ssub.s32 %s361, 1
      %p363 = scmp.gt.s32.totalorder %s362, 0
      %s364 = scalar_select %p363, %s362, 0
      %s365 = sadd.s32 %s21, 1
      %s366 = smul.u32 %s365, 16
      %p367 = scmp.lt.s32.totalorder %s366, 15
      %s368 = scalar_select %p367, %s366, 15
      %p369 = scmp.lt.s32.totalorder %s20, 1
      %s370 = scalar_select %p369, %s20, 1
      %p371 = scmp.lt.s32.totalorder %s368, 15
      %s372 = scalar_select %p371, %s368, 15
      %s373 = smul.addr %s372, 2
      %s374 = smul.addr %s370, 32
      %s375 = sadd.s32 %s373, %s374
      %s376 = smul.addr %s375, 8
      %s377 = scalar_lea.vmem %s2, %s376
      %s378 = sadd.s32 %s21, 1
      %s379 = smul.u32 %s378, 16
      %p380 = scmp.lt.s32.totalorder %s379, 15
      %s381 = scalar_select %p380, %s379, 15
      %s382 = smul.u32 16, %s21
      %p383 = scmp.lt.s32.totalorder %s20, 1
      %s384 = scalar_select %p383, %s20, 1
      %p385 = scmp.lt.s32.totalorder %s382, 15
      %s386 = scalar_select %p385, %s382, 15
      %s387 = smul.addr %s386, 2
      %s388 = smul.addr %s384, 32
      %s389 = sadd.s32 %s387, %s388
      %s390 = smul.addr %s389, 8
      %s391 = scalar_lea.vmem %s5, %s390
      %s392 = smul.u32 16, %s21
      %vm394 = vcmask 64512
      %395 = vst.msk [vmem:[#allocation2] sm:$0xff] %vm394, 0.0
      %396 = vst.msk [vmem:[#allocation2 + $0x8] sm:$0xff] %vm394, 0.0
      %vm397 = vcmask 58368
      %398 = vst.msk [vmem:[#allocation2 + $0x10] sm:$0x3] %vm397, 0.0
      %399 = vst.msk [vmem:[#allocation2 + $0x18] sm:$0xff] %vm394, 0.0
      %400 = vst.msk [vmem:[#allocation2 + $0x20] sm:$0xff] %vm394, 0.0
      %401 = vst.msk [vmem:[#allocation2 + $0x28] sm:$0x3] %vm397, 0.0
      %402 = vst.msk [vmem:[#allocation2 + $0x30] sm:$0xff] %vm394, 0.0
      %403 = vst.msk [vmem:[#allocation2 + $0x38] sm:$0xff] %vm394, 0.0
      %404 = vst.msk [vmem:[#allocation2 + $0x40] sm:$0x3] %vm397, 0.0
      %405 = vst.msk [vmem:[#allocation2 + $0x48] sm:$0xff] %vm394, 0.0
      %406 = vst.msk [vmem:[#allocation2 + $0x50] sm:$0xff] %vm394, 0.0
      %407 = vst.msk [vmem:[#allocation2 + $0x58] sm:$0x3] %vm397, 0.0
      %408 = vst.msk [vmem:[#allocation2 + $0x60] sm:$0xff] %vm394, 0.0
      %409 = vst.msk [vmem:[#allocation2 + $0x68] sm:$0xff] %vm394, 0.0
      %410 = vst.msk [vmem:[#allocation2 + $0x70] sm:$0x3] %vm397, 0.0
      %411 = vst.msk [vmem:[#allocation2 + $0x78] sm:$0xff] %vm394, 0.0
      %412 = vst.msk [vmem:[#allocation2 + $0x80] sm:$0xff] %vm394, 0.0
      %413 = vst.msk [vmem:[#allocation2 + $0x88] sm:$0x3] %vm397, 0.0
      %414 = vst.msk [vmem:[#allocation2 + $0x90] sm:$0xff] %vm394, 0.0
      %415 = vst.msk [vmem:[#allocation2 + $0x98] sm:$0xff] %vm394, 0.0
      %416 = vst.msk [vmem:[#allocation2 + $0xa0] sm:$0x3] %vm397, 0.0
      %417 = vst.msk [vmem:[#allocation2 + $0xa8] sm:$0xff] %vm394, 0.0
      %418 = vst.msk [vmem:[#allocation2 + $0xb0] sm:$0xff] %vm394, 0.0
      %419 = vst.msk [vmem:[#allocation2 + $0xb8] sm:$0x3] %vm397, 0.0
      %420 = vst.msk [vmem:[#allocation2 + $0xc0] sm:$0xff] %vm394, 0.0
      %421 = vst.msk [vmem:[#allocation2 + $0xc8] sm:$0xff] %vm394, 0.0
      %422 = vst.msk [vmem:[#allocation2 + $0xd0] sm:$0x3] %vm397, 0.0
      %423 = vst.msk [vmem:[#allocation2 + $0xd8] sm:$0xff] %vm394, 0.0
      %424 = vst.msk [vmem:[#allocation2 + $0xe0] sm:$0xff] %vm394, 0.0
      %425 = vst.msk [vmem:[#allocation2 + $0xe8] sm:$0x3] %vm397, 0.0
      %426 = vst.msk [vmem:[#allocation2 + $0xf0] sm:$0xff] %vm394, 0.0
      %427 = vst.msk [vmem:[#allocation2 + $0xf8] sm:$0xff] %vm394, 0.0
      %428 = vst.msk [vmem:[#allocation2 + $0x100] sm:$0x3] %vm397, 0.0
      %429 = vst.msk [vmem:[#allocation2 + $0x108] sm:$0xff] %vm394, 0.0
      %430 = vst.msk [vmem:[#allocation2 + $0x110] sm:$0xff] %vm394, 0.0
      %431 = vst.msk [vmem:[#allocation2 + $0x118] sm:$0x3] %vm397, 0.0
      %432 = vst.msk [vmem:[#allocation2 + $0x120] sm:$0xff] %vm394, 0.0
      %433 = vst.msk [vmem:[#allocation2 + $0x128] sm:$0xff] %vm394, 0.0
      %434 = vst.msk [vmem:[#allocation2 + $0x130] sm:$0x3] %vm397, 0.0
      %435 = vst.msk [vmem:[#allocation2 + $0x138] sm:$0xff] %vm394, 0.0
      %436 = vst.msk [vmem:[#allocation2 + $0x140] sm:$0xff] %vm394, 0.0
      %437 = vst.msk [vmem:[#allocation2 + $0x148] sm:$0x3] %vm397, 0.0
      %438 = vst.msk [vmem:[#allocation2 + $0x150] sm:$0xff] %vm394, 0.0
      %439 = vst.msk [vmem:[#allocation2 + $0x158] sm:$0xff] %vm394, 0.0
      %440 = vst.msk [vmem:[#allocation2 + $0x160] sm:$0x3] %vm397, 0.0
      %441 = vst.msk [vmem:[#allocation2 + $0x168] sm:$0xff] %vm394, 0.0
      %442 = vst.msk [vmem:[#allocation2 + $0x170] sm:$0xff] %vm394, 0.0
      %443 = vst.msk [vmem:[#allocation2 + $0x178] sm:$0x3] %vm397, 0.0
      %444 = vst.msk [vmem:[#allocation2 + $0x180] sm:$0xff] %vm394, 0.0
      %445 = vst.msk [vmem:[#allocation2 + $0x188] sm:$0xff] %vm394, 0.0
      %446 = vst.msk [vmem:[#allocation2 + $0x190] sm:$0x3] %vm397, 0.0
      %447 = vst.msk [vmem:[#allocation2 + $0x198] sm:$0xff] %vm394, 0.0
      %448 = vst.msk [vmem:[#allocation2 + $0x1a0] sm:$0xff] %vm394, 0.0
      %449 = vst.msk [vmem:[#allocation2 + $0x1a8] sm:$0x3] %vm397, 0.0
      %v450 = vld [vmem:[%s346] sm:$0xff]
      %v451 = vld [vmem:[%s346 + $0x8] sm:$0xff]
      %v452 = vld [vmem:[%s346 + $0x10] sm:$0xff]
      %v453 = vld [vmem:[%s346 + $0x18] sm:$0xff]
      %v454 = vld [vmem:[%s346 + $0x20] sm:$0xff]
      %v455 = vld [vmem:[%s346 + $0x28] sm:$0xff]
      %v456 = vld [vmem:[%s346 + $0x30] sm:$0xff]
      %v457 = vld [vmem:[%s346 + $0x38] sm:$0xff]
      %v458 = vld [vmem:[%s346 + $0x40] sm:$0xff]
      %v459 = vld [vmem:[%s346 + $0x48] sm:$0xff]
      %v460 = vld [vmem:[%s346 + $0x50] sm:$0xff]
      %v461 = vld [vmem:[%s346 + $0x58] sm:$0xff]
      %v462 = vld [vmem:[%s346 + $0x60] sm:$0xff]
      %v463 = vld [vmem:[%s346 + $0x68] sm:$0xff]
      %v464 = vld [vmem:[%s346 + $0x70] sm:$0xff]
      %v465 = vld [vmem:[%s346 + $0x78] sm:$0xff]
      %v466 = vld [vmem:[%s346 + $0x80] sm:$0xff]
      %v467 = vld [vmem:[%s346 + $0x88] sm:$0xff]
      %v468 = vld [vmem:[%s346 + $0x90] sm:$0xff]
      %v469 = vld [vmem:[%s346 + $0x98] sm:$0xff]
      %v470 = vld [vmem:[%s346 + $0xa0] sm:$0xff]
      %v471 = vld [vmem:[%s346 + $0xa8] sm:$0xff]
      %v472 = vld [vmem:[%s346 + $0xb0] sm:$0xff]
      %v473 = vld [vmem:[%s346 + $0xb8] sm:$0xff]
      %v474 = vld [vmem:[%s346 + $0xc0] sm:$0xff]
      %v475 = vld [vmem:[%s346 + $0xc8] sm:$0xff]
      %v476 = vld [vmem:[%s346 + $0xd0] sm:$0xff]
      %v477 = vld [vmem:[%s346 + $0xd8] sm:$0xff]
      %v478 = vld [vmem:[%s346 + $0xe0] sm:$0xff]
      %v479 = vld [vmem:[%s346 + $0xe8] sm:$0xff]
      %v480 = vld [vmem:[%s346 + $0xf0] sm:$0xff]
      %v481 = vld [vmem:[%s346 + $0xf8] sm:$0xff]
      %s482 = scalar_lea.vmem [#allocation2], 24
      %483 = vst.msk [vmem:[%s482 + $0x1] sm:$0xff] %vm394, %v450
      %484 = vst.msk [vmem:[%s482 + $0x9] sm:$0xff] %vm394, %v451
      %485 = vst.msk [vmem:[%s482 + $0x19] sm:$0xff] %vm394, %v452
      %486 = vst.msk [vmem:[%s482 + $0x21] sm:$0xff] %vm394, %v453
      %487 = vst.msk [vmem:[%s482 + $0x31] sm:$0xff] %vm394, %v454
      %488 = vst.msk [vmem:[%s482 + $0x39] sm:$0xff] %vm394, %v455
      %489 = vst.msk [vmem:[%s482 + $0x49] sm:$0xff] %vm394, %v456
      %490 = vst.msk [vmem:[%s482 + $0x51] sm:$0xff] %vm394, %v457
      %491 = vst.msk [vmem:[%s482 + $0x61] sm:$0xff] %vm394, %v458
      %492 = vst.msk [vmem:[%s482 + $0x69] sm:$0xff] %vm394, %v459
      %493 = vst.msk [vmem:[%s482 + $0x79] sm:$0xff] %vm394, %v460
      %494 = vst.msk [vmem:[%s482 + $0x81] sm:$0xff] %vm394, %v461
      %495 = vst.msk [vmem:[%s482 + $0x91] sm:$0xff] %vm394, %v462
      %496 = vst.msk [vmem:[%s482 + $0x99] sm:$0xff] %vm394, %v463
      %497 = vst.msk [vmem:[%s482 + $0xa9] sm:$0xff] %vm394, %v464
      %498 = vst.msk [vmem:[%s482 + $0xb1] sm:$0xff] %vm394, %v465
      %499 = vst.msk [vmem:[%s482 + $0xc1] sm:$0xff] %vm394, %v466
      %500 = vst.msk [vmem:[%s482 + $0xc9] sm:$0xff] %vm394, %v467
      %501 = vst.msk [vmem:[%s482 + $0xd9] sm:$0xff] %vm394, %v468
      %502 = vst.msk [vmem:[%s482 + $0xe1] sm:$0xff] %vm394, %v469
      %503 = vst.msk [vmem:[%s482 + $0xf1] sm:$0xff] %vm394, %v470
      %504 = vst.msk [vmem:[%s482 + $0xf9] sm:$0xff] %vm394, %v471
      %505 = vst.msk [vmem:[%s482 + $0x109] sm:$0xff] %vm394, %v472
      %506 = vst.msk [vmem:[%s482 + $0x111] sm:$0xff] %vm394, %v473
      %507 = vst.msk [vmem:[%s482 + $0x121] sm:$0xff] %vm394, %v474
      %508 = vst.msk [vmem:[%s482 + $0x129] sm:$0xff] %vm394, %v475
      %509 = vst.msk [vmem:[%s482 + $0x139] sm:$0xff] %vm394, %v476
      %510 = vst.msk [vmem:[%s482 + $0x141] sm:$0xff] %vm394, %v477
      %511 = vst.msk [vmem:[%s482 + $0x151] sm:$0xff] %vm394, %v478
      %512 = vst.msk [vmem:[%s482 + $0x159] sm:$0xff] %vm394, %v479
      %513 = vst.msk [vmem:[%s482 + $0x169] sm:$0xff] %vm394, %v480
      %514 = vst.msk [vmem:[%s482 + $0x171] sm:$0xff] %vm394, %v481
      %p515 = scmp.gt.s32.totalorder %s21, 0
      // Predicated region
      $region41: #{conv_block_forward.3} parent=39 // pred_check
        %p516 = pneg %p515
      $region42: #{conv_block_forward.3} parent=39 // pred_check_branch
        %518 = sbr.rel (%p516) target = $region44
      $region43: #{conv_block_forward.3} parent=39 // pred_region
        %v519 = vld [vmem:[%s360] sm:$0xff]
        %v520 = vld [vmem:[%s360 + $0x8] sm:$0xff]
        %521 = vst.msk [vmem:[#allocation2 + $0x1] sm:$0xff] %vm394, %v519
        %522 = vst.msk [vmem:[#allocation2 + $0x9] sm:$0xff] %vm394, %v520
      $region44: #{conv_block_forward.3} parent=39 // pred_fallthru
        _
      %p523 = scmp.lt.s32.totalorder %s21, 0
      // Predicated region
      $region45: #{conv_block_forward.3} parent=39 // pred_check
        %p524 = pneg %p523
      $region46: #{conv_block_forward.3} parent=39 // pred_check_branch
        %526 = sbr.rel (%p524) target = $region48
      $region47: #{conv_block_forward.3} parent=39 // pred_region
        %v527 = vld [vmem:[%s377] sm:$0xff]
        %v528 = vld [vmem:[%s377 + $0x8] sm:$0xff]
        %s529 = scalar_lea.vmem [#allocation2], 408
        %530 = vst.msk [vmem:[%s529 + $0x1] sm:$0xff] %vm394, %v527
        %531 = vst.msk [vmem:[%s529 + $0x9] sm:$0xff] %vm394, %v528
      $region48: #{conv_block_forward.3} parent=39 // pred_fallthru
        _
      %v532 = vld [vmem:[%s4] sm:$0x1]
      %v534 = vlaneseq
      %v535 = vshrl.u32 %v534, 7
      %v536 = vsub.s32 0, %v535
      %v537 = vrot.slane %v532, %v536
      %v539 = vld [vmem:[#allocation2] sm:$0xff]
      %v540 = vld [vmem:[#allocation2 + $0x8] sm:$0xff]
      %v541 = vld [vmem:[#allocation2 + $0x18] sm:$0xff]
      %v542 = vld [vmem:[#allocation2 + $0x20] sm:$0xff]
      %v543 = vld [vmem:[#allocation2 + $0x30] sm:$0xff]
      %v544 = vld [vmem:[#allocation2 + $0x38] sm:$0xff]
      %v545 = vld [vmem:[#allocation2 + $0x48] sm:$0xff]
      %v546 = vld [vmem:[#allocation2 + $0x50] sm:$0xff]
      %v547 = vld [vmem:[#allocation2 + $0x60] sm:$0xff]
      %v548 = vld [vmem:[#allocation2 + $0x68] sm:$0xff]
      %v549 = vld [vmem:[#allocation2 + $0x78] sm:$0xff]
      %v550 = vld [vmem:[#allocation2 + $0x80] sm:$0xff]
      %v551 = vld [vmem:[#allocation2 + $0x90] sm:$0xff]
      %v552 = vld [vmem:[#allocation2 + $0x98] sm:$0xff]
      %v553 = vld [vmem:[#allocation2 + $0xa8] sm:$0xff]
      %v554 = vld [vmem:[#allocation2 + $0xb0] sm:$0xff]
      %v555 = vld [vmem:[#allocation2 + $0xc0] sm:$0xff]
      %v556 = vld [vmem:[#allocation2 + $0xc8] sm:$0xff]
      %v557 = vld [vmem:[#allocation2 + $0xd8] sm:$0xff]
      %v558 = vld [vmem:[#allocation2 + $0xe0] sm:$0xff]
      %v559 = vld [vmem:[#allocation2 + $0xf0] sm:$0xff]
      %v560 = vld [vmem:[#allocation2 + $0xf8] sm:$0xff]
      %v561 = vld [vmem:[#allocation2 + $0x108] sm:$0xff]
      %v562 = vld [vmem:[#allocation2 + $0x110] sm:$0xff]
      %v563 = vld [vmem:[#allocation2 + $0x120] sm:$0xff]
      %v564 = vld [vmem:[#allocation2 + $0x128] sm:$0xff]
      %v565 = vld [vmem:[#allocation2 + $0x138] sm:$0xff]
      %v566 = vld [vmem:[#allocation2 + $0x140] sm:$0xff]
      %v567 = vld [vmem:[#allocation2 + $0x150] sm:$0xff]
      %v568 = vld [vmem:[#allocation2 + $0x158] sm:$0xff]
      %v569 = vld [vmem:[#allocation2 + $0x168] sm:$0xff]
      %v570 = vld [vmem:[#allocation2 + $0x170] sm:$0xff]
      %v571 = vpack.c.bf16 %v540, %v539
      %v572 = vpack.c.bf16 %v542, %v541
      %v573 = vpack.c.bf16 %v544, %v543
      %v574 = vpack.c.bf16 %v546, %v545
      %v575 = vpack.c.bf16 %v548, %v547
      %v576 = vpack.c.bf16 %v550, %v549
      %v577 = vpack.c.bf16 %v552, %v551
      %v578 = vpack.c.bf16 %v554, %v553
      %v579 = vpack.c.bf16 %v556, %v555
      %v580 = vpack.c.bf16 %v558, %v557
      %v581 = vpack.c.bf16 %v560, %v559
      %v582 = vpack.c.bf16 %v562, %v561
      %v583 = vpack.c.bf16 %v564, %v563
      %v584 = vpack.c.bf16 %v566, %v565
      %v585 = vpack.c.bf16 %v568, %v567
      %v586 = vpack.c.bf16 %v570, %v569
      %v587 = vld [vmem:[%s3] sm:$0xf]
      %v589 = vsel %vm394, %v571, 0
      %v592 = vsel %vm394, %v572, 0
      %v595 = vsel %vm394, %v573, 0
      %v598 = vsel %vm394, %v574, 0
      %v601 = vsel %vm394, %v575, 0
      %v604 = vsel %vm394, %v576, 0
      %v607 = vsel %vm394, %v577, 0
      %v610 = vsel %vm394, %v578, 0
      %v613 = vsel %vm394, %v579, 0
      %v616 = vsel %vm394, %v580, 0
      %v619 = vsel %vm394, %v581, 0
      %v622 = vsel %vm394, %v582, 0
      %v625 = vsel %vm394, %v583, 0
      %v628 = vsel %vm394, %v584, 0
      %v631 = vsel %vm394, %v585, 0
      %v634 = vsel %vm394, %v586, 0
      %vm636 = vcmask 1043456
      %v638 = vsel %vm636, %v587, 0
      %640 = vmatprep.subr.bf16.mxu0 0
      %641 = vmatpush1.bf16.msra.mxu0 %v638
      %642 = vmatprep.subr.bf16.mxu0 0
      %643 = vmatpush1.bf16.msra.mxu0 0
      %644 = vmatprep.subr.bf16.mxu0 0
      %645 = vmatpush1.bf16.msra.mxu0 0
      %646 = vmatprep.subr.bf16.mxu0 0
      %647 = vmatpush1.bf16.msra.mxu0 0
      %648 = vmatprep.subr.bf16.mxu0 0
      %649 = vmatpush1.bf16.msra.mxu0 0
      %650 = vmatprep.subr.bf16.mxu0 0
      %651 = vmatpush1.bf16.msra.mxu0 0
      %652 = vmatprep.subr.bf16.mxu0 0
      %653 = vmatpush1.bf16.msra.mxu0 0
      %654 = vmatprep.subr.bf16.mxu0 0
      %655 = vmatpush1.bf16.msra.mxu0 0
      %656 = vmatprep.subr.bf16.mxu0 0
      %657 = vmatpush1.bf16.msra.mxu0 0
      %658 = vmatprep.subr.bf16.mxu0 0
      %659 = vmatpush1.bf16.msra.mxu0 0
      %660 = vmatprep.subr.bf16.mxu0 0
      %661 = vmatpush1.bf16.msra.mxu0 0
      %662 = vmatprep.subr.bf16.mxu0 0
      %663 = vmatpush1.bf16.msra.mxu0 0
      %664 = vmatprep.subr.bf16.mxu0 0
      %665 = vmatpush1.bf16.msra.mxu0 0
      %666 = vmatprep.subr.bf16.mxu0 0
      %667 = vmatpush1.bf16.msra.mxu0 0
      %668 = vmatprep.subr.bf16.mxu0 0
      %669 = vmatpush1.bf16.msra.mxu0 0
      %670 = vmatprep.subr.bf16.mxu0 0
      %671 = vmatpush1.bf16.msra.mxu0 0
      %672 = vmatprep.mubr.bf16.mxu0 0
      %673 = vmatmul.mubr.bf16.gmra.mrb[0].mxu0 %v589
      %v674 = vpop.f32.mrb[0].mxu0
      %v675 = vadd.f32 0.0, %v674
      %v676 = vpop.f32.mrb[0].mxu0
      %v677 = vpop.f32.mrb[0].mxu0
      %v678 = vadd.f32 0.0, %v677
      %v679 = vpop.f32.mrb[0].mxu0
      %680 = vmatprep.mubr.bf16.mxu0 0
      %681 = vmatmul.mubr.bf16.gmra.mrb[0].mxu0 %v592
      %v682 = vpop.f32.mrb[0].mxu0
      %v683 = vadd.f32 0.0, %v682
      %v684 = vpop.f32.mrb[0].mxu0
      %v685 = vpop.f32.mrb[0].mxu0
      %v686 = vadd.f32 0.0, %v685
      %v687 = vpop.f32.mrb[0].mxu0
      %688 = vmatprep.mubr.bf16.mxu0 0
      %689 = vmatmul.mubr.bf16.gmra.mrb[0].mxu0 %v595
      %v690 = vpop.f32.mrb[0].mxu0
      %v691 = vadd.f32 0.0, %v690
      %v692 = vpop.f32.mrb[0].mxu0
      %v693 = vpop.f32.mrb[0].mxu0
      %v694 = vadd.f32 0.0, %v693
      %v695 = vpop.f32.mrb[0].mxu0
      %696 = vmatprep.mubr.bf16.mxu0 0
      %697 = vmatmul.mubr.bf16.gmra.mrb[0].mxu0 %v598
      %v698 = vpop.f32.mrb[0].mxu0
      %v699 = vadd.f32 0.0, %v698
      %v700 = vpop.f32.mrb[0].mxu0
      %v701 = vpop.f32.mrb[0].mxu0
      %v702 = vadd.f32 0.0, %v701
      %v703 = vpop.f32.mrb[0].mxu0
      %704 = vmatprep.mubr.bf16.mxu0 0
      %705 = vmatmul.mubr.bf16.gmra.mrb[0].mxu0 %v601
      %v706 = vpop.f32.mrb[0].mxu0
      %v707 = vadd.f32 0.0, %v706
      %v708 = vpop.f32.mrb[0].mxu0
      %v709 = vpop.f32.mrb[0].mxu0
      %v710 = vadd.f32 0.0, %v709
      %v711 = vpop.f32.mrb[0].mxu0
      %712 = vmatprep.mubr.bf16.mxu0 0
      %713 = vmatmul.mubr.bf16.gmra.mrb[0].mxu0 %v604
      %v714 = vpop.f32.mrb[0].mxu0
      %v715 = vadd.f32 0.0, %v714
      %v716 = vpop.f32.mrb[0].mxu0
      %v717 = vpop.f32.mrb[0].mxu0
      %v718 = vadd.f32 0.0, %v717
      %v719 = vpop.f32.mrb[0].mxu0
      %720 = vmatprep.mubr.bf16.mxu0 0
      %721 = vmatmul.mubr.bf16.gmra.mrb[0].mxu0 %v607
      %v722 = vpop.f32.mrb[0].mxu0
      %v723 = vadd.f32 0.0, %v722
      %v724 = vpop.f32.mrb[0].mxu0
      %v725 = vpop.f32.mrb[0].mxu0
      %v726 = vadd.f32 0.0, %v725
      %v727 = vpop.f32.mrb[0].mxu0
      %728 = vmatprep.mubr.bf16.mxu0 0
      %729 = vmatmul.mubr.bf16.gmra.mrb[0].mxu0 %v610
      %v730 = vpop.f32.mrb[0].mxu0
      %v731 = vadd.f32 0.0, %v730
      %v732 = vpop.f32.mrb[0].mxu0
      %v733 = vpop.f32.mrb[0].mxu0
      %v734 = vadd.f32 0.0, %v733
      %v735 = vpop.f32.mrb[0].mxu0
      %736 = vmatprep.mubr.bf16.mxu0 0
      %737 = vmatmul.mubr.bf16.gmra.mrb[0].mxu0 %v613
      %v738 = vpop.f32.mrb[0].mxu0
      %v739 = vadd.f32 0.0, %v738
      %v740 = vpop.f32.mrb[0].mxu0
      %v741 = vpop.f32.mrb[0].mxu0
      %v742 = vadd.f32 0.0, %v741
      %v743 = vpop.f32.mrb[0].mxu0
      %744 = vmatprep.mubr.bf16.mxu0 0
      %745 = vmatmul.mubr.bf16.gmra.mrb[0].mxu0 %v616
      %v746 = vpop.f32.mrb[0].mxu0
      %v747 = vadd.f32 0.0, %v746
      %v748 = vpop.f32.mrb[0].mxu0
      %v749 = vpop.f32.mrb[0].mxu0
      %v750 = vadd.f32 0.0, %v749
      %v751 = vpop.f32.mrb[0].mxu0
      %752 = vmatprep.mubr.bf16.mxu0 0
      %753 = vmatmul.mubr.bf16.gmra.mrb[0].mxu0 %v619
      %v754 = vpop.f32.mrb[0].mxu0
      %v755 = vadd.f32 0.0, %v754
      %v756 = vpop.f32.mrb[0].mxu0
      %v757 = vpop.f32.mrb[0].mxu0
      %v758 = vadd.f32 0.0, %v757
      %v759 = vpop.f32.mrb[0].mxu0
      %760 = vmatprep.mubr.bf16.mxu0 0
      %761 = vmatmul.mubr.bf16.gmra.mrb[0].mxu0 %v622
      %v762 = vpop.f32.mrb[0].mxu0
      %v763 = vadd.f32 0.0, %v762
      %v764 = vpop.f32.mrb[0].mxu0
      %v765 = vpop.f32.mrb[0].mxu0
      %v766 = vadd.f32 0.0, %v765
      %v767 = vpop.f32.mrb[0].mxu0
      %768 = vmatprep.mubr.bf16.mxu0 0
      %769 = vmatmul.mubr.bf16.gmra.mrb[0].mxu0 %v625
      %v770 = vpop.f32.mrb[0].mxu0
      %v771 = vadd.f32 0.0, %v770
      %v772 = vpop.f32.mrb[0].mxu0
      %v773 = vpop.f32.mrb[0].mxu0
      %v774 = vadd.f32 0.0, %v773
      %v775 = vpop.f32.mrb[0].mxu0
      %776 = vmatprep.mubr.bf16.mxu0 0
      %777 = vmatmul.mubr.bf16.gmra.mrb[0].mxu0 %v628
      %v778 = vpop.f32.mrb[0].mxu0
      %v779 = vadd.f32 0.0, %v778
      %v780 = vpop.f32.mrb[0].mxu0
      %v781 = vpop.f32.mrb[0].mxu0
      %v782 = vadd.f32 0.0, %v781
      %v783 = vpop.f32.mrb[0].mxu0
      %784 = vmatprep.mubr.bf16.mxu0 0
      %785 = vmatmul.mubr.bf16.gmra.mrb[0].mxu0 %v631
      %v786 = vpop.f32.mrb[0].mxu0
      %v787 = vadd.f32 0.0, %v786
      %v788 = vpop.f32.mrb[0].mxu0
      %v789 = vpop.f32.mrb[0].mxu0
      %v790 = vadd.f32 0.0, %v789
      %v791 = vpop.f32.mrb[0].mxu0
      %792 = vmatprep.mubr.bf16.mxu0 0
      %793 = vmatmul.mubr.bf16.gmra.mrb[0].mxu0 %v634
      %v794 = vpop.f32.mrb[0].mxu0
      %v795 = vadd.f32 0.0, %v794
      %v796 = vpop.f32.mrb[0].mxu0
      %v797 = vpop.f32.mrb[0].mxu0
      %v798 = vadd.f32 0.0, %v797
      %v799 = vpop.f32.mrb[0].mxu0
      %800 = vdwg.mxu0
      %v801 = vadd.f32 %v537, %v675
      %v802 = vadd.f32 %v537, %v678
      %v803 = vadd.f32 %v537, %v683
      %v804 = vadd.f32 %v537, %v686
      %v805 = vadd.f32 %v537, %v691
      %v806 = vadd.f32 %v537, %v694
      %v807 = vadd.f32 %v537, %v699
      %v808 = vadd.f32 %v537, %v702
      %v809 = vadd.f32 %v537, %v707
      %v810 = vadd.f32 %v537, %v710
      %v811 = vadd.f32 %v537, %v715
      %v812 = vadd.f32 %v537, %v718
      %v813 = vadd.f32 %v537, %v723
      %v814 = vadd.f32 %v537, %v726
      %v815 = vadd.f32 %v537, %v731
      %v816 = vadd.f32 %v537, %v734
      %v817 = vadd.f32 %v537, %v739
      %v818 = vadd.f32 %v537, %v742
      %v819 = vadd.f32 %v537, %v747
      %v820 = vadd.f32 %v537, %v750
      %v821 = vadd.f32 %v537, %v755
      %v822 = vadd.f32 %v537, %v758
      %v823 = vadd.f32 %v537, %v763
      %v824 = vadd.f32 %v537, %v766
      %v825 = vadd.f32 %v537, %v771
      %v826 = vadd.f32 %v537, %v774
      %v827 = vadd.f32 %v537, %v779
      %v828 = vadd.f32 %v537, %v782
      %v829 = vadd.f32 %v537, %v787
      %v830 = vadd.f32 %v537, %v790
      %v831 = vadd.f32 %v537, %v795
      %v832 = vadd.f32 %v537, %v798
      %v833 = vld [vmem:[#allocation2 + $0x1] sm:$0xff]
      %v834 = vld [vmem:[#allocation2 + $0x9] sm:$0xff]
      %v835 = vld [vmem:[#allocation2 + $0x19] sm:$0xff]
      %v836 = vld [vmem:[#allocation2 + $0x21] sm:$0xff]
      %v837 = vld [vmem:[#allocation2 + $0x31] sm:$0xff]
      %v838 = vld [vmem:[#allocation2 + $0x39] sm:$0xff]
      %v839 = vld [vmem:[#allocation2 + $0x49] sm:$0xff]
      %v840 = vld [vmem:[#allocation2 + $0x51] sm:$0xff]
      %v841 = vld [vmem:[#allocation2 + $0x61] sm:$0xff]
      %v842 = vld [vmem:[#allocation2 + $0x69] sm:$0xff]
      %v843 = vld [vmem:[#allocation2 + $0x79] sm:$0xff]
      %v844 = vld [vmem:[#allocation2 + $0x81] sm:$0xff]
      %v845 = vld [vmem:[#allocation2 + $0x91] sm:$0xff]
      %v846 = vld [vmem:[#allocation2 + $0x99] sm:$0xff]
      %v847 = vld [vmem:[#allocation2 + $0xa9] sm:$0xff]
      %v848 = vld [vmem:[#allocation2 + $0xb1] sm:$0xff]
      %v849 = vld [vmem:[#allocation2 + $0xc1] sm:$0xff]
      %v850 = vld [vmem:[#allocation2 + $0xc9] sm:$0xff]
      %v851 = vld [vmem:[#allocation2 + $0xd9] sm:$0xff]
      %v852 = vld [vmem:[#allocation2 + $0xe1] sm:$0xff]
      %v853 = vld [vmem:[#allocation2 + $0xf1] sm:$0xff]
      %v854 = vld [vmem:[#allocation2 + $0xf9] sm:$0xff]
      %v855 = vld [vmem:[#allocation2 + $0x109] sm:$0xff]
      %v856 = vld [vmem:[#allocation2 + $0x111] sm:$0xff]
      %v857 = vld [vmem:[#allocation2 + $0x121] sm:$0xff]
      %v858 = vld [vmem:[#allocation2 + $0x129] sm:$0xff]
      %v859 = vld [vmem:[#allocation2 + $0x139] sm:$0xff]
      %v860 = vld [vmem:[#allocation2 + $0x141] sm:$0xff]
      %v861 = vld [vmem:[#allocation2 + $0x151] sm:$0xff]
      %v862 = vld [vmem:[#allocation2 + $0x159] sm:$0xff]
      %v863 = vld [vmem:[#allocation2 + $0x169] sm:$0xff]
      %v864 = vld [vmem:[#allocation2 + $0x171] sm:$0xff]
      %v865 = vpack.c.bf16 %v834, %v833
      %v866 = vpack.c.bf16 %v836, %v835
      %v867 = vpack.c.bf16 %v838, %v837
      %v868 = vpack.c.bf16 %v840, %v839
      %v869 = vpack.c.bf16 %v842, %v841
      %v870 = vpack.c.bf16 %v844, %v843
      %v871 = vpack.c.bf16 %v846, %v845
      %v872 = vpack.c.bf16 %v848, %v847
      %v873 = vpack.c.bf16 %v850, %v849
      %v874 = vpack.c.bf16 %v852, %v851
      %v875 = vpack.c.bf16 %v854, %v853
      %v876 = vpack.c.bf16 %v856, %v855
      %v877 = vpack.c.bf16 %v858, %v857
      %v878 = vpack.c.bf16 %v860, %v859
      %v879 = vpack.c.bf16 %v862, %v861
      %v880 = vpack.c.bf16 %v864, %v863
      %s881 = scalar_lea.vmem %s3, 4
      %v882 = vld [vmem:[%s881] sm:$0xf]
      %v884 = vsel %vm394, %v865, 0
      %v887 = vsel %vm394, %v866, 0
      %v890 = vsel %vm394, %v867, 0
      %v893 = vsel %vm394, %v868, 0
      %v896 = vsel %vm394, %v869, 0
      %v899 = vsel %vm394, %v870, 0
      %v902 = vsel %vm394, %v871, 0
      %v905 = vsel %vm394, %v872, 0
      %v908 = vsel %vm394, %v873, 0
      %v911 = vsel %vm394, %v874, 0
      %v914 = vsel %vm394, %v875, 0
      %v917 = vsel %vm394, %v876, 0
      %v920 = vsel %vm394, %v877, 0
      %v923 = vsel %vm394, %v878, 0
      %v926 = vsel %vm394, %v879, 0
      %v929 = vsel %vm394, %v880, 0
      %v932 = vsel %vm636, %v882, 0
      %934 = vmatprep.subr.bf16.mxu0 0
      %935 = vmatpush1.bf16.msra.mxu0 %v932
      %936 = vmatprep.subr.bf16.mxu0 0
      %937 = vmatpush1.bf16.msra.mxu0 0
      %938 = vmatprep.subr.bf16.mxu0 0
      %939 = vmatpush1.bf16.msra.mxu0 0
      %940 = vmatprep.subr.bf16.mxu0 0
      %941 = vmatpush1.bf16.msra.mxu0 0
      %942 = vmatprep.subr.bf16.mxu0 0
      %943 = vmatpush1.bf16.msra.mxu0 0
      %944 = vmatprep.subr.bf16.mxu0 0
      %945 = vmatpush1.bf16.msra.mxu0 0
      %946 = vmatprep.subr.bf16.mxu0 0
      %947 = vmatpush1.bf16.msra.mxu0 0
      %948 = vmatprep.subr.bf16.mxu0 0
      %949 = vmatpush1.bf16.msra.mxu0 0
      %950 = vmatprep.subr.bf16.mxu0 0
      %951 = vmatpush1.bf16.msra.mxu0 0
      %952 = vmatprep.subr.bf16.mxu0 0
      %953 = vmatpush1.bf16.msra.mxu0 0
      %954 = vmatprep.subr.bf16.mxu0 0
      %955 = vmatpush1.bf16.msra.mxu0 0
      %956 = vmatprep.subr.bf16.mxu0 0
      %957 = vmatpush1.bf16.msra.mxu0 0
      %958 = vmatprep.subr.bf16.mxu0 0
      %959 = vmatpush1.bf16.msra.mxu0 0
      %960 = vmatprep.subr.bf16.mxu0 0
      %961 = vmatpush1.bf16.msra.mxu0 0
      %962 = vmatprep.subr.bf16.mxu0 0
      %963 = vmatpush1.bf16.msra.mxu0 0
      %964 = vmatprep.subr.bf16.mxu0 0
      %965 = vmatpush1.bf16.msra.mxu0 0
      %966 = vmatprep.mubr.bf16.mxu0 0
      %967 = vmatmul.mubr.bf16.gmra.mrb[0].mxu0 %v884
      %v968 = vpop.f32.mrb[0].mxu0
      %v969 = vadd.f32 0.0, %v968
      %v970 = vpop.f32.mrb[0].mxu0
      %v971 = vpop.f32.mrb[0].mxu0
      %v972 = vadd.f32 0.0, %v971
      %v973 = vpop.f32.mrb[0].mxu0
      %974 = vmatprep.mubr.bf16.mxu0 0
      %975 = vmatmul.mubr.bf16.gmra.mrb[0].mxu0 %v887
      %v976 = vpop.f32.mrb[0].mxu0
      %v977 = vadd.f32 0.0, %v976
      %v978 = vpop.f32.mrb[0].mxu0
      %v979 = vpop.f32.mrb[0].mxu0
      %v980 = vadd.f32 0.0, %v979
      %v981 = vpop.f32.mrb[0].mxu0
      %982 = vmatprep.mubr.bf16.mxu0 0
      %983 = vmatmul.mubr.bf16.gmra.mrb[0].mxu0 %v890
      %v984 = vpop.f32.mrb[0].mxu0
      %v985 = vadd.f32 0.0, %v984
      %v986 = vpop.f32.mrb[0].mxu0
      %v987 = vpop.f32.mrb[0].mxu0
      %v988 = vadd.f32 0.0, %v987
      %v989 = vpop.f32.mrb[0].mxu0
      %990 = vmatprep.mubr.bf16.mxu0 0
      %991 = vmatmul.mubr.bf16.gmra.mrb[0].mxu0 %v893
      %v992 = vpop.f32.mrb[0].mxu0
      %v993 = vadd.f32 0.0, %v992
      %v994 = vpop.f32.mrb[0].mxu0
      %v995 = vpop.f32.mrb[0].mxu0
      %v996 = vadd.f32 0.0, %v995
      %v997 = vpop.f32.mrb[0].mxu0
      %998 = vmatprep.mubr.bf16.mxu0 0
      %999 = vmatmul.mubr.bf16.gmra.mrb[0].mxu0 %v896
      %v1000 = vpop.f32.mrb[0].mxu0
      %v1001 = vadd.f32 0.0, %v1000
      %v1002 = vpop.f32.mrb[0].mxu0
      %v1003 = vpop.f32.mrb[0].mxu0
      %v1004 = vadd.f32 0.0, %v1003
      %v1005 = vpop.f32.mrb[0].mxu0
      %1006 = vmatprep.mubr.bf16.mxu0 0
      %1007 = vmatmul.mubr.bf16.gmra.mrb[0].mxu0 %v899
      %v1008 = vpop.f32.mrb[0].mxu0
      %v1009 = vadd.f32 0.0, %v1008
      %v1010 = vpop.f32.mrb[0].mxu0
      %v1011 = vpop.f32.mrb[0].mxu0
      %v1012 = vadd.f32 0.0, %v1011
      %v1013 = vpop.f32.mrb[0].mxu0
      %1014 = vmatprep.mubr.bf16.mxu0 0
      %1015 = vmatmul.mubr.bf16.gmra.mrb[0].mxu0 %v902
      %v1016 = vpop.f32.mrb[0].mxu0
      %v1017 = vadd.f32 0.0, %v1016
      %v1018 = vpop.f32.mrb[0].mxu0
      %v1019 = vpop.f32.mrb[0].mxu0
      %v1020 = vadd.f32 0.0, %v1019
      %v1021 = vpop.f32.mrb[0].mxu0
      %1022 = vmatprep.mubr.bf16.mxu0 0
      %1023 = vmatmul.mubr.bf16.gmra.mrb[0].mxu0 %v905
      %v1024 = vpop.f32.mrb[0].mxu0
      %v1025 = vadd.f32 0.0, %v1024
      %v1026 = vpop.f32.mrb[0].mxu0
      %v1027 = vpop.f32.mrb[0].mxu0
      %v1028 = vadd.f32 0.0, %v1027
      %v1029 = vpop.f32.mrb[0].mxu0
      %1030 = vmatprep.mubr.bf16.mxu0 0
      %1031 = vmatmul.mubr.bf16.gmra.mrb[0].mxu0 %v908
      %v1032 = vpop.f32.mrb[0].mxu0
      %v1033 = vadd.f32 0.0, %v1032
      %v1034 = vpop.f32.mrb[0].mxu0
      %v1035 = vpop.f32.mrb[0].mxu0
      %v1036 = vadd.f32 0.0, %v1035
      %v1037 = vpop.f32.mrb[0].mxu0
      %1038 = vmatprep.mubr.bf16.mxu0 0
      %1039 = vmatmul.mubr.bf16.gmra.mrb[0].mxu0 %v911
      %v1040 = vpop.f32.mrb[0].mxu0
      %v1041 = vadd.f32 0.0, %v1040
      %v1042 = vpop.f32.mrb[0].mxu0
      %v1043 = vpop.f32.mrb[0].mxu0
      %v1044 = vadd.f32 0.0, %v1043
      %v1045 = vpop.f32.mrb[0].mxu0
      %1046 = vmatprep.mubr.bf16.mxu0 0
      %1047 = vmatmul.mubr.bf16.gmra.mrb[0].mxu0 %v914
      %v1048 = vpop.f32.mrb[0].mxu0
      %v1049 = vadd.f32 0.0, %v1048
      %v1050 = vpop.f32.mrb[0].mxu0
      %v1051 = vpop.f32.mrb[0].mxu0
      %v1052 = vadd.f32 0.0, %v1051
      %v1053 = vpop.f32.mrb[0].mxu0
      %1054 = vmatprep.mubr.bf16.mxu0 0
      %1055 = vmatmul.mubr.bf16.gmra.mrb[0].mxu0 %v917
      %v1056 = vpop.f32.mrb[0].mxu0
      %v1057 = vadd.f32 0.0, %v1056
      %v1058 = vpop.f32.mrb[0].mxu0
      %v1059 = vpop.f32.mrb[0].mxu0
      %v1060 = vadd.f32 0.0, %v1059
      %v1061 = vpop.f32.mrb[0].mxu0
      %1062 = vmatprep.mubr.bf16.mxu0 0
      %1063 = vmatmul.mubr.bf16.gmra.mrb[0].mxu0 %v920
      %v1064 = vpop.f32.mrb[0].mxu0
      %v1065 = vadd.f32 0.0, %v1064
      %v1066 = vpop.f32.mrb[0].mxu0
      %v1067 = vpop.f32.mrb[0].mxu0
      %v1068 = vadd.f32 0.0, %v1067
      %v1069 = vpop.f32.mrb[0].mxu0
      %1070 = vmatprep.mubr.bf16.mxu0 0
      %1071 = vmatmul.mubr.bf16.gmra.mrb[0].mxu0 %v923
      %v1072 = vpop.f32.mrb[0].mxu0
      %v1073 = vadd.f32 0.0, %v1072
      %v1074 = vpop.f32.mrb[0].mxu0
      %v1075 = vpop.f32.mrb[0].mxu0
      %v1076 = vadd.f32 0.0, %v1075
      %v1077 = vpop.f32.mrb[0].mxu0
      %1078 = vmatprep.mubr.bf16.mxu0 0
      %1079 = vmatmul.mubr.bf16.gmra.mrb[0].mxu0 %v926
      %v1080 = vpop.f32.mrb[0].mxu0
      %v1081 = vadd.f32 0.0, %v1080
      %v1082 = vpop.f32.mrb[0].mxu0
      %v1083 = vpop.f32.mrb[0].mxu0
      %v1084 = vadd.f32 0.0, %v1083
      %v1085 = vpop.f32.mrb[0].mxu0
      %1086 = vmatprep.mubr.bf16.mxu0 0
      %1087 = vmatmul.mubr.bf16.gmra.mrb[0].mxu0 %v929
      %v1088 = vpop.f32.mrb[0].mxu0
      %v1089 = vadd.f32 0.0, %v1088
      %v1090 = vpop.f32.mrb[0].mxu0
      %v1091 = vpop.f32.mrb[0].mxu0
      %v1092 = vadd.f32 0.0, %v1091
      %v1093 = vpop.f32.mrb[0].mxu0
      %1094 = vdwg.mxu0
      %v1095 = vadd.f32 %v801, %v969
      %v1096 = vadd.f32 %v802, %v972
      %v1097 = vadd.f32 %v803, %v977
      %v1098 = vadd.f32 %v804, %v980
      %v1099 = vadd.f32 %v805, %v985
      %v1100 = vadd.f32 %v806, %v988
      %v1101 = vadd.f32 %v807, %v993
      %v1102 = vadd.f32 %v808, %v996
      %v1103 = vadd.f32 %v809, %v1001
      %v1104 = vadd.f32 %v810, %v1004
      %v1105 = vadd.f32 %v811, %v1009
      %v1106 = vadd.f32 %v812, %v1012
      %v1107 = vadd.f32 %v813, %v1017
      %v1108 = vadd.f32 %v814, %v1020
      %v1109 = vadd.f32 %v815, %v1025
      %v1110 = vadd.f32 %v816, %v1028
      %v1111 = vadd.f32 %v817, %v1033
      %v1112 = vadd.f32 %v818, %v1036
      %v1113 = vadd.f32 %v819, %v1041
      %v1114 = vadd.f32 %v820, %v1044
      %v1115 = vadd.f32 %v821, %v1049
      %v1116 = vadd.f32 %v822, %v1052
      %v1117 = vadd.f32 %v823, %v1057
      %v1118 = vadd.f32 %v824, %v1060
      %v1119 = vadd.f32 %v825, %v1065
      %v1120 = vadd.f32 %v826, %v1068
      %v1121 = vadd.f32 %v827, %v1073
      %v1122 = vadd.f32 %v828, %v1076
      %v1123 = vadd.f32 %v829, %v1081
      %v1124 = vadd.f32 %v830, %v1084
      %v1125 = vadd.f32 %v831, %v1089
      %v1126 = vadd.f32 %v832, %v1092
      %v1127 = vld [vmem:[#allocation2 + $0x2] sm:$0xff]
      %v1128 = vld [vmem:[#allocation2 + $0xa] sm:$0xff]
      %v1129 = vld [vmem:[#allocation2 + $0x1a] sm:$0xff]
      %v1130 = vld [vmem:[#allocation2 + $0x22] sm:$0xff]
      %v1131 = vld [vmem:[#allocation2 + $0x32] sm:$0xff]
      %v1132 = vld [vmem:[#allocation2 + $0x3a] sm:$0xff]
      %v1133 = vld [vmem:[#allocation2 + $0x4a] sm:$0xff]
      %v1134 = vld [vmem:[#allocation2 + $0x52] sm:$0xff]
      %v1135 = vld [vmem:[#allocation2 + $0x62] sm:$0xff]
      %v1136 = vld [vmem:[#allocation2 + $0x6a] sm:$0xff]
      %v1137 = vld [vmem:[#allocation2 + $0x7a] sm:$0xff]
      %v1138 = vld [vmem:[#allocation2 + $0x82] sm:$0xff]
      %v1139 = vld [vmem:[#allocation2 + $0x92] sm:$0xff]
      %v1140 = vld [vmem:[#allocation2 + $0x9a] sm:$0xff]
      %v1141 = vld [vmem:[#allocation2 + $0xaa] sm:$0xff]
      %v1142 = vld [vmem:[#allocation2 + $0xb2] sm:$0xff]
      %v1143 = vld [vmem:[#allocation2 + $0xc2] sm:$0xff]
      %v1144 = vld [vmem:[#allocation2 + $0xca] sm:$0xff]
      %v1145 = vld [vmem:[#allocation2 + $0xda] sm:$0xff]
      %v1146 = vld [vmem:[#allocation2 + $0xe2] sm:$0xff]
      %v1147 = vld [vmem:[#allocation2 + $0xf2] sm:$0xff]
      %v1148 = vld [vmem:[#allocation2 + $0xfa] sm:$0xff]
      %v1149 = vld [vmem:[#allocation2 + $0x10a] sm:$0xff]
      %v1150 = vld [vmem:[#allocation2 + $0x112] sm:$0xff]
      %v1151 = vld [vmem:[#allocation2 + $0x122] sm:$0xff]
      %v1152 = vld [vmem:[#allocation2 + $0x12a] sm:$0xff]
      %v1153 = vld [vmem:[#allocation2 + $0x13a] sm:$0xff]
      %v1154 = vld [vmem:[#allocation2 + $0x142] sm:$0xff]
      %v1155 = vld [vmem:[#allocation2 + $0x152] sm:$0xff]
      %v1156 = vld [vmem:[#allocation2 + $0x15a] sm:$0xff]
      %v1157 = vld [vmem:[#allocation2 + $0x16a] sm:$0xff]
      %v1158 = vld [vmem:[#allocation2 + $0x172] sm:$0xff]
      %v1159 = vpack.c.bf16 %v1128, %v1127
      %v1160 = vpack.c.bf16 %v1130, %v1129
      %v1161 = vpack.c.bf16 %v1132, %v1131
      %v1162 = vpack.c.bf16 %v1134, %v1133
      %v1163 = vpack.c.bf16 %v1136, %v1135
      %v1164 = vpack.c.bf16 %v1138, %v1137
      %v1165 = vpack.c.bf16 %v1140, %v1139
      %v1166 = vpack.c.bf16 %v1142, %v1141
      %v1167 = vpack.c.bf16 %v1144, %v1143
      %v1168 = vpack.c.bf16 %v1146, %v1145
      %v1169 = vpack.c.bf16 %v1148, %v1147
      %v1170 = vpack.c.bf16 %v1150, %v1149
      %v1171 = vpack.c.bf16 %v1152, %v1151
      %v1172 = vpack.c.bf16 %v1154, %v1153
      %v1173 = vpack.c.bf16 %v1156, %v1155
      %v1174 = vpack.c.bf16 %v1158, %v1157
      %s1175 = scalar_lea.vmem %s3, 8
      %v1176 = vld [vmem:[%s1175] sm:$0xf]
      %v1178 = vsel %vm394, %v1159, 0
      %v1181 = vsel %vm394, %v1160, 0
      %v1184 = vsel %vm394, %v1161, 0
      %v1187 = vsel %vm394, %v1162, 0
      %v1190 = vsel %vm394, %v1163, 0
      %v1193 = vsel %vm394, %v1164, 0
      %v1196 = vsel %vm394, %v1165, 0
      %v1199 = vsel %vm394, %v1166, 0
      %v1202 = vsel %vm394, %v1167, 0
      %v1205 = vsel %vm394, %v1168, 0
      %v1208 = vsel %vm394, %v1169, 0
      %v1211 = vsel %vm394, %v1170, 0
      %v1214 = vsel %vm394, %v1171, 0
      %v1217 = vsel %vm394, %v1172, 0
      %v1220 = vsel %vm394, %v1173, 0
      %v1223 = vsel %vm394, %v1174, 0
      %v1226 = vsel %vm636, %v1176, 0
      %1228 = vmatprep.subr.bf16.mxu0 0
      %1229 = vmatpush1.bf16.msra.mxu0 %v1226
      %1230 = vmatprep.subr.bf16.mxu0 0
      %1231 = vmatpush1.bf16.msra.mxu0 0
      %1232 = vmatprep.subr.bf16.mxu0 0
      %1233 = vmatpush1.bf16.msra.mxu0 0
      %1234 = vmatprep.subr.bf16.mxu0 0
      %1235 = vmatpush1.bf16.msra.mxu0 0
      %1236 = vmatprep.subr.bf16.mxu0 0
      %1237 = vmatpush1.bf16.msra.mxu0 0
      %1238 = vmatprep.subr.bf16.mxu0 0
      %1239 = vmatpush1.bf16.msra.mxu0 0
      %1240 = vmatprep.subr.bf16.mxu0 0
      %1241 = vmatpush1.bf16.msra.mxu0 0
      %1242 = vmatprep.subr.bf16.mxu0 0
      %1243 = vmatpush1.bf16.msra.mxu0 0
      %1244 = vmatprep.subr.bf16.mxu0 0
      %1245 = vmatpush1.bf16.msra.mxu0 0
      %1246 = vmatprep.subr.bf16.mxu0 0
      %1247 = vmatpush1.bf16.msra.mxu0 0
      %1248 = vmatprep.subr.bf16.mxu0 0
      %1249 = vmatpush1.bf16.msra.mxu0 0
      %1250 = vmatprep.subr.bf16.mxu0 0
      %1251 = vmatpush1.bf16.msra.mxu0 0
      %1252 = vmatprep.subr.bf16.mxu0 0
      %1253 = vmatpush1.bf16.msra.mxu0 0
      %1254 = vmatprep.subr.bf16.mxu0 0
      %1255 = vmatpush1.bf16.msra.mxu0 0
      %1256 = vmatprep.subr.bf16.mxu0 0
      %1257 = vmatpush1.bf16.msra.mxu0 0
      %1258 = vmatprep.subr.bf16.mxu0 0
      %1259 = vmatpush1.bf16.msra.mxu0 0
      %1260 = vmatprep.mubr.bf16.mxu0 0
      %1261 = vmatmul.mubr.bf16.gmra.mrb[0].mxu0 %v1178
      %v1262 = vpop.f32.mrb[0].mxu0
      %v1263 = vadd.f32 0.0, %v1262
      %v1264 = vpop.f32.mrb[0].mxu0
      %v1265 = vpop.f32.mrb[0].mxu0
      %v1266 = vadd.f32 0.0, %v1265
      %v1267 = vpop.f32.mrb[0].mxu0
      %1268 = vmatprep.mubr.bf16.mxu0 0
      %1269 = vmatmul.mubr.bf16.gmra.mrb[0].mxu0 %v1181
      %v1270 = vpop.f32.mrb[0].mxu0
      %v1271 = vadd.f32 0.0, %v1270
      %v1272 = vpop.f32.mrb[0].mxu0
      %v1273 = vpop.f32.mrb[0].mxu0
      %v1274 = vadd.f32 0.0, %v1273
      %v1275 = vpop.f32.mrb[0].mxu0
      %1276 = vmatprep.mubr.bf16.mxu0 0
      %1277 = vmatmul.mubr.bf16.gmra.mrb[0].mxu0 %v1184
      %v1278 = vpop.f32.mrb[0].mxu0
      %v1279 = vadd.f32 0.0, %v1278
      %v1280 = vpop.f32.mrb[0].mxu0
      %v1281 = vpop.f32.mrb[0].mxu0
      %v1282 = vadd.f32 0.0, %v1281
      %v1283 = vpop.f32.mrb[0].mxu0
      %1284 = vmatprep.mubr.bf16.mxu0 0
      %1285 = vmatmul.mubr.bf16.gmra.mrb[0].mxu0 %v1187
      %v1286 = vpop.f32.mrb[0].mxu0
      %v1287 = vadd.f32 0.0, %v1286
      %v1288 = vpop.f32.mrb[0].mxu0
      %v1289 = vpop.f32.mrb[0].mxu0
      %v1290 = vadd.f32 0.0, %v1289
      %v1291 = vpop.f32.mrb[0].mxu0
      %1292 = vmatprep.mubr.bf16.mxu0 0
      %1293 = vmatmul.mubr.bf16.gmra.mrb[0].mxu0 %v1190
      %v1294 = vpop.f32.mrb[0].mxu0
      %v1295 = vadd.f32 0.0, %v1294
      %v1296 = vpop.f32.mrb[0].mxu0
      %v1297 = vpop.f32.mrb[0].mxu0
      %v1298 = vadd.f32 0.0, %v1297
      %v1299 = vpop.f32.mrb[0].mxu0
      %1300 = vmatprep.mubr.bf16.mxu0 0
      %1301 = vmatmul.mubr.bf16.gmra.mrb[0].mxu0 %v1193
      %v1302 = vpop.f32.mrb[0].mxu0
      %v1303 = vadd.f32 0.0, %v1302
      %v1304 = vpop.f32.mrb[0].mxu0
      %v1305 = vpop.f32.mrb[0].mxu0
      %v1306 = vadd.f32 0.0, %v1305
      %v1307 = vpop.f32.mrb[0].mxu0
      %1308 = vmatprep.mubr.bf16.mxu0 0
      %1309 = vmatmul.mubr.bf16.gmra.mrb[0].mxu0 %v1196
      %v1310 = vpop.f32.mrb[0].mxu0
      %v1311 = vadd.f32 0.0, %v1310
      %v1312 = vpop.f32.mrb[0].mxu0
      %v1313 = vpop.f32.mrb[0].mxu0
      %v1314 = vadd.f32 0.0, %v1313
      %v1315 = vpop.f32.mrb[0].mxu0
      %1316 = vmatprep.mubr.bf16.mxu0 0
      %1317 = vmatmul.mubr.bf16.gmra.mrb[0].mxu0 %v1199
      %v1318 = vpop.f32.mrb[0].mxu0
      %v1319 = vadd.f32 0.0, %v1318
      %v1320 = vpop.f32.mrb[0].mxu0
      %v1321 = vpop.f32.mrb[0].mxu0
      %v1322 = vadd.f32 0.0, %v1321
      %v1323 = vpop.f32.mrb[0].mxu0
      %1324 = vmatprep.mubr.bf16.mxu0 0
      %1325 = vmatmul.mubr.bf16.gmra.mrb[0].mxu0 %v1202
      %v1326 = vpop.f32.mrb[0].mxu0
      %v1327 = vadd.f32 0.0, %v1326
      %v1328 = vpop.f32.mrb[0].mxu0
      %v1329 = vpop.f32.mrb[0].mxu0
      %v1330 = vadd.f32 0.0, %v1329
      %v1331 = vpop.f32.mrb[0].mxu0
      %1332 = vmatprep.mubr.bf16.mxu0 0
      %1333 = vmatmul.mubr.bf16.gmra.mrb[0].mxu0 %v1205
      %v1334 = vpop.f32.mrb[0].mxu0
      %v1335 = vadd.f32 0.0, %v1334
      %v1336 = vpop.f32.mrb[0].mxu0
      %v1337 = vpop.f32.mrb[0].mxu0
      %v1338 = vadd.f32 0.0, %v1337
      %v1339 = vpop.f32.mrb[0].mxu0
      %1340 = vmatprep.mubr.bf16.mxu0 0
      %1341 = vmatmul.mubr.bf16.gmra.mrb[0].mxu0 %v1208
      %v1342 = vpop.f32.mrb[0].mxu0
      %v1343 = vadd.f32 0.0, %v1342
      %v1344 = vpop.f32.mrb[0].mxu0
      %v1345 = vpop.f32.mrb[0].mxu0
      %v1346 = vadd.f32 0.0, %v1345
      %v1347 = vpop.f32.mrb[0].mxu0
      %1348 = vmatprep.mubr.bf16.mxu0 0
      %1349 = vmatmul.mubr.bf16.gmra.mrb[0].mxu0 %v1211
      %v1350 = vpop.f32.mrb[0].mxu0
      %v1351 = vadd.f32 0.0, %v1350
      %v1352 = vpop.f32.mrb[0].mxu0
      %v1353 = vpop.f32.mrb[0].mxu0
      %v1354 = vadd.f32 0.0, %v1353
      %v1355 = vpop.f32.mrb[0].mxu0
      %1356 = vmatprep.mubr.bf16.mxu0 0
      %1357 = vmatmul.mubr.bf16.gmra.mrb[0].mxu0 %v1214
      %v1358 = vpop.f32.mrb[0].mxu0
      %v1359 = vadd.f32 0.0, %v1358
      %v1360 = vpop.f32.mrb[0].mxu0
      %v1361 = vpop.f32.mrb[0].mxu0
      %v1362 = vadd.f32 0.0, %v1361
      %v1363 = vpop.f32.mrb[0].mxu0
      %1364 = vmatprep.mubr.bf16.mxu0 0
      %1365 = vmatmul.mubr.bf16.gmra.mrb[0].mxu0 %v1217
      %v1366 = vpop.f32.mrb[0].mxu0
      %v1367 = vadd.f32 0.0, %v1366
      %v1368 = vpop.f32.mrb[0].mxu0
      %v1369 = vpop.f32.mrb[0].mxu0
      %v1370 = vadd.f32 0.0, %v1369
      %v1371 = vpop.f32.mrb[0].mxu0
      %1372 = vmatprep.mubr.bf16.mxu0 0
      %1373 = vmatmul.mubr.bf16.gmra.mrb[0].mxu0 %v1220
      %v1374 = vpop.f32.mrb[0].mxu0
      %v1375 = vadd.f32 0.0, %v1374
      %v1376 = vpop.f32.mrb[0].mxu0
      %v1377 = vpop.f32.mrb[0].mxu0
      %v1378 = vadd.f32 0.0, %v1377
      %v1379 = vpop.f32.mrb[0].mxu0
      %1380 = vmatprep.mubr.bf16.mxu0 0
      %1381 = vmatmul.mubr.bf16.gmra.mrb[0].mxu0 %v1223
      %v1382 = vpop.f32.mrb[0].mxu0
      %v1383 = vadd.f32 0.0, %v1382
      %v1384 = vpop.f32.mrb[0].mxu0
      %v1385 = vpop.f32.mrb[0].mxu0
      %v1386 = vadd.f32 0.0, %v1385
      %v1387 = vpop.f32.mrb[0].mxu0
      %1388 = vdwg.mxu0
      %v1389 = vadd.f32 %v1095, %v1263
      %v1390 = vadd.f32 %v1096, %v1266
      %v1391 = vadd.f32 %v1097, %v1271
      %v1392 = vadd.f32 %v1098, %v1274
      %v1393 = vadd.f32 %v1099, %v1279
      %v1394 = vadd.f32 %v1100, %v1282
      %v1395 = vadd.f32 %v1101, %v1287
      %v1396 = vadd.f32 %v1102, %v1290
      %v1397 = vadd.f32 %v1103, %v1295
      %v1398 = vadd.f32 %v1104, %v1298
      %v1399 = vadd.f32 %v1105, %v1303
      %v1400 = vadd.f32 %v1106, %v1306
      %v1401 = vadd.f32 %v1107, %v1311
      %v1402 = vadd.f32 %v1108, %v1314
      %v1403 = vadd.f32 %v1109, %v1319
      %v1404 = vadd.f32 %v1110, %v1322
      %v1405 = vadd.f32 %v1111, %v1327
      %v1406 = vadd.f32 %v1112, %v1330
      %v1407 = vadd.f32 %v1113, %v1335
      %v1408 = vadd.f32 %v1114, %v1338
      %v1409 = vadd.f32 %v1115, %v1343
      %v1410 = vadd.f32 %v1116, %v1346
      %v1411 = vadd.f32 %v1117, %v1351
      %v1412 = vadd.f32 %v1118, %v1354
      %v1413 = vadd.f32 %v1119, %v1359
      %v1414 = vadd.f32 %v1120, %v1362
      %v1415 = vadd.f32 %v1121, %v1367
      %v1416 = vadd.f32 %v1122, %v1370
      %v1417 = vadd.f32 %v1123, %v1375
      %v1418 = vadd.f32 %v1124, %v1378
      %v1419 = vadd.f32 %v1125, %v1383
      %v1420 = vadd.f32 %v1126, %v1386
      %v1421 = vld [vmem:[%s482] sm:$0xff]
      %v1422 = vld [vmem:[%s482 + $0x8] sm:$0xff]
      %v1423 = vld [vmem:[%s482 + $0x18] sm:$0xff]
      %v1424 = vld [vmem:[%s482 + $0x20] sm:$0xff]
      %v1425 = vld [vmem:[%s482 + $0x30] sm:$0xff]
      %v1426 = vld [vmem:[%s482 + $0x38] sm:$0xff]
      %v1427 = vld [vmem:[%s482 + $0x48] sm:$0xff]
      %v1428 = vld [vmem:[%s482 + $0x50] sm:$0xff]
      %v1429 = vld [vmem:[%s482 + $0x60] sm:$0xff]
      %v1430 = vld [vmem:[%s482 + $0x68] sm:$0xff]
      %v1431 = vld [vmem:[%s482 + $0x78] sm:$0xff]
      %v1432 = vld [vmem:[%s482 + $0x80] sm:$0xff]
      %v1433 = vld [vmem:[%s482 + $0x90] sm:$0xff]
      %v1434 = vld [vmem:[%s482 + $0x98] sm:$0xff]
      %v1435 = vld [vmem:[%s482 + $0xa8] sm:$0xff]
      %v1436 = vld [vmem:[%s482 + $0xb0] sm:$0xff]
      %v1437 = vld [vmem:[%s482 + $0xc0] sm:$0xff]
      %v1438 = vld [vmem:[%s482 + $0xc8] sm:$0xff]
      %v1439 = vld [vmem:[%s482 + $0xd8] sm:$0xff]
      %v1440 = vld [vmem:[%s482 + $0xe0] sm:$0xff]
      %v1441 = vld [vmem:[%s482 + $0xf0] sm:$0xff]
      %v1442 = vld [vmem:[%s482 + $0xf8] sm:$0xff]
      %v1443 = vld [vmem:[%s482 + $0x108] sm:$0xff]
      %v1444 = vld [vmem:[%s482 + $0x110] sm:$0xff]
      %v1445 = vld [vmem:[%s482 + $0x120] sm:$0xff]
      %v1446 = vld [vmem:[%s482 + $0x128] sm:$0xff]
      %v1447 = vld [vmem:[%s482 + $0x138] sm:$0xff]
      %v1448 = vld [vmem:[%s482 + $0x140] sm:$0xff]
      %v1449 = vld [vmem:[%s482 + $0x150] sm:$0xff]
      %v1450 = vld [vmem:[%s482 + $0x158] sm:$0xff]
      %v1451 = vld [vmem:[%s482 + $0x168] sm:$0xff]
      %v1452 = vld [vmem:[%s482 + $0x170] sm:$0xff]
      %v1453 = vpack.c.bf16 %v1422, %v1421
      %v1454 = vpack.c.bf16 %v1424, %v1423
      %v1455 = vpack.c.bf16 %v1426, %v1425
      %v1456 = vpack.c.bf16 %v1428, %v1427
      %v1457 = vpack.c.bf16 %v1430, %v1429
      %v1458 = vpack.c.bf16 %v1432, %v1431
      %v1459 = vpack.c.bf16 %v1434, %v1433
      %v1460 = vpack.c.bf16 %v1436, %v1435
      %v1461 = vpack.c.bf16 %v1438, %v1437
      %v1462 = vpack.c.bf16 %v1440, %v1439
      %v1463 = vpack.c.bf16 %v1442, %v1441
      %v1464 = vpack.c.bf16 %v1444, %v1443
      %v1465 = vpack.c.bf16 %v1446, %v1445
      %v1466 = vpack.c.bf16 %v1448, %v1447
      %v1467 = vpack.c.bf16 %v1450, %v1449
      %v1468 = vpack.c.bf16 %v1452, %v1451
      %s1469 = scalar_lea.vmem %s3, 12
      %v1470 = vld [vmem:[%s1469] sm:$0xf]
      %v1472 = vsel %vm394, %v1453, 0
      %v1475 = vsel %vm394, %v1454, 0
      %v1478 = vsel %vm394, %v1455, 0
      %v1481 = vsel %vm394, %v1456, 0
      %v1484 = vsel %vm394, %v1457, 0
      %v1487 = vsel %vm394, %v1458, 0
      %v1490 = vsel %vm394, %v1459, 0
      %v1493 = vsel %vm394, %v1460, 0
      %v1496 = vsel %vm394, %v1461, 0
      %v1499 = vsel %vm394, %v1462, 0
      %v1502 = vsel %vm394, %v1463, 0
      %v1505 = vsel %vm394, %v1464, 0
      %v1508 = vsel %vm394, %v1465, 0
      %v1511 = vsel %vm394, %v1466, 0
      %v1514 = vsel %vm394, %v1467, 0
      %v1517 = vsel %vm394, %v1468, 0
      %v1520 = vsel %vm636, %v1470, 0
      %1522 = vmatprep.subr.bf16.mxu0 0
      %1523 = vmatpush1.bf16.msra.mxu0 %v1520
      %1524 = vmatprep.subr.bf16.mxu0 0
      %1525 = vmatpush1.bf16.msra.mxu0 0
      %1526 = vmatprep.subr.bf16.mxu0 0
      %1527 = vmatpush1.bf16.msra.mxu0 0
      %1528 = vmatprep.subr.bf16.mxu0 0
      %1529 = vmatpush1.bf16.msra.mxu0 0
      %1530 = vmatprep.subr.bf16.mxu0 0
      %1531 = vmatpush1.bf16.msra.mxu0 0
      %1532 = vmatprep.subr.bf16.mxu0 0
      %1533 = vmatpush1.bf16.msra.mxu0 0
      %1534 = vmatprep.subr.bf16.mxu0 0
      %1535 = vmatpush1.bf16.msra.mxu0 0
      %1536 = vmatprep.subr.bf16.mxu0 0
      %1537 = vmatpush1.bf16.msra.mxu0 0
      %1538 = vmatprep.subr.bf16.mxu0 0
      %1539 = vmatpush1.bf16.msra.mxu0 0
      %1540 = vmatprep.subr.bf16.mxu0 0
      %1541 = vmatpush1.bf16.msra.mxu0 0
      %1542 = vmatprep.subr.bf16.mxu0 0
      %1543 = vmatpush1.bf16.msra.mxu0 0
      %1544 = vmatprep.subr.bf16.mxu0 0
      %1545 = vmatpush1.bf16.msra.mxu0 0
      %1546 = vmatprep.subr.bf16.mxu0 0
      %1547 = vmatpush1.bf16.msra.mxu0 0
      %1548 = vmatprep.subr.bf16.mxu0 0
      %1549 = vmatpush1.bf16.msra.mxu0 0
      %1550 = vmatprep.subr.bf16.mxu0 0
      %1551 = vmatpush1.bf16.msra.mxu0 0
      %1552 = vmatprep.subr.bf16.mxu0 0
      %1553 = vmatpush1.bf16.msra.mxu0 0
      %1554 = vmatprep.mubr.bf16.mxu0 0
      %1555 = vmatmul.mubr.bf16.gmra.mrb[0].mxu0 %v1472
      %v1556 = vpop.f32.mrb[0].mxu0
      %v1557 = vadd.f32 0.0, %v1556
      %v1558 = vpop.f32.mrb[0].mxu0
      %v1559 = vpop.f32.mrb[0].mxu0
      %v1560 = vadd.f32 0.0, %v1559
      %v1561 = vpop.f32.mrb[0].mxu0
      %1562 = vmatprep.mubr.bf16.mxu0 0
      %1563 = vmatmul.mubr.bf16.gmra.mrb[0].mxu0 %v1475
      %v1564 = vpop.f32.mrb[0].mxu0
      %v1565 = vadd.f32 0.0, %v1564
      %v1566 = vpop.f32.mrb[0].mxu0
      %v1567 = vpop.f32.mrb[0].mxu0
      %v1568 = vadd.f32 0.0, %v1567
      %v1569 = vpop.f32.mrb[0].mxu0
      %1570 = vmatprep.mubr.bf16.mxu0 0
      %1571 = vmatmul.mubr.bf16.gmra.mrb[0].mxu0 %v1478
      %v1572 = vpop.f32.mrb[0].mxu0
      %v1573 = vadd.f32 0.0, %v1572
      %v1574 = vpop.f32.mrb[0].mxu0
      %v1575 = vpop.f32.mrb[0].mxu0
      %v1576 = vadd.f32 0.0, %v1575
      %v1577 = vpop.f32.mrb[0].mxu0
      %1578 = vmatprep.mubr.bf16.mxu0 0
      %1579 = vmatmul.mubr.bf16.gmra.mrb[0].mxu0 %v1481
      %v1580 = vpop.f32.mrb[0].mxu0
      %v1581 = vadd.f32 0.0, %v1580
      %v1582 = vpop.f32.mrb[0].mxu0
      %v1583 = vpop.f32.mrb[0].mxu0
      %v1584 = vadd.f32 0.0, %v1583
      %v1585 = vpop.f32.mrb[0].mxu0
      %1586 = vmatprep.mubr.bf16.mxu0 0
      %1587 = vmatmul.mubr.bf16.gmra.mrb[0].mxu0 %v1484
      %v1588 = vpop.f32.mrb[0].mxu0
      %v1589 = vadd.f32 0.0, %v1588
      %v1590 = vpop.f32.mrb[0].mxu0
      %v1591 = vpop.f32.mrb[0].mxu0
      %v1592 = vadd.f32 0.0, %v1591
      %v1593 = vpop.f32.mrb[0].mxu0
      %1594 = vmatprep.mubr.bf16.mxu0 0
      %1595 = vmatmul.mubr.bf16.gmra.mrb[0].mxu0 %v1487
      %v1596 = vpop.f32.mrb[0].mxu0
      %v1597 = vadd.f32 0.0, %v1596
      %v1598 = vpop.f32.mrb[0].mxu0
      %v1599 = vpop.f32.mrb[0].mxu0
      %v1600 = vadd.f32 0.0, %v1599
      %v1601 = vpop.f32.mrb[0].mxu0
      %1602 = vmatprep.mubr.bf16.mxu0 0
      %1603 = vmatmul.mubr.bf16.gmra.mrb[0].mxu0 %v1490
      %v1604 = vpop.f32.mrb[0].mxu0
      %v1605 = vadd.f32 0.0, %v1604
      %v1606 = vpop.f32.mrb[0].mxu0
      %v1607 = vpop.f32.mrb[0].mxu0
      %v1608 = vadd.f32 0.0, %v1607
      %v1609 = vpop.f32.mrb[0].mxu0
      %1610 = vmatprep.mubr.bf16.mxu0 0
      %1611 = vmatmul.mubr.bf16.gmra.mrb[0].mxu0 %v1493
      %v1612 = vpop.f32.mrb[0].mxu0
      %v1613 = vadd.f32 0.0, %v1612
      %v1614 = vpop.f32.mrb[0].mxu0
      %v1615 = vpop.f32.mrb[0].mxu0
      %v1616 = vadd.f32 0.0, %v1615
      %v1617 = vpop.f32.mrb[0].mxu0
      %1618 = vmatprep.mubr.bf16.mxu0 0
      %1619 = vmatmul.mubr.bf16.gmra.mrb[0].mxu0 %v1496
      %v1620 = vpop.f32.mrb[0].mxu0
      %v1621 = vadd.f32 0.0, %v1620
      %v1622 = vpop.f32.mrb[0].mxu0
      %v1623 = vpop.f32.mrb[0].mxu0
      %v1624 = vadd.f32 0.0, %v1623
      %v1625 = vpop.f32.mrb[0].mxu0
      %1626 = vmatprep.mubr.bf16.mxu0 0
      %1627 = vmatmul.mubr.bf16.gmra.mrb[0].mxu0 %v1499
      %v1628 = vpop.f32.mrb[0].mxu0
      %v1629 = vadd.f32 0.0, %v1628
      %v1630 = vpop.f32.mrb[0].mxu0
      %v1631 = vpop.f32.mrb[0].mxu0
      %v1632 = vadd.f32 0.0, %v1631
      %v1633 = vpop.f32.mrb[0].mxu0
      %1634 = vmatprep.mubr.bf16.mxu0 0
      %1635 = vmatmul.mubr.bf16.gmra.mrb[0].mxu0 %v1502
      %v1636 = vpop.f32.mrb[0].mxu0
      %v1637 = vadd.f32 0.0, %v1636
      %v1638 = vpop.f32.mrb[0].mxu0
      %v1639 = vpop.f32.mrb[0].mxu0
      %v1640 = vadd.f32 0.0, %v1639
      %v1641 = vpop.f32.mrb[0].mxu0
      %1642 = vmatprep.mubr.bf16.mxu0 0
      %1643 = vmatmul.mubr.bf16.gmra.mrb[0].mxu0 %v1505
      %v1644 = vpop.f32.mrb[0].mxu0
      %v1645 = vadd.f32 0.0, %v1644
      %v1646 = vpop.f32.mrb[0].mxu0
      %v1647 = vpop.f32.mrb[0].mxu0
      %v1648 = vadd.f32 0.0, %v1647
      %v1649 = vpop.f32.mrb[0].mxu0
      %1650 = vmatprep.mubr.bf16.mxu0 0
      %1651 = vmatmul.mubr.bf16.gmra.mrb[0].mxu0 %v1508
      %v1652 = vpop.f32.mrb[0].mxu0
      %v1653 = vadd.f32 0.0, %v1652
      %v1654 = vpop.f32.mrb[0].mxu0
      %v1655 = vpop.f32.mrb[0].mxu0
      %v1656 = vadd.f32 0.0, %v1655
      %v1657 = vpop.f32.mrb[0].mxu0
      %1658 = vmatprep.mubr.bf16.mxu0 0
      %1659 = vmatmul.mubr.bf16.gmra.mrb[0].mxu0 %v1511
      %v1660 = vpop.f32.mrb[0].mxu0
      %v1661 = vadd.f32 0.0, %v1660
      %v1662 = vpop.f32.mrb[0].mxu0
      %v1663 = vpop.f32.mrb[0].mxu0
      %v1664 = vadd.f32 0.0, %v1663
      %v1665 = vpop.f32.mrb[0].mxu0
      %1666 = vmatprep.mubr.bf16.mxu0 0
      %1667 = vmatmul.mubr.bf16.gmra.mrb[0].mxu0 %v1514
      %v1668 = vpop.f32.mrb[0].mxu0
      %v1669 = vadd.f32 0.0, %v1668
      %v1670 = vpop.f32.mrb[0].mxu0
      %v1671 = vpop.f32.mrb[0].mxu0
      %v1672 = vadd.f32 0.0, %v1671
      %v1673 = vpop.f32.mrb[0].mxu0
      %1674 = vmatprep.mubr.bf16.mxu0 0
      %1675 = vmatmul.mubr.bf16.gmra.mrb[0].mxu0 %v1517
      %v1676 = vpop.f32.mrb[0].mxu0
      %v1677 = vadd.f32 0.0, %v1676
      %v1678 = vpop.f32.mrb[0].mxu0
      %v1679 = vpop.f32.mrb[0].mxu0
      %v1680 = vadd.f32 0.0, %v1679
      %v1681 = vpop.f32.mrb[0].mxu0
      %1682 = vdwg.mxu0
      %v1683 = vadd.f32 %v1389, %v1557
      %v1684 = vadd.f32 %v1390, %v1560
      %v1685 = vadd.f32 %v1391, %v1565
      %v1686 = vadd.f32 %v1392, %v1568
      %v1687 = vadd.f32 %v1393, %v1573
      %v1688 = vadd.f32 %v1394, %v1576
      %v1689 = vadd.f32 %v1395, %v1581
      %v1690 = vadd.f32 %v1396, %v1584
      %v1691 = vadd.f32 %v1397, %v1589
      %v1692 = vadd.f32 %v1398, %v1592
      %v1693 = vadd.f32 %v1399, %v1597
      %v1694 = vadd.f32 %v1400, %v1600
      %v1695 = vadd.f32 %v1401, %v1605
      %v1696 = vadd.f32 %v1402, %v1608
      %v1697 = vadd.f32 %v1403, %v1613
      %v1698 = vadd.f32 %v1404, %v1616
      %v1699 = vadd.f32 %v1405, %v1621
      %v1700 = vadd.f32 %v1406, %v1624
      %v1701 = vadd.f32 %v1407, %v1629
      %v1702 = vadd.f32 %v1408, %v1632
      %v1703 = vadd.f32 %v1409, %v1637
      %v1704 = vadd.f32 %v1410, %v1640
      %v1705 = vadd.f32 %v1411, %v1645
      %v1706 = vadd.f32 %v1412, %v1648
      %v1707 = vadd.f32 %v1413, %v1653
      %v1708 = vadd.f32 %v1414, %v1656
      %v1709 = vadd.f32 %v1415, %v1661
      %v1710 = vadd.f32 %v1416, %v1664
      %v1711 = vadd.f32 %v1417, %v1669
      %v1712 = vadd.f32 %v1418, %v1672
      %v1713 = vadd.f32 %v1419, %v1677
      %v1714 = vadd.f32 %v1420, %v1680
      %v1715 = vld [vmem:[%s482 + $0x1] sm:$0xff]
      %v1716 = vld [vmem:[%s482 + $0x9] sm:$0xff]
      %v1717 = vld [vmem:[%s482 + $0x19] sm:$0xff]
      %v1718 = vld [vmem:[%s482 + $0x21] sm:$0xff]
      %v1719 = vld [vmem:[%s482 + $0x31] sm:$0xff]
      %v1720 = vld [vmem:[%s482 + $0x39] sm:$0xff]
      %v1721 = vld [vmem:[%s482 + $0x49] sm:$0xff]
      %v1722 = vld [vmem:[%s482 + $0x51] sm:$0xff]
      %v1723 = vld [vmem:[%s482 + $0x61] sm:$0xff]
      %v1724 = vld [vmem:[%s482 + $0x69] sm:$0xff]
      %v1725 = vld [vmem:[%s482 + $0x79] sm:$0xff]
      %v1726 = vld [vmem:[%s482 + $0x81] sm:$0xff]
      %v1727 = vld [vmem:[%s482 + $0x91] sm:$0xff]
      %v1728 = vld [vmem:[%s482 + $0x99] sm:$0xff]
      %v1729 = vld [vmem:[%s482 + $0xa9] sm:$0xff]
      %v1730 = vld [vmem:[%s482 + $0xb1] sm:$0xff]
      %v1731 = vld [vmem:[%s482 + $0xc1] sm:$0xff]
      %v1732 = vld [vmem:[%s482 + $0xc9] sm:$0xff]
      %v1733 = vld [vmem:[%s482 + $0xd9] sm:$0xff]
      %v1734 = vld [vmem:[%s482 + $0xe1] sm:$0xff]
      %v1735 = vld [vmem:[%s482 + $0xf1] sm:$0xff]
      %v1736 = vld [vmem:[%s482 + $0xf9] sm:$0xff]
      %v1737 = vld [vmem:[%s482 + $0x109] sm:$0xff]
      %v1738 = vld [vmem:[%s482 + $0x111] sm:$0xff]
      %v1739 = vld [vmem:[%s482 + $0x121] sm:$0xff]
      %v1740 = vld [vmem:[%s482 + $0x129] sm:$0xff]
      %v1741 = vld [vmem:[%s482 + $0x139] sm:$0xff]
      %v1742 = vld [vmem:[%s482 + $0x141] sm:$0xff]
      %v1743 = vld [vmem:[%s482 + $0x151] sm:$0xff]
      %v1744 = vld [vmem:[%s482 + $0x159] sm:$0xff]
      %v1745 = vld [vmem:[%s482 + $0x169] sm:$0xff]
      %v1746 = vld [vmem:[%s482 + $0x171] sm:$0xff]
      %v1747 = vpack.c.bf16 %v1716, %v1715
      %v1748 = vpack.c.bf16 %v1718, %v1717
      %v1749 = vpack.c.bf16 %v1720, %v1719
      %v1750 = vpack.c.bf16 %v1722, %v1721
      %v1751 = vpack.c.bf16 %v1724, %v1723
      %v1752 = vpack.c.bf16 %v1726, %v1725
      %v1753 = vpack.c.bf16 %v1728, %v1727
      %v1754 = vpack.c.bf16 %v1730, %v1729
      %v1755 = vpack.c.bf16 %v1732, %v1731
      %v1756 = vpack.c.bf16 %v1734, %v1733
      %v1757 = vpack.c.bf16 %v1736, %v1735
      %v1758 = vpack.c.bf16 %v1738, %v1737
      %v1759 = vpack.c.bf16 %v1740, %v1739
      %v1760 = vpack.c.bf16 %v1742, %v1741
      %v1761 = vpack.c.bf16 %v1744, %v1743
      %v1762 = vpack.c.bf16 %v1746, %v1745
      %s1763 = scalar_lea.vmem %s3, 16
      %v1764 = vld [vmem:[%s1763] sm:$0xf]
      %v1766 = vsel %vm394, %v1747, 0
      %v1769 = vsel %vm394, %v1748, 0
      %v1772 = vsel %vm394, %v1749, 0
      %v1775 = vsel %vm394, %v1750, 0
      %v1778 = vsel %vm394, %v1751, 0
      %v1781 = vsel %vm394, %v1752, 0
      %v1784 = vsel %vm394, %v1753, 0
      %v1787 = vsel %vm394, %v1754, 0
      %v1790 = vsel %vm394, %v1755, 0
      %v1793 = vsel %vm394, %v1756, 0
      %v1796 = vsel %vm394, %v1757, 0
      %v1799 = vsel %vm394, %v1758, 0
      %v1802 = vsel %vm394, %v1759, 0
      %v1805 = vsel %vm394, %v1760, 0
      %v1808 = vsel %vm394, %v1761, 0
      %v1811 = vsel %vm394, %v1762, 0
      %v1814 = vsel %vm636, %v1764, 0
      %1816 = vmatprep.subr.bf16.mxu0 0
      %1817 = vmatpush1.bf16.msra.mxu0 %v1814
      %1818 = vmatprep.subr.bf16.mxu0 0
      %1819 = vmatpush1.bf16.msra.mxu0 0
      %1820 = vmatprep.subr.bf16.mxu0 0
      %1821 = vmatpush1.bf16.msra.mxu0 0
      %1822 = vmatprep.subr.bf16.mxu0 0
      %1823 = vmatpush1.bf16.msra.mxu0 0
      %1824 = vmatprep.subr.bf16.mxu0 0
      %1825 = vmatpush1.bf16.msra.mxu0 0
      %1826 = vmatprep.subr.bf16.mxu0 0
      %1827 = vmatpush1.bf16.msra.mxu0 0
      %1828 = vmatprep.subr.bf16.mxu0 0
      %1829 = vmatpush1.bf16.msra.mxu0 0
      %1830 = vmatprep.subr.bf16.mxu0 0
      %1831 = vmatpush1.bf16.msra.mxu0 0
      %1832 = vmatprep.subr.bf16.mxu0 0
      %1833 = vmatpush1.bf16.msra.mxu0 0
      %1834 = vmatprep.subr.bf16.mxu0 0
      %1835 = vmatpush1.bf16.msra.mxu0 0
      %1836 = vmatprep.subr.bf16.mxu0 0
      %1837 = vmatpush1.bf16.msra.mxu0 0
      %1838 = vmatprep.subr.bf16.mxu0 0
      %1839 = vmatpush1.bf16.msra.mxu0 0
      %1840 = vmatprep.subr.bf16.mxu0 0
      %1841 = vmatpush1.bf16.msra.mxu0 0
      %1842 = vmatprep.subr.bf16.mxu0 0
      %1843 = vmatpush1.bf16.msra.mxu0 0
      %1844 = vmatprep.subr.bf16.mxu0 0
      %1845 = vmatpush1.bf16.msra.mxu0 0
      %1846 = vmatprep.subr.bf16.mxu0 0
      %1847 = vmatpush1.bf16.msra.mxu0 0
      %1848 = vmatprep.mubr.bf16.mxu0 0
      %1849 = vmatmul.mubr.bf16.gmra.mrb[0].mxu0 %v1766
      %v1850 = vpop.f32.mrb[0].mxu0
      %v1851 = vadd.f32 0.0, %v1850
      %v1852 = vpop.f32.mrb[0].mxu0
      %v1853 = vpop.f32.mrb[0].mxu0
      %v1854 = vadd.f32 0.0, %v1853
      %v1855 = vpop.f32.mrb[0].mxu0
      %1856 = vmatprep.mubr.bf16.mxu0 0
      %1857 = vmatmul.mubr.bf16.gmra.mrb[0].mxu0 %v1769
      %v1858 = vpop.f32.mrb[0].mxu0
      %v1859 = vadd.f32 0.0, %v1858
      %v1860 = vpop.f32.mrb[0].mxu0
      %v1861 = vpop.f32.mrb[0].mxu0
      %v1862 = vadd.f32 0.0, %v1861
      %v1863 = vpop.f32.mrb[0].mxu0
      %1864 = vmatprep.mubr.bf16.mxu0 0
      %1865 = vmatmul.mubr.bf16.gmra.mrb[0].mxu0 %v1772
      %v1866 = vpop.f32.mrb[0].mxu0
      %v1867 = vadd.f32 0.0, %v1866
      %v1868 = vpop.f32.mrb[0].mxu0
      %v1869 = vpop.f32.mrb[0].mxu0
      %v1870 = vadd.f32 0.0, %v1869
      %v1871 = vpop.f32.mrb[0].mxu0
      %1872 = vmatprep.mubr.bf16.mxu0 0
      %1873 = vmatmul.mubr.bf16.gmra.mrb[0].mxu0 %v1775
      %v1874 = vpop.f32.mrb[0].mxu0
      %v1875 = vadd.f32 0.0, %v1874
      %v1876 = vpop.f32.mrb[0].mxu0
      %v1877 = vpop.f32.mrb[0].mxu0
      %v1878 = vadd.f32 0.0, %v1877
      %v1879 = vpop.f32.mrb[0].mxu0
      %1880 = vmatprep.mubr.bf16.mxu0 0
      %1881 = vmatmul.mubr.bf16.gmra.mrb[0].mxu0 %v1778
      %v1882 = vpop.f32.mrb[0].mxu0
      %v1883 = vadd.f32 0.0, %v1882
      %v1884 = vpop.f32.mrb[0].mxu0
      %v1885 = vpop.f32.mrb[0].mxu0
      %v1886 = vadd.f32 0.0, %v1885
      %v1887 = vpop.f32.mrb[0].mxu0
      %1888 = vmatprep.mubr.bf16.mxu0 0
      %1889 = vmatmul.mubr.bf16.gmra.mrb[0].mxu0 %v1781
      %v1890 = vpop.f32.mrb[0].mxu0
      %v1891 = vadd.f32 0.0, %v1890
      %v1892 = vpop.f32.mrb[0].mxu0
      %v1893 = vpop.f32.mrb[0].mxu0
      %v1894 = vadd.f32 0.0, %v1893
      %v1895 = vpop.f32.mrb[0].mxu0
      %1896 = vmatprep.mubr.bf16.mxu0 0
      %1897 = vmatmul.mubr.bf16.gmra.mrb[0].mxu0 %v1784
      %v1898 = vpop.f32.mrb[0].mxu0
      %v1899 = vadd.f32 0.0, %v1898
      %v1900 = vpop.f32.mrb[0].mxu0
      %v1901 = vpop.f32.mrb[0].mxu0
      %v1902 = vadd.f32 0.0, %v1901
      %v1903 = vpop.f32.mrb[0].mxu0
      %1904 = vmatprep.mubr.bf16.mxu0 0
      %1905 = vmatmul.mubr.bf16.gmra.mrb[0].mxu0 %v1787
      %v1906 = vpop.f32.mrb[0].mxu0
      %v1907 = vadd.f32 0.0, %v1906
      %v1908 = vpop.f32.mrb[0].mxu0
      %v1909 = vpop.f32.mrb[0].mxu0
      %v1910 = vadd.f32 0.0, %v1909
      %v1911 = vpop.f32.mrb[0].mxu0
      %1912 = vmatprep.mubr.bf16.mxu0 0
      %1913 = vmatmul.mubr.bf16.gmra.mrb[0].mxu0 %v1790
      %v1914 = vpop.f32.mrb[0].mxu0
      %v1915 = vadd.f32 0.0, %v1914
      %v1916 = vpop.f32.mrb[0].mxu0
      %v1917 = vpop.f32.mrb[0].mxu0
      %v1918 = vadd.f32 0.0, %v1917
      %v1919 = vpop.f32.mrb[0].mxu0
      %1920 = vmatprep.mubr.bf16.mxu0 0
      %1921 = vmatmul.mubr.bf16.gmra.mrb[0].mxu0 %v1793
      %v1922 = vpop.f32.mrb[0].mxu0
      %v1923 = vadd.f32 0.0, %v1922
      %v1924 = vpop.f32.mrb[0].mxu0
      %v1925 = vpop.f32.mrb[0].mxu0
      %v1926 = vadd.f32 0.0, %v1925
      %v1927 = vpop.f32.mrb[0].mxu0
      %1928 = vmatprep.mubr.bf16.mxu0 0
      %1929 = vmatmul.mubr.bf16.gmra.mrb[0].mxu0 %v1796
      %v1930 = vpop.f32.mrb[0].mxu0
      %v1931 = vadd.f32 0.0, %v1930
      %v1932 = vpop.f32.mrb[0].mxu0
      %v1933 = vpop.f32.mrb[0].mxu0
      %v1934 = vadd.f32 0.0, %v1933
      %v1935 = vpop.f32.mrb[0].mxu0
      %1936 = vmatprep.mubr.bf16.mxu0 0
      %1937 = vmatmul.mubr.bf16.gmra.mrb[0].mxu0 %v1799
      %v1938 = vpop.f32.mrb[0].mxu0
      %v1939 = vadd.f32 0.0, %v1938
      %v1940 = vpop.f32.mrb[0].mxu0
      %v1941 = vpop.f32.mrb[0].mxu0
      %v1942 = vadd.f32 0.0, %v1941
      %v1943 = vpop.f32.mrb[0].mxu0
      %1944 = vmatprep.mubr.bf16.mxu0 0
      %1945 = vmatmul.mubr.bf16.gmra.mrb[0].mxu0 %v1802
      %v1946 = vpop.f32.mrb[0].mxu0
      %v1947 = vadd.f32 0.0, %v1946
      %v1948 = vpop.f32.mrb[0].mxu0
      %v1949 = vpop.f32.mrb[0].mxu0
      %v1950 = vadd.f32 0.0, %v1949
      %v1951 = vpop.f32.mrb[0].mxu0
      %1952 = vmatprep.mubr.bf16.mxu0 0
      %1953 = vmatmul.mubr.bf16.gmra.mrb[0].mxu0 %v1805
      %v1954 = vpop.f32.mrb[0].mxu0
      %v1955 = vadd.f32 0.0, %v1954
      %v1956 = vpop.f32.mrb[0].mxu0
      %v1957 = vpop.f32.mrb[0].mxu0
      %v1958 = vadd.f32 0.0, %v1957
      %v1959 = vpop.f32.mrb[0].mxu0
      %1960 = vmatprep.mubr.bf16.mxu0 0
      %1961 = vmatmul.mubr.bf16.gmra.mrb[0].mxu0 %v1808
      %v1962 = vpop.f32.mrb[0].mxu0
      %v1963 = vadd.f32 0.0, %v1962
      %v1964 = vpop.f32.mrb[0].mxu0
      %v1965 = vpop.f32.mrb[0].mxu0
      %v1966 = vadd.f32 0.0, %v1965
      %v1967 = vpop.f32.mrb[0].mxu0
      %1968 = vmatprep.mubr.bf16.mxu0 0
      %1969 = vmatmul.mubr.bf16.gmra.mrb[0].mxu0 %v1811
      %v1970 = vpop.f32.mrb[0].mxu0
      %v1971 = vadd.f32 0.0, %v1970
      %v1972 = vpop.f32.mrb[0].mxu0
      %v1973 = vpop.f32.mrb[0].mxu0
      %v1974 = vadd.f32 0.0, %v1973
      %v1975 = vpop.f32.mrb[0].mxu0
      %1976 = vdwg.mxu0
      %v1977 = vadd.f32 %v1683, %v1851
      %v1978 = vadd.f32 %v1684, %v1854
      %v1979 = vadd.f32 %v1685, %v1859
      %v1980 = vadd.f32 %v1686, %v1862
      %v1981 = vadd.f32 %v1687, %v1867
      %v1982 = vadd.f32 %v1688, %v1870
      %v1983 = vadd.f32 %v1689, %v1875
      %v1984 = vadd.f32 %v1690, %v1878
      %v1985 = vadd.f32 %v1691, %v1883
      %v1986 = vadd.f32 %v1692, %v1886
      %v1987 = vadd.f32 %v1693, %v1891
      %v1988 = vadd.f32 %v1694, %v1894
      %v1989 = vadd.f32 %v1695, %v1899
      %v1990 = vadd.f32 %v1696, %v1902
      %v1991 = vadd.f32 %v1697, %v1907
      %v1992 = vadd.f32 %v1698, %v1910
      %v1993 = vadd.f32 %v1699, %v1915
      %v1994 = vadd.f32 %v1700, %v1918
      %v1995 = vadd.f32 %v1701, %v1923
      %v1996 = vadd.f32 %v1702, %v1926
      %v1997 = vadd.f32 %v1703, %v1931
      %v1998 = vadd.f32 %v1704, %v1934
      %v1999 = vadd.f32 %v1705, %v1939
      %v2000 = vadd.f32 %v1706, %v1942
      %v2001 = vadd.f32 %v1707, %v1947
      %v2002 = vadd.f32 %v1708, %v1950
      %v2003 = vadd.f32 %v1709, %v1955
      %v2004 = vadd.f32 %v1710, %v1958
      %v2005 = vadd.f32 %v1711, %v1963
      %v2006 = vadd.f32 %v1712, %v1966
      %v2007 = vadd.f32 %v1713, %v1971
      %v2008 = vadd.f32 %v1714, %v1974
      %v2009 = vld [vmem:[%s482 + $0x2] sm:$0xff]
      %v2010 = vld [vmem:[%s482 + $0xa] sm:$0xff]
      %v2011 = vld [vmem:[%s482 + $0x1a] sm:$0xff]
      %v2012 = vld [vmem:[%s482 + $0x22] sm:$0xff]
      %v2013 = vld [vmem:[%s482 + $0x32] sm:$0xff]
      %v2014 = vld [vmem:[%s482 + $0x3a] sm:$0xff]
      %v2015 = vld [vmem:[%s482 + $0x4a] sm:$0xff]
      %v2016 = vld [vmem:[%s482 + $0x52] sm:$0xff]
      %v2017 = vld [vmem:[%s482 + $0x62] sm:$0xff]
      %v2018 = vld [vmem:[%s482 + $0x6a] sm:$0xff]
      %v2019 = vld [vmem:[%s482 + $0x7a] sm:$0xff]
      %v2020 = vld [vmem:[%s482 + $0x82] sm:$0xff]
      %v2021 = vld [vmem:[%s482 + $0x92] sm:$0xff]
      %v2022 = vld [vmem:[%s482 + $0x9a] sm:$0xff]
      %v2023 = vld [vmem:[%s482 + $0xaa] sm:$0xff]
      %v2024 = vld [vmem:[%s482 + $0xb2] sm:$0xff]
      %v2025 = vld [vmem:[%s482 + $0xc2] sm:$0xff]
      %v2026 = vld [vmem:[%s482 + $0xca] sm:$0xff]
      %v2027 = vld [vmem:[%s482 + $0xda] sm:$0xff]
      %v2028 = vld [vmem:[%s482 + $0xe2] sm:$0xff]
      %v2029 = vld [vmem:[%s482 + $0xf2] sm:$0xff]
      %v2030 = vld [vmem:[%s482 + $0xfa] sm:$0xff]
      %v2031 = vld [vmem:[%s482 + $0x10a] sm:$0xff]
      %v2032 = vld [vmem:[%s482 + $0x112] sm:$0xff]
      %v2033 = vld [vmem:[%s482 + $0x122] sm:$0xff]
      %v2034 = vld [vmem:[%s482 + $0x12a] sm:$0xff]
      %v2035 = vld [vmem:[%s482 + $0x13a] sm:$0xff]
      %v2036 = vld [vmem:[%s482 + $0x142] sm:$0xff]
      %v2037 = vld [vmem:[%s482 + $0x152] sm:$0xff]
      %v2038 = vld [vmem:[%s482 + $0x15a] sm:$0xff]
      %v2039 = vld [vmem:[%s482 + $0x16a] sm:$0xff]
      %v2040 = vld [vmem:[%s482 + $0x172] sm:$0xff]
      %v2041 = vpack.c.bf16 %v2010, %v2009
      %v2042 = vpack.c.bf16 %v2012, %v2011
      %v2043 = vpack.c.bf16 %v2014, %v2013
      %v2044 = vpack.c.bf16 %v2016, %v2015
      %v2045 = vpack.c.bf16 %v2018, %v2017
      %v2046 = vpack.c.bf16 %v2020, %v2019
      %v2047 = vpack.c.bf16 %v2022, %v2021
      %v2048 = vpack.c.bf16 %v2024, %v2023
      %v2049 = vpack.c.bf16 %v2026, %v2025
      %v2050 = vpack.c.bf16 %v2028, %v2027
      %v2051 = vpack.c.bf16 %v2030, %v2029
      %v2052 = vpack.c.bf16 %v2032, %v2031
      %v2053 = vpack.c.bf16 %v2034, %v2033
      %v2054 = vpack.c.bf16 %v2036, %v2035
      %v2055 = vpack.c.bf16 %v2038, %v2037
      %v2056 = vpack.c.bf16 %v2040, %v2039
      %s2057 = scalar_lea.vmem %s3, 20
      %v2058 = vld [vmem:[%s2057] sm:$0xf]
      %v2060 = vsel %vm394, %v2041, 0
      %v2063 = vsel %vm394, %v2042, 0
      %v2066 = vsel %vm394, %v2043, 0
      %v2069 = vsel %vm394, %v2044, 0
      %v2072 = vsel %vm394, %v2045, 0
      %v2075 = vsel %vm394, %v2046, 0
      %v2078 = vsel %vm394, %v2047, 0
      %v2081 = vsel %vm394, %v2048, 0
      %v2084 = vsel %vm394, %v2049, 0
      %v2087 = vsel %vm394, %v2050, 0
      %v2090 = vsel %vm394, %v2051, 0
      %v2093 = vsel %vm394, %v2052, 0
      %v2096 = vsel %vm394, %v2053, 0
      %v2099 = vsel %vm394, %v2054, 0
      %v2102 = vsel %vm394, %v2055, 0
      %v2105 = vsel %vm394, %v2056, 0
      %v2108 = vsel %vm636, %v2058, 0
      %2110 = vmatprep.subr.bf16.mxu0 0
      %2111 = vmatpush1.bf16.msra.mxu0 %v2108
      %2112 = vmatprep.subr.bf16.mxu0 0
      %2113 = vmatpush1.bf16.msra.mxu0 0
      %2114 = vmatprep.subr.bf16.mxu0 0
      %2115 = vmatpush1.bf16.msra.mxu0 0
      %2116 = vmatprep.subr.bf16.mxu0 0
      %2117 = vmatpush1.bf16.msra.mxu0 0
      %2118 = vmatprep.subr.bf16.mxu0 0
      %2119 = vmatpush1.bf16.msra.mxu0 0
      %2120 = vmatprep.subr.bf16.mxu0 0
      %2121 = vmatpush1.bf16.msra.mxu0 0
      %2122 = vmatprep.subr.bf16.mxu0 0
      %2123 = vmatpush1.bf16.msra.mxu0 0
      %2124 = vmatprep.subr.bf16.mxu0 0
      %2125 = vmatpush1.bf16.msra.mxu0 0
      %2126 = vmatprep.subr.bf16.mxu0 0
      %2127 = vmatpush1.bf16.msra.mxu0 0
      %2128 = vmatprep.subr.bf16.mxu0 0
      %2129 = vmatpush1.bf16.msra.mxu0 0
      %2130 = vmatprep.subr.bf16.mxu0 0
      %2131 = vmatpush1.bf16.msra.mxu0 0
      %2132 = vmatprep.subr.bf16.mxu0 0
      %2133 = vmatpush1.bf16.msra.mxu0 0
      %2134 = vmatprep.subr.bf16.mxu0 0
      %2135 = vmatpush1.bf16.msra.mxu0 0
      %2136 = vmatprep.subr.bf16.mxu0 0
      %2137 = vmatpush1.bf16.msra.mxu0 0
      %2138 = vmatprep.subr.bf16.mxu0 0
      %2139 = vmatpush1.bf16.msra.mxu0 0
      %2140 = vmatprep.subr.bf16.mxu0 0
      %2141 = vmatpush1.bf16.msra.mxu0 0
      %2142 = vmatprep.mubr.bf16.mxu0 0
      %2143 = vmatmul.mubr.bf16.gmra.mrb[0].mxu0 %v2060
      %v2144 = vpop.f32.mrb[0].mxu0
      %v2145 = vadd.f32 0.0, %v2144
      %v2146 = vpop.f32.mrb[0].mxu0
      %v2147 = vpop.f32.mrb[0].mxu0
      %v2148 = vadd.f32 0.0, %v2147
      %v2149 = vpop.f32.mrb[0].mxu0
      %2150 = vmatprep.mubr.bf16.mxu0 0
      %2151 = vmatmul.mubr.bf16.gmra.mrb[0].mxu0 %v2063
      %v2152 = vpop.f32.mrb[0].mxu0
      %v2153 = vadd.f32 0.0, %v2152
      %v2154 = vpop.f32.mrb[0].mxu0
      %v2155 = vpop.f32.mrb[0].mxu0
      %v2156 = vadd.f32 0.0, %v2155
      %v2157 = vpop.f32.mrb[0].mxu0
      %2158 = vmatprep.mubr.bf16.mxu0 0
      %2159 = vmatmul.mubr.bf16.gmra.mrb[0].mxu0 %v2066
      %v2160 = vpop.f32.mrb[0].mxu0
      %v2161 = vadd.f32 0.0, %v2160
      %v2162 = vpop.f32.mrb[0].mxu0
      %v2163 = vpop.f32.mrb[0].mxu0
      %v2164 = vadd.f32 0.0, %v2163
      %v2165 = vpop.f32.mrb[0].mxu0
      %2166 = vmatprep.mubr.bf16.mxu0 0
      %2167 = vmatmul.mubr.bf16.gmra.mrb[0].mxu0 %v2069
      %v2168 = vpop.f32.mrb[0].mxu0
      %v2169 = vadd.f32 0.0, %v2168
      %v2170 = vpop.f32.mrb[0].mxu0
      %v2171 = vpop.f32.mrb[0].mxu0
      %v2172 = vadd.f32 0.0, %v2171
      %v2173 = vpop.f32.mrb[0].mxu0
      %2174 = vmatprep.mubr.bf16.mxu0 0
      %2175 = vmatmul.mubr.bf16.gmra.mrb[0].mxu0 %v2072
      %v2176 = vpop.f32.mrb[0].mxu0
      %v2177 = vadd.f32 0.0, %v2176
      %v2178 = vpop.f32.mrb[0].mxu0
      %v2179 = vpop.f32.mrb[0].mxu0
      %v2180 = vadd.f32 0.0, %v2179
      %v2181 = vpop.f32.mrb[0].mxu0
      %2182 = vmatprep.mubr.bf16.mxu0 0
      %2183 = vmatmul.mubr.bf16.gmra.mrb[0].mxu0 %v2075
      %v2184 = vpop.f32.mrb[0].mxu0
      %v2185 = vadd.f32 0.0, %v2184
      %v2186 = vpop.f32.mrb[0].mxu0
      %v2187 = vpop.f32.mrb[0].mxu0
      %v2188 = vadd.f32 0.0, %v2187
      %v2189 = vpop.f32.mrb[0].mxu0
      %2190 = vmatprep.mubr.bf16.mxu0 0
      %2191 = vmatmul.mubr.bf16.gmra.mrb[0].mxu0 %v2078
      %v2192 = vpop.f32.mrb[0].mxu0
      %v2193 = vadd.f32 0.0, %v2192
      %v2194 = vpop.f32.mrb[0].mxu0
      %v2195 = vpop.f32.mrb[0].mxu0
      %v2196 = vadd.f32 0.0, %v2195
      %v2197 = vpop.f32.mrb[0].mxu0
      %2198 = vmatprep.mubr.bf16.mxu0 0
      %2199 = vmatmul.mubr.bf16.gmra.mrb[0].mxu0 %v2081
      %v2200 = vpop.f32.mrb[0].mxu0
      %v2201 = vadd.f32 0.0, %v2200
      %v2202 = vpop.f32.mrb[0].mxu0
      %v2203 = vpop.f32.mrb[0].mxu0
      %v2204 = vadd.f32 0.0, %v2203
      %v2205 = vpop.f32.mrb[0].mxu0
      %2206 = vmatprep.mubr.bf16.mxu0 0
      %2207 = vmatmul.mubr.bf16.gmra.mrb[0].mxu0 %v2084
      %v2208 = vpop.f32.mrb[0].mxu0
      %v2209 = vadd.f32 0.0, %v2208
      %v2210 = vpop.f32.mrb[0].mxu0
      %v2211 = vpop.f32.mrb[0].mxu0
      %v2212 = vadd.f32 0.0, %v2211
      %v2213 = vpop.f32.mrb[0].mxu0
      %2214 = vmatprep.mubr.bf16.mxu0 0
      %2215 = vmatmul.mubr.bf16.gmra.mrb[0].mxu0 %v2087
      %v2216 = vpop.f32.mrb[0].mxu0
      %v2217 = vadd.f32 0.0, %v2216
      %v2218 = vpop.f32.mrb[0].mxu0
      %v2219 = vpop.f32.mrb[0].mxu0
      %v2220 = vadd.f32 0.0, %v2219
      %v2221 = vpop.f32.mrb[0].mxu0
      %2222 = vmatprep.mubr.bf16.mxu0 0
      %2223 = vmatmul.mubr.bf16.gmra.mrb[0].mxu0 %v2090
      %v2224 = vpop.f32.mrb[0].mxu0
      %v2225 = vadd.f32 0.0, %v2224
      %v2226 = vpop.f32.mrb[0].mxu0
      %v2227 = vpop.f32.mrb[0].mxu0
      %v2228 = vadd.f32 0.0, %v2227
      %v2229 = vpop.f32.mrb[0].mxu0
      %2230 = vmatprep.mubr.bf16.mxu0 0
      %2231 = vmatmul.mubr.bf16.gmra.mrb[0].mxu0 %v2093
      %v2232 = vpop.f32.mrb[0].mxu0
      %v2233 = vadd.f32 0.0, %v2232
      %v2234 = vpop.f32.mrb[0].mxu0
      %v2235 = vpop.f32.mrb[0].mxu0
      %v2236 = vadd.f32 0.0, %v2235
      %v2237 = vpop.f32.mrb[0].mxu0
      %2238 = vmatprep.mubr.bf16.mxu0 0
      %2239 = vmatmul.mubr.bf16.gmra.mrb[0].mxu0 %v2096
      %v2240 = vpop.f32.mrb[0].mxu0
      %v2241 = vadd.f32 0.0, %v2240
      %v2242 = vpop.f32.mrb[0].mxu0
      %v2243 = vpop.f32.mrb[0].mxu0
      %v2244 = vadd.f32 0.0, %v2243
      %v2245 = vpop.f32.mrb[0].mxu0
      %2246 = vmatprep.mubr.bf16.mxu0 0
      %2247 = vmatmul.mubr.bf16.gmra.mrb[0].mxu0 %v2099
      %v2248 = vpop.f32.mrb[0].mxu0
      %v2249 = vadd.f32 0.0, %v2248
      %v2250 = vpop.f32.mrb[0].mxu0
      %v2251 = vpop.f32.mrb[0].mxu0
      %v2252 = vadd.f32 0.0, %v2251
      %v2253 = vpop.f32.mrb[0].mxu0
      %2254 = vmatprep.mubr.bf16.mxu0 0
      %2255 = vmatmul.mubr.bf16.gmra.mrb[0].mxu0 %v2102
      %v2256 = vpop.f32.mrb[0].mxu0
      %v2257 = vadd.f32 0.0, %v2256
      %v2258 = vpop.f32.mrb[0].mxu0
      %v2259 = vpop.f32.mrb[0].mxu0
      %v2260 = vadd.f32 0.0, %v2259
      %v2261 = vpop.f32.mrb[0].mxu0
      %2262 = vmatprep.mubr.bf16.mxu0 0
      %2263 = vmatmul.mubr.bf16.gmra.mrb[0].mxu0 %v2105
      %v2264 = vpop.f32.mrb[0].mxu0
      %v2265 = vadd.f32 0.0, %v2264
      %v2266 = vpop.f32.mrb[0].mxu0
      %v2267 = vpop.f32.mrb[0].mxu0
      %v2268 = vadd.f32 0.0, %v2267
      %v2269 = vpop.f32.mrb[0].mxu0
      %2270 = vdwg.mxu0
      %v2271 = vadd.f32 %v1977, %v2145
      %v2272 = vadd.f32 %v1978, %v2148
      %v2273 = vadd.f32 %v1979, %v2153
      %v2274 = vadd.f32 %v1980, %v2156
      %v2275 = vadd.f32 %v1981, %v2161
      %v2276 = vadd.f32 %v1982, %v2164
      %v2277 = vadd.f32 %v1983, %v2169
      %v2278 = vadd.f32 %v1984, %v2172
      %v2279 = vadd.f32 %v1985, %v2177
      %v2280 = vadd.f32 %v1986, %v2180
      %v2281 = vadd.f32 %v1987, %v2185
      %v2282 = vadd.f32 %v1988, %v2188
      %v2283 = vadd.f32 %v1989, %v2193
      %v2284 = vadd.f32 %v1990, %v2196
      %v2285 = vadd.f32 %v1991, %v2201
      %v2286 = vadd.f32 %v1992, %v2204
      %v2287 = vadd.f32 %v1993, %v2209
      %v2288 = vadd.f32 %v1994, %v2212
      %v2289 = vadd.f32 %v1995, %v2217
      %v2290 = vadd.f32 %v1996, %v2220
      %v2291 = vadd.f32 %v1997, %v2225
      %v2292 = vadd.f32 %v1998, %v2228
      %v2293 = vadd.f32 %v1999, %v2233
      %v2294 = vadd.f32 %v2000, %v2236
      %v2295 = vadd.f32 %v2001, %v2241
      %v2296 = vadd.f32 %v2002, %v2244
      %v2297 = vadd.f32 %v2003, %v2249
      %v2298 = vadd.f32 %v2004, %v2252
      %v2299 = vadd.f32 %v2005, %v2257
      %v2300 = vadd.f32 %v2006, %v2260
      %v2301 = vadd.f32 %v2007, %v2265
      %v2302 = vadd.f32 %v2008, %v2268
      %s2303 = scalar_lea.vmem [#allocation2], 48
      %v2304 = vld [vmem:[%s2303] sm:$0xff]
      %v2305 = vld [vmem:[%s2303 + $0x8] sm:$0xff]
      %v2306 = vld [vmem:[%s2303 + $0x18] sm:$0xff]
      %v2307 = vld [vmem:[%s2303 + $0x20] sm:$0xff]
      %v2308 = vld [vmem:[%s2303 + $0x30] sm:$0xff]
      %v2309 = vld [vmem:[%s2303 + $0x38] sm:$0xff]
      %v2310 = vld [vmem:[%s2303 + $0x48] sm:$0xff]
      %v2311 = vld [vmem:[%s2303 + $0x50] sm:$0xff]
      %v2312 = vld [vmem:[%s2303 + $0x60] sm:$0xff]
      %v2313 = vld [vmem:[%s2303 + $0x68] sm:$0xff]
      %v2314 = vld [vmem:[%s2303 + $0x78] sm:$0xff]
      %v2315 = vld [vmem:[%s2303 + $0x80] sm:$0xff]
      %v2316 = vld [vmem:[%s2303 + $0x90] sm:$0xff]
      %v2317 = vld [vmem:[%s2303 + $0x98] sm:$0xff]
      %v2318 = vld [vmem:[%s2303 + $0xa8] sm:$0xff]
      %v2319 = vld [vmem:[%s2303 + $0xb0] sm:$0xff]
      %v2320 = vld [vmem:[%s2303 + $0xc0] sm:$0xff]
      %v2321 = vld [vmem:[%s2303 + $0xc8] sm:$0xff]
      %v2322 = vld [vmem:[%s2303 + $0xd8] sm:$0xff]
      %v2323 = vld [vmem:[%s2303 + $0xe0] sm:$0xff]
      %v2324 = vld [vmem:[%s2303 + $0xf0] sm:$0xff]
      %v2325 = vld [vmem:[%s2303 + $0xf8] sm:$0xff]
      %v2326 = vld [vmem:[%s2303 + $0x108] sm:$0xff]
      %v2327 = vld [vmem:[%s2303 + $0x110] sm:$0xff]
      %v2328 = vld [vmem:[%s2303 + $0x120] sm:$0xff]
      %v2329 = vld [vmem:[%s2303 + $0x128] sm:$0xff]
      %v2330 = vld [vmem:[%s2303 + $0x138] sm:$0xff]
      %v2331 = vld [vmem:[%s2303 + $0x140] sm:$0xff]
      %v2332 = vld [vmem:[%s2303 + $0x150] sm:$0xff]
      %v2333 = vld [vmem:[%s2303 + $0x158] sm:$0xff]
      %v2334 = vld [vmem:[%s2303 + $0x168] sm:$0xff]
      %v2335 = vld [vmem:[%s2303 + $0x170] sm:$0xff]
      %v2336 = vpack.c.bf16 %v2305, %v2304
      %v2337 = vpack.c.bf16 %v2307, %v2306
      %v2338 = vpack.c.bf16 %v2309, %v2308
      %v2339 = vpack.c.bf16 %v2311, %v2310
      %v2340 = vpack.c.bf16 %v2313, %v2312
      %v2341 = vpack.c.bf16 %v2315, %v2314
      %v2342 = vpack.c.bf16 %v2317, %v2316
      %v2343 = vpack.c.bf16 %v2319, %v2318
      %v2344 = vpack.c.bf16 %v2321, %v2320
      %v2345 = vpack.c.bf16 %v2323, %v2322
      %v2346 = vpack.c.bf16 %v2325, %v2324
      %v2347 = vpack.c.bf16 %v2327, %v2326
      %v2348 = vpack.c.bf16 %v2329, %v2328
      %v2349 = vpack.c.bf16 %v2331, %v2330
      %v2350 = vpack.c.bf16 %v2333, %v2332
      %v2351 = vpack.c.bf16 %v2335, %v2334
      %s2352 = scalar_lea.vmem %s3, 24
      %v2353 = vld [vmem:[%s2352] sm:$0xf]
      %v2355 = vsel %vm394, %v2336, 0
      %v2358 = vsel %vm394, %v2337, 0
      %v2361 = vsel %vm394, %v2338, 0
      %v2364 = vsel %vm394, %v2339, 0
      %v2367 = vsel %vm394, %v2340, 0
      %v2370 = vsel %vm394, %v2341, 0
      %v2373 = vsel %vm394, %v2342, 0
      %v2376 = vsel %vm394, %v2343, 0
      %v2379 = vsel %vm394, %v2344, 0
      %v2382 = vsel %vm394, %v2345, 0
      %v2385 = vsel %vm394, %v2346, 0
      %v2388 = vsel %vm394, %v2347, 0
      %v2391 = vsel %vm394, %v2348, 0
      %v2394 = vsel %vm394, %v2349, 0
      %v2397 = vsel %vm394, %v2350, 0
      %v2400 = vsel %vm394, %v2351, 0
      %v2403 = vsel %vm636, %v2353, 0
      %2405 = vmatprep.subr.bf16.mxu0 0
      %2406 = vmatpush1.bf16.msra.mxu0 %v2403
      %2407 = vmatprep.subr.bf16.mxu0 0
      %2408 = vmatpush1.bf16.msra.mxu0 0
      %2409 = vmatprep.subr.bf16.mxu0 0
      %2410 = vmatpush1.bf16.msra.mxu0 0
      %2411 = vmatprep.subr.bf16.mxu0 0
      %2412 = vmatpush1.bf16.msra.mxu0 0
      %2413 = vmatprep.subr.bf16.mxu0 0
      %2414 = vmatpush1.bf16.msra.mxu0 0
      %2415 = vmatprep.subr.bf16.mxu0 0
      %2416 = vmatpush1.bf16.msra.mxu0 0
      %2417 = vmatprep.subr.bf16.mxu0 0
      %2418 = vmatpush1.bf16.msra.mxu0 0
      %2419 = vmatprep.subr.bf16.mxu0 0
      %2420 = vmatpush1.bf16.msra.mxu0 0
      %2421 = vmatprep.subr.bf16.mxu0 0
      %2422 = vmatpush1.bf16.msra.mxu0 0
      %2423 = vmatprep.subr.bf16.mxu0 0
      %2424 = vmatpush1.bf16.msra.mxu0 0
      %2425 = vmatprep.subr.bf16.mxu0 0
      %2426 = vmatpush1.bf16.msra.mxu0 0
      %2427 = vmatprep.subr.bf16.mxu0 0
      %2428 = vmatpush1.bf16.msra.mxu0 0
      %2429 = vmatprep.subr.bf16.mxu0 0
      %2430 = vmatpush1.bf16.msra.mxu0 0
      %2431 = vmatprep.subr.bf16.mxu0 0
      %2432 = vmatpush1.bf16.msra.mxu0 0
      %2433 = vmatprep.subr.bf16.mxu0 0
      %2434 = vmatpush1.bf16.msra.mxu0 0
      %2435 = vmatprep.subr.bf16.mxu0 0
      %2436 = vmatpush1.bf16.msra.mxu0 0
      %2437 = vmatprep.mubr.bf16.mxu0 0
      %2438 = vmatmul.mubr.bf16.gmra.mrb[0].mxu0 %v2355
      %v2439 = vpop.f32.mrb[0].mxu0
      %v2440 = vadd.f32 0.0, %v2439
      %v2441 = vpop.f32.mrb[0].mxu0
      %v2442 = vpop.f32.mrb[0].mxu0
      %v2443 = vadd.f32 0.0, %v2442
      %v2444 = vpop.f32.mrb[0].mxu0
      %2445 = vmatprep.mubr.bf16.mxu0 0
      %2446 = vmatmul.mubr.bf16.gmra.mrb[0].mxu0 %v2358
      %v2447 = vpop.f32.mrb[0].mxu0
      %v2448 = vadd.f32 0.0, %v2447
      %v2449 = vpop.f32.mrb[0].mxu0
      %v2450 = vpop.f32.mrb[0].mxu0
      %v2451 = vadd.f32 0.0, %v2450
      %v2452 = vpop.f32.mrb[0].mxu0
      %2453 = vmatprep.mubr.bf16.mxu0 0
      %2454 = vmatmul.mubr.bf16.gmra.mrb[0].mxu0 %v2361
      %v2455 = vpop.f32.mrb[0].mxu0
      %v2456 = vadd.f32 0.0, %v2455
      %v2457 = vpop.f32.mrb[0].mxu0
      %v2458 = vpop.f32.mrb[0].mxu0
      %v2459 = vadd.f32 0.0, %v2458
      %v2460 = vpop.f32.mrb[0].mxu0
      %2461 = vmatprep.mubr.bf16.mxu0 0
      %2462 = vmatmul.mubr.bf16.gmra.mrb[0].mxu0 %v2364
      %v2463 = vpop.f32.mrb[0].mxu0
      %v2464 = vadd.f32 0.0, %v2463
      %v2465 = vpop.f32.mrb[0].mxu0
      %v2466 = vpop.f32.mrb[0].mxu0
      %v2467 = vadd.f32 0.0, %v2466
      %v2468 = vpop.f32.mrb[0].mxu0
      %2469 = vmatprep.mubr.bf16.mxu0 0
      %2470 = vmatmul.mubr.bf16.gmra.mrb[0].mxu0 %v2367
      %v2471 = vpop.f32.mrb[0].mxu0
      %v2472 = vadd.f32 0.0, %v2471
      %v2473 = vpop.f32.mrb[0].mxu0
      %v2474 = vpop.f32.mrb[0].mxu0
      %v2475 = vadd.f32 0.0, %v2474
      %v2476 = vpop.f32.mrb[0].mxu0
      %2477 = vmatprep.mubr.bf16.mxu0 0
      %2478 = vmatmul.mubr.bf16.gmra.mrb[0].mxu0 %v2370
      %v2479 = vpop.f32.mrb[0].mxu0
      %v2480 = vadd.f32 0.0, %v2479
      %v2481 = vpop.f32.mrb[0].mxu0
      %v2482 = vpop.f32.mrb[0].mxu0
      %v2483 = vadd.f32 0.0, %v2482
      %v2484 = vpop.f32.mrb[0].mxu0
      %2485 = vmatprep.mubr.bf16.mxu0 0
      %2486 = vmatmul.mubr.bf16.gmra.mrb[0].mxu0 %v2373
      %v2487 = vpop.f32.mrb[0].mxu0
      %v2488 = vadd.f32 0.0, %v2487
      %v2489 = vpop.f32.mrb[0].mxu0
      %v2490 = vpop.f32.mrb[0].mxu0
      %v2491 = vadd.f32 0.0, %v2490
      %v2492 = vpop.f32.mrb[0].mxu0
      %2493 = vmatprep.mubr.bf16.mxu0 0
      %2494 = vmatmul.mubr.bf16.gmra.mrb[0].mxu0 %v2376
      %v2495 = vpop.f32.mrb[0].mxu0
      %v2496 = vadd.f32 0.0, %v2495
      %v2497 = vpop.f32.mrb[0].mxu0
      %v2498 = vpop.f32.mrb[0].mxu0
      %v2499 = vadd.f32 0.0, %v2498
      %v2500 = vpop.f32.mrb[0].mxu0
      %2501 = vmatprep.mubr.bf16.mxu0 0
      %2502 = vmatmul.mubr.bf16.gmra.mrb[0].mxu0 %v2379
      %v2503 = vpop.f32.mrb[0].mxu0
      %v2504 = vadd.f32 0.0, %v2503
      %v2505 = vpop.f32.mrb[0].mxu0
      %v2506 = vpop.f32.mrb[0].mxu0
      %v2507 = vadd.f32 0.0, %v2506
      %v2508 = vpop.f32.mrb[0].mxu0
      %2509 = vmatprep.mubr.bf16.mxu0 0
      %2510 = vmatmul.mubr.bf16.gmra.mrb[0].mxu0 %v2382
      %v2511 = vpop.f32.mrb[0].mxu0
      %v2512 = vadd.f32 0.0, %v2511
      %v2513 = vpop.f32.mrb[0].mxu0
      %v2514 = vpop.f32.mrb[0].mxu0
      %v2515 = vadd.f32 0.0, %v2514
      %v2516 = vpop.f32.mrb[0].mxu0
      %2517 = vmatprep.mubr.bf16.mxu0 0
      %2518 = vmatmul.mubr.bf16.gmra.mrb[0].mxu0 %v2385
      %v2519 = vpop.f32.mrb[0].mxu0
      %v2520 = vadd.f32 0.0, %v2519
      %v2521 = vpop.f32.mrb[0].mxu0
      %v2522 = vpop.f32.mrb[0].mxu0
      %v2523 = vadd.f32 0.0, %v2522
      %v2524 = vpop.f32.mrb[0].mxu0
      %2525 = vmatprep.mubr.bf16.mxu0 0
      %2526 = vmatmul.mubr.bf16.gmra.mrb[0].mxu0 %v2388
      %v2527 = vpop.f32.mrb[0].mxu0
      %v2528 = vadd.f32 0.0, %v2527
      %v2529 = vpop.f32.mrb[0].mxu0
      %v2530 = vpop.f32.mrb[0].mxu0
      %v2531 = vadd.f32 0.0, %v2530
      %v2532 = vpop.f32.mrb[0].mxu0
      %2533 = vmatprep.mubr.bf16.mxu0 0
      %2534 = vmatmul.mubr.bf16.gmra.mrb[0].mxu0 %v2391
      %v2535 = vpop.f32.mrb[0].mxu0
      %v2536 = vadd.f32 0.0, %v2535
      %v2537 = vpop.f32.mrb[0].mxu0
      %v2538 = vpop.f32.mrb[0].mxu0
      %v2539 = vadd.f32 0.0, %v2538
      %v2540 = vpop.f32.mrb[0].mxu0
      %2541 = vmatprep.mubr.bf16.mxu0 0
      %2542 = vmatmul.mubr.bf16.gmra.mrb[0].mxu0 %v2394
      %v2543 = vpop.f32.mrb[0].mxu0
      %v2544 = vadd.f32 0.0, %v2543
      %v2545 = vpop.f32.mrb[0].mxu0
      %v2546 = vpop.f32.mrb[0].mxu0
      %v2547 = vadd.f32 0.0, %v2546
      %v2548 = vpop.f32.mrb[0].mxu0
      %2549 = vmatprep.mubr.bf16.mxu0 0
      %2550 = vmatmul.mubr.bf16.gmra.mrb[0].mxu0 %v2397
      %v2551 = vpop.f32.mrb[0].mxu0
      %v2552 = vadd.f32 0.0, %v2551
      %v2553 = vpop.f32.mrb[0].mxu0
      %v2554 = vpop.f32.mrb[0].mxu0
      %v2555 = vadd.f32 0.0, %v2554
      %v2556 = vpop.f32.mrb[0].mxu0
      %2557 = vmatprep.mubr.bf16.mxu0 0
      %2558 = vmatmul.mubr.bf16.gmra.mrb[0].mxu0 %v2400
      %v2559 = vpop.f32.mrb[0].mxu0
      %v2560 = vadd.f32 0.0, %v2559
      %v2561 = vpop.f32.mrb[0].mxu0
      %v2562 = vpop.f32.mrb[0].mxu0
      %v2563 = vadd.f32 0.0, %v2562
      %v2564 = vpop.f32.mrb[0].mxu0
      %2565 = vdwg.mxu0
      %v2566 = vadd.f32 %v2271, %v2440
      %v2567 = vadd.f32 %v2272, %v2443
      %v2568 = vadd.f32 %v2273, %v2448
      %v2569 = vadd.f32 %v2274, %v2451
      %v2570 = vadd.f32 %v2275, %v2456
      %v2571 = vadd.f32 %v2276, %v2459
      %v2572 = vadd.f32 %v2277, %v2464
      %v2573 = vadd.f32 %v2278, %v2467
      %v2574 = vadd.f32 %v2279, %v2472
      %v2575 = vadd.f32 %v2280, %v2475
      %v2576 = vadd.f32 %v2281, %v2480
      %v2577 = vadd.f32 %v2282, %v2483
      %v2578 = vadd.f32 %v2283, %v2488
      %v2579 = vadd.f32 %v2284, %v2491
      %v2580 = vadd.f32 %v2285, %v2496
      %v2581 = vadd.f32 %v2286, %v2499
      %v2582 = vadd.f32 %v2287, %v2504
      %v2583 = vadd.f32 %v2288, %v2507
      %v2584 = vadd.f32 %v2289, %v2512
      %v2585 = vadd.f32 %v2290, %v2515
      %v2586 = vadd.f32 %v2291, %v2520
      %v2587 = vadd.f32 %v2292, %v2523
      %v2588 = vadd.f32 %v2293, %v2528
      %v2589 = vadd.f32 %v2294, %v2531
      %v2590 = vadd.f32 %v2295, %v2536
      %v2591 = vadd.f32 %v2296, %v2539
      %v2592 = vadd.f32 %v2297, %v2544
      %v2593 = vadd.f32 %v2298, %v2547
      %v2594 = vadd.f32 %v2299, %v2552
      %v2595 = vadd.f32 %v2300, %v2555
      %v2596 = vadd.f32 %v2301, %v2560
      %v2597 = vadd.f32 %v2302, %v2563
      %v2598 = vld [vmem:[%s2303 + $0x1] sm:$0xff]
      %v2599 = vld [vmem:[%s2303 + $0x9] sm:$0xff]
      %v2600 = vld [vmem:[%s2303 + $0x19] sm:$0xff]
      %v2601 = vld [vmem:[%s2303 + $0x21] sm:$0xff]
      %v2602 = vld [vmem:[%s2303 + $0x31] sm:$0xff]
      %v2603 = vld [vmem:[%s2303 + $0x39] sm:$0xff]
      %v2604 = vld [vmem:[%s2303 + $0x49] sm:$0xff]
      %v2605 = vld [vmem:[%s2303 + $0x51] sm:$0xff]
      %v2606 = vld [vmem:[%s2303 + $0x61] sm:$0xff]
      %v2607 = vld [vmem:[%s2303 + $0x69] sm:$0xff]
      %v2608 = vld [vmem:[%s2303 + $0x79] sm:$0xff]
      %v2609 = vld [vmem:[%s2303 + $0x81] sm:$0xff]
      %v2610 = vld [vmem:[%s2303 + $0x91] sm:$0xff]
      %v2611 = vld [vmem:[%s2303 + $0x99] sm:$0xff]
      %v2612 = vld [vmem:[%s2303 + $0xa9] sm:$0xff]
      %v2613 = vld [vmem:[%s2303 + $0xb1] sm:$0xff]
      %v2614 = vld [vmem:[%s2303 + $0xc1] sm:$0xff]
      %v2615 = vld [vmem:[%s2303 + $0xc9] sm:$0xff]
      %v2616 = vld [vmem:[%s2303 + $0xd9] sm:$0xff]
      %v2617 = vld [vmem:[%s2303 + $0xe1] sm:$0xff]
      %v2618 = vld [vmem:[%s2303 + $0xf1] sm:$0xff]
      %v2619 = vld [vmem:[%s2303 + $0xf9] sm:$0xff]
      %v2620 = vld [vmem:[%s2303 + $0x109] sm:$0xff]
      %v2621 = vld [vmem:[%s2303 + $0x111] sm:$0xff]
      %v2622 = vld [vmem:[%s2303 + $0x121] sm:$0xff]
      %v2623 = vld [vmem:[%s2303 + $0x129] sm:$0xff]
      %v2624 = vld [vmem:[%s2303 + $0x139] sm:$0xff]
      %v2625 = vld [vmem:[%s2303 + $0x141] sm:$0xff]
      %v2626 = vld [vmem:[%s2303 + $0x151] sm:$0xff]
      %v2627 = vld [vmem:[%s2303 + $0x159] sm:$0xff]
      %v2628 = vld [vmem:[%s2303 + $0x169] sm:$0xff]
      %v2629 = vld [vmem:[%s2303 + $0x171] sm:$0xff]
      %v2630 = vpack.c.bf16 %v2599, %v2598
      %v2631 = vpack.c.bf16 %v2601, %v2600
      %v2632 = vpack.c.bf16 %v2603, %v2602
      %v2633 = vpack.c.bf16 %v2605, %v2604
      %v2634 = vpack.c.bf16 %v2607, %v2606
      %v2635 = vpack.c.bf16 %v2609, %v2608
      %v2636 = vpack.c.bf16 %v2611, %v2610
      %v2637 = vpack.c.bf16 %v2613, %v2612
      %v2638 = vpack.c.bf16 %v2615, %v2614
      %v2639 = vpack.c.bf16 %v2617, %v2616
      %v2640 = vpack.c.bf16 %v2619, %v2618
      %v2641 = vpack.c.bf16 %v2621, %v2620
      %v2642 = vpack.c.bf16 %v2623, %v2622
      %v2643 = vpack.c.bf16 %v2625, %v2624
      %v2644 = vpack.c.bf16 %v2627, %v2626
      %v2645 = vpack.c.bf16 %v2629, %v2628
      %s2646 = scalar_lea.vmem %s3, 28
      %v2647 = vld [vmem:[%s2646] sm:$0xf]
      %v2649 = vsel %vm394, %v2630, 0
      %v2652 = vsel %vm394, %v2631, 0
      %v2655 = vsel %vm394, %v2632, 0
      %v2658 = vsel %vm394, %v2633, 0
      %v2661 = vsel %vm394, %v2634, 0
      %v2664 = vsel %vm394, %v2635, 0
      %v2667 = vsel %vm394, %v2636, 0
      %v2670 = vsel %vm394, %v2637, 0
      %v2673 = vsel %vm394, %v2638, 0
      %v2676 = vsel %vm394, %v2639, 0
      %v2679 = vsel %vm394, %v2640, 0
      %v2682 = vsel %vm394, %v2641, 0
      %v2685 = vsel %vm394, %v2642, 0
      %v2688 = vsel %vm394, %v2643, 0
      %v2691 = vsel %vm394, %v2644, 0
      %v2694 = vsel %vm394, %v2645, 0
      %v2697 = vsel %vm636, %v2647, 0
      %2699 = vmatprep.subr.bf16.mxu0 0
      %2700 = vmatpush1.bf16.msra.mxu0 %v2697
      %2701 = vmatprep.subr.bf16.mxu0 0
      %2702 = vmatpush1.bf16.msra.mxu0 0
      %2703 = vmatprep.subr.bf16.mxu0 0
      %2704 = vmatpush1.bf16.msra.mxu0 0
      %2705 = vmatprep.subr.bf16.mxu0 0
      %2706 = vmatpush1.bf16.msra.mxu0 0
      %2707 = vmatprep.subr.bf16.mxu0 0
      %2708 = vmatpush1.bf16.msra.mxu0 0
      %2709 = vmatprep.subr.bf16.mxu0 0
      %2710 = vmatpush1.bf16.msra.mxu0 0
      %2711 = vmatprep.subr.bf16.mxu0 0
      %2712 = vmatpush1.bf16.msra.mxu0 0
      %2713 = vmatprep.subr.bf16.mxu0 0
      %2714 = vmatpush1.bf16.msra.mxu0 0
      %2715 = vmatprep.subr.bf16.mxu0 0
      %2716 = vmatpush1.bf16.msra.mxu0 0
      %2717 = vmatprep.subr.bf16.mxu0 0
      %2718 = vmatpush1.bf16.msra.mxu0 0
      %2719 = vmatprep.subr.bf16.mxu0 0
      %2720 = vmatpush1.bf16.msra.mxu0 0
      %2721 = vmatprep.subr.bf16.mxu0 0
      %2722 = vmatpush1.bf16.msra.mxu0 0
      %2723 = vmatprep.subr.bf16.mxu0 0
      %2724 = vmatpush1.bf16.msra.mxu0 0
      %2725 = vmatprep.subr.bf16.mxu0 0
      %2726 = vmatpush1.bf16.msra.mxu0 0
      %2727 = vmatprep.subr.bf16.mxu0 0
      %2728 = vmatpush1.bf16.msra.mxu0 0
      %2729 = vmatprep.subr.bf16.mxu0 0
      %2730 = vmatpush1.bf16.msra.mxu0 0
      %2731 = vmatprep.mubr.bf16.mxu0 0
      %2732 = vmatmul.mubr.bf16.gmra.mrb[0].mxu0 %v2649
      %v2733 = vpop.f32.mrb[0].mxu0
      %v2734 = vadd.f32 0.0, %v2733
      %v2735 = vpop.f32.mrb[0].mxu0
      %v2736 = vpop.f32.mrb[0].mxu0
      %v2737 = vadd.f32 0.0, %v2736
      %v2738 = vpop.f32.mrb[0].mxu0
      %2739 = vmatprep.mubr.bf16.mxu0 0
      %2740 = vmatmul.mubr.bf16.gmra.mrb[0].mxu0 %v2652
      %v2741 = vpop.f32.mrb[0].mxu0
      %v2742 = vadd.f32 0.0, %v2741
      %v2743 = vpop.f32.mrb[0].mxu0
      %v2744 = vpop.f32.mrb[0].mxu0
      %v2745 = vadd.f32 0.0, %v2744
      %v2746 = vpop.f32.mrb[0].mxu0
      %2747 = vmatprep.mubr.bf16.mxu0 0
      %2748 = vmatmul.mubr.bf16.gmra.mrb[0].mxu0 %v2655
      %v2749 = vpop.f32.mrb[0].mxu0
      %v2750 = vadd.f32 0.0, %v2749
      %v2751 = vpop.f32.mrb[0].mxu0
      %v2752 = vpop.f32.mrb[0].mxu0
      %v2753 = vadd.f32 0.0, %v2752
      %v2754 = vpop.f32.mrb[0].mxu0
      %2755 = vmatprep.mubr.bf16.mxu0 0
      %2756 = vmatmul.mubr.bf16.gmra.mrb[0].mxu0 %v2658
      %v2757 = vpop.f32.mrb[0].mxu0
      %v2758 = vadd.f32 0.0, %v2757
      %v2759 = vpop.f32.mrb[0].mxu0
      %v2760 = vpop.f32.mrb[0].mxu0
      %v2761 = vadd.f32 0.0, %v2760
      %v2762 = vpop.f32.mrb[0].mxu0
      %2763 = vmatprep.mubr.bf16.mxu0 0
      %2764 = vmatmul.mubr.bf16.gmra.mrb[0].mxu0 %v2661
      %v2765 = vpop.f32.mrb[0].mxu0
      %v2766 = vadd.f32 0.0, %v2765
      %v2767 = vpop.f32.mrb[0].mxu0
      %v2768 = vpop.f32.mrb[0].mxu0
      %v2769 = vadd.f32 0.0, %v2768
      %v2770 = vpop.f32.mrb[0].mxu0
      %2771 = vmatprep.mubr.bf16.mxu0 0
      %2772 = vmatmul.mubr.bf16.gmra.mrb[0].mxu0 %v2664
      %v2773 = vpop.f32.mrb[0].mxu0
      %v2774 = vadd.f32 0.0, %v2773
      %v2775 = vpop.f32.mrb[0].mxu0
      %v2776 = vpop.f32.mrb[0].mxu0
      %v2777 = vadd.f32 0.0, %v2776
      %v2778 = vpop.f32.mrb[0].mxu0
      %2779 = vmatprep.mubr.bf16.mxu0 0
      %2780 = vmatmul.mubr.bf16.gmra.mrb[0].mxu0 %v2667
      %v2781 = vpop.f32.mrb[0].mxu0
      %v2782 = vadd.f32 0.0, %v2781
      %v2783 = vpop.f32.mrb[0].mxu0
      %v2784 = vpop.f32.mrb[0].mxu0
      %v2785 = vadd.f32 0.0, %v2784
      %v2786 = vpop.f32.mrb[0].mxu0
      %2787 = vmatprep.mubr.bf16.mxu0 0
      %2788 = vmatmul.mubr.bf16.gmra.mrb[0].mxu0 %v2670
      %v2789 = vpop.f32.mrb[0].mxu0
      %v2790 = vadd.f32 0.0, %v2789
      %v2791 = vpop.f32.mrb[0].mxu0
      %v2792 = vpop.f32.mrb[0].mxu0
      %v2793 = vadd.f32 0.0, %v2792
      %v2794 = vpop.f32.mrb[0].mxu0
      %2795 = vmatprep.mubr.bf16.mxu0 0
      %2796 = vmatmul.mubr.bf16.gmra.mrb[0].mxu0 %v2673
      %v2797 = vpop.f32.mrb[0].mxu0
      %v2798 = vadd.f32 0.0, %v2797
      %v2799 = vpop.f32.mrb[0].mxu0
      %v2800 = vpop.f32.mrb[0].mxu0
      %v2801 = vadd.f32 0.0, %v2800
      %v2802 = vpop.f32.mrb[0].mxu0
      %2803 = vmatprep.mubr.bf16.mxu0 0
      %2804 = vmatmul.mubr.bf16.gmra.mrb[0].mxu0 %v2676
      %v2805 = vpop.f32.mrb[0].mxu0
      %v2806 = vadd.f32 0.0, %v2805
      %v2807 = vpop.f32.mrb[0].mxu0
      %v2808 = vpop.f32.mrb[0].mxu0
      %v2809 = vadd.f32 0.0, %v2808
      %v2810 = vpop.f32.mrb[0].mxu0
      %2811 = vmatprep.mubr.bf16.mxu0 0
      %2812 = vmatmul.mubr.bf16.gmra.mrb[0].mxu0 %v2679
      %v2813 = vpop.f32.mrb[0].mxu0
      %v2814 = vadd.f32 0.0, %v2813
      %v2815 = vpop.f32.mrb[0].mxu0
      %v2816 = vpop.f32.mrb[0].mxu0
      %v2817 = vadd.f32 0.0, %v2816
      %v2818 = vpop.f32.mrb[0].mxu0
      %2819 = vmatprep.mubr.bf16.mxu0 0
      %2820 = vmatmul.mubr.bf16.gmra.mrb[0].mxu0 %v2682
      %v2821 = vpop.f32.mrb[0].mxu0
      %v2822 = vadd.f32 0.0, %v2821
      %v2823 = vpop.f32.mrb[0].mxu0
      %v2824 = vpop.f32.mrb[0].mxu0
      %v2825 = vadd.f32 0.0, %v2824
      %v2826 = vpop.f32.mrb[0].mxu0
      %2827 = vmatprep.mubr.bf16.mxu0 0
      %2828 = vmatmul.mubr.bf16.gmra.mrb[0].mxu0 %v2685
      %v2829 = vpop.f32.mrb[0].mxu0
      %v2830 = vadd.f32 0.0, %v2829
      %v2831 = vpop.f32.mrb[0].mxu0
      %v2832 = vpop.f32.mrb[0].mxu0
      %v2833 = vadd.f32 0.0, %v2832
      %v2834 = vpop.f32.mrb[0].mxu0
      %2835 = vmatprep.mubr.bf16.mxu0 0
      %2836 = vmatmul.mubr.bf16.gmra.mrb[0].mxu0 %v2688
      %v2837 = vpop.f32.mrb[0].mxu0
      %v2838 = vadd.f32 0.0, %v2837
      %v2839 = vpop.f32.mrb[0].mxu0
      %v2840 = vpop.f32.mrb[0].mxu0
      %v2841 = vadd.f32 0.0, %v2840
      %v2842 = vpop.f32.mrb[0].mxu0
      %2843 = vmatprep.mubr.bf16.mxu0 0
      %2844 = vmatmul.mubr.bf16.gmra.mrb[0].mxu0 %v2691
      %v2845 = vpop.f32.mrb[0].mxu0
      %v2846 = vadd.f32 0.0, %v2845
      %v2847 = vpop.f32.mrb[0].mxu0
      %v2848 = vpop.f32.mrb[0].mxu0
      %v2849 = vadd.f32 0.0, %v2848
      %v2850 = vpop.f32.mrb[0].mxu0
      %2851 = vmatprep.mubr.bf16.mxu0 0
      %2852 = vmatmul.mubr.bf16.gmra.mrb[0].mxu0 %v2694
      %v2853 = vpop.f32.mrb[0].mxu0
      %v2854 = vadd.f32 0.0, %v2853
      %v2855 = vpop.f32.mrb[0].mxu0
      %v2856 = vpop.f32.mrb[0].mxu0
      %v2857 = vadd.f32 0.0, %v2856
      %v2858 = vpop.f32.mrb[0].mxu0
      %2859 = vdwg.mxu0
      %v2860 = vadd.f32 %v2566, %v2734
      %v2861 = vadd.f32 %v2567, %v2737
      %v2862 = vadd.f32 %v2568, %v2742
      %v2863 = vadd.f32 %v2569, %v2745
      %v2864 = vadd.f32 %v2570, %v2750
      %v2865 = vadd.f32 %v2571, %v2753
      %v2866 = vadd.f32 %v2572, %v2758
      %v2867 = vadd.f32 %v2573, %v2761
      %v2868 = vadd.f32 %v2574, %v2766
      %v2869 = vadd.f32 %v2575, %v2769
      %v2870 = vadd.f32 %v2576, %v2774
      %v2871 = vadd.f32 %v2577, %v2777
      %v2872 = vadd.f32 %v2578, %v2782
      %v2873 = vadd.f32 %v2579, %v2785
      %v2874 = vadd.f32 %v2580, %v2790
      %v2875 = vadd.f32 %v2581, %v2793
      %v2876 = vadd.f32 %v2582, %v2798
      %v2877 = vadd.f32 %v2583, %v2801
      %v2878 = vadd.f32 %v2584, %v2806
      %v2879 = vadd.f32 %v2585, %v2809
      %v2880 = vadd.f32 %v2586, %v2814
      %v2881 = vadd.f32 %v2587, %v2817
      %v2882 = vadd.f32 %v2588, %v2822
      %v2883 = vadd.f32 %v2589, %v2825
      %v2884 = vadd.f32 %v2590, %v2830
      %v2885 = vadd.f32 %v2591, %v2833
      %v2886 = vadd.f32 %v2592, %v2838
      %v2887 = vadd.f32 %v2593, %v2841
      %v2888 = vadd.f32 %v2594, %v2846
      %v2889 = vadd.f32 %v2595, %v2849
      %v2890 = vadd.f32 %v2596, %v2854
      %v2891 = vadd.f32 %v2597, %v2857
      %v2892 = vld [vmem:[%s2303 + $0x2] sm:$0xff]
      %v2893 = vld [vmem:[%s2303 + $0xa] sm:$0xff]
      %v2894 = vld [vmem:[%s2303 + $0x1a] sm:$0xff]
      %v2895 = vld [vmem:[%s2303 + $0x22] sm:$0xff]
      %v2896 = vld [vmem:[%s2303 + $0x32] sm:$0xff]
      %v2897 = vld [vmem:[%s2303 + $0x3a] sm:$0xff]
      %v2898 = vld [vmem:[%s2303 + $0x4a] sm:$0xff]
      %v2899 = vld [vmem:[%s2303 + $0x52] sm:$0xff]
      %v2900 = vld [vmem:[%s2303 + $0x62] sm:$0xff]
      %v2901 = vld [vmem:[%s2303 + $0x6a] sm:$0xff]
      %v2902 = vld [vmem:[%s2303 + $0x7a] sm:$0xff]
      %v2903 = vld [vmem:[%s2303 + $0x82] sm:$0xff]
      %v2904 = vld [vmem:[%s2303 + $0x92] sm:$0xff]
      %v2905 = vld [vmem:[%s2303 + $0x9a] sm:$0xff]
      %v2906 = vld [vmem:[%s2303 + $0xaa] sm:$0xff]
      %v2907 = vld [vmem:[%s2303 + $0xb2] sm:$0xff]
      %v2908 = vld [vmem:[%s2303 + $0xc2] sm:$0xff]
      %v2909 = vld [vmem:[%s2303 + $0xca] sm:$0xff]
      %v2910 = vld [vmem:[%s2303 + $0xda] sm:$0xff]
      %v2911 = vld [vmem:[%s2303 + $0xe2] sm:$0xff]
      %v2912 = vld [vmem:[%s2303 + $0xf2] sm:$0xff]
      %v2913 = vld [vmem:[%s2303 + $0xfa] sm:$0xff]
      %v2914 = vld [vmem:[%s2303 + $0x10a] sm:$0xff]
      %v2915 = vld [vmem:[%s2303 + $0x112] sm:$0xff]
      %v2916 = vld [vmem:[%s2303 + $0x122] sm:$0xff]
      %v2917 = vld [vmem:[%s2303 + $0x12a] sm:$0xff]
      %v2918 = vld [vmem:[%s2303 + $0x13a] sm:$0xff]
      %v2919 = vld [vmem:[%s2303 + $0x142] sm:$0xff]
      %v2920 = vld [vmem:[%s2303 + $0x152] sm:$0xff]
      %v2921 = vld [vmem:[%s2303 + $0x15a] sm:$0xff]
      %v2922 = vld [vmem:[%s2303 + $0x16a] sm:$0xff]
      %v2923 = vld [vmem:[%s2303 + $0x172] sm:$0xff]
      %v2924 = vpack.c.bf16 %v2893, %v2892
      %v2925 = vpack.c.bf16 %v2895, %v2894
      %v2926 = vpack.c.bf16 %v2897, %v2896
      %v2927 = vpack.c.bf16 %v2899, %v2898
      %v2928 = vpack.c.bf16 %v2901, %v2900
      %v2929 = vpack.c.bf16 %v2903, %v2902
      %v2930 = vpack.c.bf16 %v2905, %v2904
      %v2931 = vpack.c.bf16 %v2907, %v2906
      %v2932 = vpack.c.bf16 %v2909, %v2908
      %v2933 = vpack.c.bf16 %v2911, %v2910
      %v2934 = vpack.c.bf16 %v2913, %v2912
      %v2935 = vpack.c.bf16 %v2915, %v2914
      %v2936 = vpack.c.bf16 %v2917, %v2916
      %v2937 = vpack.c.bf16 %v2919, %v2918
      %v2938 = vpack.c.bf16 %v2921, %v2920
      %v2939 = vpack.c.bf16 %v2923, %v2922
      %s2940 = scalar_lea.vmem %s3, 32
      %v2941 = vld [vmem:[%s2940] sm:$0xf]
      %v2943 = vsel %vm394, %v2924, 0
      %v2946 = vsel %vm394, %v2925, 0
      %v2949 = vsel %vm394, %v2926, 0
      %v2952 = vsel %vm394, %v2927, 0
      %v2955 = vsel %vm394, %v2928, 0
      %v2958 = vsel %vm394, %v2929, 0
      %v2961 = vsel %vm394, %v2930, 0
      %v2964 = vsel %vm394, %v2931, 0
      %v2967 = vsel %vm394, %v2932, 0
      %v2970 = vsel %vm394, %v2933, 0
      %v2973 = vsel %vm394, %v2934, 0
      %v2976 = vsel %vm394, %v2935, 0
      %v2979 = vsel %vm394, %v2936, 0
      %v2982 = vsel %vm394, %v2937, 0
      %v2985 = vsel %vm394, %v2938, 0
      %v2988 = vsel %vm394, %v2939, 0
      %v2991 = vsel %vm636, %v2941, 0
      %2993 = vmatprep.subr.bf16.mxu0 0
      %2994 = vmatpush1.bf16.msra.mxu0 %v2991
      %2995 = vmatprep.subr.bf16.mxu0 0
      %2996 = vmatpush1.bf16.msra.mxu0 0
      %2997 = vmatprep.subr.bf16.mxu0 0
      %2998 = vmatpush1.bf16.msra.mxu0 0
      %2999 = vmatprep.subr.bf16.mxu0 0
      %3000 = vmatpush1.bf16.msra.mxu0 0
      %3001 = vmatprep.subr.bf16.mxu0 0
      %3002 = vmatpush1.bf16.msra.mxu0 0
      %3003 = vmatprep.subr.bf16.mxu0 0
      %3004 = vmatpush1.bf16.msra.mxu0 0
      %3005 = vmatprep.subr.bf16.mxu0 0
      %3006 = vmatpush1.bf16.msra.mxu0 0
      %3007 = vmatprep.subr.bf16.mxu0 0
      %3008 = vmatpush1.bf16.msra.mxu0 0
      %3009 = vmatprep.subr.bf16.mxu0 0
      %3010 = vmatpush1.bf16.msra.mxu0 0
      %3011 = vmatprep.subr.bf16.mxu0 0
      %3012 = vmatpush1.bf16.msra.mxu0 0
      %3013 = vmatprep.subr.bf16.mxu0 0
      %3014 = vmatpush1.bf16.msra.mxu0 0
      %3015 = vmatprep.subr.bf16.mxu0 0
      %3016 = vmatpush1.bf16.msra.mxu0 0
      %3017 = vmatprep.subr.bf16.mxu0 0
      %3018 = vmatpush1.bf16.msra.mxu0 0
      %3019 = vmatprep.subr.bf16.mxu0 0
      %3020 = vmatpush1.bf16.msra.mxu0 0
      %3021 = vmatprep.subr.bf16.mxu0 0
      %3022 = vmatpush1.bf16.msra.mxu0 0
      %3023 = vmatprep.subr.bf16.mxu0 0
      %3024 = vmatpush1.bf16.msra.mxu0 0
      %3025 = vmatprep.mubr.bf16.mxu0 0
      %3026 = vmatmul.mubr.bf16.gmra.mrb[0].mxu0 %v2943
      %v3027 = vpop.f32.mrb[0].mxu0
      %v3028 = vadd.f32 0.0, %v3027
      %v3029 = vpop.f32.mrb[0].mxu0
      %v3030 = vpop.f32.mrb[0].mxu0
      %v3031 = vadd.f32 0.0, %v3030
      %v3032 = vpop.f32.mrb[0].mxu0
      %3033 = vmatprep.mubr.bf16.mxu0 0
      %3034 = vmatmul.mubr.bf16.gmra.mrb[0].mxu0 %v2946
      %v3035 = vpop.f32.mrb[0].mxu0
      %v3036 = vadd.f32 0.0, %v3035
      %v3037 = vpop.f32.mrb[0].mxu0
      %v3038 = vpop.f32.mrb[0].mxu0
      %v3039 = vadd.f32 0.0, %v3038
      %v3040 = vpop.f32.mrb[0].mxu0
      %3041 = vmatprep.mubr.bf16.mxu0 0
      %3042 = vmatmul.mubr.bf16.gmra.mrb[0].mxu0 %v2949
      %v3043 = vpop.f32.mrb[0].mxu0
      %v3044 = vadd.f32 0.0, %v3043
      %v3045 = vpop.f32.mrb[0].mxu0
      %v3046 = vpop.f32.mrb[0].mxu0
      %v3047 = vadd.f32 0.0, %v3046
      %v3048 = vpop.f32.mrb[0].mxu0
      %3049 = vmatprep.mubr.bf16.mxu0 0
      %3050 = vmatmul.mubr.bf16.gmra.mrb[0].mxu0 %v2952
      %v3051 = vpop.f32.mrb[0].mxu0
      %v3052 = vadd.f32 0.0, %v3051
      %v3053 = vpop.f32.mrb[0].mxu0
      %v3054 = vpop.f32.mrb[0].mxu0
      %v3055 = vadd.f32 0.0, %v3054
      %v3056 = vpop.f32.mrb[0].mxu0
      %3057 = vmatprep.mubr.bf16.mxu0 0
      %3058 = vmatmul.mubr.bf16.gmra.mrb[0].mxu0 %v2955
      %v3059 = vpop.f32.mrb[0].mxu0
      %v3060 = vadd.f32 0.0, %v3059
      %v3061 = vpop.f32.mrb[0].mxu0
      %v3062 = vpop.f32.mrb[0].mxu0
      %v3063 = vadd.f32 0.0, %v3062
      %v3064 = vpop.f32.mrb[0].mxu0
      %3065 = vmatprep.mubr.bf16.mxu0 0
      %3066 = vmatmul.mubr.bf16.gmra.mrb[0].mxu0 %v2958
      %v3067 = vpop.f32.mrb[0].mxu0
      %v3068 = vadd.f32 0.0, %v3067
      %v3069 = vpop.f32.mrb[0].mxu0
      %v3070 = vpop.f32.mrb[0].mxu0
      %v3071 = vadd.f32 0.0, %v3070
      %v3072 = vpop.f32.mrb[0].mxu0
      %3073 = vmatprep.mubr.bf16.mxu0 0
      %3074 = vmatmul.mubr.bf16.gmra.mrb[0].mxu0 %v2961
      %v3075 = vpop.f32.mrb[0].mxu0
      %v3076 = vadd.f32 0.0, %v3075
      %v3077 = vpop.f32.mrb[0].mxu0
      %v3078 = vpop.f32.mrb[0].mxu0
      %v3079 = vadd.f32 0.0, %v3078
      %v3080 = vpop.f32.mrb[0].mxu0
      %3081 = vmatprep.mubr.bf16.mxu0 0
      %3082 = vmatmul.mubr.bf16.gmra.mrb[0].mxu0 %v2964
      %v3083 = vpop.f32.mrb[0].mxu0
      %v3084 = vadd.f32 0.0, %v3083
      %v3085 = vpop.f32.mrb[0].mxu0
      %v3086 = vpop.f32.mrb[0].mxu0
      %v3087 = vadd.f32 0.0, %v3086
      %v3088 = vpop.f32.mrb[0].mxu0
      %3089 = vmatprep.mubr.bf16.mxu0 0
      %3090 = vmatmul.mubr.bf16.gmra.mrb[0].mxu0 %v2967
      %v3091 = vpop.f32.mrb[0].mxu0
      %v3092 = vadd.f32 0.0, %v3091
      %v3093 = vpop.f32.mrb[0].mxu0
      %v3094 = vpop.f32.mrb[0].mxu0
      %v3095 = vadd.f32 0.0, %v3094
      %v3096 = vpop.f32.mrb[0].mxu0
      %3097 = vmatprep.mubr.bf16.mxu0 0
      %3098 = vmatmul.mubr.bf16.gmra.mrb[0].mxu0 %v2970
      %v3099 = vpop.f32.mrb[0].mxu0
      %v3100 = vadd.f32 0.0, %v3099
      %v3101 = vpop.f32.mrb[0].mxu0
      %v3102 = vpop.f32.mrb[0].mxu0
      %v3103 = vadd.f32 0.0, %v3102
      %v3104 = vpop.f32.mrb[0].mxu0
      %3105 = vmatprep.mubr.bf16.mxu0 0
      %3106 = vmatmul.mubr.bf16.gmra.mrb[0].mxu0 %v2973
      %v3107 = vpop.f32.mrb[0].mxu0
      %v3108 = vadd.f32 0.0, %v3107
      %v3109 = vpop.f32.mrb[0].mxu0
      %v3110 = vpop.f32.mrb[0].mxu0
      %v3111 = vadd.f32 0.0, %v3110
      %v3112 = vpop.f32.mrb[0].mxu0
      %3113 = vmatprep.mubr.bf16.mxu0 0
      %3114 = vmatmul.mubr.bf16.gmra.mrb[0].mxu0 %v2976
      %v3115 = vpop.f32.mrb[0].mxu0
      %v3116 = vadd.f32 0.0, %v3115
      %v3117 = vpop.f32.mrb[0].mxu0
      %v3118 = vpop.f32.mrb[0].mxu0
      %v3119 = vadd.f32 0.0, %v3118
      %v3120 = vpop.f32.mrb[0].mxu0
      %3121 = vmatprep.mubr.bf16.mxu0 0
      %3122 = vmatmul.mubr.bf16.gmra.mrb[0].mxu0 %v2979
      %v3123 = vpop.f32.mrb[0].mxu0
      %v3124 = vadd.f32 0.0, %v3123
      %v3125 = vpop.f32.mrb[0].mxu0
      %v3126 = vpop.f32.mrb[0].mxu0
      %v3127 = vadd.f32 0.0, %v3126
      %v3128 = vpop.f32.mrb[0].mxu0
      %3129 = vmatprep.mubr.bf16.mxu0 0
      %3130 = vmatmul.mubr.bf16.gmra.mrb[0].mxu0 %v2982
      %v3131 = vpop.f32.mrb[0].mxu0
      %v3132 = vadd.f32 0.0, %v3131
      %v3133 = vpop.f32.mrb[0].mxu0
      %v3134 = vpop.f32.mrb[0].mxu0
      %v3135 = vadd.f32 0.0, %v3134
      %v3136 = vpop.f32.mrb[0].mxu0
      %3137 = vmatprep.mubr.bf16.mxu0 0
      %3138 = vmatmul.mubr.bf16.gmra.mrb[0].mxu0 %v2985
      %v3139 = vpop.f32.mrb[0].mxu0
      %v3140 = vadd.f32 0.0, %v3139
      %v3141 = vpop.f32.mrb[0].mxu0
      %v3142 = vpop.f32.mrb[0].mxu0
      %v3143 = vadd.f32 0.0, %v3142
      %v3144 = vpop.f32.mrb[0].mxu0
      %3145 = vmatprep.mubr.bf16.mxu0 0
      %3146 = vmatmul.mubr.bf16.gmra.mrb[0].mxu0 %v2988
      %v3147 = vpop.f32.mrb[0].mxu0
      %v3148 = vadd.f32 0.0, %v3147
      %v3149 = vpop.f32.mrb[0].mxu0
      %v3150 = vpop.f32.mrb[0].mxu0
      %v3151 = vadd.f32 0.0, %v3150
      %v3152 = vpop.f32.mrb[0].mxu0
      %3153 = vdwg.mxu0
      %v3154 = vadd.f32 %v2860, %v3028
      %v3155 = vadd.f32 %v2861, %v3031
      %v3156 = vadd.f32 %v2862, %v3036
      %v3157 = vadd.f32 %v2863, %v3039
      %v3158 = vadd.f32 %v2864, %v3044
      %v3159 = vadd.f32 %v2865, %v3047
      %v3160 = vadd.f32 %v2866, %v3052
      %v3161 = vadd.f32 %v2867, %v3055
      %v3162 = vadd.f32 %v2868, %v3060
      %v3163 = vadd.f32 %v2869, %v3063
      %v3164 = vadd.f32 %v2870, %v3068
      %v3165 = vadd.f32 %v2871, %v3071
      %v3166 = vadd.f32 %v2872, %v3076
      %v3167 = vadd.f32 %v2873, %v3079
      %v3168 = vadd.f32 %v2874, %v3084
      %v3169 = vadd.f32 %v2875, %v3087
      %v3170 = vadd.f32 %v2876, %v3092
      %v3171 = vadd.f32 %v2877, %v3095
      %v3172 = vadd.f32 %v2878, %v3100
      %v3173 = vadd.f32 %v2879, %v3103
      %v3174 = vadd.f32 %v2880, %v3108
      %v3175 = vadd.f32 %v2881, %v3111
      %v3176 = vadd.f32 %v2882, %v3116
      %v3177 = vadd.f32 %v2883, %v3119
      %v3178 = vadd.f32 %v2884, %v3124
      %v3179 = vadd.f32 %v2885, %v3127
      %v3180 = vadd.f32 %v2886, %v3132
      %v3181 = vadd.f32 %v2887, %v3135
      %v3182 = vadd.f32 %v2888, %v3140
      %v3183 = vadd.f32 %v2889, %v3143
      %v3184 = vadd.f32 %v2890, %v3148
      %v3185 = vadd.f32 %v2891, %v3151
      %v3186 = vmax.f32 %v3154, 0.0
      %v3187 = vmax.f32 %v3155, 0.0
      %v3188 = vmax.f32 %v3156, 0.0
      %v3189 = vmax.f32 %v3157, 0.0
      %v3190 = vmax.f32 %v3158, 0.0
      %v3191 = vmax.f32 %v3159, 0.0
      %v3192 = vmax.f32 %v3160, 0.0
      %v3193 = vmax.f32 %v3161, 0.0
      %v3194 = vmax.f32 %v3162, 0.0
      %v3195 = vmax.f32 %v3163, 0.0
      %v3196 = vmax.f32 %v3164, 0.0
      %v3197 = vmax.f32 %v3165, 0.0
      %v3198 = vmax.f32 %v3166, 0.0
      %v3199 = vmax.f32 %v3167, 0.0
      %v3200 = vmax.f32 %v3168, 0.0
      %v3201 = vmax.f32 %v3169, 0.0
      %v3202 = vmax.f32 %v3170, 0.0
      %v3203 = vmax.f32 %v3171, 0.0
      %v3204 = vmax.f32 %v3172, 0.0
      %v3205 = vmax.f32 %v3173, 0.0
      %v3206 = vmax.f32 %v3174, 0.0
      %v3207 = vmax.f32 %v3175, 0.0
      %v3208 = vmax.f32 %v3176, 0.0
      %v3209 = vmax.f32 %v3177, 0.0
      %v3210 = vmax.f32 %v3178, 0.0
      %v3211 = vmax.f32 %v3179, 0.0
      %v3212 = vmax.f32 %v3180, 0.0
      %v3213 = vmax.f32 %v3181, 0.0
      %v3214 = vmax.f32 %v3182, 0.0
      %v3215 = vmax.f32 %v3183, 0.0
      %v3216 = vmax.f32 %v3184, 0.0
      %v3217 = vmax.f32 %v3185, 0.0
      %3218 = vst.msk [vmem:[%s391] sm:$0xff] %vm394, %v3186
      %3219 = vst.msk [vmem:[%s391 + $0x8] sm:$0xff] %vm394, %v3187
      %3220 = vst.msk [vmem:[%s391 + $0x10] sm:$0xff] %vm394, %v3188
      %3221 = vst.msk [vmem:[%s391 + $0x18] sm:$0xff] %vm394, %v3189
      %3222 = vst.msk [vmem:[%s391 + $0x20] sm:$0xff] %vm394, %v3190
      %3223 = vst.msk [vmem:[%s391 + $0x28] sm:$0xff] %vm394, %v3191
      %3224 = vst.msk [vmem:[%s391 + $0x30] sm:$0xff] %vm394, %v3192
      %3225 = vst.msk [vmem:[%s391 + $0x38] sm:$0xff] %vm394, %v3193
      %3226 = vst.msk [vmem:[%s391 + $0x40] sm:$0xff] %vm394, %v3194
      %3227 = vst.msk [vmem:[%s391 + $0x48] sm:$0xff] %vm394, %v3195
      %3228 = vst.msk [vmem:[%s391 + $0x50] sm:$0xff] %vm394, %v3196
      %3229 = vst.msk [vmem:[%s391 + $0x58] sm:$0xff] %vm394, %v3197
      %3230 = vst.msk [vmem:[%s391 + $0x60] sm:$0xff] %vm394, %v3198
      %3231 = vst.msk [vmem:[%s391 + $0x68] sm:$0xff] %vm394, %v3199
      %3232 = vst.msk [vmem:[%s391 + $0x70] sm:$0xff] %vm394, %v3200
      %3233 = vst.msk [vmem:[%s391 + $0x78] sm:$0xff] %vm394, %v3201
      %3234 = vst.msk [vmem:[%s391 + $0x80] sm:$0xff] %vm394, %v3202
      %3235 = vst.msk [vmem:[%s391 + $0x88] sm:$0xff] %vm394, %v3203
      %3236 = vst.msk [vmem:[%s391 + $0x90] sm:$0xff] %vm394, %v3204
      %3237 = vst.msk [vmem:[%s391 + $0x98] sm:$0xff] %vm394, %v3205
      %3238 = vst.msk [vmem:[%s391 + $0xa0] sm:$0xff] %vm394, %v3206
      %3239 = vst.msk [vmem:[%s391 + $0xa8] sm:$0xff] %vm394, %v3207
      %3240 = vst.msk [vmem:[%s391 + $0xb0] sm:$0xff] %vm394, %v3208
      %3241 = vst.msk [vmem:[%s391 + $0xb8] sm:$0xff] %vm394, %v3209
      %3242 = vst.msk [vmem:[%s391 + $0xc0] sm:$0xff] %vm394, %v3210
      %3243 = vst.msk [vmem:[%s391 + $0xc8] sm:$0xff] %vm394, %v3211
      %3244 = vst.msk [vmem:[%s391 + $0xd0] sm:$0xff] %vm394, %v3212
      %3245 = vst.msk [vmem:[%s391 + $0xd8] sm:$0xff] %vm394, %v3213
      %3246 = vst.msk [vmem:[%s391 + $0xe0] sm:$0xff] %vm394, %v3214
      %3247 = vst.msk [vmem:[%s391 + $0xe8] sm:$0xff] %vm394, %v3215
      %3248 = vst.msk [vmem:[%s391 + $0xf0] sm:$0xff] %vm394, %v3216
      %3249 = vst.msk [vmem:[%s391 + $0xf8] sm:$0xff] %vm394, %v3217
      %s3250 = smul.u32 16, %s21
      %p3251 = scmp.lt.s32.totalorder %s20, 1
      %s3252 = scalar_select %p3251, %s20, 1
      %p3253 = scmp.lt.s32.totalorder %s3250, 15
      %s3254 = scalar_select %p3253, %s3250, 15
      %s3255 = smul.addr %s3254, 2
      %s3256 = smul.addr %s3252, 32
      %s3257 = sadd.s32 %s3255, %s3256
      %s3258 = smul.addr %s3257, 8
      %s3259 = scalar_lea.vmem %s5, %s3258
      // Predicated region
      $region49: #{conv_block_forward.3} parent=39 // pred_check
        %p3260 = pneg %p190
      $region50: #{conv_block_forward.3} parent=39 // pred_check_branch
        %3262 = sbr.rel (%p3260) target = $region52
      $region51: #{conv_block_forward.3} parent=39 // pred_region
        %s3263 = smul.u32 16, %s21
      $region52: #{conv_block_forward.3} parent=39 // pred_fallthru
        _
    $region40: #{conv_block_forward.3} parent=5 // pred_fallthru
      _
    %p3264 = scmp.le.s32.totalorder 2, %s11
    // Predicated region
    $region53: #{conv_block_forward.3} parent=5 // pred_check
      %p3265 = pneg %p3264
    $region54: #{conv_block_forward.3} parent=5 // pred_check_branch
      %3267 = sbr.rel (%p3265) target = $region56
    $region55: #{conv_block_forward.3} parent=5 // pred_region
      %s3268 = ssub.s32 %s11, 2
      // Predicated region
      $region57: #{conv_block_forward.3} parent=55 // pred_check
        %p3269 = pneg %p196
      $region58: #{conv_block_forward.3} parent=55 // pred_check_branch
        %3271 = sbr.rel (%p3269) target = $region60
      $region59: #{conv_block_forward.3} parent=55 // pred_region
        %s3272 = smul.u32 16, %s23
        %p3273 = scmp.lt.s32.totalorder %s22, 1
        %s3274 = scalar_select %p3273, %s22, 1
        %p3275 = scmp.lt.s32.totalorder %s3272, 15
        %s3276 = scalar_select %p3275, %s3272, 15
        %s3277 = smul.addr %s3276, 2
        %s3278 = smul.addr %s3274, 32
        %s3279 = sadd.s32 %s3277, %s3278
        %s3280 = smul.addr %s3279, 8
        %s3281 = scalar_lea.vmem %s5, %s3280
      $region60: #{conv_block_forward.3} parent=55 // pred_fallthru
        _
    $region56: #{conv_block_forward.3} parent=5 // pred_fallthru
      _
  $region6: #{conv_block_forward.3} parent=0 // loop_footer
    %s15 = sadd.s32 1, %s11
  $region7: #{conv_block_forward.3} parent=0 // loop_footer_branch
    %10 = sbr.rel target = $region3
  $region8: #{conv_block_forward.3} parent=0 // loop_exit
    _

// kernel: conv_block_forward.2
$region0: #{conv_block_forward.2}
  #allocation0 [shape = 'u32[]', space=smem, size = 0x4, offset = 0x4, fixed_abs, tag = 'smem constant byte address 0x4 - core index']
  #allocation1 [shape = 'u32[144,128]{1,0:T(1,128)}', space=vmem, size = 0x12000, scoped, tag = 'internal scratch']
  #allocation2 [shape = 'f32[18,18,4]{2,1,0:T(8,128)}', space=vmem, size = 0x36000, scoped, tag = 'scratch operand']
  %s0 = inlined_call_operand.vmem [shape: f32[2,16,16,4], index: 0, kind: input, shape index: {}, may-alias: {0,1,2}]
  %s1 = inlined_call_operand.vmem [shape: f32[2,16,16,4], index: 1, kind: input, shape index: {}, may-alias: {0,1,2}]
  %s2 = inlined_call_operand.vmem [shape: f32[2,16,16,4], index: 2, kind: input, shape index: {}, may-alias: {0,1,2}]
  %s3 = inlined_call_operand.vmem [shape: bf16[9,4,8], index: 3, kind: input, shape index: {}]
  %s4 = inlined_call_operand.vmem [shape: f32[1,8], index: 4, kind: input, shape index: {}]
  %s5 = inlined_call_operand.vmem [shape: f32[2,16,16,8], index: 5, kind: output, shape index: {}]
  %s6 = sld [smem:[#allocation0]]
  $region61: #{conv_block_forward.2} parent=0
    _
  %s8 = ssub.s32 1, %s6
  %s9 = scalar_select 0, %s8, %s6
  loop: start=0, step=1, limit=4
  $region2: #{conv_block_forward.2} parent=0 // loop_pre_header
    _
  $region3: #{conv_block_forward.2} parent=0 // loop_header
    %s11 = sphi 0, %s15
    %p12 = scmp.ge.s32.totalorder %s11, 4
    %s18 = sphi 0, %s30
    %s19 = sphi 0, %s26
    %s20 = sphi 0, %s18
    %s21 = sphi 0, %s19
    %s22 = sphi 0, %s20
    %s23 = sphi 0, %s21
    %s35 = sphi 0, %s37
    %s38 = sphi 0, %s35
    %s39 = sphi 0, %s38
    %s55 = sphi 0, %s39
    %s71 = sphi 0, %s73
    %s74 = sphi 0, %s71
    %s75 = sphi 0, %s74
    %s91 = sphi 0, %s75
    %s107 = sphi 0, %s109
    %s110 = sphi 0, %s107
    %s111 = sphi 0, %s110
    %s127 = sphi 0, %s111
    %s131 = sphi 0, %s131
    %s133 = sphi 0, %s131
    %s134 = sphi 0, %s133
    %s148 = sphi 0, %s134
    %s152 = sphi 0, %s152
    %s154 = sphi 0, %s152
    %s155 = sphi 0, %s154
    %s169 = sphi 0, %s155
    %s177 = sphi 0, %s179
    %s180 = sphi 0, %s177
    %s181 = sphi 0, %s180
    %s197 = sphi 0, %s181
  $region4: #{conv_block_forward.2} parent=0 // loop_header_branch
    %14 = sbr.rel (%p12) target = $region8
  $region5: #{conv_block_forward.2} parent=0 // loop_body
    %s16 = ssub.s32 %s11, 1
    %s17 = ssub.s32 %s11, 2
    %s24 = sadd.s32 1, %s19
    %p25 = scmp.ge.s32.totalorder %s24, 1
    %s26 = scalar_select %p25, 0, %s24
    %s27 = sadd.s32 1, %s18
    %s28 = scalar_select %p25, %s27, %s18
    %p29 = scmp.ge.s32.totalorder %s28, 2
    %s30 = scalar_select %p29, 0, %s28
    %s31 = ssub.s32 %s18, %s30
    %s32 = ssub.s32 %s19, %s26
    %s33 = sor.u32 %s31, %s32
    %p34 = scmp.eq.s32.totalorder %s33, 0
    %s36 = sadd.s32 %s35, 1
    %s37 = scalar_select %p34, %s35, %s36
    %p40 = pneg %p34
    %p41 = scmp.eq.s32.totalorder %s11, 1
    %p42 = por %p40, %p41
    %p43 = scmp.ne.s32.totalorder %s35, %s38
    %p44 = scmp.eq.s32.totalorder %s11, 0
    %p45 = por %p43, %p44
    %p46 = scmp.ne.s32.totalorder %s35, %s38
    %p47 = scmp.eq.s32.totalorder %s16, 1
    %p48 = por %p46, %p47
    %p49 = scmp.ne.s32.totalorder %s38, %s39
    %p50 = scmp.eq.s32.totalorder %s16, 0
    %p51 = por %p49, %p50
    %p52 = scmp.ne.s32.totalorder %s38, %s39
    %p53 = scmp.eq.s32.totalorder %s17, 1
    %p54 = por %p52, %p53
    %p56 = scmp.ne.s32.totalorder %s39, %s55
    %p57 = scmp.eq.s32.totalorder %s17, 0
    %p58 = por %p56, %p57
    %s59 = smul.u32 %s19, 16
    %s60 = ssub.s32 %s59, 1
    %p61 = scmp.gt.s32.totalorder %s60, 0
    %s62 = scalar_select %p61, %s60, 0
    %s63 = smul.u32 %s26, 16
    %s64 = ssub.s32 %s63, 1
    %p65 = scmp.gt.s32.totalorder %s64, 0
    %s66 = scalar_select %p65, %s64, 0
    %s67 = ssub.s32 %s18, %s30
    %s68 = ssub.s32 %s62, %s66
    %s69 = sor.u32 %s67, %s68
    %p70 = scmp.eq.s32.totalorder %s69, 0
    %s72 = sadd.s32 %s71, 1
    %s73 = scalar_select %p70, %s71, %s72
    %p76 = pneg %p70
    %p77 = scmp.eq.s32.totalorder %s11, 1
    %p78 = por %p76, %p77
    %p79 = scmp.ne.s32.totalorder %s71, %s74
    %p80 = scmp.eq.s32.totalorder %s11, 0
    %p81 = por %p79, %p80
    %p82 = scmp.ne.s32.totalorder %s71, %s74
    %p83 = scmp.eq.s32.totalorder %s16, 1
    %p84 = por %p82, %p83
    %p85 = scmp.ne.s32.totalorder %s74, %s75
    %p86 = scmp.eq.s32.totalorder %s16, 0
    %p87 = por %p85, %p86
    %p88 = scmp.ne.s32.totalorder %s74, %s75
    %p89 = scmp.eq.s32.totalorder %s17, 1
    %p90 = por %p88, %p89
    %p92 = scmp.ne.s32.totalorder %s75, %s91
    %p93 = scmp.eq.s32.totalorder %s17, 0
    %p94 = por %p92, %p93
    %s95 = sadd.s32 %s19, 1
    %s96 = smul.u32 %s95, 16
    %p97 = scmp.lt.s32.totalorder %s96, 15
    %s98 = scalar_select %p97, %s96, 15
    %s99 = sadd.s32 %s26, 1
    %s100 = smul.u32 %s99, 16
    %p101 = scmp.lt.s32.totalorder %s100, 15
    %s102 = scalar_select %p101, %s100, 15
    %s103 = ssub.s32 %s18, %s30
    %s104 = ssub.s32 %s98, %s102
    %s105 = sor.u32 %s103, %s104
    %p106 = scmp.eq.s32.totalorder %s105, 0
    %s108 = sadd.s32 %s107, 1
    %s109 = scalar_select %p106, %s107, %s108
    %p112 = pneg %p106
    %p113 = scmp.eq.s32.totalorder %s11, 1
    %p114 = por %p112, %p113
    %p115 = scmp.ne.s32.totalorder %s107, %s110
    %p116 = scmp.eq.s32.totalorder %s11, 0
    %p117 = por %p115, %p116
    %p118 = scmp.ne.s32.totalorder %s107, %s110
    %p119 = scmp.eq.s32.totalorder %s16, 1
    %p120 = por %p118, %p119
    %p121 = scmp.ne.s32.totalorder %s110, %s111
    %p122 = scmp.eq.s32.totalorder %s16, 0
    %p123 = por %p121, %p122
    %p124 = scmp.ne.s32.totalorder %s110, %s111
    %p125 = scmp.eq.s32.totalorder %s17, 1
    %p126 = por %p124, %p125
    %p128 = scmp.ne.s32.totalorder %s111, %s127
    %p129 = scmp.eq.s32.totalorder %s17, 0
    %p130 = por %p128, %p129
    %s132 = sadd.s32 %s131, 1
    %p135 = scmp.eq.s32.totalorder %s11, 1
    %p136 = scmp.ne.s32.totalorder %s131, %s133
    %p137 = scmp.eq.s32.totalorder %s11, 0
    %p138 = por %p136, %p137
    %p139 = scmp.ne.s32.totalorder %s131, %s133
    %p140 = scmp.eq.s32.totalorder %s16, 1
    %p141 = por %p139, %p140
    %p142 = scmp.ne.s32.totalorder %s133, %s134
    %p143 = scmp.eq.s32.totalorder %s16, 0
    %p144 = por %p142, %p143
    %p145 = scmp.ne.s32.totalorder %s133, %s134
    %p146 = scmp.eq.s32.totalorder %s17, 1
    %p147 = por %p145, %p146
    %p149 = scmp.ne.s32.totalorder %s134, %s148
    %p150 = scmp.eq.s32.totalorder %s17, 0
    %p151 = por %p149, %p150
    %s153 = sadd.s32 %s152, 1
    %p156 = scmp.eq.s32.totalorder %s11, 1
    %p157 = scmp.ne.s32.totalorder %s152, %s154
    %p158 = scmp.eq.s32.totalorder %s11, 0
    %p159 = por %p157, %p158
    %p160 = scmp.ne.s32.totalorder %s152, %s154
    %p161 = scmp.eq.s32.totalorder %s16, 1
    %p162 = por %p160, %p161
    %p163 = scmp.ne.s32.totalorder %s154, %s155
    %p164 = scmp.eq.s32.totalorder %s16, 0
    %p165 = por %p163, %p164
    %p166 = scmp.ne.s32.totalorder %s154, %s155
    %p167 = scmp.eq.s32.totalorder %s17, 1
    %p168 = por %p166, %p167
    %p170 = scmp.ne.s32.totalorder %s155, %s169
    %p171 = scmp.eq.s32.totalorder %s17, 0
    %p172 = por %p170, %p171
    %s173 = ssub.s32 %s18, %s30
    %s174 = ssub.s32 %s19, %s26
    %s175 = sor.u32 %s173, %s174
    %p176 = scmp.eq.s32.totalorder %s175, 0
    %s178 = sadd.s32 %s177, 1
    %s179 = scalar_select %p176, %s177, %s178
    %p182 = pneg %p176
    %p183 = scmp.eq.s32.totalorder %s11, 1
    %p184 = por %p182, %p183
    %p185 = scmp.ne.s32.totalorder %s177, %s180
    %p186 = scmp.eq.s32.totalorder %s11, 0
    %p187 = por %p185, %p186
    %p188 = scmp.ne.s32.totalorder %s177, %s180
    %p189 = scmp.eq.s32.totalorder %s16, 1
    %p190 = por %p188, %p189
    %p191 = scmp.ne.s32.totalorder %s180, %s181
    %p192 = scmp.eq.s32.totalorder %s16, 0
    %p193 = por %p191, %p192
    %p194 = scmp.ne.s32.totalorder %s180, %s181
    %p195 = scmp.eq.s32.totalorder %s17, 1
    %p196 = por %p194, %p195
    %p198 = scmp.ne.s32.totalorder %s181, %s197
    %p199 = scmp.eq.s32.totalorder %s17, 0
    %p200 = por %p198, %p199
    %p201 = scmp.le.s32.totalorder 1, %s11
    %p202 = scmp.lt.s32.totalorder %s11, 3
    %p203 = pnand %p201, %p202
    %p204 = pneg %p203
    // Predicated region
    $region9: #{conv_block_forward.2} parent=5 // pred_check
      _
    $region10: #{conv_block_forward.2} parent=5 // pred_check_branch
      %206 = sbr.rel (%p203) target = $region12
    $region11: #{conv_block_forward.2} parent=5 // pred_region
      %s207 = ssub.s32 %s11, 1
      // Predicated region
      $region13: #{conv_block_forward.2} parent=11 // pred_check
        %p208 = pneg %p144
      $region14: #{conv_block_forward.2} parent=11 // pred_check_branch
        %210 = sbr.rel (%p208) target = $region16
      $region15: #{conv_block_forward.2} parent=11 // pred_region
        _
      $region16: #{conv_block_forward.2} parent=11 // pred_fallthru
        _
      // Predicated region
      $region17: #{conv_block_forward.2} parent=11 // pred_check
        %p211 = pneg %p165
      $region18: #{conv_block_forward.2} parent=11 // pred_check_branch
        %213 = sbr.rel (%p211) target = $region20
      $region19: #{conv_block_forward.2} parent=11 // pred_region
        _
      $region20: #{conv_block_forward.2} parent=11 // pred_fallthru
        _
    $region12: #{conv_block_forward.2} parent=5 // pred_fallthru
      _
    %p214 = scmp.lt.s32.totalorder %s11, 2
    // Predicated region
    $region21: #{conv_block_forward.2} parent=5 // pred_check
      %p215 = pneg %p214
    $region22: #{conv_block_forward.2} parent=5 // pred_check_branch
      %217 = sbr.rel (%p215) target = $region24
    $region23: #{conv_block_forward.2} parent=5 // pred_region
      // Predicated region
      $region25: #{conv_block_forward.2} parent=23 // pred_check
        %p218 = pneg %p45
      $region26: #{conv_block_forward.2} parent=23 // pred_check_branch
        %220 = sbr.rel (%p218) target = $region28
      $region27: #{conv_block_forward.2} parent=23 // pred_region
        %s221 = smul.u32 16, %s19
        %p222 = scmp.lt.s32.totalorder %s18, 1
        %s223 = scalar_select %p222, %s18, 1
        %p224 = scmp.lt.s32.totalorder %s221, 15
        %s225 = scalar_select %p224, %s221, 15
        %s226 = smul.addr %s225, 2
        %s227 = smul.addr %s223, 32
        %s228 = sadd.s32 %s226, %s227
        %s229 = smul.addr %s228, 8
        %s230 = scalar_lea.vmem %s0, %s229
        %s231 = smul.u32 16, %s19
      $region28: #{conv_block_forward.2} parent=23 // pred_fallthru
        _
      // Predicated region
      $region29: #{conv_block_forward.2} parent=23 // pred_check
        %p232 = pneg %p81
      $region30: #{conv_block_forward.2} parent=23 // pred_check_branch
        %234 = sbr.rel (%p232) target = $region32
      $region31: #{conv_block_forward.2} parent=23 // pred_region
        %s235 = smul.u32 %s19, 16
        %s236 = ssub.s32 %s235, 1
        %p237 = scmp.gt.s32.totalorder %s236, 0
        %s238 = scalar_select %p237, %s236, 0
        %p239 = scmp.lt.s32.totalorder %s18, 1
        %s240 = scalar_select %p239, %s18, 1
        %p241 = scmp.lt.s32.totalorder %s238, 15
        %s242 = scalar_select %p241, %s238, 15
        %s243 = smul.addr %s242, 2
        %s244 = smul.addr %s240, 32
        %s245 = sadd.s32 %s243, %s244
        %s246 = smul.addr %s245, 8
        %s247 = scalar_lea.vmem %s1, %s246
        %s248 = smul.u32 %s19, 16
        %s249 = ssub.s32 %s248, 1
        %p250 = scmp.gt.s32.totalorder %s249, 0
        %s251 = scalar_select %p250, %s249, 0
      $region32: #{conv_block_forward.2} parent=23 // pred_fallthru
        _
      // Predicated region
      $region33: #{conv_block_forward.2} parent=23 // pred_check
        %p252 = pneg %p117
      $region34: #{conv_block_forward.2} parent=23 // pred_check_branch
        %254 = sbr.rel (%p252) target = $region36
      $region35: #{conv_block_forward.2} parent=23 // pred_region
        %s255 = sadd.s32 %s19, 1
        %s256 = smul.u32 %s255, 16
        %p257 = scmp.lt.s32.totalorder %s256, 15
        %s258 = scalar_select %p257, %s256, 15
        %p259 = scmp.lt.s32.totalorder %s18, 1
        %s260 = scalar_select %p259, %s18, 1
        %p261 = scmp.lt.s32.totalorder %s258, 15
        %s262 = scalar_select %p261, %s258, 15
        %s263 = smul.addr %s262, 2
        %s264 = smul.addr %s260, 32
        %s265 = sadd.s32 %s263, %s264
        %s266 = smul.addr %s265, 8
        %s267 = scalar_lea.vmem %s2, %s266
        %s268 = sadd.s32 %s19, 1
        %s269 = smul.u32 %s268, 16
        %p270 = scmp.lt.s32.totalorder %s269, 15
        %s271 = scalar_select %p270, %s269, 15
      $region36: #{conv_block_forward.2} parent=23 // pred_fallthru
        _
    $region24: #{conv_block_forward.2} parent=5 // pred_fallthru
      _
    %p272 = scmp.le.s32.totalorder 1, %s11
    %p273 = scmp.lt.s32.totalorder %s11, 3
    %p274 = pnand %p272, %p273
    %p275 = pneg %p274
    // Predicated region
    $region37: #{conv_block_forward.2} parent=5 // pred_check
      _
    $region38: #{conv_block_forward.2} parent=5 // pred_check_branch
      %277 = sbr.rel (%p274) target = $region40
    $region39: #{conv_block_forward.2} parent=5 // pred_region
      %s278 = ssub.s32 %s11, 1
      %s279 = smul.u32 16, %s21
      %p280 = scmp.lt.s32.totalorder %s20, 1
      %s281 = scalar_select %p280, %s20, 1
      %p282 = scmp.lt.s32.totalorder %s279, 15
      %s283 = scalar_select %p282, %s279, 15
      %s284 = smul.addr %s283, 2
      %s285 = smul.addr %s281, 32
      %s286 = sadd.s32 %s284, %s285
      %s287 = smul.addr %s286, 8
      %s288 = scalar_lea.vmem %s0, %s287
      %p289 = pneg %p51
      %p290 = pneg %p48
      %s291 = smul.u32 %s21, 16
      %s292 = ssub.s32 %s291, 1
      %p293 = scmp.gt.s32.totalorder %s292, 0
      %s294 = scalar_select %p293, %s292, 0
      %p295 = scmp.lt.s32.totalorder %s20, 1
      %s296 = scalar_select %p295, %s20, 1
      %p297 = scmp.lt.s32.totalorder %s294, 15
      %s298 = scalar_select %p297, %s294, 15
      %s299 = smul.addr %s298, 2
      %s300 = smul.addr %s296, 32
      %s301 = sadd.s32 %s299, %s300
      %s302 = smul.addr %s301, 8
      %s303 = scalar_lea.vmem %s1, %s302
      %p304 = pneg %p87
      %p305 = pneg %p84
      %s306 = sadd.s32 %s21, 1
      %s307 = smul.u32 %s306, 16
      %p308 = scmp.lt.s32.totalorder %s307, 15
      %s309 = scalar_select %p308, %s307, 15
      %p310 = scmp.lt.s32.totalorder %s20, 1
      %s311 = scalar_select %p310, %s20, 1
      %p312 = scmp.lt.s32.totalorder %s309, 15
      %s313 = scalar_select %p312, %s309, 15
      %s314 = smul.addr %s313, 2
      %s315 = smul.addr %s311, 32
      %s316 = sadd.s32 %s314, %s315
      %s317 = smul.addr %s316, 8
      %s318 = scalar_lea.vmem %s2, %s317
      %p319 = pneg %p123
      %p320 = pneg %p120
      %p321 = pneg %p144
      %p322 = pneg %p141
      %p323 = pneg %p165
      %p324 = pneg %p162
      %p325 = pneg %p193
      %p326 = pneg %p190
      %s327 = smul.u32 16, %s21
      %p328 = scmp.lt.s32.totalorder %s20, 1
      %s329 = scalar_select %p328, %s20, 1
      %p330 = scmp.lt.s32.totalorder %s327, 15
      %s331 = scalar_select %p330, %s327, 15
      %s332 = smul.addr %s331, 2
      %s333 = smul.addr %s329, 32
      %s334 = sadd.s32 %s332, %s333
      %s335 = smul.addr %s334, 8
      %s336 = scalar_lea.vmem %s5, %s335
      %s337 = smul.u32 16, %s21
      %p338 = scmp.lt.s32.totalorder %s20, 1
      %s339 = scalar_select %p338, %s20, 1
      %p340 = scmp.lt.s32.totalorder %s337, 15
      %s341 = scalar_select %p340, %s337, 15
      %s342 = smul.addr %s341, 2
      %s343 = smul.addr %s339, 32
      %s344 = sadd.s32 %s342, %s343
      %s345 = smul.addr %s344, 8
      %s346 = scalar_lea.vmem %s0, %s345
      %s347 = smul.u32 16, %s21
      %s348 = smul.u32 %s21, 16
      %s349 = ssub.s32 %s348, 1
      %p350 = scmp.gt.s32.totalorder %s349, 0
      %s351 = scalar_select %p350, %s349, 0
      %p352 = scmp.lt.s32.totalorder %s20, 1
      %s353 = scalar_select %p352, %s20, 1
      %p354 = scmp.lt.s32.totalorder %s351, 15
      %s355 = scalar_select %p354, %s351, 15
      %s356 = smul.addr %s355, 2
      %s357 = smul.addr %s353, 32
      %s358 = sadd.s32 %s356, %s357
      %s359 = smul.addr %s358, 8
      %s360 = scalar_lea.vmem %s1, %s359
      %s361 = smul.u32 %s21, 16
      %s362 = ssub.s32 %s361, 1
      %p363 = scmp.gt.s32.totalorder %s362, 0
      %s364 = scalar_select %p363, %s362, 0
      %s365 = sadd.s32 %s21, 1
      %s366 = smul.u32 %s365, 16
      %p367 = scmp.lt.s32.totalorder %s366, 15
      %s368 = scalar_select %p367, %s366, 15
      %p369 = scmp.lt.s32.totalorder %s20, 1
      %s370 = scalar_select %p369, %s20, 1
      %p371 = scmp.lt.s32.totalorder %s368, 15
      %s372 = scalar_select %p371, %s368, 15
      %s373 = smul.addr %s372, 2
      %s374 = smul.addr %s370, 32
      %s375 = sadd.s32 %s373, %s374
      %s376 = smul.addr %s375, 8
      %s377 = scalar_lea.vmem %s2, %s376
      %s378 = sadd.s32 %s21, 1
      %s379 = smul.u32 %s378, 16
      %p380 = scmp.lt.s32.totalorder %s379, 15
      %s381 = scalar_select %p380, %s379, 15
      %s382 = smul.u32 16, %s21
      %p383 = scmp.lt.s32.totalorder %s20, 1
      %s384 = scalar_select %p383, %s20, 1
      %p385 = scmp.lt.s32.totalorder %s382, 15
      %s386 = scalar_select %p385, %s382, 15
      %s387 = smul.addr %s386, 2
      %s388 = smul.addr %s384, 32
      %s389 = sadd.s32 %s387, %s388
      %s390 = smul.addr %s389, 8
      %s391 = scalar_lea.vmem %s5, %s390
      %s392 = smul.u32 16, %s21
      %vm394 = vcmask 31744
      %395 = vst.msk [vmem:[#allocation2] sm:$0xff] %vm394, 0.0
      %396 = vst.msk [vmem:[#allocation2 + $0x8] sm:$0xff] %vm394, 0.0
      %vm397 = vcmask 25600
      %398 = vst.msk [vmem:[#allocation2 + $0x10] sm:$0x3] %vm397, 0.0
      %399 = vst.msk [vmem:[#allocation2 + $0x18] sm:$0xff] %vm394, 0.0
      %400 = vst.msk [vmem:[#allocation2 + $0x20] sm:$0xff] %vm394, 0.0
      %401 = vst.msk [vmem:[#allocation2 + $0x28] sm:$0x3] %vm397, 0.0
      %402 = vst.msk [vmem:[#allocation2 + $0x30] sm:$0xff] %vm394, 0.0
      %403 = vst.msk [vmem:[#allocation2 + $0x38] sm:$0xff] %vm394, 0.0
      %404 = vst.msk [vmem:[#allocation2 + $0x40] sm:$0x3] %vm397, 0.0
      %405 = vst.msk [vmem:[#allocation2 + $0x48] sm:$0xff] %vm394, 0.0
      %406 = vst.msk [vmem:[#allocation2 + $0x50] sm:$0xff] %vm394, 0.0
      %407 = vst.msk [vmem:[#allocation2 + $0x58] sm:$0x3] %vm397, 0.0
      %408 = vst.msk [vmem:[#allocation2 + $0x60] sm:$0xff] %vm394, 0.0
      %409 = vst.msk [vmem:[#allocation2 + $0x68] sm:$0xff] %vm394, 0.0
      %410 = vst.msk [vmem:[#allocation2 + $0x70] sm:$0x3] %vm397, 0.0
      %411 = vst.msk [vmem:[#allocation2 + $0x78] sm:$0xff] %vm394, 0.0
      %412 = vst.msk [vmem:[#allocation2 + $0x80] sm:$0xff] %vm394, 0.0
      %413 = vst.msk [vmem:[#allocation2 + $0x88] sm:$0x3] %vm397, 0.0
      %414 = vst.msk [vmem:[#allocation2 + $0x90] sm:$0xff] %vm394, 0.0
      %415 = vst.msk [vmem:[#allocation2 + $0x98] sm:$0xff] %vm394, 0.0
      %416 = vst.msk [vmem:[#allocation2 + $0xa0] sm:$0x3] %vm397, 0.0
      %417 = vst.msk [vmem:[#allocation2 + $0xa8] sm:$0xff] %vm394, 0.0
      %418 = vst.msk [vmem:[#allocation2 + $0xb0] sm:$0xff] %vm394, 0.0
      %419 = vst.msk [vmem:[#allocation2 + $0xb8] sm:$0x3] %vm397, 0.0
      %420 = vst.msk [vmem:[#allocation2 + $0xc0] sm:$0xff] %vm394, 0.0
      %421 = vst.msk [vmem:[#allocation2 + $0xc8] sm:$0xff] %vm394, 0.0
      %422 = vst.msk [vmem:[#allocation2 + $0xd0] sm:$0x3] %vm397, 0.0
      %423 = vst.msk [vmem:[#allocation2 + $0xd8] sm:$0xff] %vm394, 0.0
      %424 = vst.msk [vmem:[#allocation2 + $0xe0] sm:$0xff] %vm394, 0.0
      %425 = vst.msk [vmem:[#allocation2 + $0xe8] sm:$0x3] %vm397, 0.0
      %426 = vst.msk [vmem:[#allocation2 + $0xf0] sm:$0xff] %vm394, 0.0
      %427 = vst.msk [vmem:[#allocation2 + $0xf8] sm:$0xff] %vm394, 0.0
      %428 = vst.msk [vmem:[#allocation2 + $0x100] sm:$0x3] %vm397, 0.0
      %429 = vst.msk [vmem:[#allocation2 + $0x108] sm:$0xff] %vm394, 0.0
      %430 = vst.msk [vmem:[#allocation2 + $0x110] sm:$0xff] %vm394, 0.0
      %431 = vst.msk [vmem:[#allocation2 + $0x118] sm:$0x3] %vm397, 0.0
      %432 = vst.msk [vmem:[#allocation2 + $0x120] sm:$0xff] %vm394, 0.0
      %433 = vst.msk [vmem:[#allocation2 + $0x128] sm:$0xff] %vm394, 0.0
      %434 = vst.msk [vmem:[#allocation2 + $0x130] sm:$0x3] %vm397, 0.0
      %435 = vst.msk [vmem:[#allocation2 + $0x138] sm:$0xff] %vm394, 0.0
      %436 = vst.msk [vmem:[#allocation2 + $0x140] sm:$0xff] %vm394, 0.0
      %437 = vst.msk [vmem:[#allocation2 + $0x148] sm:$0x3] %vm397, 0.0
      %438 = vst.msk [vmem:[#allocation2 + $0x150] sm:$0xff] %vm394, 0.0
      %439 = vst.msk [vmem:[#allocation2 + $0x158] sm:$0xff] %vm394, 0.0
      %440 = vst.msk [vmem:[#allocation2 + $0x160] sm:$0x3] %vm397, 0.0
      %441 = vst.msk [vmem:[#allocation2 + $0x168] sm:$0xff] %vm394, 0.0
      %442 = vst.msk [vmem:[#allocation2 + $0x170] sm:$0xff] %vm394, 0.0
      %443 = vst.msk [vmem:[#allocation2 + $0x178] sm:$0x3] %vm397, 0.0
      %444 = vst.msk [vmem:[#allocation2 + $0x180] sm:$0xff] %vm394, 0.0
      %445 = vst.msk [vmem:[#allocation2 + $0x188] sm:$0xff] %vm394, 0.0
      %446 = vst.msk [vmem:[#allocation2 + $0x190] sm:$0x3] %vm397, 0.0
      %447 = vst.msk [vmem:[#allocation2 + $0x198] sm:$0xff] %vm394, 0.0
      %448 = vst.msk [vmem:[#allocation2 + $0x1a0] sm:$0xff] %vm394, 0.0
      %449 = vst.msk [vmem:[#allocation2 + $0x1a8] sm:$0x3] %vm397, 0.0
      %v450 = vld [vmem:[%s346] sm:$0xff]
      %v451 = vld [vmem:[%s346 + $0x8] sm:$0xff]
      %v452 = vld [vmem:[%s346 + $0x10] sm:$0xff]
      %v453 = vld [vmem:[%s346 + $0x18] sm:$0xff]
      %v454 = vld [vmem:[%s346 + $0x20] sm:$0xff]
      %v455 = vld [vmem:[%s346 + $0x28] sm:$0xff]
      %v456 = vld [vmem:[%s346 + $0x30] sm:$0xff]
      %v457 = vld [vmem:[%s346 + $0x38] sm:$0xff]
      %v458 = vld [vmem:[%s346 + $0x40] sm:$0xff]
      %v459 = vld [vmem:[%s346 + $0x48] sm:$0xff]
      %v460 = vld [vmem:[%s346 + $0x50] sm:$0xff]
      %v461 = vld [vmem:[%s346 + $0x58] sm:$0xff]
      %v462 = vld [vmem:[%s346 + $0x60] sm:$0xff]
      %v463 = vld [vmem:[%s346 + $0x68] sm:$0xff]
      %v464 = vld [vmem:[%s346 + $0x70] sm:$0xff]
      %v465 = vld [vmem:[%s346 + $0x78] sm:$0xff]
      %v466 = vld [vmem:[%s346 + $0x80] sm:$0xff]
      %v467 = vld [vmem:[%s346 + $0x88] sm:$0xff]
      %v468 = vld [vmem:[%s346 + $0x90] sm:$0xff]
      %v469 = vld [vmem:[%s346 + $0x98] sm:$0xff]
      %v470 = vld [vmem:[%s346 + $0xa0] sm:$0xff]
      %v471 = vld [vmem:[%s346 + $0xa8] sm:$0xff]
      %v472 = vld [vmem:[%s346 + $0xb0] sm:$0xff]
      %v473 = vld [vmem:[%s346 + $0xb8] sm:$0xff]
      %v474 = vld [vmem:[%s346 + $0xc0] sm:$0xff]
      %v475 = vld [vmem:[%s346 + $0xc8] sm:$0xff]
      %v476 = vld [vmem:[%s346 + $0xd0] sm:$0xff]
      %v477 = vld [vmem:[%s346 + $0xd8] sm:$0xff]
      %v478 = vld [vmem:[%s346 + $0xe0] sm:$0xff]
      %v479 = vld [vmem:[%s346 + $0xe8] sm:$0xff]
      %v480 = vld [vmem:[%s346 + $0xf0] sm:$0xff]
      %v481 = vld [vmem:[%s346 + $0xf8] sm:$0xff]
      %s482 = scalar_lea.vmem [#allocation2], 24
      %483 = vst.msk [vmem:[%s482 + $0x1] sm:$0xff] %vm394, %v450
      %484 = vst.msk [vmem:[%s482 + $0x9] sm:$0xff] %vm394, %v451
      %485 = vst.msk [vmem:[%s482 + $0x19] sm:$0xff] %vm394, %v452
      %486 = vst.msk [vmem:[%s482 + $0x21] sm:$0xff] %vm394, %v453
      %487 = vst.msk [vmem:[%s482 + $0x31] sm:$0xff] %vm394, %v454
      %488 = vst.msk [vmem:[%s482 + $0x39] sm:$0xff] %vm394, %v455
      %489 = vst.msk [vmem:[%s482 + $0x49] sm:$0xff] %vm394, %v456
      %490 = vst.msk [vmem:[%s482 + $0x51] sm:$0xff] %vm394, %v457
      %491 = vst.msk [vmem:[%s482 + $0x61] sm:$0xff] %vm394, %v458
      %492 = vst.msk [vmem:[%s482 + $0x69] sm:$0xff] %vm394, %v459
      %493 = vst.msk [vmem:[%s482 + $0x79] sm:$0xff] %vm394, %v460
      %494 = vst.msk [vmem:[%s482 + $0x81] sm:$0xff] %vm394, %v461
      %495 = vst.msk [vmem:[%s482 + $0x91] sm:$0xff] %vm394, %v462
      %496 = vst.msk [vmem:[%s482 + $0x99] sm:$0xff] %vm394, %v463
      %497 = vst.msk [vmem:[%s482 + $0xa9] sm:$0xff] %vm394, %v464
      %498 = vst.msk [vmem:[%s482 + $0xb1] sm:$0xff] %vm394, %v465
      %499 = vst.msk [vmem:[%s482 + $0xc1] sm:$0xff] %vm394, %v466
      %500 = vst.msk [vmem:[%s482 + $0xc9] sm:$0xff] %vm394, %v467
      %501 = vst.msk [vmem:[%s482 + $0xd9] sm:$0xff] %vm394, %v468
      %502 = vst.msk [vmem:[%s482 + $0xe1] sm:$0xff] %vm394, %v469
      %503 = vst.msk [vmem:[%s482 + $0xf1] sm:$0xff] %vm394, %v470
      %504 = vst.msk [vmem:[%s482 + $0xf9] sm:$0xff] %vm394, %v471
      %505 = vst.msk [vmem:[%s482 + $0x109] sm:$0xff] %vm394, %v472
      %506 = vst.msk [vmem:[%s482 + $0x111] sm:$0xff] %vm394, %v473
      %507 = vst.msk [vmem:[%s482 + $0x121] sm:$0xff] %vm394, %v474
      %508 = vst.msk [vmem:[%s482 + $0x129] sm:$0xff] %vm394, %v475
      %509 = vst.msk [vmem:[%s482 + $0x139] sm:$0xff] %vm394, %v476
      %510 = vst.msk [vmem:[%s482 + $0x141] sm:$0xff] %vm394, %v477
      %511 = vst.msk [vmem:[%s482 + $0x151] sm:$0xff] %vm394, %v478
      %512 = vst.msk [vmem:[%s482 + $0x159] sm:$0xff] %vm394, %v479
      %513 = vst.msk [vmem:[%s482 + $0x169] sm:$0xff] %vm394, %v480
      %514 = vst.msk [vmem:[%s482 + $0x171] sm:$0xff] %vm394, %v481
      %p515 = scmp.gt.s32.totalorder %s21, 0
      // Predicated region
      $region41: #{conv_block_forward.2} parent=39 // pred_check
        %p516 = pneg %p515
      $region42: #{conv_block_forward.2} parent=39 // pred_check_branch
        %518 = sbr.rel (%p516) target = $region44
      $region43: #{conv_block_forward.2} parent=39 // pred_region
        %v519 = vld [vmem:[%s360] sm:$0xff]
        %v520 = vld [vmem:[%s360 + $0x8] sm:$0xff]
        %521 = vst.msk [vmem:[#allocation2 + $0x1] sm:$0xff] %vm394, %v519
        %522 = vst.msk [vmem:[#allocation2 + $0x9] sm:$0xff] %vm394, %v520
      $region44: #{conv_block_forward.2} parent=39 // pred_fallthru
        _
      %p523 = scmp.lt.s32.totalorder %s21, 0
      // Predicated region
      $region45: #{conv_block_forward.2} parent=39 // pred_check
        %p524 = pneg %p523
      $region46: #{conv_block_forward.2} parent=39 // pred_check_branch
        %526 = sbr.rel (%p524) target = $region48
      $region47: #{conv_block_forward.2} parent=39 // pred_region
        %v527 = vld [vmem:[%s377] sm:$0xff]
        %v528 = vld [vmem:[%s377 + $0x8] sm:$0xff]
        %s529 = scalar_lea.vmem [#allocation2], 408
        %530 = vst.msk [vmem:[%s529 + $0x1] sm:$0xff] %vm394, %v527
        %531 = vst.msk [vmem:[%s529 + $0x9] sm:$0xff] %vm394, %v528
      $region48: #{conv_block_forward.2} parent=39 // pred_fallthru
        _
      %v532 = vld [vmem:[%s4] sm:$0x1]
      %v534 = vlaneseq
      %v535 = vshrl.u32 %v534, 7
      %v536 = vsub.s32 0, %v535
      %v537 = vrot.slane %v532, %v536
      %v539 = vld [vmem:[#allocation2] sm:$0xff]
      %v540 = vld [vmem:[#allocation2 + $0x8] sm:$0xff]
      %v541 = vld [vmem:[#allocation2 + $0x18] sm:$0xff]
      %v542 = vld [vmem:[#allocation2 + $0x20] sm:$0xff]
      %v543 = vld [vmem:[#allocation2 + $0x30] sm:$0xff]
      %v544 = vld [vmem:[#allocation2 + $0x38] sm:$0xff]
      %v545 = vld [vmem:[#allocation2 + $0x48] sm:$0xff]
      %v546 = vld [vmem:[#allocation2 + $0x50] sm:$0xff]
      %v547 = vld [vmem:[#allocation2 + $0x60] sm:$0xff]
      %v548 = vld [vmem:[#allocation2 + $0x68] sm:$0xff]
      %v549 = vld [vmem:[#allocation2 + $0x78] sm:$0xff]
      %v550 = vld [vmem:[#allocation2 + $0x80] sm:$0xff]
      %v551 = vld [vmem:[#allocation2 + $0x90] sm:$0xff]
      %v552 = vld [vmem:[#allocation2 + $0x98] sm:$0xff]
      %v553 = vld [vmem:[#allocation2 + $0xa8] sm:$0xff]
      %v554 = vld [vmem:[#allocation2 + $0xb0] sm:$0xff]
      %v555 = vld [vmem:[#allocation2 + $0xc0] sm:$0xff]
      %v556 = vld [vmem:[#allocation2 + $0xc8] sm:$0xff]
      %v557 = vld [vmem:[#allocation2 + $0xd8] sm:$0xff]
      %v558 = vld [vmem:[#allocation2 + $0xe0] sm:$0xff]
      %v559 = vld [vmem:[#allocation2 + $0xf0] sm:$0xff]
      %v560 = vld [vmem:[#allocation2 + $0xf8] sm:$0xff]
      %v561 = vld [vmem:[#allocation2 + $0x108] sm:$0xff]
      %v562 = vld [vmem:[#allocation2 + $0x110] sm:$0xff]
      %v563 = vld [vmem:[#allocation2 + $0x120] sm:$0xff]
      %v564 = vld [vmem:[#allocation2 + $0x128] sm:$0xff]
      %v565 = vld [vmem:[#allocation2 + $0x138] sm:$0xff]
      %v566 = vld [vmem:[#allocation2 + $0x140] sm:$0xff]
      %v567 = vld [vmem:[#allocation2 + $0x150] sm:$0xff]
      %v568 = vld [vmem:[#allocation2 + $0x158] sm:$0xff]
      %v569 = vld [vmem:[#allocation2 + $0x168] sm:$0xff]
      %v570 = vld [vmem:[#allocation2 + $0x170] sm:$0xff]
      %v571 = vpack.c.bf16 %v540, %v539
      %v572 = vpack.c.bf16 %v542, %v541
      %v573 = vpack.c.bf16 %v544, %v543
      %v574 = vpack.c.bf16 %v546, %v545
      %v575 = vpack.c.bf16 %v548, %v547
      %v576 = vpack.c.bf16 %v550, %v549
      %v577 = vpack.c.bf16 %v552, %v551
      %v578 = vpack.c.bf16 %v554, %v553
      %v579 = vpack.c.bf16 %v556, %v555
      %v580 = vpack.c.bf16 %v558, %v557
      %v581 = vpack.c.bf16 %v560, %v559
      %v582 = vpack.c.bf16 %v562, %v561
      %v583 = vpack.c.bf16 %v564, %v563
      %v584 = vpack.c.bf16 %v566, %v565
      %v585 = vpack.c.bf16 %v568, %v567
      %v586 = vpack.c.bf16 %v570, %v569
      %v587 = vld [vmem:[%s3] sm:$0x3]
      %v589 = vsel %vm394, %v571, 0
      %v592 = vsel %vm394, %v572, 0
      %v595 = vsel %vm394, %v573, 0
      %v598 = vsel %vm394, %v574, 0
      %v601 = vsel %vm394, %v575, 0
      %v604 = vsel %vm394, %v576, 0
      %v607 = vsel %vm394, %v577, 0
      %v610 = vsel %vm394, %v578, 0
      %v613 = vsel %vm394, %v579, 0
      %v616 = vsel %vm394, %v580, 0
      %v619 = vsel %vm394, %v581, 0
      %v622 = vsel %vm394, %v582, 0
      %v625 = vsel %vm394, %v583, 0
      %v628 = vsel %vm394, %v584, 0
      %v631 = vsel %vm394, %v585, 0
      %v634 = vsel %vm394, %v586, 0
      %vm636 = vcmask 1041408
      %v638 = vsel %vm636, %v587, 0
      %640 = vmatprep.subr.bf16.mxu0 0
      %641 = vmatpush1.bf16.msra.mxu0 %v638
      %642 = vmatprep.subr.bf16.mxu0 0
      %643 = vmatpush1.bf16.msra.mxu0 0
      %644 = vmatprep.subr.bf16.mxu0 0
      %645 = vmatpush1.bf16.msra.mxu0 0
      %646 = vmatprep.subr.bf16.mxu0 0
      %647 = vmatpush1.bf16.msra.mxu0 0
      %648 = vmatprep.subr.bf16.mxu0 0
      %649 = vmatpush1.bf16.msra.mxu0 0
      %650 = vmatprep.subr.bf16.mxu0 0
      %651 = vmatpush1.bf16.msra.mxu0 0
      %652 = vmatprep.subr.bf16.mxu0 0
      %653 = vmatpush1.bf16.msra.mxu0 0
      %654 = vmatprep.subr.bf16.mxu0 0
      %655 = vmatpush1.bf16.msra.mxu0 0
      %656 = vmatprep.subr.bf16.mxu0 0
      %657 = vmatpush1.bf16.msra.mxu0 0
      %658 = vmatprep.subr.bf16.mxu0 0
      %659 = vmatpush1.bf16.msra.mxu0 0
      %660 = vmatprep.subr.bf16.mxu0 0
      %661 = vmatpush1.bf16.msra.mxu0 0
      %662 = vmatprep.subr.bf16.mxu0 0
      %663 = vmatpush1.bf16.msra.mxu0 0
      %664 = vmatprep.subr.bf16.mxu0 0
      %665 = vmatpush1.bf16.msra.mxu0 0
      %666 = vmatprep.subr.bf16.mxu0 0
      %667 = vmatpush1.bf16.msra.mxu0 0
      %668 = vmatprep.subr.bf16.mxu0 0
      %669 = vmatpush1.bf16.msra.mxu0 0
      %670 = vmatprep.subr.bf16.mxu0 0
      %671 = vmatpush1.bf16.msra.mxu0 0
      %672 = vmatprep.mubr.bf16.mxu0 0
      %673 = vmatmul.mubr.bf16.gmra.mrb[0].mxu0 %v589
      %v674 = vpop.f32.mrb[0].mxu0
      %v675 = vadd.f32 0.0, %v674
      %v676 = vpop.f32.mrb[0].mxu0
      %v677 = vpop.f32.mrb[0].mxu0
      %v678 = vadd.f32 0.0, %v677
      %v679 = vpop.f32.mrb[0].mxu0
      %680 = vmatprep.mubr.bf16.mxu0 0
      %681 = vmatmul.mubr.bf16.gmra.mrb[0].mxu0 %v592
      %v682 = vpop.f32.mrb[0].mxu0
      %v683 = vadd.f32 0.0, %v682
      %v684 = vpop.f32.mrb[0].mxu0
      %v685 = vpop.f32.mrb[0].mxu0
      %v686 = vadd.f32 0.0, %v685
      %v687 = vpop.f32.mrb[0].mxu0
      %688 = vmatprep.mubr.bf16.mxu0 0
      %689 = vmatmul.mubr.bf16.gmra.mrb[0].mxu0 %v595
      %v690 = vpop.f32.mrb[0].mxu0
      %v691 = vadd.f32 0.0, %v690
      %v692 = vpop.f32.mrb[0].mxu0
      %v693 = vpop.f32.mrb[0].mxu0
      %v694 = vadd.f32 0.0, %v693
      %v695 = vpop.f32.mrb[0].mxu0
      %696 = vmatprep.mubr.bf16.mxu0 0
      %697 = vmatmul.mubr.bf16.gmra.mrb[0].mxu0 %v598
      %v698 = vpop.f32.mrb[0].mxu0
      %v699 = vadd.f32 0.0, %v698
      %v700 = vpop.f32.mrb[0].mxu0
      %v701 = vpop.f32.mrb[0].mxu0
      %v702 = vadd.f32 0.0, %v701
      %v703 = vpop.f32.mrb[0].mxu0
      %704 = vmatprep.mubr.bf16.mxu0 0
      %705 = vmatmul.mubr.bf16.gmra.mrb[0].mxu0 %v601
      %v706 = vpop.f32.mrb[0].mxu0
      %v707 = vadd.f32 0.0, %v706
      %v708 = vpop.f32.mrb[0].mxu0
      %v709 = vpop.f32.mrb[0].mxu0
      %v710 = vadd.f32 0.0, %v709
      %v711 = vpop.f32.mrb[0].mxu0
      %712 = vmatprep.mubr.bf16.mxu0 0
      %713 = vmatmul.mubr.bf16.gmra.mrb[0].mxu0 %v604
      %v714 = vpop.f32.mrb[0].mxu0
      %v715 = vadd.f32 0.0, %v714
      %v716 = vpop.f32.mrb[0].mxu0
      %v717 = vpop.f32.mrb[0].mxu0
      %v718 = vadd.f32 0.0, %v717
      %v719 = vpop.f32.mrb[0].mxu0
      %720 = vmatprep.mubr.bf16.mxu0 0
      %721 = vmatmul.mubr.bf16.gmra.mrb[0].mxu0 %v607
      %v722 = vpop.f32.mrb[0].mxu0
      %v723 = vadd.f32 0.0, %v722
      %v724 = vpop.f32.mrb[0].mxu0
      %v725 = vpop.f32.mrb[0].mxu0
      %v726 = vadd.f32 0.0, %v725
      %v727 = vpop.f32.mrb[0].mxu0
      %728 = vmatprep.mubr.bf16.mxu0 0
      %729 = vmatmul.mubr.bf16.gmra.mrb[0].mxu0 %v610
      %v730 = vpop.f32.mrb[0].mxu0
      %v731 = vadd.f32 0.0, %v730
      %v732 = vpop.f32.mrb[0].mxu0
      %v733 = vpop.f32.mrb[0].mxu0
      %v734 = vadd.f32 0.0, %v733
      %v735 = vpop.f32.mrb[0].mxu0
      %736 = vmatprep.mubr.bf16.mxu0 0
      %737 = vmatmul.mubr.bf16.gmra.mrb[0].mxu0 %v613
      %v738 = vpop.f32.mrb[0].mxu0
      %v739 = vadd.f32 0.0, %v738
      %v740 = vpop.f32.mrb[0].mxu0
      %v741 = vpop.f32.mrb[0].mxu0
      %v742 = vadd.f32 0.0, %v741
      %v743 = vpop.f32.mrb[0].mxu0
      %744 = vmatprep.mubr.bf16.mxu0 0
      %745 = vmatmul.mubr.bf16.gmra.mrb[0].mxu0 %v616
      %v746 = vpop.f32.mrb[0].mxu0
      %v747 = vadd.f32 0.0, %v746
      %v748 = vpop.f32.mrb[0].mxu0
      %v749 = vpop.f32.mrb[0].mxu0
      %v750 = vadd.f32 0.0, %v749
      %v751 = vpop.f32.mrb[0].mxu0
      %752 = vmatprep.mubr.bf16.mxu0 0
      %753 = vmatmul.mubr.bf16.gmra.mrb[0].mxu0 %v619
      %v754 = vpop.f32.mrb[0].mxu0
      %v755 = vadd.f32 0.0, %v754
      %v756 = vpop.f32.mrb[0].mxu0
      %v757 = vpop.f32.mrb[0].mxu0
      %v758 = vadd.f32 0.0, %v757
      %v759 = vpop.f32.mrb[0].mxu0
      %760 = vmatprep.mubr.bf16.mxu0 0
      %761 = vmatmul.mubr.bf16.gmra.mrb[0].mxu0 %v622
      %v762 = vpop.f32.mrb[0].mxu0
      %v763 = vadd.f32 0.0, %v762
      %v764 = vpop.f32.mrb[0].mxu0
      %v765 = vpop.f32.mrb[0].mxu0
      %v766 = vadd.f32 0.0, %v765
      %v767 = vpop.f32.mrb[0].mxu0
      %768 = vmatprep.mubr.bf16.mxu0 0
      %769 = vmatmul.mubr.bf16.gmra.mrb[0].mxu0 %v625
      %v770 = vpop.f32.mrb[0].mxu0
      %v771 = vadd.f32 0.0, %v770
      %v772 = vpop.f32.mrb[0].mxu0
      %v773 = vpop.f32.mrb[0].mxu0
      %v774 = vadd.f32 0.0, %v773
      %v775 = vpop.f32.mrb[0].mxu0
      %776 = vmatprep.mubr.bf16.mxu0 0
      %777 = vmatmul.mubr.bf16.gmra.mrb[0].mxu0 %v628
      %v778 = vpop.f32.mrb[0].mxu0
      %v779 = vadd.f32 0.0, %v778
      %v780 = vpop.f32.mrb[0].mxu0
      %v781 = vpop.f32.mrb[0].mxu0
      %v782 = vadd.f32 0.0, %v781
      %v783 = vpop.f32.mrb[0].mxu0
      %784 = vmatprep.mubr.bf16.mxu0 0
      %785 = vmatmul.mubr.bf16.gmra.mrb[0].mxu0 %v631
      %v786 = vpop.f32.mrb[0].mxu0
      %v787 = vadd.f32 0.0, %v786
      %v788 = vpop.f32.mrb[0].mxu0
      %v789 = vpop.f32.mrb[0].mxu0
      %v790 = vadd.f32 0.0, %v789
      %v791 = vpop.f32.mrb[0].mxu0
      %792 = vmatprep.mubr.bf16.mxu0 0
      %793 = vmatmul.mubr.bf16.gmra.mrb[0].mxu0 %v634
      %v794 = vpop.f32.mrb[0].mxu0
      %v795 = vadd.f32 0.0, %v794
      %v796 = vpop.f32.mrb[0].mxu0
      %v797 = vpop.f32.mrb[0].mxu0
      %v798 = vadd.f32 0.0, %v797
      %v799 = vpop.f32.mrb[0].mxu0
      %800 = vdwg.mxu0
      %v801 = vadd.f32 %v537, %v675
      %v802 = vadd.f32 %v537, %v678
      %v803 = vadd.f32 %v537, %v683
      %v804 = vadd.f32 %v537, %v686
      %v805 = vadd.f32 %v537, %v691
      %v806 = vadd.f32 %v537, %v694
      %v807 = vadd.f32 %v537, %v699
      %v808 = vadd.f32 %v537, %v702
      %v809 = vadd.f32 %v537, %v707
      %v810 = vadd.f32 %v537, %v710
      %v811 = vadd.f32 %v537, %v715
      %v812 = vadd.f32 %v537, %v718
      %v813 = vadd.f32 %v537, %v723
      %v814 = vadd.f32 %v537, %v726
      %v815 = vadd.f32 %v537, %v731
      %v816 = vadd.f32 %v537, %v734
      %v817 = vadd.f32 %v537, %v739
      %v818 = vadd.f32 %v537, %v742
      %v819 = vadd.f32 %v537, %v747
      %v820 = vadd.f32 %v537, %v750
      %v821 = vadd.f32 %v537, %v755
      %v822 = vadd.f32 %v537, %v758
      %v823 = vadd.f32 %v537, %v763
      %v824 = vadd.f32 %v537, %v766
      %v825 = vadd.f32 %v537, %v771
      %v826 = vadd.f32 %v537, %v774
      %v827 = vadd.f32 %v537, %v779
      %v828 = vadd.f32 %v537, %v782
      %v829 = vadd.f32 %v537, %v787
      %v830 = vadd.f32 %v537, %v790
      %v831 = vadd.f32 %v537, %v795
      %v832 = vadd.f32 %v537, %v798
      %v833 = vld [vmem:[#allocation2 + $0x1] sm:$0xff]
      %v834 = vld [vmem:[#allocation2 + $0x9] sm:$0xff]
      %v835 = vld [vmem:[#allocation2 + $0x19] sm:$0xff]
      %v836 = vld [vmem:[#allocation2 + $0x21] sm:$0xff]
      %v837 = vld [vmem:[#allocation2 + $0x31] sm:$0xff]
      %v838 = vld [vmem:[#allocation2 + $0x39] sm:$0xff]
      %v839 = vld [vmem:[#allocation2 + $0x49] sm:$0xff]
      %v840 = vld [vmem:[#allocation2 + $0x51] sm:$0xff]
      %v841 = vld [vmem:[#allocation2 + $0x61] sm:$0xff]
      %v842 = vld [vmem:[#allocation2 + $0x69] sm:$0xff]
      %v843 = vld [vmem:[#allocation2 + $0x79] sm:$0xff]
      %v844 = vld [vmem:[#allocation2 + $0x81] sm:$0xff]
      %v845 = vld [vmem:[#allocation2 + $0x91] sm:$0xff]
      %v846 = vld [vmem:[#allocation2 + $0x99] sm:$0xff]
      %v847 = vld [vmem:[#allocation2 + $0xa9] sm:$0xff]
      %v848 = vld [vmem:[#allocation2 + $0xb1] sm:$0xff]
      %v849 = vld [vmem:[#allocation2 + $0xc1] sm:$0xff]
      %v850 = vld [vmem:[#allocation2 + $0xc9] sm:$0xff]
      %v851 = vld [vmem:[#allocation2 + $0xd9] sm:$0xff]
      %v852 = vld [vmem:[#allocation2 + $0xe1] sm:$0xff]
      %v853 = vld [vmem:[#allocation2 + $0xf1] sm:$0xff]
      %v854 = vld [vmem:[#allocation2 + $0xf9] sm:$0xff]
      %v855 = vld [vmem:[#allocation2 + $0x109] sm:$0xff]
      %v856 = vld [vmem:[#allocation2 + $0x111] sm:$0xff]
      %v857 = vld [vmem:[#allocation2 + $0x121] sm:$0xff]
      %v858 = vld [vmem:[#allocation2 + $0x129] sm:$0xff]
      %v859 = vld [vmem:[#allocation2 + $0x139] sm:$0xff]
      %v860 = vld [vmem:[#allocation2 + $0x141] sm:$0xff]
      %v861 = vld [vmem:[#allocation2 + $0x151] sm:$0xff]
      %v862 = vld [vmem:[#allocation2 + $0x159] sm:$0xff]
      %v863 = vld [vmem:[#allocation2 + $0x169] sm:$0xff]
      %v864 = vld [vmem:[#allocation2 + $0x171] sm:$0xff]
      %v865 = vpack.c.bf16 %v834, %v833
      %v866 = vpack.c.bf16 %v836, %v835
      %v867 = vpack.c.bf16 %v838, %v837
      %v868 = vpack.c.bf16 %v840, %v839
      %v869 = vpack.c.bf16 %v842, %v841
      %v870 = vpack.c.bf16 %v844, %v843
      %v871 = vpack.c.bf16 %v846, %v845
      %v872 = vpack.c.bf16 %v848, %v847
      %v873 = vpack.c.bf16 %v850, %v849
      %v874 = vpack.c.bf16 %v852, %v851
      %v875 = vpack.c.bf16 %v854, %v853
      %v876 = vpack.c.bf16 %v856, %v855
      %v877 = vpack.c.bf16 %v858, %v857
      %v878 = vpack.c.bf16 %v860, %v859
      %v879 = vpack.c.bf16 %v862, %v861
      %v880 = vpack.c.bf16 %v864, %v863
      %s881 = scalar_lea.vmem %s3, 2
      %v882 = vld [vmem:[%s881] sm:$0x3]
      %v884 = vsel %vm394, %v865, 0
      %v887 = vsel %vm394, %v866, 0
      %v890 = vsel %vm394, %v867, 0
      %v893 = vsel %vm394, %v868, 0
      %v896 = vsel %vm394, %v869, 0
      %v899 = vsel %vm394, %v870, 0
      %v902 = vsel %vm394, %v871, 0
      %v905 = vsel %vm394, %v872, 0
      %v908 = vsel %vm394, %v873, 0
      %v911 = vsel %vm394, %v874, 0
      %v914 = vsel %vm394, %v875, 0
      %v917 = vsel %vm394, %v876, 0
      %v920 = vsel %vm394, %v877, 0
      %v923 = vsel %vm394, %v878, 0
      %v926 = vsel %vm394, %v879, 0
      %v929 = vsel %vm394, %v880, 0
      %v932 = vsel %vm636, %v882, 0
      %934 = vmatprep.subr.bf16.mxu0 0
      %935 = vmatpush1.bf16.msra.mxu0 %v932
      %936 = vmatprep.subr.bf16.mxu0 0
      %937 = vmatpush1.bf16.msra.mxu0 0
      %938 = vmatprep.subr.bf16.mxu0 0
      %939 = vmatpush1.bf16.msra.mxu0 0
      %940 = vmatprep.subr.bf16.mxu0 0
      %941 = vmatpush1.bf16.msra.mxu0 0
      %942 = vmatprep.subr.bf16.mxu0 0
      %943 = vmatpush1.bf16.msra.mxu0 0
      %944 = vmatprep.subr.bf16.mxu0 0
      %945 = vmatpush1.bf16.msra.mxu0 0
      %946 = vmatprep.subr.bf16.mxu0 0
      %947 = vmatpush1.bf16.msra.mxu0 0
      %948 = vmatprep.subr.bf16.mxu0 0
      %949 = vmatpush1.bf16.msra.mxu0 0
      %950 = vmatprep.subr.bf16.mxu0 0
      %951 = vmatpush1.bf16.msra.mxu0 0
      %952 = vmatprep.subr.bf16.mxu0 0
      %953 = vmatpush1.bf16.msra.mxu0 0
      %954 = vmatprep.subr.bf16.mxu0 0
      %955 = vmatpush1.bf16.msra.mxu0 0
      %956 = vmatprep.subr.bf16.mxu0 0
      %957 = vmatpush1.bf16.msra.mxu0 0
      %958 = vmatprep.subr.bf16.mxu0 0
      %959 = vmatpush1.bf16.msra.mxu0 0
      %960 = vmatprep.subr.bf16.mxu0 0
      %961 = vmatpush1.bf16.msra.mxu0 0
      %962 = vmatprep.subr.bf16.mxu0 0
      %963 = vmatpush1.bf16.msra.mxu0 0
      %964 = vmatprep.subr.bf16.mxu0 0
      %965 = vmatpush1.bf16.msra.mxu0 0
      %966 = vmatprep.mubr.bf16.mxu0 0
      %967 = vmatmul.mubr.bf16.gmra.mrb[0].mxu0 %v884
      %v968 = vpop.f32.mrb[0].mxu0
      %v969 = vadd.f32 0.0, %v968
      %v970 = vpop.f32.mrb[0].mxu0
      %v971 = vpop.f32.mrb[0].mxu0
      %v972 = vadd.f32 0.0, %v971
      %v973 = vpop.f32.mrb[0].mxu0
      %974 = vmatprep.mubr.bf16.mxu0 0
      %975 = vmatmul.mubr.bf16.gmra.mrb[0].mxu0 %v887
      %v976 = vpop.f32.mrb[0].mxu0
      %v977 = vadd.f32 0.0, %v976
      %v978 = vpop.f32.mrb[0].mxu0
      %v979 = vpop.f32.mrb[0].mxu0
      %v980 = vadd.f32 0.0, %v979
      %v981 = vpop.f32.mrb[0].mxu0
      %982 = vmatprep.mubr.bf16.mxu0 0
      %983 = vmatmul.mubr.bf16.gmra.mrb[0].mxu0 %v890
      %v984 = vpop.f32.mrb[0].mxu0
      %v985 = vadd.f32 0.0, %v984
      %v986 = vpop.f32.mrb[0].mxu0
      %v987 = vpop.f32.mrb[0].mxu0
      %v988 = vadd.f32 0.0, %v987
      %v989 = vpop.f32.mrb[0].mxu0
      %990 = vmatprep.mubr.bf16.mxu0 0
      %991 = vmatmul.mubr.bf16.gmra.mrb[0].mxu0 %v893
      %v992 = vpop.f32.mrb[0].mxu0
      %v993 = vadd.f32 0.0, %v992
      %v994 = vpop.f32.mrb[0].mxu0
      %v995 = vpop.f32.mrb[0].mxu0
      %v996 = vadd.f32 0.0, %v995
      %v997 = vpop.f32.mrb[0].mxu0
      %998 = vmatprep.mubr.bf16.mxu0 0
      %999 = vmatmul.mubr.bf16.gmra.mrb[0].mxu0 %v896
      %v1000 = vpop.f32.mrb[0].mxu0
      %v1001 = vadd.f32 0.0, %v1000
      %v1002 = vpop.f32.mrb[0].mxu0
      %v1003 = vpop.f32.mrb[0].mxu0
      %v1004 = vadd.f32 0.0, %v1003
      %v1005 = vpop.f32.mrb[0].mxu0
      %1006 = vmatprep.mubr.bf16.mxu0 0
      %1007 = vmatmul.mubr.bf16.gmra.mrb[0].mxu0 %v899
      %v1008 = vpop.f32.mrb[0].mxu0
      %v1009 = vadd.f32 0.0, %v1008
      %v1010 = vpop.f32.mrb[0].mxu0
      %v1011 = vpop.f32.mrb[0].mxu0
      %v1012 = vadd.f32 0.0, %v1011
      %v1013 = vpop.f32.mrb[0].mxu0
      %1014 = vmatprep.mubr.bf16.mxu0 0
      %1015 = vmatmul.mubr.bf16.gmra.mrb[0].mxu0 %v902
      %v1016 = vpop.f32.mrb[0].mxu0
      %v1017 = vadd.f32 0.0, %v1016
      %v1018 = vpop.f32.mrb[0].mxu0
      %v1019 = vpop.f32.mrb[0].mxu0
      %v1020 = vadd.f32 0.0, %v1019
      %v1021 = vpop.f32.mrb[0].mxu0
      %1022 = vmatprep.mubr.bf16.mxu0 0
      %1023 = vmatmul.mubr.bf16.gmra.mrb[0].mxu0 %v905
      %v1024 = vpop.f32.mrb[0].mxu0
      %v1025 = vadd.f32 0.0, %v1024
      %v1026 = vpop.f32.mrb[0].mxu0
      %v1027 = vpop.f32.mrb[0].mxu0
      %v1028 = vadd.f32 0.0, %v1027
      %v1029 = vpop.f32.mrb[0].mxu0
      %1030 = vmatprep.mubr.bf16.mxu0 0
      %1031 = vmatmul.mubr.bf16.gmra.mrb[0].mxu0 %v908
      %v1032 = vpop.f32.mrb[0].mxu0
      %v1033 = vadd.f32 0.0, %v1032
      %v1034 = vpop.f32.mrb[0].mxu0
      %v1035 = vpop.f32.mrb[0].mxu0
      %v1036 = vadd.f32 0.0, %v1035
      %v1037 = vpop.f32.mrb[0].mxu0
      %1038 = vmatprep.mubr.bf16.mxu0 0
      %1039 = vmatmul.mubr.bf16.gmra.mrb[0].mxu0 %v911
      %v1040 = vpop.f32.mrb[0].mxu0
      %v1041 = vadd.f32 0.0, %v1040
      %v1042 = vpop.f32.mrb[0].mxu0
      %v1043 = vpop.f32.mrb[0].mxu0
      %v1044 = vadd.f32 0.0, %v1043
      %v1045 = vpop.f32.mrb[0].mxu0
      %1046 = vmatprep.mubr.bf16.mxu0 0
      %1047 = vmatmul.mubr.bf16.gmra.mrb[0].mxu0 %v914
      %v1048 = vpop.f32.mrb[0].mxu0
      %v1049 = vadd.f32 0.0, %v1048
      %v1050 = vpop.f32.mrb[0].mxu0
      %v1051 = vpop.f32.mrb[0].mxu0
      %v1052 = vadd.f32 0.0, %v1051
      %v1053 = vpop.f32.mrb[0].mxu0
      %1054 = vmatprep.mubr.bf16.mxu0 0
      %1055 = vmatmul.mubr.bf16.gmra.mrb[0].mxu0 %v917
      %v1056 = vpop.f32.mrb[0].mxu0
      %v1057 = vadd.f32 0.0, %v1056
      %v1058 = vpop.f32.mrb[0].mxu0
      %v1059 = vpop.f32.mrb[0].mxu0
      %v1060 = vadd.f32 0.0, %v1059
      %v1061 = vpop.f32.mrb[0].mxu0
      %1062 = vmatprep.mubr.bf16.mxu0 0
      %1063 = vmatmul.mubr.bf16.gmra.mrb[0].mxu0 %v920
      %v1064 = vpop.f32.mrb[0].mxu0
      %v1065 = vadd.f32 0.0, %v1064
      %v1066 = vpop.f32.mrb[0].mxu0
      %v1067 = vpop.f32.mrb[0].mxu0
      %v1068 = vadd.f32 0.0, %v1067
      %v1069 = vpop.f32.mrb[0].mxu0
      %1070 = vmatprep.mubr.bf16.mxu0 0
      %1071 = vmatmul.mubr.bf16.gmra.mrb[0].mxu0 %v923
      %v1072 = vpop.f32.mrb[0].mxu0
      %v1073 = vadd.f32 0.0, %v1072
      %v1074 = vpop.f32.mrb[0].mxu0
      %v1075 = vpop.f32.mrb[0].mxu0
      %v1076 = vadd.f32 0.0, %v1075
      %v1077 = vpop.f32.mrb[0].mxu0
      %1078 = vmatprep.mubr.bf16.mxu0 0
      %1079 = vmatmul.mubr.bf16.gmra.mrb[0].mxu0 %v926
      %v1080 = vpop.f32.mrb[0].mxu0
      %v1081 = vadd.f32 0.0, %v1080
      %v1082 = vpop.f32.mrb[0].mxu0
      %v1083 = vpop.f32.mrb[0].mxu0
      %v1084 = vadd.f32 0.0, %v1083
      %v1085 = vpop.f32.mrb[0].mxu0
      %1086 = vmatprep.mubr.bf16.mxu0 0
      %1087 = vmatmul.mubr.bf16.gmra.mrb[0].mxu0 %v929
      %v1088 = vpop.f32.mrb[0].mxu0
      %v1089 = vadd.f32 0.0, %v1088
      %v1090 = vpop.f32.mrb[0].mxu0
      %v1091 = vpop.f32.mrb[0].mxu0
      %v1092 = vadd.f32 0.0, %v1091
      %v1093 = vpop.f32.mrb[0].mxu0
      %1094 = vdwg.mxu0
      %v1095 = vadd.f32 %v801, %v969
      %v1096 = vadd.f32 %v802, %v972
      %v1097 = vadd.f32 %v803, %v977
      %v1098 = vadd.f32 %v804, %v980
      %v1099 = vadd.f32 %v805, %v985
      %v1100 = vadd.f32 %v806, %v988
      %v1101 = vadd.f32 %v807, %v993
      %v1102 = vadd.f32 %v808, %v996
      %v1103 = vadd.f32 %v809, %v1001
      %v1104 = vadd.f32 %v810, %v1004
      %v1105 = vadd.f32 %v811, %v1009
      %v1106 = vadd.f32 %v812, %v1012
      %v1107 = vadd.f32 %v813, %v1017
      %v1108 = vadd.f32 %v814, %v1020
      %v1109 = vadd.f32 %v815, %v1025
      %v1110 = vadd.f32 %v816, %v1028
      %v1111 = vadd.f32 %v817, %v1033
      %v1112 = vadd.f32 %v818, %v1036
      %v1113 = vadd.f32 %v819, %v1041
      %v1114 = vadd.f32 %v820, %v1044
      %v1115 = vadd.f32 %v821, %v1049
      %v1116 = vadd.f32 %v822, %v1052
      %v1117 = vadd.f32 %v823, %v1057
      %v1118 = vadd.f32 %v824, %v1060
      %v1119 = vadd.f32 %v825, %v1065
      %v1120 = vadd.f32 %v826, %v1068
      %v1121 = vadd.f32 %v827, %v1073
      %v1122 = vadd.f32 %v828, %v1076
      %v1123 = vadd.f32 %v829, %v1081
      %v1124 = vadd.f32 %v830, %v1084
      %v1125 = vadd.f32 %v831, %v1089
      %v1126 = vadd.f32 %v832, %v1092
      %v1127 = vld [vmem:[#allocation2 + $0x2] sm:$0xff]
      %v1128 = vld [vmem:[#allocation2 + $0xa] sm:$0xff]
      %v1129 = vld [vmem:[#allocation2 + $0x1a] sm:$0xff]
      %v1130 = vld [vmem:[#allocation2 + $0x22] sm:$0xff]
      %v1131 = vld [vmem:[#allocation2 + $0x32] sm:$0xff]
      %v1132 = vld [vmem:[#allocation2 + $0x3a] sm:$0xff]
      %v1133 = vld [vmem:[#allocation2 + $0x4a] sm:$0xff]
      %v1134 = vld [vmem:[#allocation2 + $0x52] sm:$0xff]
      %v1135 = vld [vmem:[#allocation2 + $0x62] sm:$0xff]
      %v1136 = vld [vmem:[#allocation2 + $0x6a] sm:$0xff]
      %v1137 = vld [vmem:[#allocation2 + $0x7a] sm:$0xff]
      %v1138 = vld [vmem:[#allocation2 + $0x82] sm:$0xff]
      %v1139 = vld [vmem:[#allocation2 + $0x92] sm:$0xff]
      %v1140 = vld [vmem:[#allocation2 + $0x9a] sm:$0xff]
      %v1141 = vld [vmem:[#allocation2 + $0xaa] sm:$0xff]
      %v1142 = vld [vmem:[#allocation2 + $0xb2] sm:$0xff]
      %v1143 = vld [vmem:[#allocation2 + $0xc2] sm:$0xff]
      %v1144 = vld [vmem:[#allocation2 + $0xca] sm:$0xff]
      %v1145 = vld [vmem:[#allocation2 + $0xda] sm:$0xff]
      %v1146 = vld [vmem:[#allocation2 + $0xe2] sm:$0xff]
      %v1147 = vld [vmem:[#allocation2 + $0xf2] sm:$0xff]
      %v1148 = vld [vmem:[#allocation2 + $0xfa] sm:$0xff]
      %v1149 = vld [vmem:[#allocation2 + $0x10a] sm:$0xff]
      %v1150 = vld [vmem:[#allocation2 + $0x112] sm:$0xff]
      %v1151 = vld [vmem:[#allocation2 + $0x122] sm:$0xff]
      %v1152 = vld [vmem:[#allocation2 + $0x12a] sm:$0xff]
      %v1153 = vld [vmem:[#allocation2 + $0x13a] sm:$0xff]
      %v1154 = vld [vmem:[#allocation2 + $0x142] sm:$0xff]
      %v1155 = vld [vmem:[#allocation2 + $0x152] sm:$0xff]
      %v1156 = vld [vmem:[#allocation2 + $0x15a] sm:$0xff]
      %v1157 = vld [vmem:[#allocation2 + $0x16a] sm:$0xff]
      %v1158 = vld [vmem:[#allocation2 + $0x172] sm:$0xff]
      %v1159 = vpack.c.bf16 %v1128, %v1127
      %v1160 = vpack.c.bf16 %v1130, %v1129
      %v1161 = vpack.c.bf16 %v1132, %v1131
      %v1162 = vpack.c.bf16 %v1134, %v1133
      %v1163 = vpack.c.bf16 %v1136, %v1135
      %v1164 = vpack.c.bf16 %v1138, %v1137
      %v1165 = vpack.c.bf16 %v1140, %v1139
      %v1166 = vpack.c.bf16 %v1142, %v1141
      %v1167 = vpack.c.bf16 %v1144, %v1143
      %v1168 = vpack.c.bf16 %v1146, %v1145
      %v1169 = vpack.c.bf16 %v1148, %v1147
      %v1170 = vpack.c.bf16 %v1150, %v1149
      %v1171 = vpack.c.bf16 %v1152, %v1151
      %v1172 = vpack.c.bf16 %v1154, %v1153
      %v1173 = vpack.c.bf16 %v1156, %v1155
      %v1174 = vpack.c.bf16 %v1158, %v1157
      %s1175 = scalar_lea.vmem %s3, 4
      %v1176 = vld [vmem:[%s1175] sm:$0x3]
      %v1178 = vsel %vm394, %v1159, 0
      %v1181 = vsel %vm394, %v1160, 0
      %v1184 = vsel %vm394, %v1161, 0
      %v1187 = vsel %vm394, %v1162, 0
      %v1190 = vsel %vm394, %v1163, 0
      %v1193 = vsel %vm394, %v1164, 0
      %v1196 = vsel %vm394, %v1165, 0
      %v1199 = vsel %vm394, %v1166, 0
      %v1202 = vsel %vm394, %v1167, 0
      %v1205 = vsel %vm394, %v1168, 0
      %v1208 = vsel %vm394, %v1169, 0
      %v1211 = vsel %vm394, %v1170, 0
      %v1214 = vsel %vm394, %v1171, 0
      %v1217 = vsel %vm394, %v1172, 0
      %v1220 = vsel %vm394, %v1173, 0
      %v1223 = vsel %vm394, %v1174, 0
      %v1226 = vsel %vm636, %v1176, 0
      %1228 = vmatprep.subr.bf16.mxu0 0
      %1229 = vmatpush1.bf16.msra.mxu0 %v1226
      %1230 = vmatprep.subr.bf16.mxu0 0
      %1231 = vmatpush1.bf16.msra.mxu0 0
      %1232 = vmatprep.subr.bf16.mxu0 0
      %1233 = vmatpush1.bf16.msra.mxu0 0
      %1234 = vmatprep.subr.bf16.mxu0 0
      %1235 = vmatpush1.bf16.msra.mxu0 0
      %1236 = vmatprep.subr.bf16.mxu0 0
      %1237 = vmatpush1.bf16.msra.mxu0 0
      %1238 = vmatprep.subr.bf16.mxu0 0
      %1239 = vmatpush1.bf16.msra.mxu0 0
      %1240 = vmatprep.subr.bf16.mxu0 0
      %1241 = vmatpush1.bf16.msra.mxu0 0
      %1242 = vmatprep.subr.bf16.mxu0 0
      %1243 = vmatpush1.bf16.msra.mxu0 0
      %1244 = vmatprep.subr.bf16.mxu0 0
      %1245 = vmatpush1.bf16.msra.mxu0 0
      %1246 = vmatprep.subr.bf16.mxu0 0
      %1247 = vmatpush1.bf16.msra.mxu0 0
      %1248 = vmatprep.subr.bf16.mxu0 0
      %1249 = vmatpush1.bf16.msra.mxu0 0
      %1250 = vmatprep.subr.bf16.mxu0 0
      %1251 = vmatpush1.bf16.msra.mxu0 0
      %1252 = vmatprep.subr.bf16.mxu0 0
      %1253 = vmatpush1.bf16.msra.mxu0 0
      %1254 = vmatprep.subr.bf16.mxu0 0
      %1255 = vmatpush1.bf16.msra.mxu0 0
      %1256 = vmatprep.subr.bf16.mxu0 0
      %1257 = vmatpush1.bf16.msra.mxu0 0
      %1258 = vmatprep.subr.bf16.mxu0 0
      %1259 = vmatpush1.bf16.msra.mxu0 0
      %1260 = vmatprep.mubr.bf16.mxu0 0
      %1261 = vmatmul.mubr.bf16.gmra.mrb[0].mxu0 %v1178
      %v1262 = vpop.f32.mrb[0].mxu0
      %v1263 = vadd.f32 0.0, %v1262
      %v1264 = vpop.f32.mrb[0].mxu0
      %v1265 = vpop.f32.mrb[0].mxu0
      %v1266 = vadd.f32 0.0, %v1265
      %v1267 = vpop.f32.mrb[0].mxu0
      %1268 = vmatprep.mubr.bf16.mxu0 0
      %1269 = vmatmul.mubr.bf16.gmra.mrb[0].mxu0 %v1181
      %v1270 = vpop.f32.mrb[0].mxu0
      %v1271 = vadd.f32 0.0, %v1270
      %v1272 = vpop.f32.mrb[0].mxu0
      %v1273 = vpop.f32.mrb[0].mxu0
      %v1274 = vadd.f32 0.0, %v1273
      %v1275 = vpop.f32.mrb[0].mxu0
      %1276 = vmatprep.mubr.bf16.mxu0 0
      %1277 = vmatmul.mubr.bf16.gmra.mrb[0].mxu0 %v1184
      %v1278 = vpop.f32.mrb[0].mxu0
      %v1279 = vadd.f32 0.0, %v1278
      %v1280 = vpop.f32.mrb[0].mxu0
      %v1281 = vpop.f32.mrb[0].mxu0
      %v1282 = vadd.f32 0.0, %v1281
      %v1283 = vpop.f32.mrb[0].mxu0
      %1284 = vmatprep.mubr.bf16.mxu0 0
      %1285 = vmatmul.mubr.bf16.gmra.mrb[0].mxu0 %v1187
      %v1286 = vpop.f32.mrb[0].mxu0
      %v1287 = vadd.f32 0.0, %v1286
      %v1288 = vpop.f32.mrb[0].mxu0
      %v1289 = vpop.f32.mrb[0].mxu0
      %v1290 = vadd.f32 0.0, %v1289
      %v1291 = vpop.f32.mrb[0].mxu0
      %1292 = vmatprep.mubr.bf16.mxu0 0
      %1293 = vmatmul.mubr.bf16.gmra.mrb[0].mxu0 %v1190
      %v1294 = vpop.f32.mrb[0].mxu0
      %v1295 = vadd.f32 0.0, %v1294
      %v1296 = vpop.f32.mrb[0].mxu0
      %v1297 = vpop.f32.mrb[0].mxu0
      %v1298 = vadd.f32 0.0, %v1297
      %v1299 = vpop.f32.mrb[0].mxu0
      %1300 = vmatprep.mubr.bf16.mxu0 0
      %1301 = vmatmul.mubr.bf16.gmra.mrb[0].mxu0 %v1193
      %v1302 = vpop.f32.mrb[0].mxu0
      %v1303 = vadd.f32 0.0, %v1302
      %v1304 = vpop.f32.mrb[0].mxu0
      %v1305 = vpop.f32.mrb[0].mxu0
      %v1306 = vadd.f32 0.0, %v1305
      %v1307 = vpop.f32.mrb[0].mxu0
      %1308 = vmatprep.mubr.bf16.mxu0 0
      %1309 = vmatmul.mubr.bf16.gmra.mrb[0].mxu0 %v1196
      %v1310 = vpop.f32.mrb[0].mxu0
      %v1311 = vadd.f32 0.0, %v1310
      %v1312 = vpop.f32.mrb[0].mxu0
      %v1313 = vpop.f32.mrb[0].mxu0
      %v1314 = vadd.f32 0.0, %v1313
      %v1315 = vpop.f32.mrb[0].mxu0
      %1316 = vmatprep.mubr.bf16.mxu0 0
      %1317 = vmatmul.mubr.bf16.gmra.mrb[0].mxu0 %v1199
      %v1318 = vpop.f32.mrb[0].mxu0
      %v1319 = vadd.f32 0.0, %v1318
      %v1320 = vpop.f32.mrb[0].mxu0
      %v1321 = vpop.f32.mrb[0].mxu0
      %v1322 = vadd.f32 0.0, %v1321
      %v1323 = vpop.f32.mrb[0].mxu0
      %1324 = vmatprep.mubr.bf16.mxu0 0
      %1325 = vmatmul.mubr.bf16.gmra.mrb[0].mxu0 %v1202
      %v1326 = vpop.f32.mrb[0].mxu0
      %v1327 = vadd.f32 0.0, %v1326
      %v1328 = vpop.f32.mrb[0].mxu0
      %v1329 = vpop.f32.mrb[0].mxu0
      %v1330 = vadd.f32 0.0, %v1329
      %v1331 = vpop.f32.mrb[0].mxu0
      %1332 = vmatprep.mubr.bf16.mxu0 0
      %1333 = vmatmul.mubr.bf16.gmra.mrb[0].mxu0 %v1205
      %v1334 = vpop.f32.mrb[0].mxu0
      %v1335 = vadd.f32 0.0, %v1334
      %v1336 = vpop.f32.mrb[0].mxu0
      %v1337 = vpop.f32.mrb[0].mxu0
      %v1338 = vadd.f32 0.0, %v1337
      %v1339 = vpop.f32.mrb[0].mxu0
      %1340 = vmatprep.mubr.bf16.mxu0 0
      %1341 = vmatmul.mubr.bf16.gmra.mrb[0].mxu0 %v1208
      %v1342 = vpop.f32.mrb[0].mxu0
      %v1343 = vadd.f32 0.0, %v1342
      %v1344 = vpop.f32.mrb[0].mxu0
      %v1345 = vpop.f32.mrb[0].mxu0
      %v1346 = vadd.f32 0.0, %v1345
      %v1347 = vpop.f32.mrb[0].mxu0
      %1348 = vmatprep.mubr.bf16.mxu0 0
      %1349 = vmatmul.mubr.bf16.gmra.mrb[0].mxu0 %v1211
      %v1350 = vpop.f32.mrb[0].mxu0
      %v1351 = vadd.f32 0.0, %v1350
      %v1352 = vpop.f32.mrb[0].mxu0
      %v1353 = vpop.f32.mrb[0].mxu0
      %v1354 = vadd.f32 0.0, %v1353
      %v1355 = vpop.f32.mrb[0].mxu0
      %1356 = vmatprep.mubr.bf16.mxu0 0
      %1357 = vmatmul.mubr.bf16.gmra.mrb[0].mxu0 %v1214
      %v1358 = vpop.f32.mrb[0].mxu0
      %v1359 = vadd.f32 0.0, %v1358
      %v1360 = vpop.f32.mrb[0].mxu0
      %v1361 = vpop.f32.mrb[0].mxu0
      %v1362 = vadd.f32 0.0, %v1361
      %v1363 = vpop.f32.mrb[0].mxu0
      %1364 = vmatprep.mubr.bf16.mxu0 0
      %1365 = vmatmul.mubr.bf16.gmra.mrb[0].mxu0 %v1217
      %v1366 = vpop.f32.mrb[0].mxu0
      %v1367 = vadd.f32 0.0, %v1366
      %v1368 = vpop.f32.mrb[0].mxu0
      %v1369 = vpop.f32.mrb[0].mxu0
      %v1370 = vadd.f32 0.0, %v1369
      %v1371 = vpop.f32.mrb[0].mxu0
      %1372 = vmatprep.mubr.bf16.mxu0 0
      %1373 = vmatmul.mubr.bf16.gmra.mrb[0].mxu0 %v1220
      %v1374 = vpop.f32.mrb[0].mxu0
      %v1375 = vadd.f32 0.0, %v1374
      %v1376 = vpop.f32.mrb[0].mxu0
      %v1377 = vpop.f32.mrb[0].mxu0
      %v1378 = vadd.f32 0.0, %v1377
      %v1379 = vpop.f32.mrb[0].mxu0
      %1380 = vmatprep.mubr.bf16.mxu0 0
      %1381 = vmatmul.mubr.bf16.gmra.mrb[0].mxu0 %v1223
      %v1382 = vpop.f32.mrb[0].mxu0
      %v1383 = vadd.f32 0.0, %v1382
      %v1384 = vpop.f32.mrb[0].mxu0
      %v1385 = vpop.f32.mrb[0].mxu0
      %v1386 = vadd.f32 0.0, %v1385
      %v1387 = vpop.f32.mrb[0].mxu0
      %1388 = vdwg.mxu0
      %v1389 = vadd.f32 %v1095, %v1263
      %v1390 = vadd.f32 %v1096, %v1266
      %v1391 = vadd.f32 %v1097, %v1271
      %v1392 = vadd.f32 %v1098, %v1274
      %v1393 = vadd.f32 %v1099, %v1279
      %v1394 = vadd.f32 %v1100, %v1282
      %v1395 = vadd.f32 %v1101, %v1287
      %v1396 = vadd.f32 %v1102, %v1290
      %v1397 = vadd.f32 %v1103, %v1295
      %v1398 = vadd.f32 %v1104, %v1298
      %v1399 = vadd.f32 %v1105, %v1303
      %v1400 = vadd.f32 %v1106, %v1306
      %v1401 = vadd.f32 %v1107, %v1311
      %v1402 = vadd.f32 %v1108, %v1314
      %v1403 = vadd.f32 %v1109, %v1319
      %v1404 = vadd.f32 %v1110, %v1322
      %v1405 = vadd.f32 %v1111, %v1327
      %v1406 = vadd.f32 %v1112, %v1330
      %v1407 = vadd.f32 %v1113, %v1335
      %v1408 = vadd.f32 %v1114, %v1338
      %v1409 = vadd.f32 %v1115, %v1343
      %v1410 = vadd.f32 %v1116, %v1346
      %v1411 = vadd.f32 %v1117, %v1351
      %v1412 = vadd.f32 %v1118, %v1354
      %v1413 = vadd.f32 %v1119, %v1359
      %v1414 = vadd.f32 %v1120, %v1362
      %v1415 = vadd.f32 %v1121, %v1367
      %v1416 = vadd.f32 %v1122, %v1370
      %v1417 = vadd.f32 %v1123, %v1375
      %v1418 = vadd.f32 %v1124, %v1378
      %v1419 = vadd.f32 %v1125, %v1383
      %v1420 = vadd.f32 %v1126, %v1386
      %v1421 = vld [vmem:[%s482] sm:$0xff]
      %v1422 = vld [vmem:[%s482 + $0x8] sm:$0xff]
      %v1423 = vld [vmem:[%s482 + $0x18] sm:$0xff]
      %v1424 = vld [vmem:[%s482 + $0x20] sm:$0xff]
      %v1425 = vld [vmem:[%s482 + $0x30] sm:$0xff]
      %v1426 = vld [vmem:[%s482 + $0x38] sm:$0xff]
      %v1427 = vld [vmem:[%s482 + $0x48] sm:$0xff]
      %v1428 = vld [vmem:[%s482 + $0x50] sm:$0xff]
      %v1429 = vld [vmem:[%s482 + $0x60] sm:$0xff]
      %v1430 = vld [vmem:[%s482 + $0x68] sm:$0xff]
      %v1431 = vld [vmem:[%s482 + $0x78] sm:$0xff]
      %v1432 = vld [vmem:[%s482 + $0x80] sm:$0xff]
      %v1433 = vld [vmem:[%s482 + $0x90] sm:$0xff]
      %v1434 = vld [vmem:[%s482 + $0x98] sm:$0xff]
      %v1435 = vld [vmem:[%s482 + $0xa8] sm:$0xff]
      %v1436 = vld [vmem:[%s482 + $0xb0] sm:$0xff]
      %v1437 = vld [vmem:[%s482 + $0xc0] sm:$0xff]
      %v1438 = vld [vmem:[%s482 + $0xc8] sm:$0xff]
      %v1439 = vld [vmem:[%s482 + $0xd8] sm:$0xff]
      %v1440 = vld [vmem:[%s482 + $0xe0] sm:$0xff]
      %v1441 = vld [vmem:[%s482 + $0xf0] sm:$0xff]
      %v1442 = vld [vmem:[%s482 + $0xf8] sm:$0xff]
      %v1443 = vld [vmem:[%s482 + $0x108] sm:$0xff]
      %v1444 = vld [vmem:[%s482 + $0x110] sm:$0xff]
      %v1445 = vld [vmem:[%s482 + $0x120] sm:$0xff]
      %v1446 = vld [vmem:[%s482 + $0x128] sm:$0xff]
      %v1447 = vld [vmem:[%s482 + $0x138] sm:$0xff]
      %v1448 = vld [vmem:[%s482 + $0x140] sm:$0xff]
      %v1449 = vld [vmem:[%s482 + $0x150] sm:$0xff]
      %v1450 = vld [vmem:[%s482 + $0x158] sm:$0xff]
      %v1451 = vld [vmem:[%s482 + $0x168] sm:$0xff]
      %v1452 = vld [vmem:[%s482 + $0x170] sm:$0xff]
      %v1453 = vpack.c.bf16 %v1422, %v1421
      %v1454 = vpack.c.bf16 %v1424, %v1423
      %v1455 = vpack.c.bf16 %v1426, %v1425
      %v1456 = vpack.c.bf16 %v1428, %v1427
      %v1457 = vpack.c.bf16 %v1430, %v1429
      %v1458 = vpack.c.bf16 %v1432, %v1431
      %v1459 = vpack.c.bf16 %v1434, %v1433
      %v1460 = vpack.c.bf16 %v1436, %v1435
      %v1461 = vpack.c.bf16 %v1438, %v1437
      %v1462 = vpack.c.bf16 %v1440, %v1439
      %v1463 = vpack.c.bf16 %v1442, %v1441
      %v1464 = vpack.c.bf16 %v1444, %v1443
      %v1465 = vpack.c.bf16 %v1446, %v1445
      %v1466 = vpack.c.bf16 %v1448, %v1447
      %v1467 = vpack.c.bf16 %v1450, %v1449
      %v1468 = vpack.c.bf16 %v1452, %v1451
      %s1469 = scalar_lea.vmem %s3, 6
      %v1470 = vld [vmem:[%s1469] sm:$0x3]
      %v1472 = vsel %vm394, %v1453, 0
      %v1475 = vsel %vm394, %v1454, 0
      %v1478 = vsel %vm394, %v1455, 0
      %v1481 = vsel %vm394, %v1456, 0
      %v1484 = vsel %vm394, %v1457, 0
      %v1487 = vsel %vm394, %v1458, 0
      %v1490 = vsel %vm394, %v1459, 0
      %v1493 = vsel %vm394, %v1460, 0
      %v1496 = vsel %vm394, %v1461, 0
      %v1499 = vsel %vm394, %v1462, 0
      %v1502 = vsel %vm394, %v1463, 0
      %v1505 = vsel %vm394, %v1464, 0
      %v1508 = vsel %vm394, %v1465, 0
      %v1511 = vsel %vm394, %v1466, 0
      %v1514 = vsel %vm394, %v1467, 0
      %v1517 = vsel %vm394, %v1468, 0
      %v1520 = vsel %vm636, %v1470, 0
      %1522 = vmatprep.subr.bf16.mxu0 0
      %1523 = vmatpush1.bf16.msra.mxu0 %v1520
      %1524 = vmatprep.subr.bf16.mxu0 0
      %1525 = vmatpush1.bf16.msra.mxu0 0
      %1526 = vmatprep.subr.bf16.mxu0 0
      %1527 = vmatpush1.bf16.msra.mxu0 0
      %1528 = vmatprep.subr.bf16.mxu0 0
      %1529 = vmatpush1.bf16.msra.mxu0 0
      %1530 = vmatprep.subr.bf16.mxu0 0
      %1531 = vmatpush1.bf16.msra.mxu0 0
      %1532 = vmatprep.subr.bf16.mxu0 0
      %1533 = vmatpush1.bf16.msra.mxu0 0
      %1534 = vmatprep.subr.bf16.mxu0 0
      %1535 = vmatpush1.bf16.msra.mxu0 0
      %1536 = vmatprep.subr.bf16.mxu0 0
      %1537 = vmatpush1.bf16.msra.mxu0 0
      %1538 = vmatprep.subr.bf16.mxu0 0
      %1539 = vmatpush1.bf16.msra.mxu0 0
      %1540 = vmatprep.subr.bf16.mxu0 0
      %1541 = vmatpush1.bf16.msra.mxu0 0
      %1542 = vmatprep.subr.bf16.mxu0 0
      %1543 = vmatpush1.bf16.msra.mxu0 0
      %1544 = vmatprep.subr.bf16.mxu0 0
      %1545 = vmatpush1.bf16.msra.mxu0 0
      %1546 = vmatprep.subr.bf16.mxu0 0
      %1547 = vmatpush1.bf16.msra.mxu0 0
      %1548 = vmatprep.subr.bf16.mxu0 0
      %1549 = vmatpush1.bf16.msra.mxu0 0
      %1550 = vmatprep.subr.bf16.mxu0 0
      %1551 = vmatpush1.bf16.msra.mxu0 0
      %1552 = vmatprep.subr.bf16.mxu0 0
      %1553 = vmatpush1.bf16.msra.mxu0 0
      %1554 = vmatprep.mubr.bf16.mxu0 0
      %1555 = vmatmul.mubr.bf16.gmra.mrb[0].mxu0 %v1472
      %v1556 = vpop.f32.mrb[0].mxu0
      %v1557 = vadd.f32 0.0, %v1556
      %v1558 = vpop.f32.mrb[0].mxu0
      %v1559 = vpop.f32.mrb[0].mxu0
      %v1560 = vadd.f32 0.0, %v1559
      %v1561 = vpop.f32.mrb[0].mxu0
      %1562 = vmatprep.mubr.bf16.mxu0 0
      %1563 = vmatmul.mubr.bf16.gmra.mrb[0].mxu0 %v1475
      %v1564 = vpop.f32.mrb[0].mxu0
      %v1565 = vadd.f32 0.0, %v1564
      %v1566 = vpop.f32.mrb[0].mxu0
      %v1567 = vpop.f32.mrb[0].mxu0
      %v1568 = vadd.f32 0.0, %v1567
      %v1569 = vpop.f32.mrb[0].mxu0
      %1570 = vmatprep.mubr.bf16.mxu0 0
      %1571 = vmatmul.mubr.bf16.gmra.mrb[0].mxu0 %v1478
      %v1572 = vpop.f32.mrb[0].mxu0
      %v1573 = vadd.f32 0.0, %v1572
      %v1574 = vpop.f32.mrb[0].mxu0
      %v1575 = vpop.f32.mrb[0].mxu0
      %v1576 = vadd.f32 0.0, %v1575
      %v1577 = vpop.f32.mrb[0].mxu0
      %1578 = vmatprep.mubr.bf16.mxu0 0
      %1579 = vmatmul.mubr.bf16.gmra.mrb[0].mxu0 %v1481
      %v1580 = vpop.f32.mrb[0].mxu0
      %v1581 = vadd.f32 0.0, %v1580
      %v1582 = vpop.f32.mrb[0].mxu0
      %v1583 = vpop.f32.mrb[0].mxu0
      %v1584 = vadd.f32 0.0, %v1583
      %v1585 = vpop.f32.mrb[0].mxu0
      %1586 = vmatprep.mubr.bf16.mxu0 0
      %1587 = vmatmul.mubr.bf16.gmra.mrb[0].mxu0 %v1484
      %v1588 = vpop.f32.mrb[0].mxu0
      %v1589 = vadd.f32 0.0, %v1588
      %v1590 = vpop.f32.mrb[0].mxu0
      %v1591 = vpop.f32.mrb[0].mxu0
      %v1592 = vadd.f32 0.0, %v1591
      %v1593 = vpop.f32.mrb[0].mxu0
      %1594 = vmatprep.mubr.bf16.mxu0 0
      %1595 = vmatmul.mubr.bf16.gmra.mrb[0].mxu0 %v1487
      %v1596 = vpop.f32.mrb[0].mxu0
      %v1597 = vadd.f32 0.0, %v1596
      %v1598 = vpop.f32.mrb[0].mxu0
      %v1599 = vpop.f32.mrb[0].mxu0
      %v1600 = vadd.f32 0.0, %v1599
      %v1601 = vpop.f32.mrb[0].mxu0
      %1602 = vmatprep.mubr.bf16.mxu0 0
      %1603 = vmatmul.mubr.bf16.gmra.mrb[0].mxu0 %v1490
      %v1604 = vpop.f32.mrb[0].mxu0
      %v1605 = vadd.f32 0.0, %v1604
      %v1606 = vpop.f32.mrb[0].mxu0
      %v1607 = vpop.f32.mrb[0].mxu0
      %v1608 = vadd.f32 0.0, %v1607
      %v1609 = vpop.f32.mrb[0].mxu0
      %1610 = vmatprep.mubr.bf16.mxu0 0
      %1611 = vmatmul.mubr.bf16.gmra.mrb[0].mxu0 %v1493
      %v1612 = vpop.f32.mrb[0].mxu0
      %v1613 = vadd.f32 0.0, %v1612
      %v1614 = vpop.f32.mrb[0].mxu0
      %v1615 = vpop.f32.mrb[0].mxu0
      %v1616 = vadd.f32 0.0, %v1615
      %v1617 = vpop.f32.mrb[0].mxu0
      %1618 = vmatprep.mubr.bf16.mxu0 0
      %1619 = vmatmul.mubr.bf16.gmra.mrb[0].mxu0 %v1496
      %v1620 = vpop.f32.mrb[0].mxu0
      %v1621 = vadd.f32 0.0, %v1620
      %v1622 = vpop.f32.mrb[0].mxu0
      %v1623 = vpop.f32.mrb[0].mxu0
      %v1624 = vadd.f32 0.0, %v1623
      %v1625 = vpop.f32.mrb[0].mxu0
      %1626 = vmatprep.mubr.bf16.mxu0 0
      %1627 = vmatmul.mubr.bf16.gmra.mrb[0].mxu0 %v1499
      %v1628 = vpop.f32.mrb[0].mxu0
      %v1629 = vadd.f32 0.0, %v1628
      %v1630 = vpop.f32.mrb[0].mxu0
      %v1631 = vpop.f32.mrb[0].mxu0
      %v1632 = vadd.f32 0.0, %v1631
      %v1633 = vpop.f32.mrb[0].mxu0
      %1634 = vmatprep.mubr.bf16.mxu0 0
      %1635 = vmatmul.mubr.bf16.gmra.mrb[0].mxu0 %v1502
      %v1636 = vpop.f32.mrb[0].mxu0
      %v1637 = vadd.f32 0.0, %v1636
      %v1638 = vpop.f32.mrb[0].mxu0
      %v1639 = vpop.f32.mrb[0].mxu0
      %v1640 = vadd.f32 0.0, %v1639
      %v1641 = vpop.f32.mrb[0].mxu0
      %1642 = vmatprep.mubr.bf16.mxu0 0
      %1643 = vmatmul.mubr.bf16.gmra.mrb[0].mxu0 %v1505
      %v1644 = vpop.f32.mrb[0].mxu0
      %v1645 = vadd.f32 0.0, %v1644
      %v1646 = vpop.f32.mrb[0].mxu0
      %v1647 = vpop.f32.mrb[0].mxu0
      %v1648 = vadd.f32 0.0, %v1647
      %v1649 = vpop.f32.mrb[0].mxu0
      %1650 = vmatprep.mubr.bf16.mxu0 0
      %1651 = vmatmul.mubr.bf16.gmra.mrb[0].mxu0 %v1508
      %v1652 = vpop.f32.mrb[0].mxu0
      %v1653 = vadd.f32 0.0, %v1652
      %v1654 = vpop.f32.mrb[0].mxu0
      %v1655 = vpop.f32.mrb[0].mxu0
      %v1656 = vadd.f32 0.0, %v1655
      %v1657 = vpop.f32.mrb[0].mxu0
      %1658 = vmatprep.mubr.bf16.mxu0 0
      %1659 = vmatmul.mubr.bf16.gmra.mrb[0].mxu0 %v1511
      %v1660 = vpop.f32.mrb[0].mxu0
      %v1661 = vadd.f32 0.0, %v1660
      %v1662 = vpop.f32.mrb[0].mxu0
      %v1663 = vpop.f32.mrb[0].mxu0
      %v1664 = vadd.f32 0.0, %v1663
      %v1665 = vpop.f32.mrb[0].mxu0
      %1666 = vmatprep.mubr.bf16.mxu0 0
      %1667 = vmatmul.mubr.bf16.gmra.mrb[0].mxu0 %v1514
      %v1668 = vpop.f32.mrb[0].mxu0
      %v1669 = vadd.f32 0.0, %v1668
      %v1670 = vpop.f32.mrb[0].mxu0
      %v1671 = vpop.f32.mrb[0].mxu0
      %v1672 = vadd.f32 0.0, %v1671
      %v1673 = vpop.f32.mrb[0].mxu0
      %1674 = vmatprep.mubr.bf16.mxu0 0
      %1675 = vmatmul.mubr.bf16.gmra.mrb[0].mxu0 %v1517
      %v1676 = vpop.f32.mrb[0].mxu0
      %v1677 = vadd.f32 0.0, %v1676
      %v1678 = vpop.f32.mrb[0].mxu0
      %v1679 = vpop.f32.mrb[0].mxu0
      %v1680 = vadd.f32 0.0, %v1679
      %v1681 = vpop.f32.mrb[0].mxu0
      %1682 = vdwg.mxu0
      %v1683 = vadd.f32 %v1389, %v1557
      %v1684 = vadd.f32 %v1390, %v1560
      %v1685 = vadd.f32 %v1391, %v1565
      %v1686 = vadd.f32 %v1392, %v1568
      %v1687 = vadd.f32 %v1393, %v1573
      %v1688 = vadd.f32 %v1394, %v1576
      %v1689 = vadd.f32 %v1395, %v1581
      %v1690 = vadd.f32 %v1396, %v1584
      %v1691 = vadd.f32 %v1397, %v1589
      %v1692 = vadd.f32 %v1398, %v1592
      %v1693 = vadd.f32 %v1399, %v1597
      %v1694 = vadd.f32 %v1400, %v1600
      %v1695 = vadd.f32 %v1401, %v1605
      %v1696 = vadd.f32 %v1402, %v1608
      %v1697 = vadd.f32 %v1403, %v1613
      %v1698 = vadd.f32 %v1404, %v1616
      %v1699 = vadd.f32 %v1405, %v1621
      %v1700 = vadd.f32 %v1406, %v1624
      %v1701 = vadd.f32 %v1407, %v1629
      %v1702 = vadd.f32 %v1408, %v1632
      %v1703 = vadd.f32 %v1409, %v1637
      %v1704 = vadd.f32 %v1410, %v1640
      %v1705 = vadd.f32 %v1411, %v1645
      %v1706 = vadd.f32 %v1412, %v1648
      %v1707 = vadd.f32 %v1413, %v1653
      %v1708 = vadd.f32 %v1414, %v1656
      %v1709 = vadd.f32 %v1415, %v1661
      %v1710 = vadd.f32 %v1416, %v1664
      %v1711 = vadd.f32 %v1417, %v1669
      %v1712 = vadd.f32 %v1418, %v1672
      %v1713 = vadd.f32 %v1419, %v1677
      %v1714 = vadd.f32 %v1420, %v1680
      %v1715 = vld [vmem:[%s482 + $0x1] sm:$0xff]
      %v1716 = vld [vmem:[%s482 + $0x9] sm:$0xff]
      %v1717 = vld [vmem:[%s482 + $0x19] sm:$0xff]
      %v1718 = vld [vmem:[%s482 + $0x21] sm:$0xff]
      %v1719 = vld [vmem:[%s482 + $0x31] sm:$0xff]
      %v1720 = vld [vmem:[%s482 + $0x39] sm:$0xff]
      %v1721 = vld [vmem:[%s482 + $0x49] sm:$0xff]
      %v1722 = vld [vmem:[%s482 + $0x51] sm:$0xff]
      %v1723 = vld [vmem:[%s482 + $0x61] sm:$0xff]
      %v1724 = vld [vmem:[%s482 + $0x69] sm:$0xff]
      %v1725 = vld [vmem:[%s482 + $0x79] sm:$0xff]
      %v1726 = vld [vmem:[%s482 + $0x81] sm:$0xff]
      %v1727 = vld [vmem:[%s482 + $0x91] sm:$0xff]
      %v1728 = vld [vmem:[%s482 + $0x99] sm:$0xff]
      %v1729 = vld [vmem:[%s482 + $0xa9] sm:$0xff]
      %v1730 = vld [vmem:[%s482 + $0xb1] sm:$0xff]
      %v1731 = vld [vmem:[%s482 + $0xc1] sm:$0xff]
      %v1732 = vld [vmem:[%s482 + $0xc9] sm:$0xff]
      %v1733 = vld [vmem:[%s482 + $0xd9] sm:$0xff]
      %v1734 = vld [vmem:[%s482 + $0xe1] sm:$0xff]
      %v1735 = vld [vmem:[%s482 + $0xf1] sm:$0xff]
      %v1736 = vld [vmem:[%s482 + $0xf9] sm:$0xff]
      %v1737 = vld [vmem:[%s482 + $0x109] sm:$0xff]
      %v1738 = vld [vmem:[%s482 + $0x111] sm:$0xff]
      %v1739 = vld [vmem:[%s482 + $0x121] sm:$0xff]
      %v1740 = vld [vmem:[%s482 + $0x129] sm:$0xff]
      %v1741 = vld [vmem:[%s482 + $0x139] sm:$0xff]
      %v1742 = vld [vmem:[%s482 + $0x141] sm:$0xff]
      %v1743 = vld [vmem:[%s482 + $0x151] sm:$0xff]
      %v1744 = vld [vmem:[%s482 + $0x159] sm:$0xff]
      %v1745 = vld [vmem:[%s482 + $0x169] sm:$0xff]
      %v1746 = vld [vmem:[%s482 + $0x171] sm:$0xff]
      %v1747 = vpack.c.bf16 %v1716, %v1715
      %v1748 = vpack.c.bf16 %v1718, %v1717
      %v1749 = vpack.c.bf16 %v1720, %v1719
      %v1750 = vpack.c.bf16 %v1722, %v1721
      %v1751 = vpack.c.bf16 %v1724, %v1723
      %v1752 = vpack.c.bf16 %v1726, %v1725
      %v1753 = vpack.c.bf16 %v1728, %v1727
      %v1754 = vpack.c.bf16 %v1730, %v1729
      %v1755 = vpack.c.bf16 %v1732, %v1731
      %v1756 = vpack.c.bf16 %v1734, %v1733
      %v1757 = vpack.c.bf16 %v1736, %v1735
      %v1758 = vpack.c.bf16 %v1738, %v1737
      %v1759 = vpack.c.bf16 %v1740, %v1739
      %v1760 = vpack.c.bf16 %v1742, %v1741
      %v1761 = vpack.c.bf16 %v1744, %v1743
      %v1762 = vpack.c.bf16 %v1746, %v1745
      %s1763 = scalar_lea.vmem %s3, 8
      %v1764 = vld [vmem:[%s1763] sm:$0x3]
      %v1766 = vsel %vm394, %v1747, 0
      %v1769 = vsel %vm394, %v1748, 0
      %v1772 = vsel %vm394, %v1749, 0
      %v1775 = vsel %vm394, %v1750, 0
      %v1778 = vsel %vm394, %v1751, 0
      %v1781 = vsel %vm394, %v1752, 0
      %v1784 = vsel %vm394, %v1753, 0
      %v1787 = vsel %vm394, %v1754, 0
      %v1790 = vsel %vm394, %v1755, 0
      %v1793 = vsel %vm394, %v1756, 0
      %v1796 = vsel %vm394, %v1757, 0
      %v1799 = vsel %vm394, %v1758, 0
      %v1802 = vsel %vm394, %v1759, 0
      %v1805 = vsel %vm394, %v1760, 0
      %v1808 = vsel %vm394, %v1761, 0
      %v1811 = vsel %vm394, %v1762, 0
      %v1814 = vsel %vm636, %v1764, 0
      %1816 = vmatprep.subr.bf16.mxu0 0
      %1817 = vmatpush1.bf16.msra.mxu0 %v1814
      %1818 = vmatprep.subr.bf16.mxu0 0
      %1819 = vmatpush1.bf16.msra.mxu0 0
      %1820 = vmatprep.subr.bf16.mxu0 0
      %1821 = vmatpush1.bf16.msra.mxu0 0
      %1822 = vmatprep.subr.bf16.mxu0 0
      %1823 = vmatpush1.bf16.msra.mxu0 0
      %1824 = vmatprep.subr.bf16.mxu0 0
      %1825 = vmatpush1.bf16.msra.mxu0 0
      %1826 = vmatprep.subr.bf16.mxu0 0
      %1827 = vmatpush1.bf16.msra.mxu0 0
      %1828 = vmatprep.subr.bf16.mxu0 0
      %1829 = vmatpush1.bf16.msra.mxu0 0
      %1830 = vmatprep.subr.bf16.mxu0 0
      %1831 = vmatpush1.bf16.msra.mxu0 0
      %1832 = vmatprep.subr.bf16.mxu0 0
      %1833 = vmatpush1.bf16.msra.mxu0 0
      %1834 = vmatprep.subr.bf16.mxu0 0
      %1835 = vmatpush1.bf16.msra.mxu0 0
      %1836 = vmatprep.subr.bf16.mxu0 0
      %1837 = vmatpush1.bf16.msra.mxu0 0
      %1838 = vmatprep.subr.bf16.mxu0 0
      %1839 = vmatpush1.bf16.msra.mxu0 0
      %1840 = vmatprep.subr.bf16.mxu0 0
      %1841 = vmatpush1.bf16.msra.mxu0 0
      %1842 = vmatprep.subr.bf16.mxu0 0
      %1843 = vmatpush1.bf16.msra.mxu0 0
      %1844 = vmatprep.subr.bf16.mxu0 0
      %1845 = vmatpush1.bf16.msra.mxu0 0
      %1846 = vmatprep.subr.bf16.mxu0 0
      %1847 = vmatpush1.bf16.msra.mxu0 0
      %1848 = vmatprep.mubr.bf16.mxu0 0
      %1849 = vmatmul.mubr.bf16.gmra.mrb[0].mxu0 %v1766
      %v1850 = vpop.f32.mrb[0].mxu0
      %v1851 = vadd.f32 0.0, %v1850
      %v1852 = vpop.f32.mrb[0].mxu0
      %v1853 = vpop.f32.mrb[0].mxu0
      %v1854 = vadd.f32 0.0, %v1853
      %v1855 = vpop.f32.mrb[0].mxu0
      %1856 = vmatprep.mubr.bf16.mxu0 0
      %1857 = vmatmul.mubr.bf16.gmra.mrb[0].mxu0 %v1769
      %v1858 = vpop.f32.mrb[0].mxu0
      %v1859 = vadd.f32 0.0, %v1858
      %v1860 = vpop.f32.mrb[0].mxu0
      %v1861 = vpop.f32.mrb[0].mxu0
      %v1862 = vadd.f32 0.0, %v1861
      %v1863 = vpop.f32.mrb[0].mxu0
      %1864 = vmatprep.mubr.bf16.mxu0 0
      %1865 = vmatmul.mubr.bf16.gmra.mrb[0].mxu0 %v1772
      %v1866 = vpop.f32.mrb[0].mxu0
      %v1867 = vadd.f32 0.0, %v1866
      %v1868 = vpop.f32.mrb[0].mxu0
      %v1869 = vpop.f32.mrb[0].mxu0
      %v1870 = vadd.f32 0.0, %v1869
      %v1871 = vpop.f32.mrb[0].mxu0
      %1872 = vmatprep.mubr.bf16.mxu0 0
      %1873 = vmatmul.mubr.bf16.gmra.mrb[0].mxu0 %v1775
      %v1874 = vpop.f32.mrb[0].mxu0
      %v1875 = vadd.f32 0.0, %v1874
      %v1876 = vpop.f32.mrb[0].mxu0
      %v1877 = vpop.f32.mrb[0].mxu0
      %v1878 = vadd.f32 0.0, %v1877
      %v1879 = vpop.f32.mrb[0].mxu0
      %1880 = vmatprep.mubr.bf16.mxu0 0
      %1881 = vmatmul.mubr.bf16.gmra.mrb[0].mxu0 %v1778
      %v1882 = vpop.f32.mrb[0].mxu0
      %v1883 = vadd.f32 0.0, %v1882
      %v1884 = vpop.f32.mrb[0].mxu0
      %v1885 = vpop.f32.mrb[0].mxu0
      %v1886 = vadd.f32 0.0, %v1885
      %v1887 = vpop.f32.mrb[0].mxu0
      %1888 = vmatprep.mubr.bf16.mxu0 0
      %1889 = vmatmul.mubr.bf16.gmra.mrb[0].mxu0 %v1781
      %v1890 = vpop.f32.mrb[0].mxu0
      %v1891 = vadd.f32 0.0, %v1890
      %v1892 = vpop.f32.mrb[0].mxu0
      %v1893 = vpop.f32.mrb[0].mxu0
      %v1894 = vadd.f32 0.0, %v1893
      %v1895 = vpop.f32.mrb[0].mxu0
      %1896 = vmatprep.mubr.bf16.mxu0 0
      %1897 = vmatmul.mubr.bf16.gmra.mrb[0].mxu0 %v1784
      %v1898 = vpop.f32.mrb[0].mxu0
      %v1899 = vadd.f32 0.0, %v1898
      %v1900 = vpop.f32.mrb[0].mxu0
      %v1901 = vpop.f32.mrb[0].mxu0
      %v1902 = vadd.f32 0.0, %v1901
      %v1903 = vpop.f32.mrb[0].mxu0
      %1904 = vmatprep.mubr.bf16.mxu0 0
      %1905 = vmatmul.mubr.bf16.gmra.mrb[0].mxu0 %v1787
      %v1906 = vpop.f32.mrb[0].mxu0
      %v1907 = vadd.f32 0.0, %v1906
      %v1908 = vpop.f32.mrb[0].mxu0
      %v1909 = vpop.f32.mrb[0].mxu0
      %v1910 = vadd.f32 0.0, %v1909
      %v1911 = vpop.f32.mrb[0].mxu0
      %1912 = vmatprep.mubr.bf16.mxu0 0
      %1913 = vmatmul.mubr.bf16.gmra.mrb[0].mxu0 %v1790
      %v1914 = vpop.f32.mrb[0].mxu0
      %v1915 = vadd.f32 0.0, %v1914
      %v1916 = vpop.f32.mrb[0].mxu0
      %v1917 = vpop.f32.mrb[0].mxu0
      %v1918 = vadd.f32 0.0, %v1917
      %v1919 = vpop.f32.mrb[0].mxu0
      %1920 = vmatprep.mubr.bf16.mxu0 0
      %1921 = vmatmul.mubr.bf16.gmra.mrb[0].mxu0 %v1793
      %v1922 = vpop.f32.mrb[0].mxu0
      %v1923 = vadd.f32 0.0, %v1922
      %v1924 = vpop.f32.mrb[0].mxu0
      %v1925 = vpop.f32.mrb[0].mxu0
      %v1926 = vadd.f32 0.0, %v1925
      %v1927 = vpop.f32.mrb[0].mxu0
      %1928 = vmatprep.mubr.bf16.mxu0 0
      %1929 = vmatmul.mubr.bf16.gmra.mrb[0].mxu0 %v1796
      %v1930 = vpop.f32.mrb[0].mxu0
      %v1931 = vadd.f32 0.0, %v1930
      %v1932 = vpop.f32.mrb[0].mxu0
      %v1933 = vpop.f32.mrb[0].mxu0
      %v1934 = vadd.f32 0.0, %v1933
      %v1935 = vpop.f32.mrb[0].mxu0
      %1936 = vmatprep.mubr.bf16.mxu0 0
      %1937 = vmatmul.mubr.bf16.gmra.mrb[0].mxu0 %v1799
      %v1938 = vpop.f32.mrb[0].mxu0
      %v1939 = vadd.f32 0.0, %v1938
      %v1940 = vpop.f32.mrb[0].mxu0
      %v1941 = vpop.f32.mrb[0].mxu0
      %v1942 = vadd.f32 0.0, %v1941
      %v1943 = vpop.f32.mrb[0].mxu0
      %1944 = vmatprep.mubr.bf16.mxu0 0
      %1945 = vmatmul.mubr.bf16.gmra.mrb[0].mxu0 %v1802
      %v1946 = vpop.f32.mrb[0].mxu0
      %v1947 = vadd.f32 0.0, %v1946
      %v1948 = vpop.f32.mrb[0].mxu0
      %v1949 = vpop.f32.mrb[0].mxu0
      %v1950 = vadd.f32 0.0, %v1949
      %v1951 = vpop.f32.mrb[0].mxu0
      %1952 = vmatprep.mubr.bf16.mxu0 0
      %1953 = vmatmul.mubr.bf16.gmra.mrb[0].mxu0 %v1805
      %v1954 = vpop.f32.mrb[0].mxu0
      %v1955 = vadd.f32 0.0, %v1954
      %v1956 = vpop.f32.mrb[0].mxu0
      %v1957 = vpop.f32.mrb[0].mxu0
      %v1958 = vadd.f32 0.0, %v1957
      %v1959 = vpop.f32.mrb[0].mxu0
      %1960 = vmatprep.mubr.bf16.mxu0 0
      %1961 = vmatmul.mubr.bf16.gmra.mrb[0].mxu0 %v1808
      %v1962 = vpop.f32.mrb[0].mxu0
      %v1963 = vadd.f32 0.0, %v1962
      %v1964 = vpop.f32.mrb[0].mxu0
      %v1965 = vpop.f32.mrb[0].mxu0
      %v1966 = vadd.f32 0.0, %v1965
      %v1967 = vpop.f32.mrb[0].mxu0
      %1968 = vmatprep.mubr.bf16.mxu0 0
      %1969 = vmatmul.mubr.bf16.gmra.mrb[0].mxu0 %v1811
      %v1970 = vpop.f32.mrb[0].mxu0
      %v1971 = vadd.f32 0.0, %v1970
      %v1972 = vpop.f32.mrb[0].mxu0
      %v1973 = vpop.f32.mrb[0].mxu0
      %v1974 = vadd.f32 0.0, %v1973
      %v1975 = vpop.f32.mrb[0].mxu0
      %1976 = vdwg.mxu0
      %v1977 = vadd.f32 %v1683, %v1851
      %v1978 = vadd.f32 %v1684, %v1854
      %v1979 = vadd.f32 %v1685, %v1859
      %v1980 = vadd.f32 %v1686, %v1862
      %v1981 = vadd.f32 %v1687, %v1867
      %v1982 = vadd.f32 %v1688, %v1870
      %v1983 = vadd.f32 %v1689, %v1875
      %v1984 = vadd.f32 %v1690, %v1878
      %v1985 = vadd.f32 %v1691, %v1883
      %v1986 = vadd.f32 %v1692, %v1886
      %v1987 = vadd.f32 %v1693, %v1891
      %v1988 = vadd.f32 %v1694, %v1894
      %v1989 = vadd.f32 %v1695, %v1899
      %v1990 = vadd.f32 %v1696, %v1902
      %v1991 = vadd.f32 %v1697, %v1907
      %v1992 = vadd.f32 %v1698, %v1910
      %v1993 = vadd.f32 %v1699, %v1915
      %v1994 = vadd.f32 %v1700, %v1918
      %v1995 = vadd.f32 %v1701, %v1923
      %v1996 = vadd.f32 %v1702, %v1926
      %v1997 = vadd.f32 %v1703, %v1931
      %v1998 = vadd.f32 %v1704, %v1934
      %v1999 = vadd.f32 %v1705, %v1939
      %v2000 = vadd.f32 %v1706, %v1942
      %v2001 = vadd.f32 %v1707, %v1947
      %v2002 = vadd.f32 %v1708, %v1950
      %v2003 = vadd.f32 %v1709, %v1955
      %v2004 = vadd.f32 %v1710, %v1958
      %v2005 = vadd.f32 %v1711, %v1963
      %v2006 = vadd.f32 %v1712, %v1966
      %v2007 = vadd.f32 %v1713, %v1971
      %v2008 = vadd.f32 %v1714, %v1974
      %v2009 = vld [vmem:[%s482 + $0x2] sm:$0xff]
      %v2010 = vld [vmem:[%s482 + $0xa] sm:$0xff]
      %v2011 = vld [vmem:[%s482 + $0x1a] sm:$0xff]
      %v2012 = vld [vmem:[%s482 + $0x22] sm:$0xff]
      %v2013 = vld [vmem:[%s482 + $0x32] sm:$0xff]
      %v2014 = vld [vmem:[%s482 + $0x3a] sm:$0xff]
      %v2015 = vld [vmem:[%s482 + $0x4a] sm:$0xff]
      %v2016 = vld [vmem:[%s482 + $0x52] sm:$0xff]
      %v2017 = vld [vmem:[%s482 + $0x62] sm:$0xff]
      %v2018 = vld [vmem:[%s482 + $0x6a] sm:$0xff]
      %v2019 = vld [vmem:[%s482 + $0x7a] sm:$0xff]
      %v2020 = vld [vmem:[%s482 + $0x82] sm:$0xff]
      %v2021 = vld [vmem:[%s482 + $0x92] sm:$0xff]
      %v2022 = vld [vmem:[%s482 + $0x9a] sm:$0xff]
      %v2023 = vld [vmem:[%s482 + $0xaa] sm:$0xff]
      %v2024 = vld [vmem:[%s482 + $0xb2] sm:$0xff]
      %v2025 = vld [vmem:[%s482 + $0xc2] sm:$0xff]
      %v2026 = vld [vmem:[%s482 + $0xca] sm:$0xff]
      %v2027 = vld [vmem:[%s482 + $0xda] sm:$0xff]
      %v2028 = vld [vmem:[%s482 + $0xe2] sm:$0xff]
      %v2029 = vld [vmem:[%s482 + $0xf2] sm:$0xff]
      %v2030 = vld [vmem:[%s482 + $0xfa] sm:$0xff]
      %v2031 = vld [vmem:[%s482 + $0x10a] sm:$0xff]
      %v2032 = vld [vmem:[%s482 + $0x112] sm:$0xff]
      %v2033 = vld [vmem:[%s482 + $0x122] sm:$0xff]
      %v2034 = vld [vmem:[%s482 + $0x12a] sm:$0xff]
      %v2035 = vld [vmem:[%s482 + $0x13a] sm:$0xff]
      %v2036 = vld [vmem:[%s482 + $0x142] sm:$0xff]
      %v2037 = vld [vmem:[%s482 + $0x152] sm:$0xff]
      %v2038 = vld [vmem:[%s482 + $0x15a] sm:$0xff]
      %v2039 = vld [vmem:[%s482 + $0x16a] sm:$0xff]
      %v2040 = vld [vmem:[%s482 + $0x172] sm:$0xff]
      %v2041 = vpack.c.bf16 %v2010, %v2009
      %v2042 = vpack.c.bf16 %v2012, %v2011
      %v2043 = vpack.c.bf16 %v2014, %v2013
      %v2044 = vpack.c.bf16 %v2016, %v2015
      %v2045 = vpack.c.bf16 %v2018, %v2017
      %v2046 = vpack.c.bf16 %v2020, %v2019
      %v2047 = vpack.c.bf16 %v2022, %v2021
      %v2048 = vpack.c.bf16 %v2024, %v2023
      %v2049 = vpack.c.bf16 %v2026, %v2025
      %v2050 = vpack.c.bf16 %v2028, %v2027
      %v2051 = vpack.c.bf16 %v2030, %v2029
      %v2052 = vpack.c.bf16 %v2032, %v2031
      %v2053 = vpack.c.bf16 %v2034, %v2033
      %v2054 = vpack.c.bf16 %v2036, %v2035
      %v2055 = vpack.c.bf16 %v2038, %v2037
      %v2056 = vpack.c.bf16 %v2040, %v2039
      %s2057 = scalar_lea.vmem %s3, 10
      %v2058 = vld [vmem:[%s2057] sm:$0x3]
      %v2060 = vsel %vm394, %v2041, 0
      %v2063 = vsel %vm394, %v2042, 0
      %v2066 = vsel %vm394, %v2043, 0
      %v2069 = vsel %vm394, %v2044, 0
      %v2072 = vsel %vm394, %v2045, 0
      %v2075 = vsel %vm394, %v2046, 0
      %v2078 = vsel %vm394, %v2047, 0
      %v2081 = vsel %vm394, %v2048, 0
      %v2084 = vsel %vm394, %v2049, 0
      %v2087 = vsel %vm394, %v2050, 0
      %v2090 = vsel %vm394, %v2051, 0
      %v2093 = vsel %vm394, %v2052, 0
      %v2096 = vsel %vm394, %v2053, 0
      %v2099 = vsel %vm394, %v2054, 0
      %v2102 = vsel %vm394, %v2055, 0
      %v2105 = vsel %vm394, %v2056, 0
      %v2108 = vsel %vm636, %v2058, 0
      %2110 = vmatprep.subr.bf16.mxu0 0
      %2111 = vmatpush1.bf16.msra.mxu0 %v2108
      %2112 = vmatprep.subr.bf16.mxu0 0
      %2113 = vmatpush1.bf16.msra.mxu0 0
      %2114 = vmatprep.subr.bf16.mxu0 0
      %2115 = vmatpush1.bf16.msra.mxu0 0
      %2116 = vmatprep.subr.bf16.mxu0 0
      %2117 = vmatpush1.bf16.msra.mxu0 0
      %2118 = vmatprep.subr.bf16.mxu0 0
      %2119 = vmatpush1.bf16.msra.mxu0 0
      %2120 = vmatprep.subr.bf16.mxu0 0
      %2121 = vmatpush1.bf16.msra.mxu0 0
      %2122 = vmatprep.subr.bf16.mxu0 0
      %2123 = vmatpush1.bf16.msra.mxu0 0
      %2124 = vmatprep.subr.bf16.mxu0 0
      %2125 = vmatpush1.bf16.msra.mxu0 0
      %2126 = vmatprep.subr.bf16.mxu0 0
      %2127 = vmatpush1.bf16.msra.mxu0 0
      %2128 = vmatprep.subr.bf16.mxu0 0
      %2129 = vmatpush1.bf16.msra.mxu0 0
      %2130 = vmatprep.subr.bf16.mxu0 0
      %2131 = vmatpush1.bf16.msra.mxu0 0
      %2132 = vmatprep.subr.bf16.mxu0 0
      %2133 = vmatpush1.bf16.msra.mxu0 0
      %2134 = vmatprep.subr.bf16.mxu0 0
      %2135 = vmatpush1.bf16.msra.mxu0 0
      %2136 = vmatprep.subr.bf16.mxu0 0
      %2137 = vmatpush1.bf16.msra.mxu0 0
      %2138 = vmatprep.subr.bf16.mxu0 0
      %2139 = vmatpush1.bf16.msra.mxu0 0
      %2140 = vmatprep.subr.bf16.mxu0 0
      %2141 = vmatpush1.bf16.msra.mxu0 0
      %2142 = vmatprep.mubr.bf16.mxu0 0
      %2143 = vmatmul.mubr.bf16.gmra.mrb[0].mxu0 %v2060
      %v2144 = vpop.f32.mrb[0].mxu0
      %v2145 = vadd.f32 0.0, %v2144
      %v2146 = vpop.f32.mrb[0].mxu0
      %v2147 = vpop.f32.mrb[0].mxu0
      %v2148 = vadd.f32 0.0, %v2147
      %v2149 = vpop.f32.mrb[0].mxu0
      %2150 = vmatprep.mubr.bf16.mxu0 0
      %2151 = vmatmul.mubr.bf16.gmra.mrb[0].mxu0 %v2063
      %v2152 = vpop.f32.mrb[0].mxu0
      %v2153 = vadd.f32 0.0, %v2152
      %v2154 = vpop.f32.mrb[0].mxu0
      %v2155 = vpop.f32.mrb[0].mxu0
      %v2156 = vadd.f32 0.0, %v2155
      %v2157 = vpop.f32.mrb[0].mxu0
      %2158 = vmatprep.mubr.bf16.mxu0 0
      %2159 = vmatmul.mubr.bf16.gmra.mrb[0].mxu0 %v2066
      %v2160 = vpop.f32.mrb[0].mxu0
      %v2161 = vadd.f32 0.0, %v2160
      %v2162 = vpop.f32.mrb[0].mxu0
      %v2163 = vpop.f32.mrb[0].mxu0
      %v2164 = vadd.f32 0.0, %v2163
      %v2165 = vpop.f32.mrb[0].mxu0
      %2166 = vmatprep.mubr.bf16.mxu0 0
      %2167 = vmatmul.mubr.bf16.gmra.mrb[0].mxu0 %v2069
      %v2168 = vpop.f32.mrb[0].mxu0
      %v2169 = vadd.f32 0.0, %v2168
      %v2170 = vpop.f32.mrb[0].mxu0
      %v2171 = vpop.f32.mrb[0].mxu0
      %v2172 = vadd.f32 0.0, %v2171
      %v2173 = vpop.f32.mrb[0].mxu0
      %2174 = vmatprep.mubr.bf16.mxu0 0
      %2175 = vmatmul.mubr.bf16.gmra.mrb[0].mxu0 %v2072
      %v2176 = vpop.f32.mrb[0].mxu0
      %v2177 = vadd.f32 0.0, %v2176
      %v2178 = vpop.f32.mrb[0].mxu0
      %v2179 = vpop.f32.mrb[0].mxu0
      %v2180 = vadd.f32 0.0, %v2179
      %v2181 = vpop.f32.mrb[0].mxu0
      %2182 = vmatprep.mubr.bf16.mxu0 0
      %2183 = vmatmul.mubr.bf16.gmra.mrb[0].mxu0 %v2075
      %v2184 = vpop.f32.mrb[0].mxu0
      %v2185 = vadd.f32 0.0, %v2184
      %v2186 = vpop.f32.mrb[0].mxu0
      %v2187 = vpop.f32.mrb[0].mxu0
      %v2188 = vadd.f32 0.0, %v2187
      %v2189 = vpop.f32.mrb[0].mxu0
      %2190 = vmatprep.mubr.bf16.mxu0 0
      %2191 = vmatmul.mubr.bf16.gmra.mrb[0].mxu0 %v2078
      %v2192 = vpop.f32.mrb[0].mxu0
      %v2193 = vadd.f32 0.0, %v2192
      %v2194 = vpop.f32.mrb[0].mxu0
      %v2195 = vpop.f32.mrb[0].mxu0
      %v2196 = vadd.f32 0.0, %v2195
      %v2197 = vpop.f32.mrb[0].mxu0
      %2198 = vmatprep.mubr.bf16.mxu0 0
      %2199 = vmatmul.mubr.bf16.gmra.mrb[0].mxu0 %v2081
      %v2200 = vpop.f32.mrb[0].mxu0
      %v2201 = vadd.f32 0.0, %v2200
      %v2202 = vpop.f32.mrb[0].mxu0
      %v2203 = vpop.f32.mrb[0].mxu0
      %v2204 = vadd.f32 0.0, %v2203
      %v2205 = vpop.f32.mrb[0].mxu0
      %2206 = vmatprep.mubr.bf16.mxu0 0
      %2207 = vmatmul.mubr.bf16.gmra.mrb[0].mxu0 %v2084
      %v2208 = vpop.f32.mrb[0].mxu0
      %v2209 = vadd.f32 0.0, %v2208
      %v2210 = vpop.f32.mrb[0].mxu0
      %v2211 = vpop.f32.mrb[0].mxu0
      %v2212 = vadd.f32 0.0, %v2211
      %v2213 = vpop.f32.mrb[0].mxu0
      %2214 = vmatprep.mubr.bf16.mxu0 0
      %2215 = vmatmul.mubr.bf16.gmra.mrb[0].mxu0 %v2087
      %v2216 = vpop.f32.mrb[0].mxu0
      %v2217 = vadd.f32 0.0, %v2216
      %v2218 = vpop.f32.mrb[0].mxu0
      %v2219 = vpop.f32.mrb[0].mxu0
      %v2220 = vadd.f32 0.0, %v2219
      %v2221 = vpop.f32.mrb[0].mxu0
      %2222 = vmatprep.mubr.bf16.mxu0 0
      %2223 = vmatmul.mubr.bf16.gmra.mrb[0].mxu0 %v2090
      %v2224 = vpop.f32.mrb[0].mxu0
      %v2225 = vadd.f32 0.0, %v2224
      %v2226 = vpop.f32.mrb[0].mxu0
      %v2227 = vpop.f32.mrb[0].mxu0
      %v2228 = vadd.f32 0.0, %v2227
      %v2229 = vpop.f32.mrb[0].mxu0
      %2230 = vmatprep.mubr.bf16.mxu0 0
      %2231 = vmatmul.mubr.bf16.gmra.mrb[0].mxu0 %v2093
      %v2232 = vpop.f32.mrb[0].mxu0
      %v2233 = vadd.f32 0.0, %v2232
      %v2234 = vpop.f32.mrb[0].mxu0
      %v2235 = vpop.f32.mrb[0].mxu0
      %v2236 = vadd.f32 0.0, %v2235
      %v2237 = vpop.f32.mrb[0].mxu0
      %2238 = vmatprep.mubr.bf16.mxu0 0
      %2239 = vmatmul.mubr.bf16.gmra.mrb[0].mxu0 %v2096
      %v2240 = vpop.f32.mrb[0].mxu0
      %v2241 = vadd.f32 0.0, %v2240
      %v2242 = vpop.f32.mrb[0].mxu0
      %v2243 = vpop.f32.mrb[0].mxu0
      %v2244 = vadd.f32 0.0, %v2243
      %v2245 = vpop.f32.mrb[0].mxu0
      %2246 = vmatprep.mubr.bf16.mxu0 0
      %2247 = vmatmul.mubr.bf16.gmra.mrb[0].mxu0 %v2099
      %v2248 = vpop.f32.mrb[0].mxu0
      %v2249 = vadd.f32 0.0, %v2248
      %v2250 = vpop.f32.mrb[0].mxu0
      %v2251 = vpop.f32.mrb[0].mxu0
      %v2252 = vadd.f32 0.0, %v2251
      %v2253 = vpop.f32.mrb[0].mxu0
      %2254 = vmatprep.mubr.bf16.mxu0 0
      %2255 = vmatmul.mubr.bf16.gmra.mrb[0].mxu0 %v2102
      %v2256 = vpop.f32.mrb[0].mxu0
      %v2257 = vadd.f32 0.0, %v2256
      %v2258 = vpop.f32.mrb[0].mxu0
      %v2259 = vpop.f32.mrb[0].mxu0
      %v2260 = vadd.f32 0.0, %v2259
      %v2261 = vpop.f32.mrb[0].mxu0
      %2262 = vmatprep.mubr.bf16.mxu0 0
      %2263 = vmatmul.mubr.bf16.gmra.mrb[0].mxu0 %v2105
      %v2264 = vpop.f32.mrb[0].mxu0
      %v2265 = vadd.f32 0.0, %v2264
      %v2266 = vpop.f32.mrb[0].mxu0
      %v2267 = vpop.f32.mrb[0].mxu0
      %v2268 = vadd.f32 0.0, %v2267
      %v2269 = vpop.f32.mrb[0].mxu0
      %2270 = vdwg.mxu0
      %v2271 = vadd.f32 %v1977, %v2145
      %v2272 = vadd.f32 %v1978, %v2148
      %v2273 = vadd.f32 %v1979, %v2153
      %v2274 = vadd.f32 %v1980, %v2156
      %v2275 = vadd.f32 %v1981, %v2161
      %v2276 = vadd.f32 %v1982, %v2164
      %v2277 = vadd.f32 %v1983, %v2169
      %v2278 = vadd.f32 %v1984, %v2172
      %v2279 = vadd.f32 %v1985, %v2177
      %v2280 = vadd.f32 %v1986, %v2180
      %v2281 = vadd.f32 %v1987, %v2185
      %v2282 = vadd.f32 %v1988, %v2188
      %v2283 = vadd.f32 %v1989, %v2193
      %v2284 = vadd.f32 %v1990, %v2196
      %v2285 = vadd.f32 %v1991, %v2201
      %v2286 = vadd.f32 %v1992, %v2204
      %v2287 = vadd.f32 %v1993, %v2209
      %v2288 = vadd.f32 %v1994, %v2212
      %v2289 = vadd.f32 %v1995, %v2217
      %v2290 = vadd.f32 %v1996, %v2220
      %v2291 = vadd.f32 %v1997, %v2225
      %v2292 = vadd.f32 %v1998, %v2228
      %v2293 = vadd.f32 %v1999, %v2233
      %v2294 = vadd.f32 %v2000, %v2236
      %v2295 = vadd.f32 %v2001, %v2241
      %v2296 = vadd.f32 %v2002, %v2244
      %v2297 = vadd.f32 %v2003, %v2249
      %v2298 = vadd.f32 %v2004, %v2252
      %v2299 = vadd.f32 %v2005, %v2257
      %v2300 = vadd.f32 %v2006, %v2260
      %v2301 = vadd.f32 %v2007, %v2265
      %v2302 = vadd.f32 %v2008, %v2268
      %s2303 = scalar_lea.vmem [#allocation2], 48
      %v2304 = vld [vmem:[%s2303] sm:$0xff]
      %v2305 = vld [vmem:[%s2303 + $0x8] sm:$0xff]
      %v2306 = vld [vmem:[%s2303 + $0x18] sm:$0xff]
      %v2307 = vld [vmem:[%s2303 + $0x20] sm:$0xff]
      %v2308 = vld [vmem:[%s2303 + $0x30] sm:$0xff]
      %v2309 = vld [vmem:[%s2303 + $0x38] sm:$0xff]
      %v2310 = vld [vmem:[%s2303 + $0x48] sm:$0xff]
      %v2311 = vld [vmem:[%s2303 + $0x50] sm:$0xff]
      %v2312 = vld [vmem:[%s2303 + $0x60] sm:$0xff]
      %v2313 = vld [vmem:[%s2303 + $0x68] sm:$0xff]
      %v2314 = vld [vmem:[%s2303 + $0x78] sm:$0xff]
      %v2315 = vld [vmem:[%s2303 + $0x80] sm:$0xff]
      %v2316 = vld [vmem:[%s2303 + $0x90] sm:$0xff]
      %v2317 = vld [vmem:[%s2303 + $0x98] sm:$0xff]
      %v2318 = vld [vmem:[%s2303 + $0xa8] sm:$0xff]
      %v2319 = vld [vmem:[%s2303 + $0xb0] sm:$0xff]
      %v2320 = vld [vmem:[%s2303 + $0xc0] sm:$0xff]
      %v2321 = vld [vmem:[%s2303 + $0xc8] sm:$0xff]
      %v2322 = vld [vmem:[%s2303 + $0xd8] sm:$0xff]
      %v2323 = vld [vmem:[%s2303 + $0xe0] sm:$0xff]
      %v2324 = vld [vmem:[%s2303 + $0xf0] sm:$0xff]
      %v2325 = vld [vmem:[%s2303 + $0xf8] sm:$0xff]
      %v2326 = vld [vmem:[%s2303 + $0x108] sm:$0xff]
      %v2327 = vld [vmem:[%s2303 + $0x110] sm:$0xff]
      %v2328 = vld [vmem:[%s2303 + $0x120] sm:$0xff]
      %v2329 = vld [vmem:[%s2303 + $0x128] sm:$0xff]
      %v2330 = vld [vmem:[%s2303 + $0x138] sm:$0xff]
      %v2331 = vld [vmem:[%s2303 + $0x140] sm:$0xff]
      %v2332 = vld [vmem:[%s2303 + $0x150] sm:$0xff]
      %v2333 = vld [vmem:[%s2303 + $0x158] sm:$0xff]
      %v2334 = vld [vmem:[%s2303 + $0x168] sm:$0xff]
      %v2335 = vld [vmem:[%s2303 + $0x170] sm:$0xff]
      %v2336 = vpack.c.bf16 %v2305, %v2304
      %v2337 = vpack.c.bf16 %v2307, %v2306
      %v2338 = vpack.c.bf16 %v2309, %v2308
      %v2339 = vpack.c.bf16 %v2311, %v2310
      %v2340 = vpack.c.bf16 %v2313, %v2312
      %v2341 = vpack.c.bf16 %v2315, %v2314
      %v2342 = vpack.c.bf16 %v2317, %v2316
      %v2343 = vpack.c.bf16 %v2319, %v2318
      %v2344 = vpack.c.bf16 %v2321, %v2320
      %v2345 = vpack.c.bf16 %v2323, %v2322
      %v2346 = vpack.c.bf16 %v2325, %v2324
      %v2347 = vpack.c.bf16 %v2327, %v2326
      %v2348 = vpack.c.bf16 %v2329, %v2328
      %v2349 = vpack.c.bf16 %v2331, %v2330
      %v2350 = vpack.c.bf16 %v2333, %v2332
      %v2351 = vpack.c.bf16 %v2335, %v2334
      %s2352 = scalar_lea.vmem %s3, 12
      %v2353 = vld [vmem:[%s2352] sm:$0x3]
      %v2355 = vsel %vm394, %v2336, 0
      %v2358 = vsel %vm394, %v2337, 0
      %v2361 = vsel %vm394, %v2338, 0
      %v2364 = vsel %vm394, %v2339, 0
      %v2367 = vsel %vm394, %v2340, 0
      %v2370 = vsel %vm394, %v2341, 0
      %v2373 = vsel %vm394, %v2342, 0
      %v2376 = vsel %vm394, %v2343, 0
      %v2379 = vsel %vm394, %v2344, 0
      %v2382 = vsel %vm394, %v2345, 0
      %v2385 = vsel %vm394, %v2346, 0
      %v2388 = vsel %vm394, %v2347, 0
      %v2391 = vsel %vm394, %v2348, 0
      %v2394 = vsel %vm394, %v2349, 0
      %v2397 = vsel %vm394, %v2350, 0
      %v2400 = vsel %vm394, %v2351, 0
      %v2403 = vsel %vm636, %v2353, 0
      %2405 = vmatprep.subr.bf16.mxu0 0
      %2406 = vmatpush1.bf16.msra.mxu0 %v2403
      %2407 = vmatprep.subr.bf16.mxu0 0
      %2408 = vmatpush1.bf16.msra.mxu0 0
      %2409 = vmatprep.subr.bf16.mxu0 0
      %2410 = vmatpush1.bf16.msra.mxu0 0
      %2411 = vmatprep.subr.bf16.mxu0 0
      %2412 = vmatpush1.bf16.msra.mxu0 0
      %2413 = vmatprep.subr.bf16.mxu0 0
      %2414 = vmatpush1.bf16.msra.mxu0 0
      %2415 = vmatprep.subr.bf16.mxu0 0
      %2416 = vmatpush1.bf16.msra.mxu0 0
      %2417 = vmatprep.subr.bf16.mxu0 0
      %2418 = vmatpush1.bf16.msra.mxu0 0
      %2419 = vmatprep.subr.bf16.mxu0 0
      %2420 = vmatpush1.bf16.msra.mxu0 0
      %2421 = vmatprep.subr.bf16.mxu0 0
      %2422 = vmatpush1.bf16.msra.mxu0 0
      %2423 = vmatprep.subr.bf16.mxu0 0
      %2424 = vmatpush1.bf16.msra.mxu0 0
      %2425 = vmatprep.subr.bf16.mxu0 0
      %2426 = vmatpush1.bf16.msra.mxu0 0
      %2427 = vmatprep.subr.bf16.mxu0 0
      %2428 = vmatpush1.bf16.msra.mxu0 0
      %2429 = vmatprep.subr.bf16.mxu0 0
      %2430 = vmatpush1.bf16.msra.mxu0 0
      %2431 = vmatprep.subr.bf16.mxu0 0
      %2432 = vmatpush1.bf16.msra.mxu0 0
      %2433 = vmatprep.subr.bf16.mxu0 0
      %2434 = vmatpush1.bf16.msra.mxu0 0
      %2435 = vmatprep.subr.bf16.mxu0 0
      %2436 = vmatpush1.bf16.msra.mxu0 0
      %2437 = vmatprep.mubr.bf16.mxu0 0
      %2438 = vmatmul.mubr.bf16.gmra.mrb[0].mxu0 %v2355
      %v2439 = vpop.f32.mrb[0].mxu0
      %v2440 = vadd.f32 0.0, %v2439
      %v2441 = vpop.f32.mrb[0].mxu0
      %v2442 = vpop.f32.mrb[0].mxu0
      %v2443 = vadd.f32 0.0, %v2442
      %v2444 = vpop.f32.mrb[0].mxu0
      %2445 = vmatprep.mubr.bf16.mxu0 0
      %2446 = vmatmul.mubr.bf16.gmra.mrb[0].mxu0 %v2358
      %v2447 = vpop.f32.mrb[0].mxu0
      %v2448 = vadd.f32 0.0, %v2447
      %v2449 = vpop.f32.mrb[0].mxu0
      %v2450 = vpop.f32.mrb[0].mxu0
      %v2451 = vadd.f32 0.0, %v2450
      %v2452 = vpop.f32.mrb[0].mxu0
      %2453 = vmatprep.mubr.bf16.mxu0 0
      %2454 = vmatmul.mubr.bf16.gmra.mrb[0].mxu0 %v2361
      %v2455 = vpop.f32.mrb[0].mxu0
      %v2456 = vadd.f32 0.0, %v2455
      %v2457 = vpop.f32.mrb[0].mxu0
      %v2458 = vpop.f32.mrb[0].mxu0
      %v2459 = vadd.f32 0.0, %v2458
      %v2460 = vpop.f32.mrb[0].mxu0
      %2461 = vmatprep.mubr.bf16.mxu0 0
      %2462 = vmatmul.mubr.bf16.gmra.mrb[0].mxu0 %v2364
      %v2463 = vpop.f32.mrb[0].mxu0
      %v2464 = vadd.f32 0.0, %v2463
      %v2465 = vpop.f32.mrb[0].mxu0
      %v2466 = vpop.f32.mrb[0].mxu0
      %v2467 = vadd.f32 0.0, %v2466
      %v2468 = vpop.f32.mrb[0].mxu0
      %2469 = vmatprep.mubr.bf16.mxu0 0
      %2470 = vmatmul.mubr.bf16.gmra.mrb[0].mxu0 %v2367
      %v2471 = vpop.f32.mrb[0].mxu0
      %v2472 = vadd.f32 0.0, %v2471
      %v2473 = vpop.f32.mrb[0].mxu0
      %v2474 = vpop.f32.mrb[0].mxu0
      %v2475 = vadd.f32 0.0, %v2474
      %v2476 = vpop.f32.mrb[0].mxu0
      %2477 = vmatprep.mubr.bf16.mxu0 0
      %2478 = vmatmul.mubr.bf16.gmra.mrb[0].mxu0 %v2370
      %v2479 = vpop.f32.mrb[0].mxu0
      %v2480 = vadd.f32 0.0, %v2479
      %v2481 = vpop.f32.mrb[0].mxu0
      %v2482 = vpop.f32.mrb[0].mxu0
      %v2483 = vadd.f32 0.0, %v2482
      %v2484 = vpop.f32.mrb[0].mxu0
      %2485 = vmatprep.mubr.bf16.mxu0 0
      %2486 = vmatmul.mubr.bf16.gmra.mrb[0].mxu0 %v2373
      %v2487 = vpop.f32.mrb[0].mxu0
      %v2488 = vadd.f32 0.0, %v2487
      %v2489 = vpop.f32.mrb[0].mxu0
      %v2490 = vpop.f32.mrb[0].mxu0
      %v2491 = vadd.f32 0.0, %v2490
      %v2492 = vpop.f32.mrb[0].mxu0
      %2493 = vmatprep.mubr.bf16.mxu0 0
      %2494 = vmatmul.mubr.bf16.gmra.mrb[0].mxu0 %v2376
      %v2495 = vpop.f32.mrb[0].mxu0
      %v2496 = vadd.f32 0.0, %v2495
      %v2497 = vpop.f32.mrb[0].mxu0
      %v2498 = vpop.f32.mrb[0].mxu0
      %v2499 = vadd.f32 0.0, %v2498
      %v2500 = vpop.f32.mrb[0].mxu0
      %2501 = vmatprep.mubr.bf16.mxu0 0
      %2502 = vmatmul.mubr.bf16.gmra.mrb[0].mxu0 %v2379
      %v2503 = vpop.f32.mrb[0].mxu0
      %v2504 = vadd.f32 0.0, %v2503
      %v2505 = vpop.f32.mrb[0].mxu0
      %v2506 = vpop.f32.mrb[0].mxu0
      %v2507 = vadd.f32 0.0, %v2506
      %v2508 = vpop.f32.mrb[0].mxu0
      %2509 = vmatprep.mubr.bf16.mxu0 0
      %2510 = vmatmul.mubr.bf16.gmra.mrb[0].mxu0 %v2382
      %v2511 = vpop.f32.mrb[0].mxu0
      %v2512 = vadd.f32 0.0, %v2511
      %v2513 = vpop.f32.mrb[0].mxu0
      %v2514 = vpop.f32.mrb[0].mxu0
      %v2515 = vadd.f32 0.0, %v2514
      %v2516 = vpop.f32.mrb[0].mxu0
      %2517 = vmatprep.mubr.bf16.mxu0 0
      %2518 = vmatmul.mubr.bf16.gmra.mrb[0].mxu0 %v2385
      %v2519 = vpop.f32.mrb[0].mxu0
      %v2520 = vadd.f32 0.0, %v2519
      %v2521 = vpop.f32.mrb[0].mxu0
      %v2522 = vpop.f32.mrb[0].mxu0
      %v2523 = vadd.f32 0.0, %v2522
      %v2524 = vpop.f32.mrb[0].mxu0
      %2525 = vmatprep.mubr.bf16.mxu0 0
      %2526 = vmatmul.mubr.bf16.gmra.mrb[0].mxu0 %v2388
      %v2527 = vpop.f32.mrb[0].mxu0
      %v2528 = vadd.f32 0.0, %v2527
      %v2529 = vpop.f32.mrb[0].mxu0
      %v2530 = vpop.f32.mrb[0].mxu0
      %v2531 = vadd.f32 0.0, %v2530
      %v2532 = vpop.f32.mrb[0].mxu0
      %2533 = vmatprep.mubr.bf16.mxu0 0
      %2534 = vmatmul.mubr.bf16.gmra.mrb[0].mxu0 %v2391
      %v2535 = vpop.f32.mrb[0].mxu0
      %v2536 = vadd.f32 0.0, %v2535
      %v2537 = vpop.f32.mrb[0].mxu0
      %v2538 = vpop.f32.mrb[0].mxu0
      %v2539 = vadd.f32 0.0, %v2538
      %v2540 = vpop.f32.mrb[0].mxu0
      %2541 = vmatprep.mubr.bf16.mxu0 0
      %2542 = vmatmul.mubr.bf16.gmra.mrb[0].mxu0 %v2394
      %v2543 = vpop.f32.mrb[0].mxu0
      %v2544 = vadd.f32 0.0, %v2543
      %v2545 = vpop.f32.mrb[0].mxu0
      %v2546 = vpop.f32.mrb[0].mxu0
      %v2547 = vadd.f32 0.0, %v2546
      %v2548 = vpop.f32.mrb[0].mxu0
      %2549 = vmatprep.mubr.bf16.mxu0 0
      %2550 = vmatmul.mubr.bf16.gmra.mrb[0].mxu0 %v2397
      %v2551 = vpop.f32.mrb[0].mxu0
      %v2552 = vadd.f32 0.0, %v2551
      %v2553 = vpop.f32.mrb[0].mxu0
      %v2554 = vpop.f32.mrb[0].mxu0
      %v2555 = vadd.f32 0.0, %v2554
      %v2556 = vpop.f32.mrb[0].mxu0
      %2557 = vmatprep.mubr.bf16.mxu0 0
      %2558 = vmatmul.mubr.bf16.gmra.mrb[0].mxu0 %v2400
      %v2559 = vpop.f32.mrb[0].mxu0
      %v2560 = vadd.f32 0.0, %v2559
      %v2561 = vpop.f32.mrb[0].mxu0
      %v2562 = vpop.f32.mrb[0].mxu0
      %v2563 = vadd.f32 0.0, %v2562
      %v2564 = vpop.f32.mrb[0].mxu0
      %2565 = vdwg.mxu0
      %v2566 = vadd.f32 %v2271, %v2440
      %v2567 = vadd.f32 %v2272, %v2443
      %v2568 = vadd.f32 %v2273, %v2448
      %v2569 = vadd.f32 %v2274, %v2451
      %v2570 = vadd.f32 %v2275, %v2456
      %v2571 = vadd.f32 %v2276, %v2459
      %v2572 = vadd.f32 %v2277, %v2464
      %v2573 = vadd.f32 %v2278, %v2467
      %v2574 = vadd.f32 %v2279, %v2472
      %v2575 = vadd.f32 %v2280, %v2475
      %v2576 = vadd.f32 %v2281, %v2480
      %v2577 = vadd.f32 %v2282, %v2483
      %v2578 = vadd.f32 %v2283, %v2488
      %v2579 = vadd.f32 %v2284, %v2491
      %v2580 = vadd.f32 %v2285, %v2496
      %v2581 = vadd.f32 %v2286, %v2499
      %v2582 = vadd.f32 %v2287, %v2504
      %v2583 = vadd.f32 %v2288, %v2507
      %v2584 = vadd.f32 %v2289, %v2512
      %v2585 = vadd.f32 %v2290, %v2515
      %v2586 = vadd.f32 %v2291, %v2520
      %v2587 = vadd.f32 %v2292, %v2523
      %v2588 = vadd.f32 %v2293, %v2528
      %v2589 = vadd.f32 %v2294, %v2531
      %v2590 = vadd.f32 %v2295, %v2536
      %v2591 = vadd.f32 %v2296, %v2539
      %v2592 = vadd.f32 %v2297, %v2544
      %v2593 = vadd.f32 %v2298, %v2547
      %v2594 = vadd.f32 %v2299, %v2552
      %v2595 = vadd.f32 %v2300, %v2555
      %v2596 = vadd.f32 %v2301, %v2560
      %v2597 = vadd.f32 %v2302, %v2563
      %v2598 = vld [vmem:[%s2303 + $0x1] sm:$0xff]
      %v2599 = vld [vmem:[%s2303 + $0x9] sm:$0xff]
      %v2600 = vld [vmem:[%s2303 + $0x19] sm:$0xff]
      %v2601 = vld [vmem:[%s2303 + $0x21] sm:$0xff]
      %v2602 = vld [vmem:[%s2303 + $0x31] sm:$0xff]
      %v2603 = vld [vmem:[%s2303 + $0x39] sm:$0xff]
      %v2604 = vld [vmem:[%s2303 + $0x49] sm:$0xff]
      %v2605 = vld [vmem:[%s2303 + $0x51] sm:$0xff]
      %v2606 = vld [vmem:[%s2303 + $0x61] sm:$0xff]
      %v2607 = vld [vmem:[%s2303 + $0x69] sm:$0xff]
      %v2608 = vld [vmem:[%s2303 + $0x79] sm:$0xff]
      %v2609 = vld [vmem:[%s2303 + $0x81] sm:$0xff]
      %v2610 = vld [vmem:[%s2303 + $0x91] sm:$0xff]
      %v2611 = vld [vmem:[%s2303 + $0x99] sm:$0xff]
      %v2612 = vld [vmem:[%s2303 + $0xa9] sm:$0xff]
      %v2613 = vld [vmem:[%s2303 + $0xb1] sm:$0xff]
      %v2614 = vld [vmem:[%s2303 + $0xc1] sm:$0xff]
      %v2615 = vld [vmem:[%s2303 + $0xc9] sm:$0xff]
      %v2616 = vld [vmem:[%s2303 + $0xd9] sm:$0xff]
      %v2617 = vld [vmem:[%s2303 + $0xe1] sm:$0xff]
      %v2618 = vld [vmem:[%s2303 + $0xf1] sm:$0xff]
      %v2619 = vld [vmem:[%s2303 + $0xf9] sm:$0xff]
      %v2620 = vld [vmem:[%s2303 + $0x109] sm:$0xff]
      %v2621 = vld [vmem:[%s2303 + $0x111] sm:$0xff]
      %v2622 = vld [vmem:[%s2303 + $0x121] sm:$0xff]
      %v2623 = vld [vmem:[%s2303 + $0x129] sm:$0xff]
      %v2624 = vld [vmem:[%s2303 + $0x139] sm:$0xff]
      %v2625 = vld [vmem:[%s2303 + $0x141] sm:$0xff]
      %v2626 = vld [vmem:[%s2303 + $0x151] sm:$0xff]
      %v2627 = vld [vmem:[%s2303 + $0x159] sm:$0xff]
      %v2628 = vld [vmem:[%s2303 + $0x169] sm:$0xff]
      %v2629 = vld [vmem:[%s2303 + $0x171] sm:$0xff]
      %v2630 = vpack.c.bf16 %v2599, %v2598
      %v2631 = vpack.c.bf16 %v2601, %v2600
      %v2632 = vpack.c.bf16 %v2603, %v2602
      %v2633 = vpack.c.bf16 %v2605, %v2604
      %v2634 = vpack.c.bf16 %v2607, %v2606
      %v2635 = vpack.c.bf16 %v2609, %v2608
      %v2636 = vpack.c.bf16 %v2611, %v2610
      %v2637 = vpack.c.bf16 %v2613, %v2612
      %v2638 = vpack.c.bf16 %v2615, %v2614
      %v2639 = vpack.c.bf16 %v2617, %v2616
      %v2640 = vpack.c.bf16 %v2619, %v2618
      %v2641 = vpack.c.bf16 %v2621, %v2620
      %v2642 = vpack.c.bf16 %v2623, %v2622
      %v2643 = vpack.c.bf16 %v2625, %v2624
      %v2644 = vpack.c.bf16 %v2627, %v2626
      %v2645 = vpack.c.bf16 %v2629, %v2628
      %s2646 = scalar_lea.vmem %s3, 14
      %v2647 = vld [vmem:[%s2646] sm:$0x3]
      %v2649 = vsel %vm394, %v2630, 0
      %v2652 = vsel %vm394, %v2631, 0
      %v2655 = vsel %vm394, %v2632, 0
      %v2658 = vsel %vm394, %v2633, 0
      %v2661 = vsel %vm394, %v2634, 0
      %v2664 = vsel %vm394, %v2635, 0
      %v2667 = vsel %vm394, %v2636, 0
      %v2670 = vsel %vm394, %v2637, 0
      %v2673 = vsel %vm394, %v2638, 0
      %v2676 = vsel %vm394, %v2639, 0
      %v2679 = vsel %vm394, %v2640, 0
      %v2682 = vsel %vm394, %v2641, 0
      %v2685 = vsel %vm394, %v2642, 0
      %v2688 = vsel %vm394, %v2643, 0
      %v2691 = vsel %vm394, %v2644, 0
      %v2694 = vsel %vm394, %v2645, 0
      %v2697 = vsel %vm636, %v2647, 0
      %2699 = vmatprep.subr.bf16.mxu0 0
      %2700 = vmatpush1.bf16.msra.mxu0 %v2697
      %2701 = vmatprep.subr.bf16.mxu0 0
      %2702 = vmatpush1.bf16.msra.mxu0 0
      %2703 = vmatprep.subr.bf16.mxu0 0
      %2704 = vmatpush1.bf16.msra.mxu0 0
      %2705 = vmatprep.subr.bf16.mxu0 0
      %2706 = vmatpush1.bf16.msra.mxu0 0
      %2707 = vmatprep.subr.bf16.mxu0 0
      %2708 = vmatpush1.bf16.msra.mxu0 0
      %2709 = vmatprep.subr.bf16.mxu0 0
      %2710 = vmatpush1.bf16.msra.mxu0 0
      %2711 = vmatprep.subr.bf16.mxu0 0
      %2712 = vmatpush1.bf16.msra.mxu0 0
      %2713 = vmatprep.subr.bf16.mxu0 0
      %2714 = vmatpush1.bf16.msra.mxu0 0
      %2715 = vmatprep.subr.bf16.mxu0 0
      %2716 = vmatpush1.bf16.msra.mxu0 0
      %2717 = vmatprep.subr.bf16.mxu0 0
      %2718 = vmatpush1.bf16.msra.mxu0 0
      %2719 = vmatprep.subr.bf16.mxu0 0
      %2720 = vmatpush1.bf16.msra.mxu0 0
      %2721 = vmatprep.subr.bf16.mxu0 0
      %2722 = vmatpush1.bf16.msra.mxu0 0
      %2723 = vmatprep.subr.bf16.mxu0 0
      %2724 = vmatpush1.bf16.msra.mxu0 0
      %2725 = vmatprep.subr.bf16.mxu0 0
      %2726 = vmatpush1.bf16.msra.mxu0 0
      %2727 = vmatprep.subr.bf16.mxu0 0
      %2728 = vmatpush1.bf16.msra.mxu0 0
      %2729 = vmatprep.subr.bf16.mxu0 0
      %2730 = vmatpush1.bf16.msra.mxu0 0
      %2731 = vmatprep.mubr.bf16.mxu0 0
      %2732 = vmatmul.mubr.bf16.gmra.mrb[0].mxu0 %v2649
      %v2733 = vpop.f32.mrb[0].mxu0
      %v2734 = vadd.f32 0.0, %v2733
      %v2735 = vpop.f32.mrb[0].mxu0
      %v2736 = vpop.f32.mrb[0].mxu0
      %v2737 = vadd.f32 0.0, %v2736
      %v2738 = vpop.f32.mrb[0].mxu0
      %2739 = vmatprep.mubr.bf16.mxu0 0
      %2740 = vmatmul.mubr.bf16.gmra.mrb[0].mxu0 %v2652
      %v2741 = vpop.f32.mrb[0].mxu0
      %v2742 = vadd.f32 0.0, %v2741
      %v2743 = vpop.f32.mrb[0].mxu0
      %v2744 = vpop.f32.mrb[0].mxu0
      %v2745 = vadd.f32 0.0, %v2744
      %v2746 = vpop.f32.mrb[0].mxu0
      %2747 = vmatprep.mubr.bf16.mxu0 0
      %2748 = vmatmul.mubr.bf16.gmra.mrb[0].mxu0 %v2655
      %v2749 = vpop.f32.mrb[0].mxu0
      %v2750 = vadd.f32 0.0, %v2749
      %v2751 = vpop.f32.mrb[0].mxu0
      %v2752 = vpop.f32.mrb[0].mxu0
      %v2753 = vadd.f32 0.0, %v2752
      %v2754 = vpop.f32.mrb[0].mxu0
      %2755 = vmatprep.mubr.bf16.mxu0 0
      %2756 = vmatmul.mubr.bf16.gmra.mrb[0].mxu0 %v2658
      %v2757 = vpop.f32.mrb[0].mxu0
      %v2758 = vadd.f32 0.0, %v2757
      %v2759 = vpop.f32.mrb[0].mxu0
      %v2760 = vpop.f32.mrb[0].mxu0
      %v2761 = vadd.f32 0.0, %v2760
      %v2762 = vpop.f32.mrb[0].mxu0
      %2763 = vmatprep.mubr.bf16.mxu0 0
      %2764 = vmatmul.mubr.bf16.gmra.mrb[0].mxu0 %v2661
      %v2765 = vpop.f32.mrb[0].mxu0
      %v2766 = vadd.f32 0.0, %v2765
      %v2767 = vpop.f32.mrb[0].mxu0
      %v2768 = vpop.f32.mrb[0].mxu0
      %v2769 = vadd.f32 0.0, %v2768
      %v2770 = vpop.f32.mrb[0].mxu0
      %2771 = vmatprep.mubr.bf16.mxu0 0
      %2772 = vmatmul.mubr.bf16.gmra.mrb[0].mxu0 %v2664
      %v2773 = vpop.f32.mrb[0].mxu0
      %v2774 = vadd.f32 0.0, %v2773
      %v2775 = vpop.f32.mrb[0].mxu0
      %v2776 = vpop.f32.mrb[0].mxu0
      %v2777 = vadd.f32 0.0, %v2776
      %v2778 = vpop.f32.mrb[0].mxu0
      %2779 = vmatprep.mubr.bf16.mxu0 0
      %2780 = vmatmul.mubr.bf16.gmra.mrb[0].mxu0 %v2667
      %v2781 = vpop.f32.mrb[0].mxu0
      %v2782 = vadd.f32 0.0, %v2781
      %v2783 = vpop.f32.mrb[0].mxu0
      %v2784 = vpop.f32.mrb[0].mxu0
      %v2785 = vadd.f32 0.0, %v2784
      %v2786 = vpop.f32.mrb[0].mxu0
      %2787 = vmatprep.mubr.bf16.mxu0 0
      %2788 = vmatmul.mubr.bf16.gmra.mrb[0].mxu0 %v2670
      %v2789 = vpop.f32.mrb[0].mxu0
      %v2790 = vadd.f32 0.0, %v2789
      %v2791 = vpop.f32.mrb[0].mxu0
      %v2792 = vpop.f32.mrb[0].mxu0
      %v2793 = vadd.f32 0.0, %v2792
      %v2794 = vpop.f32.mrb[0].mxu0
      %2795 = vmatprep.mubr.bf16.mxu0 0
      %2796 = vmatmul.mubr.bf16.gmra.mrb[0].mxu0 %v2673
      %v2797 = vpop.f32.mrb[0].mxu0
      %v2798 = vadd.f32 0.0, %v2797
      %v2799 = vpop.f32.mrb[0].mxu0
      %v2800 = vpop.f32.mrb[0].mxu0
      %v2801 = vadd.f32 0.0, %v2800
      %v2802 = vpop.f32.mrb[0].mxu0
      %2803 = vmatprep.mubr.bf16.mxu0 0
      %2804 = vmatmul.mubr.bf16.gmra.mrb[0].mxu0 %v2676
      %v2805 = vpop.f32.mrb[0].mxu0
      %v2806 = vadd.f32 0.0, %v2805
      %v2807 = vpop.f32.mrb[0].mxu0
      %v2808 = vpop.f32.mrb[0].mxu0
      %v2809 = vadd.f32 0.0, %v2808
      %v2810 = vpop.f32.mrb[0].mxu0
      %2811 = vmatprep.mubr.bf16.mxu0 0
      %2812 = vmatmul.mubr.bf16.gmra.mrb[0].mxu0 %v2679
      %v2813 = vpop.f32.mrb[0].mxu0
      %v2814 = vadd.f32 0.0, %v2813
      %v2815 = vpop.f32.mrb[0].mxu0
      %v2816 = vpop.f32.mrb[0].mxu0
      %v2817 = vadd.f32 0.0, %v2816
      %v2818 = vpop.f32.mrb[0].mxu0
      %2819 = vmatprep.mubr.bf16.mxu0 0
      %2820 = vmatmul.mubr.bf16.gmra.mrb[0].mxu0 %v2682
      %v2821 = vpop.f32.mrb[0].mxu0
      %v2822 = vadd.f32 0.0, %v2821
      %v2823 = vpop.f32.mrb[0].mxu0
      %v2824 = vpop.f32.mrb[0].mxu0
      %v2825 = vadd.f32 0.0, %v2824
      %v2826 = vpop.f32.mrb[0].mxu0
      %2827 = vmatprep.mubr.bf16.mxu0 0
      %2828 = vmatmul.mubr.bf16.gmra.mrb[0].mxu0 %v2685
      %v2829 = vpop.f32.mrb[0].mxu0
      %v2830 = vadd.f32 0.0, %v2829
      %v2831 = vpop.f32.mrb[0].mxu0
      %v2832 = vpop.f32.mrb[0].mxu0
      %v2833 = vadd.f32 0.0, %v2832
      %v2834 = vpop.f32.mrb[0].mxu0
      %2835 = vmatprep.mubr.bf16.mxu0 0
      %2836 = vmatmul.mubr.bf16.gmra.mrb[0].mxu0 %v2688
      %v2837 = vpop.f32.mrb[0].mxu0
      %v2838 = vadd.f32 0.0, %v2837
      %v2839 = vpop.f32.mrb[0].mxu0
      %v2840 = vpop.f32.mrb[0].mxu0
      %v2841 = vadd.f32 0.0, %v2840
      %v2842 = vpop.f32.mrb[0].mxu0
      %2843 = vmatprep.mubr.bf16.mxu0 0
      %2844 = vmatmul.mubr.bf16.gmra.mrb[0].mxu0 %v2691
      %v2845 = vpop.f32.mrb[0].mxu0
      %v2846 = vadd.f32 0.0, %v2845
      %v2847 = vpop.f32.mrb[0].mxu0
      %v2848 = vpop.f32.mrb[0].mxu0
      %v2849 = vadd.f32 0.0, %v2848
      %v2850 = vpop.f32.mrb[0].mxu0
      %2851 = vmatprep.mubr.bf16.mxu0 0
      %2852 = vmatmul.mubr.bf16.gmra.mrb[0].mxu0 %v2694
      %v2853 = vpop.f32.mrb[0].mxu0
      %v2854 = vadd.f32 0.0, %v2853
      %v2855 = vpop.f32.mrb[0].mxu0
      %v2856 = vpop.f32.mrb[0].mxu0
      %v2857 = vadd.f32 0.0, %v2856
      %v2858 = vpop.f32.mrb[0].mxu0
      %2859 = vdwg.mxu0
      %v2860 = vadd.f32 %v2566, %v2734
      %v2861 = vadd.f32 %v2567, %v2737
      %v2862 = vadd.f32 %v2568, %v2742
      %v2863 = vadd.f32 %v2569, %v2745
      %v2864 = vadd.f32 %v2570, %v2750
      %v2865 = vadd.f32 %v2571, %v2753
      %v2866 = vadd.f32 %v2572, %v2758
      %v2867 = vadd.f32 %v2573, %v2761
      %v2868 = vadd.f32 %v2574, %v2766
      %v2869 = vadd.f32 %v2575, %v2769
      %v2870 = vadd.f32 %v2576, %v2774
      %v2871 = vadd.f32 %v2577, %v2777
      %v2872 = vadd.f32 %v2578, %v2782
      %v2873 = vadd.f32 %v2579, %v2785
      %v2874 = vadd.f32 %v2580, %v2790
      %v2875 = vadd.f32 %v2581, %v2793
      %v2876 = vadd.f32 %v2582, %v2798
      %v2877 = vadd.f32 %v2583, %v2801
      %v2878 = vadd.f32 %v2584, %v2806
      %v2879 = vadd.f32 %v2585, %v2809
      %v2880 = vadd.f32 %v2586, %v2814
      %v2881 = vadd.f32 %v2587, %v2817
      %v2882 = vadd.f32 %v2588, %v2822
      %v2883 = vadd.f32 %v2589, %v2825
      %v2884 = vadd.f32 %v2590, %v2830
      %v2885 = vadd.f32 %v2591, %v2833
      %v2886 = vadd.f32 %v2592, %v2838
      %v2887 = vadd.f32 %v2593, %v2841
      %v2888 = vadd.f32 %v2594, %v2846
      %v2889 = vadd.f32 %v2595, %v2849
      %v2890 = vadd.f32 %v2596, %v2854
      %v2891 = vadd.f32 %v2597, %v2857
      %v2892 = vld [vmem:[%s2303 + $0x2] sm:$0xff]
      %v2893 = vld [vmem:[%s2303 + $0xa] sm:$0xff]
      %v2894 = vld [vmem:[%s2303 + $0x1a] sm:$0xff]
      %v2895 = vld [vmem:[%s2303 + $0x22] sm:$0xff]
      %v2896 = vld [vmem:[%s2303 + $0x32] sm:$0xff]
      %v2897 = vld [vmem:[%s2303 + $0x3a] sm:$0xff]
      %v2898 = vld [vmem:[%s2303 + $0x4a] sm:$0xff]
      %v2899 = vld [vmem:[%s2303 + $0x52] sm:$0xff]
      %v2900 = vld [vmem:[%s2303 + $0x62] sm:$0xff]
      %v2901 = vld [vmem:[%s2303 + $0x6a] sm:$0xff]
      %v2902 = vld [vmem:[%s2303 + $0x7a] sm:$0xff]
      %v2903 = vld [vmem:[%s2303 + $0x82] sm:$0xff]
      %v2904 = vld [vmem:[%s2303 + $0x92] sm:$0xff]
      %v2905 = vld [vmem:[%s2303 + $0x9a] sm:$0xff]
      %v2906 = vld [vmem:[%s2303 + $0xaa] sm:$0xff]
      %v2907 = vld [vmem:[%s2303 + $0xb2] sm:$0xff]
      %v2908 = vld [vmem:[%s2303 + $0xc2] sm:$0xff]
      %v2909 = vld [vmem:[%s2303 + $0xca] sm:$0xff]
      %v2910 = vld [vmem:[%s2303 + $0xda] sm:$0xff]
      %v2911 = vld [vmem:[%s2303 + $0xe2] sm:$0xff]
      %v2912 = vld [vmem:[%s2303 + $0xf2] sm:$0xff]
      %v2913 = vld [vmem:[%s2303 + $0xfa] sm:$0xff]
      %v2914 = vld [vmem:[%s2303 + $0x10a] sm:$0xff]
      %v2915 = vld [vmem:[%s2303 + $0x112] sm:$0xff]
      %v2916 = vld [vmem:[%s2303 + $0x122] sm:$0xff]
      %v2917 = vld [vmem:[%s2303 + $0x12a] sm:$0xff]
      %v2918 = vld [vmem:[%s2303 + $0x13a] sm:$0xff]
      %v2919 = vld [vmem:[%s2303 + $0x142] sm:$0xff]
      %v2920 = vld [vmem:[%s2303 + $0x152] sm:$0xff]
      %v2921 = vld [vmem:[%s2303 + $0x15a] sm:$0xff]
      %v2922 = vld [vmem:[%s2303 + $0x16a] sm:$0xff]
      %v2923 = vld [vmem:[%s2303 + $0x172] sm:$0xff]
      %v2924 = vpack.c.bf16 %v2893, %v2892
      %v2925 = vpack.c.bf16 %v2895, %v2894
      %v2926 = vpack.c.bf16 %v2897, %v2896
      %v2927 = vpack.c.bf16 %v2899, %v2898
      %v2928 = vpack.c.bf16 %v2901, %v2900
      %v2929 = vpack.c.bf16 %v2903, %v2902
      %v2930 = vpack.c.bf16 %v2905, %v2904
      %v2931 = vpack.c.bf16 %v2907, %v2906
      %v2932 = vpack.c.bf16 %v2909, %v2908
      %v2933 = vpack.c.bf16 %v2911, %v2910
      %v2934 = vpack.c.bf16 %v2913, %v2912
      %v2935 = vpack.c.bf16 %v2915, %v2914
      %v2936 = vpack.c.bf16 %v2917, %v2916
      %v2937 = vpack.c.bf16 %v2919, %v2918
      %v2938 = vpack.c.bf16 %v2921, %v2920
      %v2939 = vpack.c.bf16 %v2923, %v2922
      %s2940 = scalar_lea.vmem %s3, 16
      %v2941 = vld [vmem:[%s2940] sm:$0x3]
      %v2943 = vsel %vm394, %v2924, 0
      %v2946 = vsel %vm394, %v2925, 0
      %v2949 = vsel %vm394, %v2926, 0
      %v2952 = vsel %vm394, %v2927, 0
      %v2955 = vsel %vm394, %v2928, 0
      %v2958 = vsel %vm394, %v2929, 0
      %v2961 = vsel %vm394, %v2930, 0
      %v2964 = vsel %vm394, %v2931, 0
      %v2967 = vsel %vm394, %v2932, 0
      %v2970 = vsel %vm394, %v2933, 0
      %v2973 = vsel %vm394, %v2934, 0
      %v2976 = vsel %vm394, %v2935, 0
      %v2979 = vsel %vm394, %v2936, 0
      %v2982 = vsel %vm394, %v2937, 0
      %v2985 = vsel %vm394, %v2938, 0
      %v2988 = vsel %vm394, %v2939, 0
      %v2991 = vsel %vm636, %v2941, 0
      %2993 = vmatprep.subr.bf16.mxu0 0
      %2994 = vmatpush1.bf16.msra.mxu0 %v2991
      %2995 = vmatprep.subr.bf16.mxu0 0
      %2996 = vmatpush1.bf16.msra.mxu0 0
      %2997 = vmatprep.subr.bf16.mxu0 0
      %2998 = vmatpush1.bf16.msra.mxu0 0
      %2999 = vmatprep.subr.bf16.mxu0 0
      %3000 = vmatpush1.bf16.msra.mxu0 0
      %3001 = vmatprep.subr.bf16.mxu0 0
      %3002 = vmatpush1.bf16.msra.mxu0 0
      %3003 = vmatprep.subr.bf16.mxu0 0
      %3004 = vmatpush1.bf16.msra.mxu0 0
      %3005 = vmatprep.subr.bf16.mxu0 0
      %3006 = vmatpush1.bf16.msra.mxu0 0
      %3007 = vmatprep.subr.bf16.mxu0 0
      %3008 = vmatpush1.bf16.msra.mxu0 0
      %3009 = vmatprep.subr.bf16.mxu0 0
      %3010 = vmatpush1.bf16.msra.mxu0 0
      %3011 = vmatprep.subr.bf16.mxu0 0
      %3012 = vmatpush1.bf16.msra.mxu0 0
      %3013 = vmatprep.subr.bf16.mxu0 0
      %3014 = vmatpush1.bf16.msra.mxu0 0
      %3015 = vmatprep.subr.bf16.mxu0 0
      %3016 = vmatpush1.bf16.msra.mxu0 0
      %3017 = vmatprep.subr.bf16.mxu0 0
      %3018 = vmatpush1.bf16.msra.mxu0 0
      %3019 = vmatprep.subr.bf16.mxu0 0
      %3020 = vmatpush1.bf16.msra.mxu0 0
      %3021 = vmatprep.subr.bf16.mxu0 0
      %3022 = vmatpush1.bf16.msra.mxu0 0
      %3023 = vmatprep.subr.bf16.mxu0 0
      %3024 = vmatpush1.bf16.msra.mxu0 0
      %3025 = vmatprep.mubr.bf16.mxu0 0
      %3026 = vmatmul.mubr.bf16.gmra.mrb[0].mxu0 %v2943
      %v3027 = vpop.f32.mrb[0].mxu0
      %v3028 = vadd.f32 0.0, %v3027
      %v3029 = vpop.f32.mrb[0].mxu0
      %v3030 = vpop.f32.mrb[0].mxu0
      %v3031 = vadd.f32 0.0, %v3030
      %v3032 = vpop.f32.mrb[0].mxu0
      %3033 = vmatprep.mubr.bf16.mxu0 0
      %3034 = vmatmul.mubr.bf16.gmra.mrb[0].mxu0 %v2946
      %v3035 = vpop.f32.mrb[0].mxu0
      %v3036 = vadd.f32 0.0, %v3035
      %v3037 = vpop.f32.mrb[0].mxu0
      %v3038 = vpop.f32.mrb[0].mxu0
      %v3039 = vadd.f32 0.0, %v3038
      %v3040 = vpop.f32.mrb[0].mxu0
      %3041 = vmatprep.mubr.bf16.mxu0 0
      %3042 = vmatmul.mubr.bf16.gmra.mrb[0].mxu0 %v2949
      %v3043 = vpop.f32.mrb[0].mxu0
      %v3044 = vadd.f32 0.0, %v3043
      %v3045 = vpop.f32.mrb[0].mxu0
      %v3046 = vpop.f32.mrb[0].mxu0
      %v3047 = vadd.f32 0.0, %v3046
      %v3048 = vpop.f32.mrb[0].mxu0
      %3049 = vmatprep.mubr.bf16.mxu0 0
      %3050 = vmatmul.mubr.bf16.gmra.mrb[0].mxu0 %v2952
      %v3051 = vpop.f32.mrb[0].mxu0
      %v3052 = vadd.f32 0.0, %v3051
      %v3053 = vpop.f32.mrb[0].mxu0
      %v3054 = vpop.f32.mrb[0].mxu0
      %v3055 = vadd.f32 0.0, %v3054
      %v3056 = vpop.f32.mrb[0].mxu0
      %3057 = vmatprep.mubr.bf16.mxu0 0
      %3058 = vmatmul.mubr.bf16.gmra.mrb[0].mxu0 %v2955
      %v3059 = vpop.f32.mrb[0].mxu0
      %v3060 = vadd.f32 0.0, %v3059
      %v3061 = vpop.f32.mrb[0].mxu0
      %v3062 = vpop.f32.mrb[0].mxu0
      %v3063 = vadd.f32 0.0, %v3062
      %v3064 = vpop.f32.mrb[0].mxu0
      %3065 = vmatprep.mubr.bf16.mxu0 0
      %3066 = vmatmul.mubr.bf16.gmra.mrb[0].mxu0 %v2958
      %v3067 = vpop.f32.mrb[0].mxu0
      %v3068 = vadd.f32 0.0, %v3067
      %v3069 = vpop.f32.mrb[0].mxu0
      %v3070 = vpop.f32.mrb[0].mxu0
      %v3071 = vadd.f32 0.0, %v3070
      %v3072 = vpop.f32.mrb[0].mxu0
      %3073 = vmatprep.mubr.bf16.mxu0 0
      %3074 = vmatmul.mubr.bf16.gmra.mrb[0].mxu0 %v2961
      %v3075 = vpop.f32.mrb[0].mxu0
      %v3076 = vadd.f32 0.0, %v3075
      %v3077 = vpop.f32.mrb[0].mxu0
      %v3078 = vpop.f32.mrb[0].mxu0
      %v3079 = vadd.f32 0.0, %v3078
      %v3080 = vpop.f32.mrb[0].mxu0
      %3081 = vmatprep.mubr.bf16.mxu0 0
      %3082 = vmatmul.mubr.bf16.gmra.mrb[0].mxu0 %v2964
      %v3083 = vpop.f32.mrb[0].mxu0
      %v3084 = vadd.f32 0.0, %v3083
      %v3085 = vpop.f32.mrb[0].mxu0
      %v3086 = vpop.f32.mrb[0].mxu0
      %v3087 = vadd.f32 0.0, %v3086
      %v3088 = vpop.f32.mrb[0].mxu0
      %3089 = vmatprep.mubr.bf16.mxu0 0
      %3090 = vmatmul.mubr.bf16.gmra.mrb[0].mxu0 %v2967
      %v3091 = vpop.f32.mrb[0].mxu0
      %v3092 = vadd.f32 0.0, %v3091
      %v3093 = vpop.f32.mrb[0].mxu0
      %v3094 = vpop.f32.mrb[0].mxu0
      %v3095 = vadd.f32 0.0, %v3094
      %v3096 = vpop.f32.mrb[0].mxu0
      %3097 = vmatprep.mubr.bf16.mxu0 0
      %3098 = vmatmul.mubr.bf16.gmra.mrb[0].mxu0 %v2970
      %v3099 = vpop.f32.mrb[0].mxu0
      %v3100 = vadd.f32 0.0, %v3099
      %v3101 = vpop.f32.mrb[0].mxu0
      %v3102 = vpop.f32.mrb[0].mxu0
      %v3103 = vadd.f32 0.0, %v3102
      %v3104 = vpop.f32.mrb[0].mxu0
      %3105 = vmatprep.mubr.bf16.mxu0 0
      %3106 = vmatmul.mubr.bf16.gmra.mrb[0].mxu0 %v2973
      %v3107 = vpop.f32.mrb[0].mxu0
      %v3108 = vadd.f32 0.0, %v3107
      %v3109 = vpop.f32.mrb[0].mxu0
      %v3110 = vpop.f32.mrb[0].mxu0
      %v3111 = vadd.f32 0.0, %v3110
      %v3112 = vpop.f32.mrb[0].mxu0
      %3113 = vmatprep.mubr.bf16.mxu0 0
      %3114 = vmatmul.mubr.bf16.gmra.mrb[0].mxu0 %v2976
      %v3115 = vpop.f32.mrb[0].mxu0
      %v3116 = vadd.f32 0.0, %v3115
      %v3117 = vpop.f32.mrb[0].mxu0
      %v3118 = vpop.f32.mrb[0].mxu0
      %v3119 = vadd.f32 0.0, %v3118
      %v3120 = vpop.f32.mrb[0].mxu0
      %3121 = vmatprep.mubr.bf16.mxu0 0
      %3122 = vmatmul.mubr.bf16.gmra.mrb[0].mxu0 %v2979
      %v3123 = vpop.f32.mrb[0].mxu0
      %v3124 = vadd.f32 0.0, %v3123
      %v3125 = vpop.f32.mrb[0].mxu0
      %v3126 = vpop.f32.mrb[0].mxu0
      %v3127 = vadd.f32 0.0, %v3126
      %v3128 = vpop.f32.mrb[0].mxu0
      %3129 = vmatprep.mubr.bf16.mxu0 0
      %3130 = vmatmul.mubr.bf16.gmra.mrb[0].mxu0 %v2982
      %v3131 = vpop.f32.mrb[0].mxu0
      %v3132 = vadd.f32 0.0, %v3131
      %v3133 = vpop.f32.mrb[0].mxu0
      %v3134 = vpop.f32.mrb[0].mxu0
      %v3135 = vadd.f32 0.0, %v3134
      %v3136 = vpop.f32.mrb[0].mxu0
      %3137 = vmatprep.mubr.bf16.mxu0 0
      %3138 = vmatmul.mubr.bf16.gmra.mrb[0].mxu0 %v2985
      %v3139 = vpop.f32.mrb[0].mxu0
      %v3140 = vadd.f32 0.0, %v3139
      %v3141 = vpop.f32.mrb[0].mxu0
      %v3142 = vpop.f32.mrb[0].mxu0
      %v3143 = vadd.f32 0.0, %v3142
      %v3144 = vpop.f32.mrb[0].mxu0
      %3145 = vmatprep.mubr.bf16.mxu0 0
      %3146 = vmatmul.mubr.bf16.gmra.mrb[0].mxu0 %v2988
      %v3147 = vpop.f32.mrb[0].mxu0
      %v3148 = vadd.f32 0.0, %v3147
      %v3149 = vpop.f32.mrb[0].mxu0
      %v3150 = vpop.f32.mrb[0].mxu0
      %v3151 = vadd.f32 0.0, %v3150
      %v3152 = vpop.f32.mrb[0].mxu0
      %3153 = vdwg.mxu0
      %v3154 = vadd.f32 %v2860, %v3028
      %v3155 = vadd.f32 %v2861, %v3031
      %v3156 = vadd.f32 %v2862, %v3036
      %v3157 = vadd.f32 %v2863, %v3039
      %v3158 = vadd.f32 %v2864, %v3044
      %v3159 = vadd.f32 %v2865, %v3047
      %v3160 = vadd.f32 %v2866, %v3052
      %v3161 = vadd.f32 %v2867, %v3055
      %v3162 = vadd.f32 %v2868, %v3060
      %v3163 = vadd.f32 %v2869, %v3063
      %v3164 = vadd.f32 %v2870, %v3068
      %v3165 = vadd.f32 %v2871, %v3071
      %v3166 = vadd.f32 %v2872, %v3076
      %v3167 = vadd.f32 %v2873, %v3079
      %v3168 = vadd.f32 %v2874, %v3084
      %v3169 = vadd.f32 %v2875, %v3087
      %v3170 = vadd.f32 %v2876, %v3092
      %v3171 = vadd.f32 %v2877, %v3095
      %v3172 = vadd.f32 %v2878, %v3100
      %v3173 = vadd.f32 %v2879, %v3103
      %v3174 = vadd.f32 %v2880, %v3108
      %v3175 = vadd.f32 %v2881, %v3111
      %v3176 = vadd.f32 %v2882, %v3116
      %v3177 = vadd.f32 %v2883, %v3119
      %v3178 = vadd.f32 %v2884, %v3124
      %v3179 = vadd.f32 %v2885, %v3127
      %v3180 = vadd.f32 %v2886, %v3132
      %v3181 = vadd.f32 %v2887, %v3135
      %v3182 = vadd.f32 %v2888, %v3140
      %v3183 = vadd.f32 %v2889, %v3143
      %v3184 = vadd.f32 %v2890, %v3148
      %v3185 = vadd.f32 %v2891, %v3151
      %v3186 = vmax.f32 %v3154, 0.0
      %v3187 = vmax.f32 %v3155, 0.0
      %v3188 = vmax.f32 %v3156, 0.0
      %v3189 = vmax.f32 %v3157, 0.0
      %v3190 = vmax.f32 %v3158, 0.0
      %v3191 = vmax.f32 %v3159, 0.0
      %v3192 = vmax.f32 %v3160, 0.0
      %v3193 = vmax.f32 %v3161, 0.0
      %v3194 = vmax.f32 %v3162, 0.0
      %v3195 = vmax.f32 %v3163, 0.0
      %v3196 = vmax.f32 %v3164, 0.0
      %v3197 = vmax.f32 %v3165, 0.0
      %v3198 = vmax.f32 %v3166, 0.0
      %v3199 = vmax.f32 %v3167, 0.0
      %v3200 = vmax.f32 %v3168, 0.0
      %v3201 = vmax.f32 %v3169, 0.0
      %v3202 = vmax.f32 %v3170, 0.0
      %v3203 = vmax.f32 %v3171, 0.0
      %v3204 = vmax.f32 %v3172, 0.0
      %v3205 = vmax.f32 %v3173, 0.0
      %v3206 = vmax.f32 %v3174, 0.0
      %v3207 = vmax.f32 %v3175, 0.0
      %v3208 = vmax.f32 %v3176, 0.0
      %v3209 = vmax.f32 %v3177, 0.0
      %v3210 = vmax.f32 %v3178, 0.0
      %v3211 = vmax.f32 %v3179, 0.0
      %v3212 = vmax.f32 %v3180, 0.0
      %v3213 = vmax.f32 %v3181, 0.0
      %v3214 = vmax.f32 %v3182, 0.0
      %v3215 = vmax.f32 %v3183, 0.0
      %v3216 = vmax.f32 %v3184, 0.0
      %v3217 = vmax.f32 %v3185, 0.0
      %vm3218 = vcmask 64512
      %3219 = vst.msk [vmem:[%s391] sm:$0xff] %vm3218, %v3186
      %3220 = vst.msk [vmem:[%s391 + $0x8] sm:$0xff] %vm3218, %v3187
      %3221 = vst.msk [vmem:[%s391 + $0x10] sm:$0xff] %vm3218, %v3188
      %3222 = vst.msk [vmem:[%s391 + $0x18] sm:$0xff] %vm3218, %v3189
      %3223 = vst.msk [vmem:[%s391 + $0x20] sm:$0xff] %vm3218, %v3190
      %3224 = vst.msk [vmem:[%s391 + $0x28] sm:$0xff] %vm3218, %v3191
      %3225 = vst.msk [vmem:[%s391 + $0x30] sm:$0xff] %vm3218, %v3192
      %3226 = vst.msk [vmem:[%s391 + $0x38] sm:$0xff] %vm3218, %v3193
      %3227 = vst.msk [vmem:[%s391 + $0x40] sm:$0xff] %vm3218, %v3194
      %3228 = vst.msk [vmem:[%s391 + $0x48] sm:$0xff] %vm3218, %v3195
      %3229 = vst.msk [vmem:[%s391 + $0x50] sm:$0xff] %vm3218, %v3196
      %3230 = vst.msk [vmem:[%s391 + $0x58] sm:$0xff] %vm3218, %v3197
      %3231 = vst.msk [vmem:[%s391 + $0x60] sm:$0xff] %vm3218, %v3198
      %3232 = vst.msk [vmem:[%s391 + $0x68] sm:$0xff] %vm3218, %v3199
      %3233 = vst.msk [vmem:[%s391 + $0x70] sm:$0xff] %vm3218, %v3200
      %3234 = vst.msk [vmem:[%s391 + $0x78] sm:$0xff] %vm3218, %v3201
      %3235 = vst.msk [vmem:[%s391 + $0x80] sm:$0xff] %vm3218, %v3202
      %3236 = vst.msk [vmem:[%s391 + $0x88] sm:$0xff] %vm3218, %v3203
      %3237 = vst.msk [vmem:[%s391 + $0x90] sm:$0xff] %vm3218, %v3204
      %3238 = vst.msk [vmem:[%s391 + $0x98] sm:$0xff] %vm3218, %v3205
      %3239 = vst.msk [vmem:[%s391 + $0xa0] sm:$0xff] %vm3218, %v3206
      %3240 = vst.msk [vmem:[%s391 + $0xa8] sm:$0xff] %vm3218, %v3207
      %3241 = vst.msk [vmem:[%s391 + $0xb0] sm:$0xff] %vm3218, %v3208
      %3242 = vst.msk [vmem:[%s391 + $0xb8] sm:$0xff] %vm3218, %v3209
      %3243 = vst.msk [vmem:[%s391 + $0xc0] sm:$0xff] %vm3218, %v3210
      %3244 = vst.msk [vmem:[%s391 + $0xc8] sm:$0xff] %vm3218, %v3211
      %3245 = vst.msk [vmem:[%s391 + $0xd0] sm:$0xff] %vm3218, %v3212
      %3246 = vst.msk [vmem:[%s391 + $0xd8] sm:$0xff] %vm3218, %v3213
      %3247 = vst.msk [vmem:[%s391 + $0xe0] sm:$0xff] %vm3218, %v3214
      %3248 = vst.msk [vmem:[%s391 + $0xe8] sm:$0xff] %vm3218, %v3215
      %3249 = vst.msk [vmem:[%s391 + $0xf0] sm:$0xff] %vm3218, %v3216
      %3250 = vst.msk [vmem:[%s391 + $0xf8] sm:$0xff] %vm3218, %v3217
      %s3251 = smul.u32 16, %s21
      %p3252 = scmp.lt.s32.totalorder %s20, 1
      %s3253 = scalar_select %p3252, %s20, 1
      %p3254 = scmp.lt.s32.totalorder %s3251, 15
      %s3255 = scalar_select %p3254, %s3251, 15
      %s3256 = smul.addr %s3255, 2
      %s3257 = smul.addr %s3253, 32
      %s3258 = sadd.s32 %s3256, %s3257
      %s3259 = smul.addr %s3258, 8
      %s3260 = scalar_lea.vmem %s5, %s3259
      // Predicated region
      $region49: #{conv_block_forward.2} parent=39 // pred_check
        %p3261 = pneg %p190
      $region50: #{conv_block_forward.2} parent=39 // pred_check_branch
        %3263 = sbr.rel (%p3261) target = $region52
      $region51: #{conv_block_forward.2} parent=39 // pred_region
        %s3264 = smul.u32 16, %s21
      $region52: #{conv_block_forward.2} parent=39 // pred_fallthru
        _
    $region40: #{conv_block_forward.2} parent=5 // pred_fallthru
      _
    %p3265 = scmp.le.s32.totalorder 2, %s11
    // Predicated region
    $region53: #{conv_block_forward.2} parent=5 // pred_check
      %p3266 = pneg %p3265
    $region54: #{conv_block_forward.2} parent=5 // pred_check_branch
      %3268 = sbr.rel (%p3266) target = $region56
    $region55: #{conv_block_forward.2} parent=5 // pred_region
      %s3269 = ssub.s32 %s11, 2
      // Predicated region
      $region57: #{conv_block_forward.2} parent=55 // pred_check
        %p3270 = pneg %p196
      $region58: #{conv_block_forward.2} parent=55 // pred_check_branch
        %3272 = sbr.rel (%p3270) target = $region60
      $region59: #{conv_block_forward.2} parent=55 // pred_region
        %s3273 = smul.u32 16, %s23
        %p3274 = scmp.lt.s32.totalorder %s22, 1
        %s3275 = scalar_select %p3274, %s22, 1
        %p3276 = scmp.lt.s32.totalorder %s3273, 15
        %s3277 = scalar_select %p3276, %s3273, 15
        %s3278 = smul.addr %s3277, 2
        %s3279 = smul.addr %s3275, 32
        %s3280 = sadd.s32 %s3278, %s3279
        %s3281 = smul.addr %s3280, 8
        %s3282 = scalar_lea.vmem %s5, %s3281
      $region60: #{conv_block_forward.2} parent=55 // pred_fallthru
        _
    $region56: #{conv_block_forward.2} parent=5 // pred_fallthru
      _
  $region6: #{conv_block_forward.2} parent=0 // loop_footer
    %s15 = sadd.s32 1, %s11
  $region7: #{conv_block_forward.2} parent=0 // loop_footer_branch
    %10 = sbr.rel target = $region3
  $region8: #{conv_block_forward.2} parent=0 // loop_exit
    _

</llo_original>
